<compile_context>
chip_gen: v5e
topology: v5e:2x2
jax: 0.10.0
libtpu: 0.0.40
codegen_flags: <defaults>
</compile_context>

<pallas_src>
import functools

import jax
import jax.numpy as jnp
from jax.experimental import pallas as pl
from jax.experimental.pallas import tpu as pltpu


_BN_EPS = 1e-5


# --------------------------- fused 3x3 conv kernel --------------------------

def _make_conv3x3_kernel(n_inputs, h, w, apply_relu):
    """Kernel computing relu?(sum_i conv3x3(x_i, w_i) + bias) for one image.

    Ref order: x_0..x_{n-1} (padded NHWC, bf16), w_0..w_{n-1} (3,3,Ci,Cout bf16),
    bias (1, Cout f32), out (1, h, w, Cout).
    """

    def kernel(*refs):
        x_refs = refs[:n_inputs]
        w_refs = refs[n_inputs:2 * n_inputs]
        b_ref = refs[2 * n_inputs]
        o_ref = refs[2 * n_inputs + 1]
        cout = o_ref.shape[-1]

        acc = jnp.zeros((h * w, cout), jnp.float32)
        for x_ref, w_ref in zip(x_refs, w_refs):
            ci = x_ref.shape[-1]
            for i in range(3):          # static unroll over the 9 taps
                for j in range(3):
                    patch = x_ref[0, i:i + h, j:j + w, :].reshape(h * w, ci)
                    acc = acc + jnp.dot(patch, w_ref[i, j],
                                        preferred_element_type=jnp.float32)
        acc = acc + b_ref[...]          # (h*w, C) + (1, C) broadcast
        if apply_relu:
            acc = jnp.maximum(acc, 0.0)
        o_ref[0] = acc.reshape(h, w, cout).astype(o_ref.dtype)

    return kernel


def conv3x3_bias_relu(xs, ws, bias, apply_relu=True, out_dtype=jnp.bfloat16):
    """3x3, stride-1, pad-1 conv over the channel-concatenation of `xs`.

    xs:   list of NHWC tensors (same N/H/W).
    ws:   list of (3, 3, Ci, Cout) bf16 weights matching xs (BN pre-folded).
    bias: (1, Cout) f32 (BN pre-folded).
    """
    n, h, w = xs[0].shape[0], xs[0].shape[1], xs[0].shape[2]
    cout = ws[0].shape[-1]

    # Spatial pad by 1 and cast activations to bf16 (single cheap pass).
    xs_p = [jnp.pad(x.astype(jnp.bfloat16),
                    ((0, 0), (1, 1), (1, 1), (0, 0))) for x in xs]

    in_specs = []
    for x in xs_p:
        _, hp, wp, ci = x.shape
        in_specs.append(pl.BlockSpec((1, hp, wp, ci),
                                     lambda nn: (nn, 0, 0, 0)))
    for wt in ws:
        in_specs.append(pl.BlockSpec(wt.shape, lambda nn: (0, 0, 0, 0)))
    in_specs.append(pl.BlockSpec((1, cout), lambda nn: (0, 0)))

    kernel = _make_conv3x3_kernel(len(xs_p), h, w, apply_relu)

    out = pl.pallas_call(
        kernel,
        out_shape=jax.ShapeDtypeStruct((n, h, w, cout), out_dtype),
        grid_spec=pltpu.PrefetchScalarGridSpec(
            num_scalar_prefetch=0,
            grid=(n,),
            in_specs=in_specs,
            out_specs=pl.BlockSpec((1, h, w, cout), lambda nn: (nn, 0, 0, 0)),
        ),
        compiler_params=pltpu.CompilerParams(
            dimension_semantics=("parallel",),
        ),
    )(*xs_p, *ws, bias)
    return out


# ------------------------ bilinear 2x upsample (no gather) ------------------

def _interp_matrix(in_size, out_size):
    """Row-stochastic (out, in) bilinear interpolation matrix, align_corners=True."""
    if in_size == 1:
        return jnp.ones((out_size, 1), jnp.float32)
    c = jnp.arange(out_size, dtype=jnp.float32) * ((in_size - 1) / (out_size - 1))
    i0 = jnp.clip(jnp.floor(c), 0.0, in_size - 2)
    frac = c - i0
    src = jnp.arange(in_size, dtype=jnp.float32)[None, :]      # (1, in)
    i0c = i0[:, None]                                          # (out, 1)
    w0 = (src == i0c).astype(jnp.float32) * (1.0 - frac)[:, None]
    w1 = (src == i0c + 1.0).astype(jnp.float32) * frac[:, None]
    return w0 + w1


def upsample_bilinear_2x(x):
    """nn.Upsample(scale_factor=2, mode='bilinear', align_corners=True), NHWC."""
    _, h, w, _ = x.shape
    ay = _interp_matrix(h, 2 * h)
    ax = _interp_matrix(w, 2 * w)
    x = jnp.einsum('oh,nhwc->nowc', ay, x)
    x = jnp.einsum('pw,nowc->nopc', ax, x)
    return x


# ------------------------------ parameters ----------------------------------

def _fold_bn(w, b, bn):
    gamma, beta, rm, rv = bn
    s = gamma / jnp.sqrt(rv + _BN_EPS)
    return w * s[None, None, None, :], b * s + beta - rm * s


def init_conv(key, kh, kw, cin, cout):
    k1, k2 = jax.random.split(key)
    fan_in = kh * kw * cin
    w = jax.random.normal(k1, (kh, kw, cin, cout), jnp.float32) * (2.0 / fan_in) ** 0.5
    b = jax.random.normal(k2, (cout,), jnp.float32) * 0.01
    return w, b


def init_bn(key, c):
    k1, k2, k3, k4 = jax.random.split(key, 4)
    gamma = 1.0 + 0.1 * jax.random.normal(k1, (c,), jnp.float32)
    beta = 0.1 * jax.random.normal(k2, (c,), jnp.float32)
    rm = 0.1 * jax.random.normal(k3, (c,), jnp.float32)
    rv = 1.0 + 0.1 * jnp.abs(jax.random.normal(k4, (c,), jnp.float32))
    return (gamma, beta, rm, rv)


def init_up_params(key, in_channel, out_channel):
    """Raw parameters of Up(in_channel, out_channel) = DoubleConv(in, out)."""
    ks = jax.random.split(key, 4)
    w1, b1 = init_conv(ks[0], 3, 3, in_channel, out_channel)
    bn1 = init_bn(ks[1], out_channel)
    w2, b2 = init_conv(ks[2], 3, 3, out_channel, out_channel)
    bn2 = init_bn(ks[3], out_channel)
    return dict(w1=w1, b1=b1, bn1=bn1, w2=w2, b2=b2, bn2=bn2)


def prepare_up_params(raw, c_skip):
    """Fold BN, split conv1's Cin for concat-free execution, pre-cast to bf16."""
    w1, b1 = _fold_bn(raw["w1"], raw["b1"], raw["bn1"])
    w2, b2 = _fold_bn(raw["w2"], raw["b2"], raw["bn2"])
    return dict(
        w1a=w1[:, :, :c_skip, :].astype(jnp.bfloat16),   # multiplies x2 (skip)
        w1b=w1[:, :, c_skip:, :].astype(jnp.bfloat16),   # multiplies upsampled x1
        b1=b1.astype(jnp.float32).reshape(1, -1),
        w2=w2.astype(jnp.bfloat16),
        b2=b2.astype(jnp.float32).reshape(1, -1),
    )


# -------------------------------- forward -----------------------------------

def up_forward(params, x1_nchw, x2_nchw):
    """Up.forward(x1, x2): upsample x1, pad x2, concat, DoubleConv.  NCHW I/O."""
    x1 = jnp.transpose(x1_nchw, (0, 2, 3, 1))           # NCHW -> NHWC
    x2 = jnp.transpose(x2_nchw, (0, 2, 3, 1))
    x1 = upsample_bilinear_2x(x1)

    dy = x1.shape[1] - x2.shape[1]
    dx = x1.shape[2] - x2.shape[2]
    if dy != 0 or dx != 0:                               # F.pad on x2 (dy,dx >= 0)
        x2 = jnp.pad(x2, ((0, 0),
                          (dy // 2, dy - dy // 2),
                          (dx // 2, dx - dx // 2),
                          (0, 0)))

    # conv1 over cat([x2, x1]) without materializing the concat:
    h = conv3x3_bias_relu([x2, x1], [params["w1a"], params["w1b"]],
                          params["b1"], apply_relu=True,
                          out_dtype=jnp.bfloat16)
    # conv2
    y = conv3x3_bias_relu([h], [params["w2"]], params["b2"],
                          apply_relu=True, out_dtype=jnp.float32)
    return jnp.transpose(y, (0, 3, 1, 2))                # NHWC -> NCHW


# --------------------------------- main --------------------------------------

if __name__ == "__main__":
    key = jax.random.PRNGKey(0)
    kp, k1, k2 = jax.random.split(key, 3)

    in_channel, out_channel = 256, 128                   # Up(256, 128)
    c_branch = in_channel // 2                           # channels of x1 and x2
    raw = init_up_params(kp, in_channel, out_channel)
    params = prepare_up_params(raw, c_skip=c_branch)

    x1 = jax.random.normal(k1, (2, c_branch, 8, 8), jnp.float32)    # NCHW (coarse)
    x2 = jax.random.normal(k2, (2, c_branch, 16, 16), jnp.float32)  # NCHW (skip)

    fwd = jax.jit(up_forward)
    out = jax.block_until_ready(fwd(params, x1, x2))
    assert out.shape == (2, out_channel, 16, 16), out.shape
    assert bool(jnp.all(jnp.isfinite(out)))

    # f32 plain-JAX reference (same folded-BN math) to sanity-check the kernel.
    def reference(raw_p, a_nchw, b_nchw):
        w1, b1 = _fold_bn(raw_p["w1"], raw_p["b1"], raw_p["bn1"])
        w2, b2 = _fold_bn(raw_p["w2"], raw_p["b2"], raw_p["bn2"])
        a = jnp.transpose(a_nchw, (0, 2, 3, 1))
        b = jnp.transpose(b_nchw, (0, 2, 3, 1))
        a = upsample_bilinear_2x(a)
        x = jnp.concatenate([b, a], axis=-1)

        def conv(v, wt, bs):
            y = jax.lax.conv_general_dilated(
                v, wt, (1, 1), ((1, 1), (1, 1)),
                dimension_numbers=("NHWC", "HWIO", "NHWC"))
            return jnp.maximum(y + bs, 0.0)

        x = conv(x, w1, b1)
        x = conv(x, w2, b2)
        return jnp.transpose(x, (0, 3, 1, 2))

    ref = reference(raw, x1, x2)
    max_err = float(jnp.max(jnp.abs(out - ref)))
    assert max_err < 0.15, max_err                       # bf16 operand tolerance

    print("KERNEL_OK")
</pallas_src>

<mosaic_0001>
module attributes {stable_mosaic.version = 11 : i64} {
  func.func @kernel(%arg0: i32, %arg1: memref<1x18x18x128xbf16, #tpu.memory_space<vmem>>, %arg2: memref<1x18x18x128xbf16, #tpu.memory_space<vmem>>, %arg3: memref<3x3x128x128xbf16, #tpu.memory_space<vmem>>, %arg4: memref<3x3x128x128xbf16, #tpu.memory_space<vmem>>, %arg5: memref<1x128xf32, #tpu.memory_space<vmem>>, %arg6: memref<1x16x16x128xbf16, #tpu.memory_space<vmem>>) attributes {dimension_semantics = [#tpu.dimension_semantics<parallel>], iteration_bounds = array<i64: 2>, scalar_prefetch = 0 : i64, scratch_operands = 0 : i64, tpu.core_type = #tpu.core_type<tc>, window_params = [{transform_indices = @transform_0, window_bounds = array<i64: 1, 18, 18, 128>}, {transform_indices = @transform_1, window_bounds = array<i64: 1, 18, 18, 128>}, {pipeline_mode = #tpu.pipeline_mode<synchronous>, transform_indices = @transform_2, window_bounds = array<i64: 3, 3, 128, 128>}, {pipeline_mode = #tpu.pipeline_mode<synchronous>, transform_indices = @transform_3, window_bounds = array<i64: 3, 3, 128, 128>}, {pipeline_mode = #tpu.pipeline_mode<synchronous>, transform_indices = @transform_4, window_bounds = array<i64: 1, 128>}, {transform_indices = @transform_5, window_bounds = array<i64: 1, 16, 16, 128>}]} {
    %cst = arith.constant 0.000000e+00 : f32
    %0 = vector.broadcast %cst : f32 to vector<256x128xf32>
    %c0 = arith.constant 0 : index
    %c0_0 = arith.constant 0 : index
    %c0_1 = arith.constant 0 : index
    %c0_2 = arith.constant 0 : index
    %1 = vector.load %arg1[%c0, %c0_0, %c0_1, %c0_2] : memref<1x18x18x128xbf16, #tpu.memory_space<vmem>>, vector<1x16x16x128xbf16>
    %2 = vector.shape_cast %1 : vector<1x16x16x128xbf16> to vector<16x16x128xbf16>
    %3 = vector.shape_cast %2 : vector<16x16x128xbf16> to vector<256x128xbf16>
    %c0_3 = arith.constant 0 : index
    %c0_4 = arith.constant 0 : index
    %c0_5 = arith.constant 0 : index
    %c0_6 = arith.constant 0 : index
    %4 = vector.load %arg3[%c0_3, %c0_4, %c0_5, %c0_6] : memref<3x3x128x128xbf16, #tpu.memory_space<vmem>>, vector<1x1x128x128xbf16>
    %5 = vector.shape_cast %4 : vector<1x1x128x128xbf16> to vector<128x128xbf16>
    %cst_7 = arith.constant dense<0.000000e+00> : vector<256x128xf32>
    %6 = tpu.matmul %3, %5, %cst_7 {dimension_numbers = #tpu.dot_dimension_numbers<[1], [0], [0], [1], [0, 0, 1, 1], [], []>} : vector<256x128xbf16>, vector<128x128xbf16>, vector<256x128xf32> -> vector<256x128xf32>
    %7 = arith.addf %0, %6 : vector<256x128xf32>
    %c0_8 = arith.constant 0 : index
    %c0_9 = arith.constant 0 : index
    %c1 = arith.constant 1 : index
    %c0_10 = arith.constant 0 : index
    %8 = vector.load %arg1[%c0_8, %c0_9, %c1, %c0_10] : memref<1x18x18x128xbf16, #tpu.memory_space<vmem>>, vector<1x16x16x128xbf16>
    %9 = vector.shape_cast %8 : vector<1x16x16x128xbf16> to vector<16x16x128xbf16>
    %10 = vector.shape_cast %9 : vector<16x16x128xbf16> to vector<256x128xbf16>
    %c0_11 = arith.constant 0 : index
    %c1_12 = arith.constant 1 : index
    %c0_13 = arith.constant 0 : index
    %c0_14 = arith.constant 0 : index
    %11 = vector.load %arg3[%c0_11, %c1_12, %c0_13, %c0_14] : memref<3x3x128x128xbf16, #tpu.memory_space<vmem>>, vector<1x1x128x128xbf16>
    %12 = vector.shape_cast %11 : vector<1x1x128x128xbf16> to vector<128x128xbf16>
    %cst_15 = arith.constant dense<0.000000e+00> : vector<256x128xf32>
    %13 = tpu.matmul %10, %12, %cst_15 {dimension_numbers = #tpu.dot_dimension_numbers<[1], [0], [0], [1], [0, 0, 1, 1], [], []>} : vector<256x128xbf16>, vector<128x128xbf16>, vector<256x128xf32> -> vector<256x128xf32>
    %14 = arith.addf %7, %13 : vector<256x128xf32>
    %c0_16 = arith.constant 0 : index
    %c0_17 = arith.constant 0 : index
    %c2 = arith.constant 2 : index
    %c0_18 = arith.constant 0 : index
    %15 = vector.load %arg1[%c0_16, %c0_17, %c2, %c0_18] : memref<1x18x18x128xbf16, #tpu.memory_space<vmem>>, vector<1x16x16x128xbf16>
    %16 = vector.shape_cast %15 : vector<1x16x16x128xbf16> to vector<16x16x128xbf16>
    %17 = vector.shape_cast %16 : vector<16x16x128xbf16> to vector<256x128xbf16>
    %c0_19 = arith.constant 0 : index
    %c2_20 = arith.constant 2 : index
    %c0_21 = arith.constant 0 : index
    %c0_22 = arith.constant 0 : index
    %18 = vector.load %arg3[%c0_19, %c2_20, %c0_21, %c0_22] : memref<3x3x128x128xbf16, #tpu.memory_space<vmem>>, vector<1x1x128x128xbf16>
    %19 = vector.shape_cast %18 : vector<1x1x128x128xbf16> to vector<128x128xbf16>
    %cst_23 = arith.constant dense<0.000000e+00> : vector<256x128xf32>
    %20 = tpu.matmul %17, %19, %cst_23 {dimension_numbers = #tpu.dot_dimension_numbers<[1], [0], [0], [1], [0, 0, 1, 1], [], []>} : vector<256x128xbf16>, vector<128x128xbf16>, vector<256x128xf32> -> vector<256x128xf32>
    %21 = arith.addf %14, %20 : vector<256x128xf32>
    %c0_24 = arith.constant 0 : index
    %c1_25 = arith.constant 1 : index
    %c0_26 = arith.constant 0 : index
    %c0_27 = arith.constant 0 : index
    %22 = vector.load %arg1[%c0_24, %c1_25, %c0_26, %c0_27] : memref<1x18x18x128xbf16, #tpu.memory_space<vmem>>, vector<1x16x16x128xbf16>
    %23 = vector.shape_cast %22 : vector<1x16x16x128xbf16> to vector<16x16x128xbf16>
    %24 = vector.shape_cast %23 : vector<16x16x128xbf16> to vector<256x128xbf16>
    %c1_28 = arith.constant 1 : index
    %c0_29 = arith.constant 0 : index
    %c0_30 = arith.constant 0 : index
    %c0_31 = arith.constant 0 : index
    %25 = vector.load %arg3[%c1_28, %c0_29, %c0_30, %c0_31] : memref<3x3x128x128xbf16, #tpu.memory_space<vmem>>, vector<1x1x128x128xbf16>
    %26 = vector.shape_cast %25 : vector<1x1x128x128xbf16> to vector<128x128xbf16>
    %cst_32 = arith.constant dense<0.000000e+00> : vector<256x128xf32>
    %27 = tpu.matmul %24, %26, %cst_32 {dimension_numbers = #tpu.dot_dimension_numbers<[1], [0], [0], [1], [0, 0, 1, 1], [], []>} : vector<256x128xbf16>, vector<128x128xbf16>, vector<256x128xf32> -> vector<256x128xf32>
    %28 = arith.addf %21, %27 : vector<256x128xf32>
    %c0_33 = arith.constant 0 : index
    %c1_34 = arith.constant 1 : index
    %c1_35 = arith.constant 1 : index
    %c0_36 = arith.constant 0 : index
    %29 = vector.load %arg1[%c0_33, %c1_34, %c1_35, %c0_36] : memref<1x18x18x128xbf16, #tpu.memory_space<vmem>>, vector<1x16x16x128xbf16>
    %30 = vector.shape_cast %29 : vector<1x16x16x128xbf16> to vector<16x16x128xbf16>
    %31 = vector.shape_cast %30 : vector<16x16x128xbf16> to vector<256x128xbf16>
    %c1_37 = arith.constant 1 : index
    %c1_38 = arith.constant 1 : index
    %c0_39 = arith.constant 0 : index
    %c0_40 = arith.constant 0 : index
    %32 = vector.load %arg3[%c1_37, %c1_38, %c0_39, %c0_40] : memref<3x3x128x128xbf16, #tpu.memory_space<vmem>>, vector<1x1x128x128xbf16>
    %33 = vector.shape_cast %32 : vector<1x1x128x128xbf16> to vector<128x128xbf16>
    %cst_41 = arith.constant dense<0.000000e+00> : vector<256x128xf32>
    %34 = tpu.matmul %31, %33, %cst_41 {dimension_numbers = #tpu.dot_dimension_numbers<[1], [0], [0], [1], [0, 0, 1, 1], [], []>} : vector<256x128xbf16>, vector<128x128xbf16>, vector<256x128xf32> -> vector<256x128xf32>
    %35 = arith.addf %28, %34 : vector<256x128xf32>
    %c0_42 = arith.constant 0 : index
    %c1_43 = arith.constant 1 : index
    %c2_44 = arith.constant 2 : index
    %c0_45 = arith.constant 0 : index
    %36 = vector.load %arg1[%c0_42, %c1_43, %c2_44, %c0_45] : memref<1x18x18x128xbf16, #tpu.memory_space<vmem>>, vector<1x16x16x128xbf16>
    %37 = vector.shape_cast %36 : vector<1x16x16x128xbf16> to vector<16x16x128xbf16>
    %38 = vector.shape_cast %37 : vector<16x16x128xbf16> to vector<256x128xbf16>
    %c1_46 = arith.constant 1 : index
    %c2_47 = arith.constant 2 : index
    %c0_48 = arith.constant 0 : index
    %c0_49 = arith.constant 0 : index
    %39 = vector.load %arg3[%c1_46, %c2_47, %c0_48, %c0_49] : memref<3x3x128x128xbf16, #tpu.memory_space<vmem>>, vector<1x1x128x128xbf16>
    %40 = vector.shape_cast %39 : vector<1x1x128x128xbf16> to vector<128x128xbf16>
    %cst_50 = arith.constant dense<0.000000e+00> : vector<256x128xf32>
    %41 = tpu.matmul %38, %40, %cst_50 {dimension_numbers = #tpu.dot_dimension_numbers<[1], [0], [0], [1], [0, 0, 1, 1], [], []>} : vector<256x128xbf16>, vector<128x128xbf16>, vector<256x128xf32> -> vector<256x128xf32>
    %42 = arith.addf %35, %41 : vector<256x128xf32>
    %c0_51 = arith.constant 0 : index
    %c2_52 = arith.constant 2 : index
    %c0_53 = arith.constant 0 : index
    %c0_54 = arith.constant 0 : index
    %43 = vector.load %arg1[%c0_51, %c2_52, %c0_53, %c0_54] : memref<1x18x18x128xbf16, #tpu.memory_space<vmem>>, vector<1x16x16x128xbf16>
    %44 = vector.shape_cast %43 : vector<1x16x16x128xbf16> to vector<16x16x128xbf16>
    %45 = vector.shape_cast %44 : vector<16x16x128xbf16> to vector<256x128xbf16>
    %c2_55 = arith.constant 2 : index
    %c0_56 = arith.constant 0 : index
    %c0_57 = arith.constant 0 : index
    %c0_58 = arith.constant 0 : index
    %46 = vector.load %arg3[%c2_55, %c0_56, %c0_57, %c0_58] : memref<3x3x128x128xbf16, #tpu.memory_space<vmem>>, vector<1x1x128x128xbf16>
    %47 = vector.shape_cast %46 : vector<1x1x128x128xbf16> to vector<128x128xbf16>
    %cst_59 = arith.constant dense<0.000000e+00> : vector<256x128xf32>
    %48 = tpu.matmul %45, %47, %cst_59 {dimension_numbers = #tpu.dot_dimension_numbers<[1], [0], [0], [1], [0, 0, 1, 1], [], []>} : vector<256x128xbf16>, vector<128x128xbf16>, vector<256x128xf32> -> vector<256x128xf32>
    %49 = arith.addf %42, %48 : vector<256x128xf32>
    %c0_60 = arith.constant 0 : index
    %c2_61 = arith.constant 2 : index
    %c1_62 = arith.constant 1 : index
    %c0_63 = arith.constant 0 : index
    %50 = vector.load %arg1[%c0_60, %c2_61, %c1_62, %c0_63] : memref<1x18x18x128xbf16, #tpu.memory_space<vmem>>, vector<1x16x16x128xbf16>
    %51 = vector.shape_cast %50 : vector<1x16x16x128xbf16> to vector<16x16x128xbf16>
    %52 = vector.shape_cast %51 : vector<16x16x128xbf16> to vector<256x128xbf16>
    %c2_64 = arith.constant 2 : index
    %c1_65 = arith.constant 1 : index
    %c0_66 = arith.constant 0 : index
    %c0_67 = arith.constant 0 : index
    %53 = vector.load %arg3[%c2_64, %c1_65, %c0_66, %c0_67] : memref<3x3x128x128xbf16, #tpu.memory_space<vmem>>, vector<1x1x128x128xbf16>
    %54 = vector.shape_cast %53 : vector<1x1x128x128xbf16> to vector<128x128xbf16>
    %cst_68 = arith.constant dense<0.000000e+00> : vector<256x128xf32>
    %55 = tpu.matmul %52, %54, %cst_68 {dimension_numbers = #tpu.dot_dimension_numbers<[1], [0], [0], [1], [0, 0, 1, 1], [], []>} : vector<256x128xbf16>, vector<128x128xbf16>, vector<256x128xf32> -> vector<256x128xf32>
    %56 = arith.addf %49, %55 : vector<256x128xf32>
    %c0_69 = arith.constant 0 : index
    %c2_70 = arith.constant 2 : index
    %c2_71 = arith.constant 2 : index
    %c0_72 = arith.constant 0 : index
    %57 = vector.load %arg1[%c0_69, %c2_70, %c2_71, %c0_72] : memref<1x18x18x128xbf16, #tpu.memory_space<vmem>>, vector<1x16x16x128xbf16>
    %58 = vector.shape_cast %57 : vector<1x16x16x128xbf16> to vector<16x16x128xbf16>
    %59 = vector.shape_cast %58 : vector<16x16x128xbf16> to vector<256x128xbf16>
    %c2_73 = arith.constant 2 : index
    %c2_74 = arith.constant 2 : index
    %c0_75 = arith.constant 0 : index
    %c0_76 = arith.constant 0 : index
    %60 = vector.load %arg3[%c2_73, %c2_74, %c0_75, %c0_76] : memref<3x3x128x128xbf16, #tpu.memory_space<vmem>>, vector<1x1x128x128xbf16>
    %61 = vector.shape_cast %60 : vector<1x1x128x128xbf16> to vector<128x128xbf16>
    %cst_77 = arith.constant dense<0.000000e+00> : vector<256x128xf32>
    %62 = tpu.matmul %59, %61, %cst_77 {dimension_numbers = #tpu.dot_dimension_numbers<[1], [0], [0], [1], [0, 0, 1, 1], [], []>} : vector<256x128xbf16>, vector<128x128xbf16>, vector<256x128xf32> -> vector<256x128xf32>
    %63 = arith.addf %56, %62 : vector<256x128xf32>
    %c0_78 = arith.constant 0 : index
    %c0_79 = arith.constant 0 : index
    %c0_80 = arith.constant 0 : index
    %c0_81 = arith.constant 0 : index
    %64 = vector.load %arg2[%c0_78, %c0_79, %c0_80, %c0_81] : memref<1x18x18x128xbf16, #tpu.memory_space<vmem>>, vector<1x16x16x128xbf16>
    %65 = vector.shape_cast %64 : vector<1x16x16x128xbf16> to vector<16x16x128xbf16>
    %66 = vector.shape_cast %65 : vector<16x16x128xbf16> to vector<256x128xbf16>
    %c0_82 = arith.constant 0 : index
    %c0_83 = arith.constant 0 : index
    %c0_84 = arith.constant 0 : index
    %c0_85 = arith.constant 0 : index
    %67 = vector.load %arg4[%c0_82, %c0_83, %c0_84, %c0_85] : memref<3x3x128x128xbf16, #tpu.memory_space<vmem>>, vector<1x1x128x128xbf16>
    %68 = vector.shape_cast %67 : vector<1x1x128x128xbf16> to vector<128x128xbf16>
    %cst_86 = arith.constant dense<0.000000e+00> : vector<256x128xf32>
    %69 = tpu.matmul %66, %68, %cst_86 {dimension_numbers = #tpu.dot_dimension_numbers<[1], [0], [0], [1], [0, 0, 1, 1], [], []>} : vector<256x128xbf16>, vector<128x128xbf16>, vector<256x128xf32> -> vector<256x128xf32>
    %70 = arith.addf %63, %69 : vector<256x128xf32>
    %c0_87 = arith.constant 0 : index
    %c0_88 = arith.constant 0 : index
    %c1_89 = arith.constant 1 : index
    %c0_90 = arith.constant 0 : index
    %71 = vector.load %arg2[%c0_87, %c0_88, %c1_89, %c0_90] : memref<1x18x18x128xbf16, #tpu.memory_space<vmem>>, vector<1x16x16x128xbf16>
    %72 = vector.shape_cast %71 : vector<1x16x16x128xbf16> to vector<16x16x128xbf16>
    %73 = vector.shape_cast %72 : vector<16x16x128xbf16> to vector<256x128xbf16>
    %c0_91 = arith.constant 0 : index
    %c1_92 = arith.constant 1 : index
    %c0_93 = arith.constant 0 : index
    %c0_94 = arith.constant 0 : index
    %74 = vector.load %arg4[%c0_91, %c1_92, %c0_93, %c0_94] : memref<3x3x128x128xbf16, #tpu.memory_space<vmem>>, vector<1x1x128x128xbf16>
    %75 = vector.shape_cast %74 : vector<1x1x128x128xbf16> to vector<128x128xbf16>
    %cst_95 = arith.constant dense<0.000000e+00> : vector<256x128xf32>
    %76 = tpu.matmul %73, %75, %cst_95 {dimension_numbers = #tpu.dot_dimension_numbers<[1], [0], [0], [1], [0, 0, 1, 1], [], []>} : vector<256x128xbf16>, vector<128x128xbf16>, vector<256x128xf32> -> vector<256x128xf32>
    %77 = arith.addf %70, %76 : vector<256x128xf32>
    %c0_96 = arith.constant 0 : index
    %c0_97 = arith.constant 0 : index
    %c2_98 = arith.constant 2 : index
    %c0_99 = arith.constant 0 : index
    %78 = vector.load %arg2[%c0_96, %c0_97, %c2_98, %c0_99] : memref<1x18x18x128xbf16, #tpu.memory_space<vmem>>, vector<1x16x16x128xbf16>
    %79 = vector.shape_cast %78 : vector<1x16x16x128xbf16> to vector<16x16x128xbf16>
    %80 = vector.shape_cast %79 : vector<16x16x128xbf16> to vector<256x128xbf16>
    %c0_100 = arith.constant 0 : index
    %c2_101 = arith.constant 2 : index
    %c0_102 = arith.constant 0 : index
    %c0_103 = arith.constant 0 : index
    %81 = vector.load %arg4[%c0_100, %c2_101, %c0_102, %c0_103] : memref<3x3x128x128xbf16, #tpu.memory_space<vmem>>, vector<1x1x128x128xbf16>
    %82 = vector.shape_cast %81 : vector<1x1x128x128xbf16> to vector<128x128xbf16>
    %cst_104 = arith.constant dense<0.000000e+00> : vector<256x128xf32>
    %83 = tpu.matmul %80, %82, %cst_104 {dimension_numbers = #tpu.dot_dimension_numbers<[1], [0], [0], [1], [0, 0, 1, 1], [], []>} : vector<256x128xbf16>, vector<128x128xbf16>, vector<256x128xf32> -> vector<256x128xf32>
    %84 = arith.addf %77, %83 : vector<256x128xf32>
    %c0_105 = arith.constant 0 : index
    %c1_106 = arith.constant 1 : index
    %c0_107 = arith.constant 0 : index
    %c0_108 = arith.constant 0 : index
    %85 = vector.load %arg2[%c0_105, %c1_106, %c0_107, %c0_108] : memref<1x18x18x128xbf16, #tpu.memory_space<vmem>>, vector<1x16x16x128xbf16>
    %86 = vector.shape_cast %85 : vector<1x16x16x128xbf16> to vector<16x16x128xbf16>
    %87 = vector.shape_cast %86 : vector<16x16x128xbf16> to vector<256x128xbf16>
    %c1_109 = arith.constant 1 : index
    %c0_110 = arith.constant 0 : index
    %c0_111 = arith.constant 0 : index
    %c0_112 = arith.constant 0 : index
    %88 = vector.load %arg4[%c1_109, %c0_110, %c0_111, %c0_112] : memref<3x3x128x128xbf16, #tpu.memory_space<vmem>>, vector<1x1x128x128xbf16>
    %89 = vector.shape_cast %88 : vector<1x1x128x128xbf16> to vector<128x128xbf16>
    %cst_113 = arith.constant dense<0.000000e+00> : vector<256x128xf32>
    %90 = tpu.matmul %87, %89, %cst_113 {dimension_numbers = #tpu.dot_dimension_numbers<[1], [0], [0], [1], [0, 0, 1, 1], [], []>} : vector<256x128xbf16>, vector<128x128xbf16>, vector<256x128xf32> -> vector<256x128xf32>
    %91 = arith.addf %84, %90 : vector<256x128xf32>
    %c0_114 = arith.constant 0 : index
    %c1_115 = arith.constant 1 : index
    %c1_116 = arith.constant 1 : index
    %c0_117 = arith.constant 0 : index
    %92 = vector.load %arg2[%c0_114, %c1_115, %c1_116, %c0_117] : memref<1x18x18x128xbf16, #tpu.memory_space<vmem>>, vector<1x16x16x128xbf16>
    %93 = vector.shape_cast %92 : vector<1x16x16x128xbf16> to vector<16x16x128xbf16>
    %94 = vector.shape_cast %93 : vector<16x16x128xbf16> to vector<256x128xbf16>
    %c1_118 = arith.constant 1 : index
    %c1_119 = arith.constant 1 : index
    %c0_120 = arith.constant 0 : index
    %c0_121 = arith.constant 0 : index
    %95 = vector.load %arg4[%c1_118, %c1_119, %c0_120, %c0_121] : memref<3x3x128x128xbf16, #tpu.memory_space<vmem>>, vector<1x1x128x128xbf16>
    %96 = vector.shape_cast %95 : vector<1x1x128x128xbf16> to vector<128x128xbf16>
    %cst_122 = arith.constant dense<0.000000e+00> : vector<256x128xf32>
    %97 = tpu.matmul %94, %96, %cst_122 {dimension_numbers = #tpu.dot_dimension_numbers<[1], [0], [0], [1], [0, 0, 1, 1], [], []>} : vector<256x128xbf16>, vector<128x128xbf16>, vector<256x128xf32> -> vector<256x128xf32>
    %98 = arith.addf %91, %97 : vector<256x128xf32>
    %c0_123 = arith.constant 0 : index
    %c1_124 = arith.constant 1 : index
    %c2_125 = arith.constant 2 : index
    %c0_126 = arith.constant 0 : index
    %99 = vector.load %arg2[%c0_123, %c1_124, %c2_125, %c0_126] : memref<1x18x18x128xbf16, #tpu.memory_space<vmem>>, vector<1x16x16x128xbf16>
    %100 = vector.shape_cast %99 : vector<1x16x16x128xbf16> to vector<16x16x128xbf16>
    %101 = vector.shape_cast %100 : vector<16x16x128xbf16> to vector<256x128xbf16>
    %c1_127 = arith.constant 1 : index
    %c2_128 = arith.constant 2 : index
    %c0_129 = arith.constant 0 : index
    %c0_130 = arith.constant 0 : index
    %102 = vector.load %arg4[%c1_127, %c2_128, %c0_129, %c0_130] : memref<3x3x128x128xbf16, #tpu.memory_space<vmem>>, vector<1x1x128x128xbf16>
    %103 = vector.shape_cast %102 : vector<1x1x128x128xbf16> to vector<128x128xbf16>
    %cst_131 = arith.constant dense<0.000000e+00> : vector<256x128xf32>
    %104 = tpu.matmul %101, %103, %cst_131 {dimension_numbers = #tpu.dot_dimension_numbers<[1], [0], [0], [1], [0, 0, 1, 1], [], []>} : vector<256x128xbf16>, vector<128x128xbf16>, vector<256x128xf32> -> vector<256x128xf32>
    %105 = arith.addf %98, %104 : vector<256x128xf32>
    %c0_132 = arith.constant 0 : index
    %c2_133 = arith.constant 2 : index
    %c0_134 = arith.constant 0 : index
    %c0_135 = arith.constant 0 : index
    %106 = vector.load %arg2[%c0_132, %c2_133, %c0_134, %c0_135] : memref<1x18x18x128xbf16, #tpu.memory_space<vmem>>, vector<1x16x16x128xbf16>
    %107 = vector.shape_cast %106 : vector<1x16x16x128xbf16> to vector<16x16x128xbf16>
    %108 = vector.shape_cast %107 : vector<16x16x128xbf16> to vector<256x128xbf16>
    %c2_136 = arith.constant 2 : index
    %c0_137 = arith.constant 0 : index
    %c0_138 = arith.constant 0 : index
    %c0_139 = arith.constant 0 : index
    %109 = vector.load %arg4[%c2_136, %c0_137, %c0_138, %c0_139] : memref<3x3x128x128xbf16, #tpu.memory_space<vmem>>, vector<1x1x128x128xbf16>
    %110 = vector.shape_cast %109 : vector<1x1x128x128xbf16> to vector<128x128xbf16>
    %cst_140 = arith.constant dense<0.000000e+00> : vector<256x128xf32>
    %111 = tpu.matmul %108, %110, %cst_140 {dimension_numbers = #tpu.dot_dimension_numbers<[1], [0], [0], [1], [0, 0, 1, 1], [], []>} : vector<256x128xbf16>, vector<128x128xbf16>, vector<256x128xf32> -> vector<256x128xf32>
    %112 = arith.addf %105, %111 : vector<256x128xf32>
    %c0_141 = arith.constant 0 : index
    %c2_142 = arith.constant 2 : index
    %c1_143 = arith.constant 1 : index
    %c0_144 = arith.constant 0 : index
    %113 = vector.load %arg2[%c0_141, %c2_142, %c1_143, %c0_144] : memref<1x18x18x128xbf16, #tpu.memory_space<vmem>>, vector<1x16x16x128xbf16>
    %114 = vector.shape_cast %113 : vector<1x16x16x128xbf16> to vector<16x16x128xbf16>
    %115 = vector.shape_cast %114 : vector<16x16x128xbf16> to vector<256x128xbf16>
    %c2_145 = arith.constant 2 : index
    %c1_146 = arith.constant 1 : index
    %c0_147 = arith.constant 0 : index
    %c0_148 = arith.constant 0 : index
    %116 = vector.load %arg4[%c2_145, %c1_146, %c0_147, %c0_148] : memref<3x3x128x128xbf16, #tpu.memory_space<vmem>>, vector<1x1x128x128xbf16>
    %117 = vector.shape_cast %116 : vector<1x1x128x128xbf16> to vector<128x128xbf16>
    %cst_149 = arith.constant dense<0.000000e+00> : vector<256x128xf32>
    %118 = tpu.matmul %115, %117, %cst_149 {dimension_numbers = #tpu.dot_dimension_numbers<[1], [0], [0], [1], [0, 0, 1, 1], [], []>} : vector<256x128xbf16>, vector<128x128xbf16>, vector<256x128xf32> -> vector<256x128xf32>
    %119 = arith.addf %112, %118 : vector<256x128xf32>
    %c0_150 = arith.constant 0 : index
    %c2_151 = arith.constant 2 : index
    %c2_152 = arith.constant 2 : index
    %c0_153 = arith.constant 0 : index
    %120 = vector.load %arg2[%c0_150, %c2_151, %c2_152, %c0_153] : memref<1x18x18x128xbf16, #tpu.memory_space<vmem>>, vector<1x16x16x128xbf16>
    %121 = vector.shape_cast %120 : vector<1x16x16x128xbf16> to vector<16x16x128xbf16>
    %122 = vector.shape_cast %121 : vector<16x16x128xbf16> to vector<256x128xbf16>
    %c2_154 = arith.constant 2 : index
    %c2_155 = arith.constant 2 : index
    %c0_156 = arith.constant 0 : index
    %c0_157 = arith.constant 0 : index
    %123 = vector.load %arg4[%c2_154, %c2_155, %c0_156, %c0_157] : memref<3x3x128x128xbf16, #tpu.memory_space<vmem>>, vector<1x1x128x128xbf16>
    %124 = vector.shape_cast %123 : vector<1x1x128x128xbf16> to vector<128x128xbf16>
    %cst_158 = arith.constant dense<0.000000e+00> : vector<256x128xf32>
    %125 = tpu.matmul %122, %124, %cst_158 {dimension_numbers = #tpu.dot_dimension_numbers<[1], [0], [0], [1], [0, 0, 1, 1], [], []>} : vector<256x128xbf16>, vector<128x128xbf16>, vector<256x128xf32> -> vector<256x128xf32>
    %126 = arith.addf %119, %125 : vector<256x128xf32>
    %c0_159 = arith.constant 0 : index
    %c0_160 = arith.constant 0 : index
    %127 = vector.load %arg5[%c0_159, %c0_160] : memref<1x128xf32, #tpu.memory_space<vmem>>, vector<1x128xf32>
    %128 = vector.broadcast %127 : vector<1x128xf32> to vector<256x128xf32>
    %129 = arith.addf %126, %128 : vector<256x128xf32>
    %cst_161 = arith.constant 0.000000e+00 : f32
    %130 = vector.broadcast %cst_161 : f32 to vector<256x128xf32>
    %131 = arith.maximumf %129, %130 : vector<256x128xf32>
    %132 = vector.shape_cast %131 : vector<256x128xf32> to vector<16x16x128xf32>
    %133 = arith.truncf %132 : vector<16x16x128xf32> to vector<16x16x128xbf16>
    %c0_162 = arith.constant 0 : index
    %c0_163 = arith.constant 0 : index
    %c0_164 = arith.constant 0 : index
    %c0_165 = arith.constant 0 : index
    %134 = vector.load %arg6[%c0_162, %c0_163, %c0_164, %c0_165] : memref<1x16x16x128xbf16, #tpu.memory_space<vmem>>, vector<1x16x16x128xbf16>
    %135 = vector.shape_cast %134 : vector<1x16x16x128xbf16> to vector<16x16x128xbf16>
    %136 = vector.shape_cast %133 : vector<16x16x128xbf16> to vector<1x16x16x128xbf16>
    tpu.vector_store %arg6[%c0_162, %c0_163, %c0_164, %c0_165], %136 {strides = array<i32>} : memref<1x16x16x128xbf16, #tpu.memory_space<vmem>>, vector<1x16x16x128xbf16>,
    return
  }
  func.func @transform_0(%arg0: i32) -> (i32, i32, i32, i32) {
    %c0_i32 = arith.constant 0 : i32
    %c0_i32_0 = arith.constant 0 : i32
    %c0_i32_1 = arith.constant 0 : i32
    %c0_i32_2 = arith.constant 0 : i32
    return %arg0, %c0_i32, %c0_i32_0, %c0_i32_1 : i32, i32, i32, i32
  }
  func.func @transform_1(%arg0: i32) -> (i32, i32, i32, i32) {
    %c0_i32 = arith.constant 0 : i32
    %c0_i32_0 = arith.constant 0 : i32
    %c0_i32_1 = arith.constant 0 : i32
    %c0_i32_2 = arith.constant 0 : i32
    return %arg0, %c0_i32, %c0_i32_0, %c0_i32_1 : i32, i32, i32, i32
  }
  func.func @transform_2(%arg0: i32) -> (i32, i32, i32, i32) {
    %c0_i32 = arith.constant 0 : i32
    %c0_i32_0 = arith.constant 0 : i32
    %c0_i32_1 = arith.constant 0 : i32
    %c0_i32_2 = arith.constant 0 : i32
    %c0_i32_3 = arith.constant 0 : i32
    return %c0_i32, %c0_i32_0, %c0_i32_1, %c0_i32_2 : i32, i32, i32, i32
  }
  func.func @transform_3(%arg0: i32) -> (i32, i32, i32, i32) {
    %c0_i32 = arith.constant 0 : i32
    %c0_i32_0 = arith.constant 0 : i32
    %c0_i32_1 = arith.constant 0 : i32
    %c0_i32_2 = arith.constant 0 : i32
    %c0_i32_3 = arith.constant 0 : i32
    return %c0_i32, %c0_i32_0, %c0_i32_1, %c0_i32_2 : i32, i32, i32, i32
  }
  func.func @transform_4(%arg0: i32) -> (i32, i32) {
    %c0_i32 = arith.constant 0 : i32
    %c0_i32_0 = arith.constant 0 : i32
    %c0_i32_1 = arith.constant 0 : i32
    return %c0_i32, %c0_i32_0 : i32, i32
  }
  func.func @transform_5(%arg0: i32) -> (i32, i32, i32, i32) {
    %c0_i32 = arith.constant 0 : i32
    %c0_i32_0 = arith.constant 0 : i32
    %c0_i32_1 = arith.constant 0 : i32
    %c0_i32_2 = arith.constant 0 : i32
    return %arg0, %c0_i32, %c0_i32_0, %c0_i32_1 : i32, i32, i32, i32
  }
}

module attributes {stable_mosaic.version = 11 : i64} {
  func.func @kernel(%arg0: i32, %arg1: memref<1x18x18x128xbf16, #tpu.memory_space<vmem>>, %arg2: memref<3x3x128x128xbf16, #tpu.memory_space<vmem>>, %arg3: memref<1x128xf32, #tpu.memory_space<vmem>>, %arg4: memref<1x16x16x128xf32, #tpu.memory_space<vmem>>) attributes {dimension_semantics = [#tpu.dimension_semantics<parallel>], iteration_bounds = array<i64: 2>, scalar_prefetch = 0 : i64, scratch_operands = 0 : i64, tpu.core_type = #tpu.core_type<tc>, window_params = [{transform_indices = @transform_0, window_bounds = array<i64: 1, 18, 18, 128>}, {pipeline_mode = #tpu.pipeline_mode<synchronous>, transform_indices = @transform_1, window_bounds = array<i64: 3, 3, 128, 128>}, {pipeline_mode = #tpu.pipeline_mode<synchronous>, transform_indices = @transform_2, window_bounds = array<i64: 1, 128>}, {transform_indices = @transform_3, window_bounds = array<i64: 1, 16, 16, 128>}]} {
    %cst = arith.constant 0.000000e+00 : f32
    %0 = vector.broadcast %cst : f32 to vector<256x128xf32>
    %c0 = arith.constant 0 : index
    %c0_0 = arith.constant 0 : index
    %c0_1 = arith.constant 0 : index
    %c0_2 = arith.constant 0 : index
    %1 = vector.load %arg1[%c0, %c0_0, %c0_1, %c0_2] : memref<1x18x18x128xbf16, #tpu.memory_space<vmem>>, vector<1x16x16x128xbf16>
    %2 = vector.shape_cast %1 : vector<1x16x16x128xbf16> to vector<16x16x128xbf16>
    %3 = vector.shape_cast %2 : vector<16x16x128xbf16> to vector<256x128xbf16>
    %c0_3 = arith.constant 0 : index
    %c0_4 = arith.constant 0 : index
    %c0_5 = arith.constant 0 : index
    %c0_6 = arith.constant 0 : index
    %4 = vector.load %arg2[%c0_3, %c0_4, %c0_5, %c0_6] : memref<3x3x128x128xbf16, #tpu.memory_space<vmem>>, vector<1x1x128x128xbf16>
    %5 = vector.shape_cast %4 : vector<1x1x128x128xbf16> to vector<128x128xbf16>
    %cst_7 = arith.constant dense<0.000000e+00> : vector<256x128xf32>
    %6 = tpu.matmul %3, %5, %cst_7 {dimension_numbers = #tpu.dot_dimension_numbers<[1], [0], [0], [1], [0, 0, 1, 1], [], []>} : vector<256x128xbf16>, vector<128x128xbf16>, vector<256x128xf32> -> vector<256x128xf32>
    %7 = arith.addf %0, %6 : vector<256x128xf32>
    %c0_8 = arith.constant 0 : index
    %c0_9 = arith.constant 0 : index
    %c1 = arith.constant 1 : index
    %c0_10 = arith.constant 0 : index
    %8 = vector.load %arg1[%c0_8, %c0_9, %c1, %c0_10] : memref<1x18x18x128xbf16, #tpu.memory_space<vmem>>, vector<1x16x16x128xbf16>
    %9 = vector.shape_cast %8 : vector<1x16x16x128xbf16> to vector<16x16x128xbf16>
    %10 = vector.shape_cast %9 : vector<16x16x128xbf16> to vector<256x128xbf16>
    %c0_11 = arith.constant 0 : index
    %c1_12 = arith.constant 1 : index
    %c0_13 = arith.constant 0 : index
    %c0_14 = arith.constant 0 : index
    %11 = vector.load %arg2[%c0_11, %c1_12, %c0_13, %c0_14] : memref<3x3x128x128xbf16, #tpu.memory_space<vmem>>, vector<1x1x128x128xbf16>
    %12 = vector.shape_cast %11 : vector<1x1x128x128xbf16> to vector<128x128xbf16>
    %cst_15 = arith.constant dense<0.000000e+00> : vector<256x128xf32>
    %13 = tpu.matmul %10, %12, %cst_15 {dimension_numbers = #tpu.dot_dimension_numbers<[1], [0], [0], [1], [0, 0, 1, 1], [], []>} : vector<256x128xbf16>, vector<128x128xbf16>, vector<256x128xf32> -> vector<256x128xf32>
    %14 = arith.addf %7, %13 : vector<256x128xf32>
    %c0_16 = arith.constant 0 : index
    %c0_17 = arith.constant 0 : index
    %c2 = arith.constant 2 : index
    %c0_18 = arith.constant 0 : index
    %15 = vector.load %arg1[%c0_16, %c0_17, %c2, %c0_18] : memref<1x18x18x128xbf16, #tpu.memory_space<vmem>>, vector<1x16x16x128xbf16>
    %16 = vector.shape_cast %15 : vector<1x16x16x128xbf16> to vector<16x16x128xbf16>
    %17 = vector.shape_cast %16 : vector<16x16x128xbf16> to vector<256x128xbf16>
    %c0_19 = arith.constant 0 : index
    %c2_20 = arith.constant 2 : index
    %c0_21 = arith.constant 0 : index
    %c0_22 = arith.constant 0 : index
    %18 = vector.load %arg2[%c0_19, %c2_20, %c0_21, %c0_22] : memref<3x3x128x128xbf16, #tpu.memory_space<vmem>>, vector<1x1x128x128xbf16>
    %19 = vector.shape_cast %18 : vector<1x1x128x128xbf16> to vector<128x128xbf16>
    %cst_23 = arith.constant dense<0.000000e+00> : vector<256x128xf32>
    %20 = tpu.matmul %17, %19, %cst_23 {dimension_numbers = #tpu.dot_dimension_numbers<[1], [0], [0], [1], [0, 0, 1, 1], [], []>} : vector<256x128xbf16>, vector<128x128xbf16>, vector<256x128xf32> -> vector<256x128xf32>
    %21 = arith.addf %14, %20 : vector<256x128xf32>
    %c0_24 = arith.constant 0 : index
    %c1_25 = arith.constant 1 : index
    %c0_26 = arith.constant 0 : index
    %c0_27 = arith.constant 0 : index
    %22 = vector.load %arg1[%c0_24, %c1_25, %c0_26, %c0_27] : memref<1x18x18x128xbf16, #tpu.memory_space<vmem>>, vector<1x16x16x128xbf16>
    %23 = vector.shape_cast %22 : vector<1x16x16x128xbf16> to vector<16x16x128xbf16>
    %24 = vector.shape_cast %23 : vector<16x16x128xbf16> to vector<256x128xbf16>
    %c1_28 = arith.constant 1 : index
    %c0_29 = arith.constant 0 : index
    %c0_30 = arith.constant 0 : index
    %c0_31 = arith.constant 0 : index
    %25 = vector.load %arg2[%c1_28, %c0_29, %c0_30, %c0_31] : memref<3x3x128x128xbf16, #tpu.memory_space<vmem>>, vector<1x1x128x128xbf16>
    %26 = vector.shape_cast %25 : vector<1x1x128x128xbf16> to vector<128x128xbf16>
    %cst_32 = arith.constant dense<0.000000e+00> : vector<256x128xf32>
    %27 = tpu.matmul %24, %26, %cst_32 {dimension_numbers = #tpu.dot_dimension_numbers<[1], [0], [0], [1], [0, 0, 1, 1], [], []>} : vector<256x128xbf16>, vector<128x128xbf16>, vector<256x128xf32> -> vector<256x128xf32>
    %28 = arith.addf %21, %27 : vector<256x128xf32>
    %c0_33 = arith.constant 0 : index
    %c1_34 = arith.constant 1 : index
    %c1_35 = arith.constant 1 : index
    %c0_36 = arith.constant 0 : index
    %29 = vector.load %arg1[%c0_33, %c1_34, %c1_35, %c0_36] : memref<1x18x18x128xbf16, #tpu.memory_space<vmem>>, vector<1x16x16x128xbf16>
    %30 = vector.shape_cast %29 : vector<1x16x16x128xbf16> to vector<16x16x128xbf16>
    %31 = vector.shape_cast %30 : vector<16x16x128xbf16> to vector<256x128xbf16>
    %c1_37 = arith.constant 1 : index
    %c1_38 = arith.constant 1 : index
    %c0_39 = arith.constant 0 : index
    %c0_40 = arith.constant 0 : index
    %32 = vector.load %arg2[%c1_37, %c1_38, %c0_39, %c0_40] : memref<3x3x128x128xbf16, #tpu.memory_space<vmem>>, vector<1x1x128x128xbf16>
    %33 = vector.shape_cast %32 : vector<1x1x128x128xbf16> to vector<128x128xbf16>
    %cst_41 = arith.constant dense<0.000000e+00> : vector<256x128xf32>
    %34 = tpu.matmul %31, %33, %cst_41 {dimension_numbers = #tpu.dot_dimension_numbers<[1], [0], [0], [1], [0, 0, 1, 1], [], []>} : vector<256x128xbf16>, vector<128x128xbf16>, vector<256x128xf32> -> vector<256x128xf32>
    %35 = arith.addf %28, %34 : vector<256x128xf32>
    %c0_42 = arith.constant 0 : index
    %c1_43 = arith.constant 1 : index
    %c2_44 = arith.constant 2 : index
    %c0_45 = arith.constant 0 : index
    %36 = vector.load %arg1[%c0_42, %c1_43, %c2_44, %c0_45] : memref<1x18x18x128xbf16, #tpu.memory_space<vmem>>, vector<1x16x16x128xbf16>
    %37 = vector.shape_cast %36 : vector<1x16x16x128xbf16> to vector<16x16x128xbf16>
    %38 = vector.shape_cast %37 : vector<16x16x128xbf16> to vector<256x128xbf16>
    %c1_46 = arith.constant 1 : index
    %c2_47 = arith.constant 2 : index
    %c0_48 = arith.constant 0 : index
    %c0_49 = arith.constant 0 : index
    %39 = vector.load %arg2[%c1_46, %c2_47, %c0_48, %c0_49] : memref<3x3x128x128xbf16, #tpu.memory_space<vmem>>, vector<1x1x128x128xbf16>
    %40 = vector.shape_cast %39 : vector<1x1x128x128xbf16> to vector<128x128xbf16>
    %cst_50 = arith.constant dense<0.000000e+00> : vector<256x128xf32>
    %41 = tpu.matmul %38, %40, %cst_50 {dimension_numbers = #tpu.dot_dimension_numbers<[1], [0], [0], [1], [0, 0, 1, 1], [], []>} : vector<256x128xbf16>, vector<128x128xbf16>, vector<256x128xf32> -> vector<256x128xf32>
    %42 = arith.addf %35, %41 : vector<256x128xf32>
    %c0_51 = arith.constant 0 : index
    %c2_52 = arith.constant 2 : index
    %c0_53 = arith.constant 0 : index
    %c0_54 = arith.constant 0 : index
    %43 = vector.load %arg1[%c0_51, %c2_52, %c0_53, %c0_54] : memref<1x18x18x128xbf16, #tpu.memory_space<vmem>>, vector<1x16x16x128xbf16>
    %44 = vector.shape_cast %43 : vector<1x16x16x128xbf16> to vector<16x16x128xbf16>
    %45 = vector.shape_cast %44 : vector<16x16x128xbf16> to vector<256x128xbf16>
    %c2_55 = arith.constant 2 : index
    %c0_56 = arith.constant 0 : index
    %c0_57 = arith.constant 0 : index
    %c0_58 = arith.constant 0 : index
    %46 = vector.load %arg2[%c2_55, %c0_56, %c0_57, %c0_58] : memref<3x3x128x128xbf16, #tpu.memory_space<vmem>>, vector<1x1x128x128xbf16>
    %47 = vector.shape_cast %46 : vector<1x1x128x128xbf16> to vector<128x128xbf16>
    %cst_59 = arith.constant dense<0.000000e+00> : vector<256x128xf32>
    %48 = tpu.matmul %45, %47, %cst_59 {dimension_numbers = #tpu.dot_dimension_numbers<[1], [0], [0], [1], [0, 0, 1, 1], [], []>} : vector<256x128xbf16>, vector<128x128xbf16>, vector<256x128xf32> -> vector<256x128xf32>
    %49 = arith.addf %42, %48 : vector<256x128xf32>
    %c0_60 = arith.constant 0 : index
    %c2_61 = arith.constant 2 : index
    %c1_62 = arith.constant 1 : index
    %c0_63 = arith.constant 0 : index
    %50 = vector.load %arg1[%c0_60, %c2_61, %c1_62, %c0_63] : memref<1x18x18x128xbf16, #tpu.memory_space<vmem>>, vector<1x16x16x128xbf16>
    %51 = vector.shape_cast %50 : vector<1x16x16x128xbf16> to vector<16x16x128xbf16>
    %52 = vector.shape_cast %51 : vector<16x16x128xbf16> to vector<256x128xbf16>
    %c2_64 = arith.constant 2 : index
    %c1_65 = arith.constant 1 : index
    %c0_66 = arith.constant 0 : index
    %c0_67 = arith.constant 0 : index
    %53 = vector.load %arg2[%c2_64, %c1_65, %c0_66, %c0_67] : memref<3x3x128x128xbf16, #tpu.memory_space<vmem>>, vector<1x1x128x128xbf16>
    %54 = vector.shape_cast %53 : vector<1x1x128x128xbf16> to vector<128x128xbf16>
    %cst_68 = arith.constant dense<0.000000e+00> : vector<256x128xf32>
    %55 = tpu.matmul %52, %54, %cst_68 {dimension_numbers = #tpu.dot_dimension_numbers<[1], [0], [0], [1], [0, 0, 1, 1], [], []>} : vector<256x128xbf16>, vector<128x128xbf16>, vector<256x128xf32> -> vector<256x128xf32>
    %56 = arith.addf %49, %55 : vector<256x128xf32>
    %c0_69 = arith.constant 0 : index
    %c2_70 = arith.constant 2 : index
    %c2_71 = arith.constant 2 : index
    %c0_72 = arith.constant 0 : index
    %57 = vector.load %arg1[%c0_69, %c2_70, %c2_71, %c0_72] : memref<1x18x18x128xbf16, #tpu.memory_space<vmem>>, vector<1x16x16x128xbf16>
    %58 = vector.shape_cast %57 : vector<1x16x16x128xbf16> to vector<16x16x128xbf16>
    %59 = vector.shape_cast %58 : vector<16x16x128xbf16> to vector<256x128xbf16>
    %c2_73 = arith.constant 2 : index
    %c2_74 = arith.constant 2 : index
    %c0_75 = arith.constant 0 : index
    %c0_76 = arith.constant 0 : index
    %60 = vector.load %arg2[%c2_73, %c2_74, %c0_75, %c0_76] : memref<3x3x128x128xbf16, #tpu.memory_space<vmem>>, vector<1x1x128x128xbf16>
    %61 = vector.shape_cast %60 : vector<1x1x128x128xbf16> to vector<128x128xbf16>
    %cst_77 = arith.constant dense<0.000000e+00> : vector<256x128xf32>
    %62 = tpu.matmul %59, %61, %cst_77 {dimension_numbers = #tpu.dot_dimension_numbers<[1], [0], [0], [1], [0, 0, 1, 1], [], []>} : vector<256x128xbf16>, vector<128x128xbf16>, vector<256x128xf32> -> vector<256x128xf32>
    %63 = arith.addf %56, %62 : vector<256x128xf32>
    %c0_78 = arith.constant 0 : index
    %c0_79 = arith.constant 0 : index
    %64 = vector.load %arg3[%c0_78, %c0_79] : memref<1x128xf32, #tpu.memory_space<vmem>>, vector<1x128xf32>
    %65 = vector.broadcast %64 : vector<1x128xf32> to vector<256x128xf32>
    %66 = arith.addf %63, %65 : vector<256x128xf32>
    %cst_80 = arith.constant 0.000000e+00 : f32
    %67 = vector.broadcast %cst_80 : f32 to vector<256x128xf32>
    %68 = arith.maximumf %66, %67 : vector<256x128xf32>
    %69 = vector.shape_cast %68 : vector<256x128xf32> to vector<16x16x128xf32>
    %c0_81 = arith.constant 0 : index
    %c0_82 = arith.constant 0 : index
    %c0_83 = arith.constant 0 : index
    %c0_84 = arith.constant 0 : index
    %70 = vector.load %arg4[%c0_81, %c0_82, %c0_83, %c0_84] : memref<1x16x16x128xf32, #tpu.memory_space<vmem>>, vector<1x16x16x128xf32>
    %71 = vector.shape_cast %70 : vector<1x16x16x128xf32> to vector<16x16x128xf32>
    %72 = vector.shape_cast %69 : vector<16x16x128xf32> to vector<1x16x16x128xf32>
    tpu.vector_store %arg4[%c0_81, %c0_82, %c0_83, %c0_84], %72 {strides = array<i32>} : memref<1x16x16x128xf32, #tpu.memory_space<vmem>>, vector<1x16x16x128xf32>,
    return
  }
  func.func @transform_0(%arg0: i32) -> (i32, i32, i32, i32) {
    %c0_i32 = arith.constant 0 : i32
    %c0_i32_0 = arith.constant 0 : i32
    %c0_i32_1 = arith.constant 0 : i32
    %c0_i32_2 = arith.constant 0 : i32
    return %arg0, %c0_i32, %c0_i32_0, %c0_i32_1 : i32, i32, i32, i32
  }
  func.func @transform_1(%arg0: i32) -> (i32, i32, i32, i32) {
    %c0_i32 = arith.constant 0 : i32
    %c0_i32_0 = arith.constant 0 : i32
    %c0_i32_1 = arith.constant 0 : i32
    %c0_i32_2 = arith.constant 0 : i32
    %c0_i32_3 = arith.constant 0 : i32
    return %c0_i32, %c0_i32_0, %c0_i32_1, %c0_i32_2 : i32, i32, i32, i32
  }
  func.func @transform_2(%arg0: i32) -> (i32, i32) {
    %c0_i32 = arith.constant 0 : i32
    %c0_i32_0 = arith.constant 0 : i32
    %c0_i32_1 = arith.constant 0 : i32
    return %c0_i32, %c0_i32_0 : i32, i32
  }
  func.func @transform_3(%arg0: i32) -> (i32, i32, i32, i32) {
    %c0_i32 = arith.constant 0 : i32
    %c0_i32_0 = arith.constant 0 : i32
    %c0_i32_1 = arith.constant 0 : i32
    %c0_i32_2 = arith.constant 0 : i32
    return %arg0, %c0_i32, %c0_i32_0, %c0_i32_1 : i32, i32, i32, i32
  }
}

</mosaic_0001>

<llo_original>
// kernel: up_forward.3
$region0: #{up_forward.3}
  #allocation0 [shape = 'u32[]', space=smem, size = 0x4, offset = 0x4, fixed_abs, tag = 'smem constant byte address 0x4 - core index']
  #allocation1 [shape = 'u32[72,128]{1,0:T(1,128)}', space=vmem, size = 0x9000, scoped, tag = 'internal scratch']
  %s0 = inlined_call_operand.vmem [shape: bf16[2,18,18,128], index: 0, kind: input, shape index: {}]
  %s1 = inlined_call_operand.vmem [shape: bf16[3,3,128,128], index: 1, kind: input, shape index: {}]
  %s2 = inlined_call_operand.vmem [shape: f32[1,128], index: 2, kind: input, shape index: {}]
  %s3 = inlined_call_operand.hbm [shape: f32[2,16,16,128], index: 3, kind: output, shape index: {}]
  %s4 = sld [smem:[#allocation0]]
  $region45: #{up_forward.3} parent=0
    _
  %s6 = ssub.s32 1, %s4
  %s7 = scalar_select 0, %s6, %s4
  $region1: #{up_forward.3} parent=0
    #allocation2 [shape = 'u8[262144]{0}', space=vmem, size = 0x40000, scoped, tag = 'output window, operand 0']
    #allocation3 [shape = 's32[2]{0}', space=sflag, size = 0x8, scoped, tag = 'scoped memory for up_forward.3']
    %8 = vsyncpa [#allocation3], 0
    %s9 = scalar_lea.sflag [#allocation3], 1
    %10 = vsyncpa %s9, 0
    loop: start=0, step=1, limit=4
    $region2: #{up_forward.3} parent=1 // loop_pre_header
      _
    $region3: #{up_forward.3} parent=1 // loop_header
      %s12 = sphi 0, %s16
      %p13 = scmp.ge.s32.totalorder %s12, 4
      %s22 = sphi 0, %s24
      %s25 = sphi 0, %s22
      %s26 = sphi 0, %s25
      %s42 = sphi 0, %s26
      %s46 = sphi 0, %s46
      %s48 = sphi 0, %s46
      %s49 = sphi 0, %s48
      %s63 = sphi 0, %s49
      %s67 = sphi 0, %s67
      %s69 = sphi 0, %s67
      %s70 = sphi 0, %s69
      %s84 = sphi 0, %s70
      %s90 = sphi 0, %s92
      %s93 = sphi 0, %s90
      %s94 = sphi 0, %s93
      %s110 = sphi 0, %s94
    $region4: #{up_forward.3} parent=1 // loop_header_branch
      %15 = sbr.rel (%p13) target = $region8
    $region5: #{up_forward.3} parent=1 // loop_body
      %s17 = ssub.s32 %s12, 1
      %s18 = ssub.s32 %s12, 2
      %s19 = sadd.s32 %s12, 1
      %s20 = ssub.s32 %s12, %s19
      %p21 = scmp.eq.s32.totalorder %s20, 0
      %s23 = sadd.s32 %s22, 1
      %s24 = scalar_select %p21, %s22, %s23
      %p27 = pneg %p21
      %p28 = scmp.eq.s32.totalorder %s12, 1
      %p29 = por %p27, %p28
      %p30 = scmp.ne.s32.totalorder %s22, %s25
      %p31 = scmp.eq.s32.totalorder %s12, 0
      %p32 = por %p30, %p31
      %p33 = scmp.ne.s32.totalorder %s22, %s25
      %p34 = scmp.eq.s32.totalorder %s17, 1
      %p35 = por %p33, %p34
      %p36 = scmp.ne.s32.totalorder %s25, %s26
      %p37 = scmp.eq.s32.totalorder %s17, 0
      %p38 = por %p36, %p37
      %p39 = scmp.ne.s32.totalorder %s25, %s26
      %p40 = scmp.eq.s32.totalorder %s18, 1
      %p41 = por %p39, %p40
      %p43 = scmp.ne.s32.totalorder %s26, %s42
      %p44 = scmp.eq.s32.totalorder %s18, 0
      %p45 = por %p43, %p44
      %s47 = sadd.s32 %s46, 1
      %p50 = scmp.eq.s32.totalorder %s12, 1
      %p51 = scmp.ne.s32.totalorder %s46, %s48
      %p52 = scmp.eq.s32.totalorder %s12, 0
      %p53 = por %p51, %p52
      %p54 = scmp.ne.s32.totalorder %s46, %s48
      %p55 = scmp.eq.s32.totalorder %s17, 1
      %p56 = por %p54, %p55
      %p57 = scmp.ne.s32.totalorder %s48, %s49
      %p58 = scmp.eq.s32.totalorder %s17, 0
      %p59 = por %p57, %p58
      %p60 = scmp.ne.s32.totalorder %s48, %s49
      %p61 = scmp.eq.s32.totalorder %s18, 1
      %p62 = por %p60, %p61
      %p64 = scmp.ne.s32.totalorder %s49, %s63
      %p65 = scmp.eq.s32.totalorder %s18, 0
      %p66 = por %p64, %p65
      %s68 = sadd.s32 %s67, 1
      %p71 = scmp.eq.s32.totalorder %s12, 1
      %p72 = scmp.ne.s32.totalorder %s67, %s69
      %p73 = scmp.eq.s32.totalorder %s12, 0
      %p74 = por %p72, %p73
      %p75 = scmp.ne.s32.totalorder %s67, %s69
      %p76 = scmp.eq.s32.totalorder %s17, 1
      %p77 = por %p75, %p76
      %p78 = scmp.ne.s32.totalorder %s69, %s70
      %p79 = scmp.eq.s32.totalorder %s17, 0
      %p80 = por %p78, %p79
      %p81 = scmp.ne.s32.totalorder %s69, %s70
      %p82 = scmp.eq.s32.totalorder %s18, 1
      %p83 = por %p81, %p82
      %p85 = scmp.ne.s32.totalorder %s70, %s84
      %p86 = scmp.eq.s32.totalorder %s18, 0
      %p87 = por %p85, %p86
      %s88 = ssub.s32 %s12, %s19
      %p89 = scmp.eq.s32.totalorder %s88, 0
      %s91 = sadd.s32 %s90, 1
      %s92 = scalar_select %p89, %s90, %s91
      %p95 = pneg %p89
      %p96 = scmp.eq.s32.totalorder %s12, 1
      %p97 = por %p95, %p96
      %p98 = scmp.ne.s32.totalorder %s90, %s93
      %p99 = scmp.eq.s32.totalorder %s12, 0
      %p100 = por %p98, %p99
      %p101 = scmp.ne.s32.totalorder %s90, %s93
      %p102 = scmp.eq.s32.totalorder %s17, 1
      %p103 = por %p101, %p102
      %p104 = scmp.ne.s32.totalorder %s93, %s94
      %p105 = scmp.eq.s32.totalorder %s17, 0
      %p106 = por %p104, %p105
      %p107 = scmp.ne.s32.totalorder %s93, %s94
      %p108 = scmp.eq.s32.totalorder %s18, 1
      %p109 = por %p107, %p108
      %p111 = scmp.ne.s32.totalorder %s94, %s110
      %p112 = scmp.eq.s32.totalorder %s18, 0
      %p113 = por %p111, %p112
      %p114 = scmp.le.s32.totalorder 1, %s12
      %p115 = scmp.lt.s32.totalorder %s12, 3
      %p116 = pnand %p114, %p115
      %p117 = pneg %p116
      // Predicated region
      $region9: #{up_forward.3} parent=5 // pred_check
        _
      $region10: #{up_forward.3} parent=5 // pred_check_branch
        %119 = sbr.rel (%p116) target = $region12
      $region11: #{up_forward.3} parent=5 // pred_region
        %s120 = ssub.s32 %s12, 1
        // Predicated region
        $region13: #{up_forward.3} parent=11 // pred_check
          %p121 = pneg %p59
        $region14: #{up_forward.3} parent=11 // pred_check_branch
          %123 = sbr.rel (%p121) target = $region16
        $region15: #{up_forward.3} parent=11 // pred_region
          _
        $region16: #{up_forward.3} parent=11 // pred_fallthru
          _
        // Predicated region
        $region17: #{up_forward.3} parent=11 // pred_check
          %p124 = pneg %p80
        $region18: #{up_forward.3} parent=11 // pred_check_branch
          %126 = sbr.rel (%p124) target = $region20
        $region19: #{up_forward.3} parent=11 // pred_region
          _
        $region20: #{up_forward.3} parent=11 // pred_fallthru
          _
      $region12: #{up_forward.3} parent=5 // pred_fallthru
        _
      %p127 = scmp.lt.s32.totalorder %s12, 2
      // Predicated region
      $region21: #{up_forward.3} parent=5 // pred_check
        %p128 = pneg %p127
      $region22: #{up_forward.3} parent=5 // pred_check_branch
        %130 = sbr.rel (%p128) target = $region24
      $region23: #{up_forward.3} parent=5 // pred_region
        // Predicated region
        $region25: #{up_forward.3} parent=23 // pred_check
          %p131 = pneg %p32
        $region26: #{up_forward.3} parent=23 // pred_check_branch
          %133 = sbr.rel (%p131) target = $region28
        $region27: #{up_forward.3} parent=23 // pred_region
          %p134 = scmp.lt.s32.totalorder %s12, 1
          %s135 = scalar_select %p134, %s12, 1
          %s136 = smul.addr %s135, 54
          %s137 = smul.addr %s136, 4
          %s138 = scalar_lea.vmem %s0, %s137
        $region28: #{up_forward.3} parent=23 // pred_fallthru
          _
      $region24: #{up_forward.3} parent=5 // pred_fallthru
        _
      %p139 = scmp.le.s32.totalorder 1, %s12
      %p140 = scmp.lt.s32.totalorder %s12, 3
      %p141 = pnand %p139, %p140
      %p142 = pneg %p141
      // Predicated region
      $region29: #{up_forward.3} parent=5 // pred_check
        _
      $region30: #{up_forward.3} parent=5 // pred_check_branch
        %144 = sbr.rel (%p141) target = $region32
      $region31: #{up_forward.3} parent=5 // pred_region
        %s145 = ssub.s32 %s12, 1
        %p146 = scmp.lt.s32.totalorder %s17, 1
        %s147 = scalar_select %p146, %s17, 1
        %s148 = smul.addr %s147, 54
        %s149 = smul.addr %s148, 4
        %s150 = scalar_lea.vmem %s0, %s149
        %p151 = pneg %p38
        %p152 = pneg %p35
        %p153 = pneg %p59
        %p154 = pneg %p56
        %p155 = pneg %p80
        %p156 = pneg %p77
        %p157 = pneg %p106
        %p158 = pneg %p103
        %s159 = sand.u32 %s93, 1
        %s160 = scalar_lea.sflag [#allocation3], %s159
        %s161 = sand.u32 %s93, 1
        %s162 = smul.addr %s161, 256
        %s163 = scalar_lea.vmem [#allocation2], %s162
        %p164 = scmp.lt.s32.totalorder %s17, 1
        %s165 = scalar_select %p164, %s17, 1
        %s166 = smul.addr %s165, 54
        %s167 = smul.addr %s166, 4
        %s168 = scalar_lea.vmem %s0, %s167
        %v169 = vld [vmem:[%s168] sm:$0xf]
        %v170 = vld [vmem:[%s168 + $0x4] sm:$0xf]
        %v171 = vld [vmem:[%s168 + $0xc] sm:$0xf]
        %v172 = vld [vmem:[%s168 + $0x10] sm:$0xf]
        %v173 = vld [vmem:[%s168 + $0x18] sm:$0xf]
        %v174 = vld [vmem:[%s168 + $0x1c] sm:$0xf]
        %v175 = vld [vmem:[%s168 + $0x24] sm:$0xf]
        %v176 = vld [vmem:[%s168 + $0x28] sm:$0xf]
        %v177 = vld [vmem:[%s168 + $0x30] sm:$0xf]
        %v178 = vld [vmem:[%s168 + $0x34] sm:$0xf]
        %v179 = vld [vmem:[%s168 + $0x3c] sm:$0xf]
        %v180 = vld [vmem:[%s168 + $0x40] sm:$0xf]
        %v181 = vld [vmem:[%s168 + $0x48] sm:$0xf]
        %v182 = vld [vmem:[%s168 + $0x4c] sm:$0xf]
        %v183 = vld [vmem:[%s168 + $0x54] sm:$0xf]
        %v184 = vld [vmem:[%s168 + $0x58] sm:$0xf]
        %v185 = vld [vmem:[%s168 + $0x60] sm:$0xf]
        %v186 = vld [vmem:[%s168 + $0x64] sm:$0xf]
        %v187 = vld [vmem:[%s168 + $0x6c] sm:$0xf]
        %v188 = vld [vmem:[%s168 + $0x70] sm:$0xf]
        %v189 = vld [vmem:[%s168 + $0x78] sm:$0xf]
        %v190 = vld [vmem:[%s168 + $0x7c] sm:$0xf]
        %v191 = vld [vmem:[%s168 + $0x84] sm:$0xf]
        %v192 = vld [vmem:[%s168 + $0x88] sm:$0xf]
        %v193 = vld [vmem:[%s168 + $0x90] sm:$0xf]
        %v194 = vld [vmem:[%s168 + $0x94] sm:$0xf]
        %v195 = vld [vmem:[%s168 + $0x9c] sm:$0xf]
        %v196 = vld [vmem:[%s168 + $0xa0] sm:$0xf]
        %v197 = vld [vmem:[%s168 + $0xa8] sm:$0xf]
        %v198 = vld [vmem:[%s168 + $0xac] sm:$0xf]
        %v199 = vld [vmem:[%s168 + $0xb4] sm:$0xf]
        %v200 = vld [vmem:[%s168 + $0xb8] sm:$0xf]
        %v201 = vld [vmem:[%s1] sm:$0xf]
        %v202 = vld [vmem:[%s1 + $0x4] sm:$0xf]
        %v203 = vld [vmem:[%s1 + $0x8] sm:$0xf]
        %v204 = vld [vmem:[%s1 + $0xc] sm:$0xf]
        %v205 = vld [vmem:[%s1 + $0x10] sm:$0xf]
        %v206 = vld [vmem:[%s1 + $0x14] sm:$0xf]
        %v207 = vld [vmem:[%s1 + $0x18] sm:$0xf]
        %v208 = vld [vmem:[%s1 + $0x1c] sm:$0xf]
        %v209 = vld [vmem:[%s1 + $0x20] sm:$0xf]
        %v210 = vld [vmem:[%s1 + $0x24] sm:$0xf]
        %v211 = vld [vmem:[%s1 + $0x28] sm:$0xf]
        %v212 = vld [vmem:[%s1 + $0x2c] sm:$0xf]
        %v213 = vld [vmem:[%s1 + $0x30] sm:$0xf]
        %v214 = vld [vmem:[%s1 + $0x34] sm:$0xf]
        %v215 = vld [vmem:[%s1 + $0x38] sm:$0xf]
        %v216 = vld [vmem:[%s1 + $0x3c] sm:$0xf]
        %v217 = vld [vmem:[%s168 + $0x8] sm:$0x1]
        %v218 = vld [vmem:[%s168 + $0x14] sm:$0x1]
        %v219 = vld [vmem:[%s168 + $0x20] sm:$0x1]
        %v220 = vld [vmem:[%s168 + $0x2c] sm:$0x1]
        %v221 = vld [vmem:[%s168 + $0x38] sm:$0x1]
        %v222 = vld [vmem:[%s168 + $0x44] sm:$0x1]
        %v223 = vld [vmem:[%s168 + $0x50] sm:$0x1]
        %v224 = vld [vmem:[%s168 + $0x5c] sm:$0x1]
        %v225 = vld [vmem:[%s168 + $0x68] sm:$0x1]
        %v226 = vld [vmem:[%s168 + $0x74] sm:$0x1]
        %v227 = vld [vmem:[%s168 + $0x80] sm:$0x1]
        %v228 = vld [vmem:[%s168 + $0x8c] sm:$0x1]
        %v229 = vld [vmem:[%s168 + $0x98] sm:$0x1]
        %v230 = vld [vmem:[%s168 + $0xa4] sm:$0x1]
        %v231 = vld [vmem:[%s168 + $0xb0] sm:$0x1]
        %v232 = vld [vmem:[%s168 + $0xbc] sm:$0x1]
        %vm233 = vsmask.f32 3328
        %vm234 = vsmask.f32 7440
        %vm235 = vmor %vm233, %vm234
        %v237 = vshrl.u32 %v169, 16
        %v239 = vrot.slane %v237, 4
        %v240 = vshll.u32 %v169, 16
        %v242 = vrot.slane %v240, 5
        %v243 = vor.u32 %v239, %v242
        %v244 = vrot.slane %v243, 4
        %v246 = vshll.u32 %v170, 16
        %v248 = vrot.slane %v246, 5
        %v249 = vsel %vm235, %v244, %v248
        %v250 = vshrl.u32 %v170, 16
        %v252 = vrot.slane %v250, 4
        %v253 = vor.u32 %v252, %v248
        %v254 = vrot.slane %v253, 4
        %v256 = vshll.u32 %v217, 16
        %v258 = vrot.slane %v256, 5
        %v259 = vsel %vm235, %v254, %v258
        %v261 = vshrl.u32 %v171, 16
        %v263 = vrot.slane %v261, 4
        %v264 = vshll.u32 %v171, 16
        %v266 = vrot.slane %v264, 5
        %v267 = vor.u32 %v263, %v266
        %v268 = vrot.slane %v267, 4
        %v270 = vshll.u32 %v172, 16
        %v272 = vrot.slane %v270, 5
        %v273 = vsel %vm235, %v268, %v272
        %v274 = vshrl.u32 %v172, 16
        %v276 = vrot.slane %v274, 4
        %v277 = vor.u32 %v276, %v272
        %v278 = vrot.slane %v277, 4
        %v280 = vshll.u32 %v218, 16
        %v282 = vrot.slane %v280, 5
        %v283 = vsel %vm235, %v278, %v282
        %v285 = vshrl.u32 %v173, 16
        %v287 = vrot.slane %v285, 4
        %v288 = vshll.u32 %v173, 16
        %v290 = vrot.slane %v288, 5
        %v291 = vor.u32 %v287, %v290
        %v292 = vrot.slane %v291, 4
        %v294 = vshll.u32 %v174, 16
        %v296 = vrot.slane %v294, 5
        %v297 = vsel %vm235, %v292, %v296
        %v298 = vshrl.u32 %v174, 16
        %v300 = vrot.slane %v298, 4
        %v301 = vor.u32 %v300, %v296
        %v302 = vrot.slane %v301, 4
        %v304 = vshll.u32 %v219, 16
        %v306 = vrot.slane %v304, 5
        %v307 = vsel %vm235, %v302, %v306
        %v309 = vshrl.u32 %v175, 16
        %v311 = vrot.slane %v309, 4
        %v312 = vshll.u32 %v175, 16
        %v314 = vrot.slane %v312, 5
        %v315 = vor.u32 %v311, %v314
        %v316 = vrot.slane %v315, 4
        %v318 = vshll.u32 %v176, 16
        %v320 = vrot.slane %v318, 5
        %v321 = vsel %vm235, %v316, %v320
        %v322 = vshrl.u32 %v176, 16
        %v324 = vrot.slane %v322, 4
        %v325 = vor.u32 %v324, %v320
        %v326 = vrot.slane %v325, 4
        %v328 = vshll.u32 %v220, 16
        %v330 = vrot.slane %v328, 5
        %v331 = vsel %vm235, %v326, %v330
        %v333 = vshrl.u32 %v177, 16
        %v335 = vrot.slane %v333, 4
        %v336 = vshll.u32 %v177, 16
        %v338 = vrot.slane %v336, 5
        %v339 = vor.u32 %v335, %v338
        %v340 = vrot.slane %v339, 4
        %v342 = vshll.u32 %v178, 16
        %v344 = vrot.slane %v342, 5
        %v345 = vsel %vm235, %v340, %v344
        %v346 = vshrl.u32 %v178, 16
        %v348 = vrot.slane %v346, 4
        %v349 = vor.u32 %v348, %v344
        %v350 = vrot.slane %v349, 4
        %v352 = vshll.u32 %v221, 16
        %v354 = vrot.slane %v352, 5
        %v355 = vsel %vm235, %v350, %v354
        %v357 = vshrl.u32 %v179, 16
        %v359 = vrot.slane %v357, 4
        %v360 = vshll.u32 %v179, 16
        %v362 = vrot.slane %v360, 5
        %v363 = vor.u32 %v359, %v362
        %v364 = vrot.slane %v363, 4
        %v366 = vshll.u32 %v180, 16
        %v368 = vrot.slane %v366, 5
        %v369 = vsel %vm235, %v364, %v368
        %v370 = vshrl.u32 %v180, 16
        %v372 = vrot.slane %v370, 4
        %v373 = vor.u32 %v372, %v368
        %v374 = vrot.slane %v373, 4
        %v376 = vshll.u32 %v222, 16
        %v378 = vrot.slane %v376, 5
        %v379 = vsel %vm235, %v374, %v378
        %v381 = vshrl.u32 %v181, 16
        %v383 = vrot.slane %v381, 4
        %v384 = vshll.u32 %v181, 16
        %v386 = vrot.slane %v384, 5
        %v387 = vor.u32 %v383, %v386
        %v388 = vrot.slane %v387, 4
        %v390 = vshll.u32 %v182, 16
        %v392 = vrot.slane %v390, 5
        %v393 = vsel %vm235, %v388, %v392
        %v394 = vshrl.u32 %v182, 16
        %v396 = vrot.slane %v394, 4
        %v397 = vor.u32 %v396, %v392
        %v398 = vrot.slane %v397, 4
        %v400 = vshll.u32 %v223, 16
        %v402 = vrot.slane %v400, 5
        %v403 = vsel %vm235, %v398, %v402
        %v405 = vshrl.u32 %v183, 16
        %v407 = vrot.slane %v405, 4
        %v408 = vshll.u32 %v183, 16
        %v410 = vrot.slane %v408, 5
        %v411 = vor.u32 %v407, %v410
        %v412 = vrot.slane %v411, 4
        %v414 = vshll.u32 %v184, 16
        %v416 = vrot.slane %v414, 5
        %v417 = vsel %vm235, %v412, %v416
        %v418 = vshrl.u32 %v184, 16
        %v420 = vrot.slane %v418, 4
        %v421 = vor.u32 %v420, %v416
        %v422 = vrot.slane %v421, 4
        %v424 = vshll.u32 %v224, 16
        %v426 = vrot.slane %v424, 5
        %v427 = vsel %vm235, %v422, %v426
        %v429 = vshrl.u32 %v185, 16
        %v431 = vrot.slane %v429, 4
        %v432 = vshll.u32 %v185, 16
        %v434 = vrot.slane %v432, 5
        %v435 = vor.u32 %v431, %v434
        %v436 = vrot.slane %v435, 4
        %v438 = vshll.u32 %v186, 16
        %v440 = vrot.slane %v438, 5
        %v441 = vsel %vm235, %v436, %v440
        %v442 = vshrl.u32 %v186, 16
        %v444 = vrot.slane %v442, 4
        %v445 = vor.u32 %v444, %v440
        %v446 = vrot.slane %v445, 4
        %v448 = vshll.u32 %v225, 16
        %v450 = vrot.slane %v448, 5
        %v451 = vsel %vm235, %v446, %v450
        %v453 = vshrl.u32 %v187, 16
        %v455 = vrot.slane %v453, 4
        %v456 = vshll.u32 %v187, 16
        %v458 = vrot.slane %v456, 5
        %v459 = vor.u32 %v455, %v458
        %v460 = vrot.slane %v459, 4
        %v462 = vshll.u32 %v188, 16
        %v464 = vrot.slane %v462, 5
        %v465 = vsel %vm235, %v460, %v464
        %v466 = vshrl.u32 %v188, 16
        %v468 = vrot.slane %v466, 4
        %v469 = vor.u32 %v468, %v464
        %v470 = vrot.slane %v469, 4
        %v472 = vshll.u32 %v226, 16
        %v474 = vrot.slane %v472, 5
        %v475 = vsel %vm235, %v470, %v474
        %v477 = vshrl.u32 %v189, 16
        %v479 = vrot.slane %v477, 4
        %v480 = vshll.u32 %v189, 16
        %v482 = vrot.slane %v480, 5
        %v483 = vor.u32 %v479, %v482
        %v484 = vrot.slane %v483, 4
        %v486 = vshll.u32 %v190, 16
        %v488 = vrot.slane %v486, 5
        %v489 = vsel %vm235, %v484, %v488
        %v490 = vshrl.u32 %v190, 16
        %v492 = vrot.slane %v490, 4
        %v493 = vor.u32 %v492, %v488
        %v494 = vrot.slane %v493, 4
        %v496 = vshll.u32 %v227, 16
        %v498 = vrot.slane %v496, 5
        %v499 = vsel %vm235, %v494, %v498
        %v501 = vshrl.u32 %v191, 16
        %v503 = vrot.slane %v501, 4
        %v504 = vshll.u32 %v191, 16
        %v506 = vrot.slane %v504, 5
        %v507 = vor.u32 %v503, %v506
        %v508 = vrot.slane %v507, 4
        %v510 = vshll.u32 %v192, 16
        %v512 = vrot.slane %v510, 5
        %v513 = vsel %vm235, %v508, %v512
        %v514 = vshrl.u32 %v192, 16
        %v516 = vrot.slane %v514, 4
        %v517 = vor.u32 %v516, %v512
        %v518 = vrot.slane %v517, 4
        %v520 = vshll.u32 %v228, 16
        %v522 = vrot.slane %v520, 5
        %v523 = vsel %vm235, %v518, %v522
        %v525 = vshrl.u32 %v193, 16
        %v527 = vrot.slane %v525, 4
        %v528 = vshll.u32 %v193, 16
        %v530 = vrot.slane %v528, 5
        %v531 = vor.u32 %v527, %v530
        %v532 = vrot.slane %v531, 4
        %v534 = vshll.u32 %v194, 16
        %v536 = vrot.slane %v534, 5
        %v537 = vsel %vm235, %v532, %v536
        %v538 = vshrl.u32 %v194, 16
        %v540 = vrot.slane %v538, 4
        %v541 = vor.u32 %v540, %v536
        %v542 = vrot.slane %v541, 4
        %v544 = vshll.u32 %v229, 16
        %v546 = vrot.slane %v544, 5
        %v547 = vsel %vm235, %v542, %v546
        %v549 = vshrl.u32 %v195, 16
        %v551 = vrot.slane %v549, 4
        %v552 = vshll.u32 %v195, 16
        %v554 = vrot.slane %v552, 5
        %v555 = vor.u32 %v551, %v554
        %v556 = vrot.slane %v555, 4
        %v558 = vshll.u32 %v196, 16
        %v560 = vrot.slane %v558, 5
        %v561 = vsel %vm235, %v556, %v560
        %v562 = vshrl.u32 %v196, 16
        %v564 = vrot.slane %v562, 4
        %v565 = vor.u32 %v564, %v560
        %v566 = vrot.slane %v565, 4
        %v568 = vshll.u32 %v230, 16
        %v570 = vrot.slane %v568, 5
        %v571 = vsel %vm235, %v566, %v570
        %v573 = vshrl.u32 %v197, 16
        %v575 = vrot.slane %v573, 4
        %v576 = vshll.u32 %v197, 16
        %v578 = vrot.slane %v576, 5
        %v579 = vor.u32 %v575, %v578
        %v580 = vrot.slane %v579, 4
        %v582 = vshll.u32 %v198, 16
        %v584 = vrot.slane %v582, 5
        %v585 = vsel %vm235, %v580, %v584
        %v586 = vshrl.u32 %v198, 16
        %v588 = vrot.slane %v586, 4
        %v589 = vor.u32 %v588, %v584
        %v590 = vrot.slane %v589, 4
        %v592 = vshll.u32 %v231, 16
        %v594 = vrot.slane %v592, 5
        %v595 = vsel %vm235, %v590, %v594
        %v597 = vshrl.u32 %v199, 16
        %v599 = vrot.slane %v597, 4
        %v600 = vshll.u32 %v199, 16
        %v602 = vrot.slane %v600, 5
        %v603 = vor.u32 %v599, %v602
        %v604 = vrot.slane %v603, 4
        %v606 = vshll.u32 %v200, 16
        %v608 = vrot.slane %v606, 5
        %v609 = vsel %vm235, %v604, %v608
        %v610 = vshrl.u32 %v200, 16
        %v612 = vrot.slane %v610, 4
        %v613 = vor.u32 %v612, %v608
        %v614 = vrot.slane %v613, 4
        %v616 = vshll.u32 %v232, 16
        %v618 = vrot.slane %v616, 5
        %v619 = vsel %vm235, %v614, %v618
        %s620 = scalar_lea.vmem %s1, 64
        %v621 = vld [vmem:[%s620] sm:$0xf]
        %v622 = vld [vmem:[%s620 + $0x4] sm:$0xf]
        %v623 = vld [vmem:[%s620 + $0x8] sm:$0xf]
        %v624 = vld [vmem:[%s620 + $0xc] sm:$0xf]
        %v625 = vld [vmem:[%s620 + $0x10] sm:$0xf]
        %v626 = vld [vmem:[%s620 + $0x14] sm:$0xf]
        %v627 = vld [vmem:[%s620 + $0x18] sm:$0xf]
        %v628 = vld [vmem:[%s620 + $0x1c] sm:$0xf]
        %v629 = vld [vmem:[%s620 + $0x20] sm:$0xf]
        %v630 = vld [vmem:[%s620 + $0x24] sm:$0xf]
        %v631 = vld [vmem:[%s620 + $0x28] sm:$0xf]
        %v632 = vld [vmem:[%s620 + $0x2c] sm:$0xf]
        %v633 = vld [vmem:[%s620 + $0x30] sm:$0xf]
        %v634 = vld [vmem:[%s620 + $0x34] sm:$0xf]
        %v635 = vld [vmem:[%s620 + $0x38] sm:$0xf]
        %v636 = vld [vmem:[%s620 + $0x3c] sm:$0xf]
        %v637 = vunpack.c.l.b16 %v249
        %v638 = vunpack.c.l.b16 %v259
        %v639 = vunpack.c.l.b16 %v273
        %v640 = vunpack.c.l.b16 %v283
        %v641 = vunpack.c.l.b16 %v297
        %v642 = vunpack.c.l.b16 %v307
        %v643 = vunpack.c.l.b16 %v321
        %v644 = vunpack.c.l.b16 %v331
        %v645 = vunpack.c.l.b16 %v345
        %v646 = vunpack.c.l.b16 %v355
        %v647 = vunpack.c.l.b16 %v369
        %v648 = vunpack.c.l.b16 %v379
        %v649 = vunpack.c.l.b16 %v393
        %v650 = vunpack.c.l.b16 %v403
        %v651 = vunpack.c.l.b16 %v417
        %v652 = vunpack.c.l.b16 %v427
        %v653 = vunpack.c.l.b16 %v441
        %v654 = vunpack.c.l.b16 %v451
        %v655 = vunpack.c.l.b16 %v465
        %v656 = vunpack.c.l.b16 %v475
        %v657 = vunpack.c.l.b16 %v489
        %v658 = vunpack.c.l.b16 %v499
        %v659 = vunpack.c.l.b16 %v513
        %v660 = vunpack.c.l.b16 %v523
        %v661 = vunpack.c.l.b16 %v537
        %v662 = vunpack.c.l.b16 %v547
        %v663 = vunpack.c.l.b16 %v561
        %v664 = vunpack.c.l.b16 %v571
        %v665 = vunpack.c.l.b16 %v585
        %v666 = vunpack.c.l.b16 %v595
        %v667 = vunpack.c.l.b16 %v609
        %v668 = vunpack.c.l.b16 %v619
        %v669 = vpack.c.b16 %v638, %v637
        %v670 = vpack.c.b16 %v640, %v639
        %v671 = vpack.c.b16 %v642, %v641
        %v672 = vpack.c.b16 %v644, %v643
        %v673 = vpack.c.b16 %v646, %v645
        %v674 = vpack.c.b16 %v648, %v647
        %v675 = vpack.c.b16 %v650, %v649
        %v676 = vpack.c.b16 %v652, %v651
        %v677 = vpack.c.b16 %v654, %v653
        %v678 = vpack.c.b16 %v656, %v655
        %v679 = vpack.c.b16 %v658, %v657
        %v680 = vpack.c.b16 %v660, %v659
        %v681 = vpack.c.b16 %v662, %v661
        %v682 = vpack.c.b16 %v664, %v663
        %v683 = vpack.c.b16 %v666, %v665
        %v684 = vpack.c.b16 %v668, %v667
        %v717 = vunpack.c.l.b16 %v621
        %v718 = vunpack.c.l.b16 %v622
        %v719 = vunpack.c.l.b16 %v623
        %v720 = vunpack.c.l.b16 %v624
        %v721 = vunpack.c.l.b16 %v625
        %v722 = vunpack.c.l.b16 %v626
        %v723 = vunpack.c.l.b16 %v627
        %v724 = vunpack.c.l.b16 %v628
        %v725 = vunpack.c.l.b16 %v629
        %v726 = vunpack.c.l.b16 %v630
        %v727 = vunpack.c.l.b16 %v631
        %v728 = vunpack.c.l.b16 %v632
        %v729 = vunpack.c.l.b16 %v633
        %v730 = vunpack.c.l.b16 %v634
        %v731 = vunpack.c.l.b16 %v635
        %v732 = vunpack.c.l.b16 %v636
        %v733 = vpack.c.b16 %v718, %v717
        %v734 = vpack.c.b16 %v720, %v719
        %v735 = vpack.c.b16 %v722, %v721
        %v736 = vpack.c.b16 %v724, %v723
        %v737 = vpack.c.b16 %v726, %v725
        %v738 = vpack.c.b16 %v728, %v727
        %v739 = vpack.c.b16 %v730, %v729
        %v740 = vpack.c.b16 %v732, %v731
        %749 = vmatpush.bf16.msra.mxu0 %v740
        %750 = vmatpush.bf16.msra.mxu0 %v739
        %751 = vmatpush.bf16.msra.mxu0 %v738
        %752 = vmatpush.bf16.msra.mxu0 %v737
        %753 = vmatpush.bf16.msra.mxu0 %v736
        %754 = vmatpush.bf16.msra.mxu0 %v735
        %755 = vmatpush.bf16.msra.mxu0 %v734
        %756 = vmatpush.bf16.msra.mxu0 %v733
        %757 = vmatmul.bf16.gmra.mxu0 %v669
        %v758 = vpop.f32.mrf.mxu0
        %v759 = vadd.f32 0.0, %v758
        %v760 = vpop.f32.mrf.mxu0
        %v761 = vadd.f32 0.0, %v760
        %762 = vmatmul.bf16.gmra.mxu0 %v670
        %v763 = vpop.f32.mrf.mxu0
        %v764 = vadd.f32 0.0, %v763
        %v765 = vpop.f32.mrf.mxu0
        %v766 = vadd.f32 0.0, %v765
        %767 = vmatmul.bf16.gmra.mxu0 %v671
        %v768 = vpop.f32.mrf.mxu0
        %v769 = vadd.f32 0.0, %v768
        %v770 = vpop.f32.mrf.mxu0
        %v771 = vadd.f32 0.0, %v770
        %772 = vmatmul.bf16.gmra.mxu0 %v672
        %v773 = vpop.f32.mrf.mxu0
        %v774 = vadd.f32 0.0, %v773
        %v775 = vpop.f32.mrf.mxu0
        %v776 = vadd.f32 0.0, %v775
        %777 = vmatmul.bf16.gmra.mxu0 %v673
        %v778 = vpop.f32.mrf.mxu0
        %v779 = vadd.f32 0.0, %v778
        %v780 = vpop.f32.mrf.mxu0
        %v781 = vadd.f32 0.0, %v780
        %782 = vmatmul.bf16.gmra.mxu0 %v674
        %v783 = vpop.f32.mrf.mxu0
        %v784 = vadd.f32 0.0, %v783
        %v785 = vpop.f32.mrf.mxu0
        %v786 = vadd.f32 0.0, %v785
        %787 = vmatmul.bf16.gmra.mxu0 %v675
        %v788 = vpop.f32.mrf.mxu0
        %v789 = vadd.f32 0.0, %v788
        %v790 = vpop.f32.mrf.mxu0
        %v791 = vadd.f32 0.0, %v790
        %792 = vmatmul.bf16.gmra.mxu0 %v676
        %v793 = vpop.f32.mrf.mxu0
        %v794 = vadd.f32 0.0, %v793
        %v795 = vpop.f32.mrf.mxu0
        %v796 = vadd.f32 0.0, %v795
        %797 = vmatmul.bf16.gmra.mxu0 %v677
        %v798 = vpop.f32.mrf.mxu0
        %v799 = vadd.f32 0.0, %v798
        %v800 = vpop.f32.mrf.mxu0
        %v801 = vadd.f32 0.0, %v800
        %802 = vmatmul.bf16.gmra.mxu0 %v678
        %v803 = vpop.f32.mrf.mxu0
        %v804 = vadd.f32 0.0, %v803
        %v805 = vpop.f32.mrf.mxu0
        %v806 = vadd.f32 0.0, %v805
        %807 = vmatmul.bf16.gmra.mxu0 %v679
        %v808 = vpop.f32.mrf.mxu0
        %v809 = vadd.f32 0.0, %v808
        %v810 = vpop.f32.mrf.mxu0
        %v811 = vadd.f32 0.0, %v810
        %812 = vmatmul.bf16.gmra.mxu0 %v680
        %v813 = vpop.f32.mrf.mxu0
        %v814 = vadd.f32 0.0, %v813
        %v815 = vpop.f32.mrf.mxu0
        %v816 = vadd.f32 0.0, %v815
        %817 = vmatmul.bf16.gmra.mxu0 %v681
        %v818 = vpop.f32.mrf.mxu0
        %v819 = vadd.f32 0.0, %v818
        %v820 = vpop.f32.mrf.mxu0
        %v821 = vadd.f32 0.0, %v820
        %822 = vmatmul.bf16.gmra.mxu0 %v682
        %v823 = vpop.f32.mrf.mxu0
        %v824 = vadd.f32 0.0, %v823
        %v825 = vpop.f32.mrf.mxu0
        %v826 = vadd.f32 0.0, %v825
        %827 = vmatmul.bf16.gmra.mxu0 %v683
        %v828 = vpop.f32.mrf.mxu0
        %v829 = vadd.f32 0.0, %v828
        %v830 = vpop.f32.mrf.mxu0
        %v831 = vadd.f32 0.0, %v830
        %832 = vmatmul.bf16.gmra.mxu0 %v684
        %v833 = vpop.f32.mrf.mxu0
        %v834 = vadd.f32 0.0, %v833
        %v835 = vpop.f32.mrf.mxu0
        %v836 = vadd.f32 0.0, %v835
        %837 = vdwg.mxu0
        %v870 = vunpack.c.l.b16 %v169
        %v871 = vunpack.c.l.b16 %v170
        %v872 = vunpack.c.l.b16 %v171
        %v873 = vunpack.c.l.b16 %v172
        %v874 = vunpack.c.l.b16 %v173
        %v875 = vunpack.c.l.b16 %v174
        %v876 = vunpack.c.l.b16 %v175
        %v877 = vunpack.c.l.b16 %v176
        %v878 = vunpack.c.l.b16 %v177
        %v879 = vunpack.c.l.b16 %v178
        %v880 = vunpack.c.l.b16 %v179
        %v881 = vunpack.c.l.b16 %v180
        %v882 = vunpack.c.l.b16 %v181
        %v883 = vunpack.c.l.b16 %v182
        %v884 = vunpack.c.l.b16 %v183
        %v885 = vunpack.c.l.b16 %v184
        %v886 = vunpack.c.l.b16 %v185
        %v887 = vunpack.c.l.b16 %v186
        %v888 = vunpack.c.l.b16 %v187
        %v889 = vunpack.c.l.b16 %v188
        %v890 = vunpack.c.l.b16 %v189
        %v891 = vunpack.c.l.b16 %v190
        %v892 = vunpack.c.l.b16 %v191
        %v893 = vunpack.c.l.b16 %v192
        %v894 = vunpack.c.l.b16 %v193
        %v895 = vunpack.c.l.b16 %v194
        %v896 = vunpack.c.l.b16 %v195
        %v897 = vunpack.c.l.b16 %v196
        %v898 = vunpack.c.l.b16 %v197
        %v899 = vunpack.c.l.b16 %v198
        %v900 = vunpack.c.l.b16 %v199
        %v901 = vunpack.c.l.b16 %v200
        %v902 = vpack.c.b16 %v871, %v870
        %v903 = vpack.c.b16 %v873, %v872
        %v904 = vpack.c.b16 %v875, %v874
        %v905 = vpack.c.b16 %v877, %v876
        %v906 = vpack.c.b16 %v879, %v878
        %v907 = vpack.c.b16 %v881, %v880
        %v908 = vpack.c.b16 %v883, %v882
        %v909 = vpack.c.b16 %v885, %v884
        %v910 = vpack.c.b16 %v887, %v886
        %v911 = vpack.c.b16 %v889, %v888
        %v912 = vpack.c.b16 %v891, %v890
        %v913 = vpack.c.b16 %v893, %v892
        %v914 = vpack.c.b16 %v895, %v894
        %v915 = vpack.c.b16 %v897, %v896
        %v916 = vpack.c.b16 %v899, %v898
        %v917 = vpack.c.b16 %v901, %v900
        %v950 = vunpack.c.l.b16 %v201
        %v951 = vunpack.c.l.b16 %v202
        %v952 = vunpack.c.l.b16 %v203
        %v953 = vunpack.c.l.b16 %v204
        %v954 = vunpack.c.l.b16 %v205
        %v955 = vunpack.c.l.b16 %v206
        %v956 = vunpack.c.l.b16 %v207
        %v957 = vunpack.c.l.b16 %v208
        %v958 = vunpack.c.l.b16 %v209
        %v959 = vunpack.c.l.b16 %v210
        %v960 = vunpack.c.l.b16 %v211
        %v961 = vunpack.c.l.b16 %v212
        %v962 = vunpack.c.l.b16 %v213
        %v963 = vunpack.c.l.b16 %v214
        %v964 = vunpack.c.l.b16 %v215
        %v965 = vunpack.c.l.b16 %v216
        %v966 = vpack.c.b16 %v951, %v950
        %v967 = vpack.c.b16 %v953, %v952
        %v968 = vpack.c.b16 %v955, %v954
        %v969 = vpack.c.b16 %v957, %v956
        %v970 = vpack.c.b16 %v959, %v958
        %v971 = vpack.c.b16 %v961, %v960
        %v972 = vpack.c.b16 %v963, %v962
        %v973 = vpack.c.b16 %v965, %v964
        %982 = vmatpush.bf16.msra.mxu0 %v973
        %983 = vmatpush.bf16.msra.mxu0 %v972
        %984 = vmatpush.bf16.msra.mxu0 %v971
        %985 = vmatpush.bf16.msra.mxu0 %v970
        %986 = vmatpush.bf16.msra.mxu0 %v969
        %987 = vmatpush.bf16.msra.mxu0 %v968
        %988 = vmatpush.bf16.msra.mxu0 %v967
        %989 = vmatpush.bf16.msra.mxu0 %v966
        %990 = vmatmul.bf16.gmra.mxu0 %v902
        %v991 = vpop.f32.mrf.mxu0
        %v992 = vadd.f32 %v759, %v991
        %v993 = vpop.f32.mrf.mxu0
        %v994 = vadd.f32 %v761, %v993
        %995 = vmatmul.bf16.gmra.mxu0 %v903
        %v996 = vpop.f32.mrf.mxu0
        %v997 = vadd.f32 %v764, %v996
        %v998 = vpop.f32.mrf.mxu0
        %v999 = vadd.f32 %v766, %v998
        %1000 = vmatmul.bf16.gmra.mxu0 %v904
        %v1001 = vpop.f32.mrf.mxu0
        %v1002 = vadd.f32 %v769, %v1001
        %v1003 = vpop.f32.mrf.mxu0
        %v1004 = vadd.f32 %v771, %v1003
        %1005 = vmatmul.bf16.gmra.mxu0 %v905
        %v1006 = vpop.f32.mrf.mxu0
        %v1007 = vadd.f32 %v774, %v1006
        %v1008 = vpop.f32.mrf.mxu0
        %v1009 = vadd.f32 %v776, %v1008
        %1010 = vmatmul.bf16.gmra.mxu0 %v906
        %v1011 = vpop.f32.mrf.mxu0
        %v1012 = vadd.f32 %v779, %v1011
        %v1013 = vpop.f32.mrf.mxu0
        %v1014 = vadd.f32 %v781, %v1013
        %1015 = vmatmul.bf16.gmra.mxu0 %v907
        %v1016 = vpop.f32.mrf.mxu0
        %v1017 = vadd.f32 %v784, %v1016
        %v1018 = vpop.f32.mrf.mxu0
        %v1019 = vadd.f32 %v786, %v1018
        %1020 = vmatmul.bf16.gmra.mxu0 %v908
        %v1021 = vpop.f32.mrf.mxu0
        %v1022 = vadd.f32 %v789, %v1021
        %v1023 = vpop.f32.mrf.mxu0
        %v1024 = vadd.f32 %v791, %v1023
        %1025 = vmatmul.bf16.gmra.mxu0 %v909
        %v1026 = vpop.f32.mrf.mxu0
        %v1027 = vadd.f32 %v794, %v1026
        %v1028 = vpop.f32.mrf.mxu0
        %v1029 = vadd.f32 %v796, %v1028
        %1030 = vmatmul.bf16.gmra.mxu0 %v910
        %v1031 = vpop.f32.mrf.mxu0
        %v1032 = vadd.f32 %v799, %v1031
        %v1033 = vpop.f32.mrf.mxu0
        %v1034 = vadd.f32 %v801, %v1033
        %1035 = vmatmul.bf16.gmra.mxu0 %v911
        %v1036 = vpop.f32.mrf.mxu0
        %v1037 = vadd.f32 %v804, %v1036
        %v1038 = vpop.f32.mrf.mxu0
        %v1039 = vadd.f32 %v806, %v1038
        %1040 = vmatmul.bf16.gmra.mxu0 %v912
        %v1041 = vpop.f32.mrf.mxu0
        %v1042 = vadd.f32 %v809, %v1041
        %v1043 = vpop.f32.mrf.mxu0
        %v1044 = vadd.f32 %v811, %v1043
        %1045 = vmatmul.bf16.gmra.mxu0 %v913
        %v1046 = vpop.f32.mrf.mxu0
        %v1047 = vadd.f32 %v814, %v1046
        %v1048 = vpop.f32.mrf.mxu0
        %v1049 = vadd.f32 %v816, %v1048
        %1050 = vmatmul.bf16.gmra.mxu0 %v914
        %v1051 = vpop.f32.mrf.mxu0
        %v1052 = vadd.f32 %v819, %v1051
        %v1053 = vpop.f32.mrf.mxu0
        %v1054 = vadd.f32 %v821, %v1053
        %1055 = vmatmul.bf16.gmra.mxu0 %v915
        %v1056 = vpop.f32.mrf.mxu0
        %v1057 = vadd.f32 %v824, %v1056
        %v1058 = vpop.f32.mrf.mxu0
        %v1059 = vadd.f32 %v826, %v1058
        %1060 = vmatmul.bf16.gmra.mxu0 %v916
        %v1061 = vpop.f32.mrf.mxu0
        %v1062 = vadd.f32 %v829, %v1061
        %v1063 = vpop.f32.mrf.mxu0
        %v1064 = vadd.f32 %v831, %v1063
        %1065 = vmatmul.bf16.gmra.mxu0 %v917
        %v1066 = vpop.f32.mrf.mxu0
        %v1067 = vadd.f32 %v834, %v1066
        %v1068 = vpop.f32.mrf.mxu0
        %v1069 = vadd.f32 %v836, %v1068
        %1070 = vdwg.mxu0
        %v1071 = vld [vmem:[%s168] sm:$0xe]
        %v1072 = vld [vmem:[%s168 + $0xc] sm:$0xe]
        %v1073 = vld [vmem:[%s168 + $0x18] sm:$0xe]
        %v1074 = vld [vmem:[%s168 + $0x24] sm:$0xe]
        %v1075 = vld [vmem:[%s168 + $0x30] sm:$0xe]
        %v1076 = vld [vmem:[%s168 + $0x3c] sm:$0xe]
        %v1077 = vld [vmem:[%s168 + $0x48] sm:$0xe]
        %v1078 = vld [vmem:[%s168 + $0x54] sm:$0xe]
        %v1079 = vld [vmem:[%s168 + $0x60] sm:$0xe]
        %v1080 = vld [vmem:[%s168 + $0x6c] sm:$0xe]
        %v1081 = vld [vmem:[%s168 + $0x78] sm:$0xe]
        %v1082 = vld [vmem:[%s168 + $0x84] sm:$0xe]
        %v1083 = vld [vmem:[%s168 + $0x90] sm:$0xe]
        %v1084 = vld [vmem:[%s168 + $0x9c] sm:$0xe]
        %v1085 = vld [vmem:[%s168 + $0xa8] sm:$0xe]
        %v1086 = vld [vmem:[%s168 + $0xb4] sm:$0xe]
        %vm1119 = vcmask 1042432
        %vm1120 = vcmask 1046532
        %vm1121 = vmor %vm1119, %vm1120
        %v1122 = vrot.slane %v1071, 5
        %v1123 = vrot.slane %v1122, 4
        %v1124 = vrot.slane %v170, 5
        %v1125 = vsel %vm1121, %v1123, %v1124
        %v1126 = vrot.slane %v1124, 4
        %v1127 = vrot.slane %v217, 5
        %v1128 = vsel %vm1121, %v1126, %v1127
        %v1129 = vrot.slane %v1072, 5
        %v1130 = vrot.slane %v1129, 4
        %v1131 = vrot.slane %v172, 5
        %v1132 = vsel %vm1121, %v1130, %v1131
        %v1133 = vrot.slane %v1131, 4
        %v1134 = vrot.slane %v218, 5
        %v1135 = vsel %vm1121, %v1133, %v1134
        %v1136 = vrot.slane %v1073, 5
        %v1137 = vrot.slane %v1136, 4
        %v1138 = vrot.slane %v174, 5
        %v1139 = vsel %vm1121, %v1137, %v1138
        %v1140 = vrot.slane %v1138, 4
        %v1141 = vrot.slane %v219, 5
        %v1142 = vsel %vm1121, %v1140, %v1141
        %v1143 = vrot.slane %v1074, 5
        %v1144 = vrot.slane %v1143, 4
        %v1145 = vrot.slane %v176, 5
        %v1146 = vsel %vm1121, %v1144, %v1145
        %v1147 = vrot.slane %v1145, 4
        %v1148 = vrot.slane %v220, 5
        %v1149 = vsel %vm1121, %v1147, %v1148
        %v1150 = vrot.slane %v1075, 5
        %v1151 = vrot.slane %v1150, 4
        %v1152 = vrot.slane %v178, 5
        %v1153 = vsel %vm1121, %v1151, %v1152
        %v1154 = vrot.slane %v1152, 4
        %v1155 = vrot.slane %v221, 5
        %v1156 = vsel %vm1121, %v1154, %v1155
        %v1157 = vrot.slane %v1076, 5
        %v1158 = vrot.slane %v1157, 4
        %v1159 = vrot.slane %v180, 5
        %v1160 = vsel %vm1121, %v1158, %v1159
        %v1161 = vrot.slane %v1159, 4
        %v1162 = vrot.slane %v222, 5
        %v1163 = vsel %vm1121, %v1161, %v1162
        %v1164 = vrot.slane %v1077, 5
        %v1165 = vrot.slane %v1164, 4
        %v1166 = vrot.slane %v182, 5
        %v1167 = vsel %vm1121, %v1165, %v1166
        %v1168 = vrot.slane %v1166, 4
        %v1169 = vrot.slane %v223, 5
        %v1170 = vsel %vm1121, %v1168, %v1169
        %v1171 = vrot.slane %v1078, 5
        %v1172 = vrot.slane %v1171, 4
        %v1173 = vrot.slane %v184, 5
        %v1174 = vsel %vm1121, %v1172, %v1173
        %v1175 = vrot.slane %v1173, 4
        %v1176 = vrot.slane %v224, 5
        %v1177 = vsel %vm1121, %v1175, %v1176
        %v1178 = vrot.slane %v1079, 5
        %v1179 = vrot.slane %v1178, 4
        %v1180 = vrot.slane %v186, 5
        %v1181 = vsel %vm1121, %v1179, %v1180
        %v1182 = vrot.slane %v1180, 4
        %v1183 = vrot.slane %v225, 5
        %v1184 = vsel %vm1121, %v1182, %v1183
        %v1185 = vrot.slane %v1080, 5
        %v1186 = vrot.slane %v1185, 4
        %v1187 = vrot.slane %v188, 5
        %v1188 = vsel %vm1121, %v1186, %v1187
        %v1189 = vrot.slane %v1187, 4
        %v1190 = vrot.slane %v226, 5
        %v1191 = vsel %vm1121, %v1189, %v1190
        %v1192 = vrot.slane %v1081, 5
        %v1193 = vrot.slane %v1192, 4
        %v1194 = vrot.slane %v190, 5
        %v1195 = vsel %vm1121, %v1193, %v1194
        %v1196 = vrot.slane %v1194, 4
        %v1197 = vrot.slane %v227, 5
        %v1198 = vsel %vm1121, %v1196, %v1197
        %v1199 = vrot.slane %v1082, 5
        %v1200 = vrot.slane %v1199, 4
        %v1201 = vrot.slane %v192, 5
        %v1202 = vsel %vm1121, %v1200, %v1201
        %v1203 = vrot.slane %v1201, 4
        %v1204 = vrot.slane %v228, 5
        %v1205 = vsel %vm1121, %v1203, %v1204
        %v1206 = vrot.slane %v1083, 5
        %v1207 = vrot.slane %v1206, 4
        %v1208 = vrot.slane %v194, 5
        %v1209 = vsel %vm1121, %v1207, %v1208
        %v1210 = vrot.slane %v1208, 4
        %v1211 = vrot.slane %v229, 5
        %v1212 = vsel %vm1121, %v1210, %v1211
        %v1213 = vrot.slane %v1084, 5
        %v1214 = vrot.slane %v1213, 4
        %v1215 = vrot.slane %v196, 5
        %v1216 = vsel %vm1121, %v1214, %v1215
        %v1217 = vrot.slane %v1215, 4
        %v1218 = vrot.slane %v230, 5
        %v1219 = vsel %vm1121, %v1217, %v1218
        %v1220 = vrot.slane %v1085, 5
        %v1221 = vrot.slane %v1220, 4
        %v1222 = vrot.slane %v198, 5
        %v1223 = vsel %vm1121, %v1221, %v1222
        %v1224 = vrot.slane %v1222, 4
        %v1225 = vrot.slane %v231, 5
        %v1226 = vsel %vm1121, %v1224, %v1225
        %v1227 = vrot.slane %v1086, 5
        %v1228 = vrot.slane %v1227, 4
        %v1229 = vrot.slane %v200, 5
        %v1230 = vsel %vm1121, %v1228, %v1229
        %v1231 = vrot.slane %v1229, 4
        %v1232 = vrot.slane %v232, 5
        %v1233 = vsel %vm1121, %v1231, %v1232
        %s1234 = scalar_lea.vmem %s1, 128
        %v1235 = vld [vmem:[%s1234] sm:$0xf]
        %v1236 = vld [vmem:[%s1234 + $0x4] sm:$0xf]
        %v1237 = vld [vmem:[%s1234 + $0x8] sm:$0xf]
        %v1238 = vld [vmem:[%s1234 + $0xc] sm:$0xf]
        %v1239 = vld [vmem:[%s1234 + $0x10] sm:$0xf]
        %v1240 = vld [vmem:[%s1234 + $0x14] sm:$0xf]
        %v1241 = vld [vmem:[%s1234 + $0x18] sm:$0xf]
        %v1242 = vld [vmem:[%s1234 + $0x1c] sm:$0xf]
        %v1243 = vld [vmem:[%s1234 + $0x20] sm:$0xf]
        %v1244 = vld [vmem:[%s1234 + $0x24] sm:$0xf]
        %v1245 = vld [vmem:[%s1234 + $0x28] sm:$0xf]
        %v1246 = vld [vmem:[%s1234 + $0x2c] sm:$0xf]
        %v1247 = vld [vmem:[%s1234 + $0x30] sm:$0xf]
        %v1248 = vld [vmem:[%s1234 + $0x34] sm:$0xf]
        %v1249 = vld [vmem:[%s1234 + $0x38] sm:$0xf]
        %v1250 = vld [vmem:[%s1234 + $0x3c] sm:$0xf]
        %v1251 = vunpack.c.l.b16 %v1125
        %v1252 = vunpack.c.l.b16 %v1128
        %v1253 = vunpack.c.l.b16 %v1132
        %v1254 = vunpack.c.l.b16 %v1135
        %v1255 = vunpack.c.l.b16 %v1139
        %v1256 = vunpack.c.l.b16 %v1142
        %v1257 = vunpack.c.l.b16 %v1146
        %v1258 = vunpack.c.l.b16 %v1149
        %v1259 = vunpack.c.l.b16 %v1153
        %v1260 = vunpack.c.l.b16 %v1156
        %v1261 = vunpack.c.l.b16 %v1160
        %v1262 = vunpack.c.l.b16 %v1163
        %v1263 = vunpack.c.l.b16 %v1167
        %v1264 = vunpack.c.l.b16 %v1170
        %v1265 = vunpack.c.l.b16 %v1174
        %v1266 = vunpack.c.l.b16 %v1177
        %v1267 = vunpack.c.l.b16 %v1181
        %v1268 = vunpack.c.l.b16 %v1184
        %v1269 = vunpack.c.l.b16 %v1188
        %v1270 = vunpack.c.l.b16 %v1191
        %v1271 = vunpack.c.l.b16 %v1195
        %v1272 = vunpack.c.l.b16 %v1198
        %v1273 = vunpack.c.l.b16 %v1202
        %v1274 = vunpack.c.l.b16 %v1205
        %v1275 = vunpack.c.l.b16 %v1209
        %v1276 = vunpack.c.l.b16 %v1212
        %v1277 = vunpack.c.l.b16 %v1216
        %v1278 = vunpack.c.l.b16 %v1219
        %v1279 = vunpack.c.l.b16 %v1223
        %v1280 = vunpack.c.l.b16 %v1226
        %v1281 = vunpack.c.l.b16 %v1230
        %v1282 = vunpack.c.l.b16 %v1233
        %v1283 = vpack.c.b16 %v1252, %v1251
        %v1284 = vpack.c.b16 %v1254, %v1253
        %v1285 = vpack.c.b16 %v1256, %v1255
        %v1286 = vpack.c.b16 %v1258, %v1257
        %v1287 = vpack.c.b16 %v1260, %v1259
        %v1288 = vpack.c.b16 %v1262, %v1261
        %v1289 = vpack.c.b16 %v1264, %v1263
        %v1290 = vpack.c.b16 %v1266, %v1265
        %v1291 = vpack.c.b16 %v1268, %v1267
        %v1292 = vpack.c.b16 %v1270, %v1269
        %v1293 = vpack.c.b16 %v1272, %v1271
        %v1294 = vpack.c.b16 %v1274, %v1273
        %v1295 = vpack.c.b16 %v1276, %v1275
        %v1296 = vpack.c.b16 %v1278, %v1277
        %v1297 = vpack.c.b16 %v1280, %v1279
        %v1298 = vpack.c.b16 %v1282, %v1281
        %v1331 = vunpack.c.l.b16 %v1235
        %v1332 = vunpack.c.l.b16 %v1236
        %v1333 = vunpack.c.l.b16 %v1237
        %v1334 = vunpack.c.l.b16 %v1238
        %v1335 = vunpack.c.l.b16 %v1239
        %v1336 = vunpack.c.l.b16 %v1240
        %v1337 = vunpack.c.l.b16 %v1241
        %v1338 = vunpack.c.l.b16 %v1242
        %v1339 = vunpack.c.l.b16 %v1243
        %v1340 = vunpack.c.l.b16 %v1244
        %v1341 = vunpack.c.l.b16 %v1245
        %v1342 = vunpack.c.l.b16 %v1246
        %v1343 = vunpack.c.l.b16 %v1247
        %v1344 = vunpack.c.l.b16 %v1248
        %v1345 = vunpack.c.l.b16 %v1249
        %v1346 = vunpack.c.l.b16 %v1250
        %v1347 = vpack.c.b16 %v1332, %v1331
        %v1348 = vpack.c.b16 %v1334, %v1333
        %v1349 = vpack.c.b16 %v1336, %v1335
        %v1350 = vpack.c.b16 %v1338, %v1337
        %v1351 = vpack.c.b16 %v1340, %v1339
        %v1352 = vpack.c.b16 %v1342, %v1341
        %v1353 = vpack.c.b16 %v1344, %v1343
        %v1354 = vpack.c.b16 %v1346, %v1345
        %1363 = vmatpush.bf16.msra.mxu0 %v1354
        %1364 = vmatpush.bf16.msra.mxu0 %v1353
        %1365 = vmatpush.bf16.msra.mxu0 %v1352
        %1366 = vmatpush.bf16.msra.mxu0 %v1351
        %1367 = vmatpush.bf16.msra.mxu0 %v1350
        %1368 = vmatpush.bf16.msra.mxu0 %v1349
        %1369 = vmatpush.bf16.msra.mxu0 %v1348
        %1370 = vmatpush.bf16.msra.mxu0 %v1347
        %1371 = vmatmul.bf16.gmra.mxu0 %v1283
        %v1372 = vpop.f32.mrf.mxu0
        %v1373 = vadd.f32 0.0, %v1372
        %v1374 = vpop.f32.mrf.mxu0
        %v1375 = vadd.f32 0.0, %v1374
        %1376 = vmatmul.bf16.gmra.mxu0 %v1284
        %v1377 = vpop.f32.mrf.mxu0
        %v1378 = vadd.f32 0.0, %v1377
        %v1379 = vpop.f32.mrf.mxu0
        %v1380 = vadd.f32 0.0, %v1379
        %1381 = vmatmul.bf16.gmra.mxu0 %v1285
        %v1382 = vpop.f32.mrf.mxu0
        %v1383 = vadd.f32 0.0, %v1382
        %v1384 = vpop.f32.mrf.mxu0
        %v1385 = vadd.f32 0.0, %v1384
        %1386 = vmatmul.bf16.gmra.mxu0 %v1286
        %v1387 = vpop.f32.mrf.mxu0
        %v1388 = vadd.f32 0.0, %v1387
        %v1389 = vpop.f32.mrf.mxu0
        %v1390 = vadd.f32 0.0, %v1389
        %1391 = vmatmul.bf16.gmra.mxu0 %v1287
        %v1392 = vpop.f32.mrf.mxu0
        %v1393 = vadd.f32 0.0, %v1392
        %v1394 = vpop.f32.mrf.mxu0
        %v1395 = vadd.f32 0.0, %v1394
        %1396 = vmatmul.bf16.gmra.mxu0 %v1288
        %v1397 = vpop.f32.mrf.mxu0
        %v1398 = vadd.f32 0.0, %v1397
        %v1399 = vpop.f32.mrf.mxu0
        %v1400 = vadd.f32 0.0, %v1399
        %1401 = vmatmul.bf16.gmra.mxu0 %v1289
        %v1402 = vpop.f32.mrf.mxu0
        %v1403 = vadd.f32 0.0, %v1402
        %v1404 = vpop.f32.mrf.mxu0
        %v1405 = vadd.f32 0.0, %v1404
        %1406 = vmatmul.bf16.gmra.mxu0 %v1290
        %v1407 = vpop.f32.mrf.mxu0
        %v1408 = vadd.f32 0.0, %v1407
        %v1409 = vpop.f32.mrf.mxu0
        %v1410 = vadd.f32 0.0, %v1409
        %1411 = vmatmul.bf16.gmra.mxu0 %v1291
        %v1412 = vpop.f32.mrf.mxu0
        %v1413 = vadd.f32 0.0, %v1412
        %v1414 = vpop.f32.mrf.mxu0
        %v1415 = vadd.f32 0.0, %v1414
        %1416 = vmatmul.bf16.gmra.mxu0 %v1292
        %v1417 = vpop.f32.mrf.mxu0
        %v1418 = vadd.f32 0.0, %v1417
        %v1419 = vpop.f32.mrf.mxu0
        %v1420 = vadd.f32 0.0, %v1419
        %1421 = vmatmul.bf16.gmra.mxu0 %v1293
        %v1422 = vpop.f32.mrf.mxu0
        %v1423 = vadd.f32 0.0, %v1422
        %v1424 = vpop.f32.mrf.mxu0
        %v1425 = vadd.f32 0.0, %v1424
        %1426 = vmatmul.bf16.gmra.mxu0 %v1294
        %v1427 = vpop.f32.mrf.mxu0
        %v1428 = vadd.f32 0.0, %v1427
        %v1429 = vpop.f32.mrf.mxu0
        %v1430 = vadd.f32 0.0, %v1429
        %1431 = vmatmul.bf16.gmra.mxu0 %v1295
        %v1432 = vpop.f32.mrf.mxu0
        %v1433 = vadd.f32 0.0, %v1432
        %v1434 = vpop.f32.mrf.mxu0
        %v1435 = vadd.f32 0.0, %v1434
        %1436 = vmatmul.bf16.gmra.mxu0 %v1296
        %v1437 = vpop.f32.mrf.mxu0
        %v1438 = vadd.f32 0.0, %v1437
        %v1439 = vpop.f32.mrf.mxu0
        %v1440 = vadd.f32 0.0, %v1439
        %1441 = vmatmul.bf16.gmra.mxu0 %v1297
        %v1442 = vpop.f32.mrf.mxu0
        %v1443 = vadd.f32 0.0, %v1442
        %v1444 = vpop.f32.mrf.mxu0
        %v1445 = vadd.f32 0.0, %v1444
        %1446 = vmatmul.bf16.gmra.mxu0 %v1298
        %v1447 = vpop.f32.mrf.mxu0
        %v1448 = vadd.f32 0.0, %v1447
        %v1449 = vpop.f32.mrf.mxu0
        %v1450 = vadd.f32 0.0, %v1449
        %1451 = vdwg.mxu0
        %v1452 = vadd.f32 %v992, %v1373
        %v1453 = vadd.f32 %v994, %v1375
        %v1454 = vadd.f32 %v997, %v1378
        %v1455 = vadd.f32 %v999, %v1380
        %v1456 = vadd.f32 %v1002, %v1383
        %v1457 = vadd.f32 %v1004, %v1385
        %v1458 = vadd.f32 %v1007, %v1388
        %v1459 = vadd.f32 %v1009, %v1390
        %v1460 = vadd.f32 %v1012, %v1393
        %v1461 = vadd.f32 %v1014, %v1395
        %v1462 = vadd.f32 %v1017, %v1398
        %v1463 = vadd.f32 %v1019, %v1400
        %v1464 = vadd.f32 %v1022, %v1403
        %v1465 = vadd.f32 %v1024, %v1405
        %v1466 = vadd.f32 %v1027, %v1408
        %v1467 = vadd.f32 %v1029, %v1410
        %v1468 = vadd.f32 %v1032, %v1413
        %v1469 = vadd.f32 %v1034, %v1415
        %v1470 = vadd.f32 %v1037, %v1418
        %v1471 = vadd.f32 %v1039, %v1420
        %v1472 = vadd.f32 %v1042, %v1423
        %v1473 = vadd.f32 %v1044, %v1425
        %v1474 = vadd.f32 %v1047, %v1428
        %v1475 = vadd.f32 %v1049, %v1430
        %v1476 = vadd.f32 %v1052, %v1433
        %v1477 = vadd.f32 %v1054, %v1435
        %v1478 = vadd.f32 %v1057, %v1438
        %v1479 = vadd.f32 %v1059, %v1440
        %v1480 = vadd.f32 %v1062, %v1443
        %v1481 = vadd.f32 %v1064, %v1445
        %v1482 = vadd.f32 %v1067, %v1448
        %v1483 = vadd.f32 %v1069, %v1450
        %s1484 = scalar_lea.vmem %s168, 12
        %v1485 = vld [vmem:[%s1484] sm:$0xf]
        %v1486 = vld [vmem:[%s1484 + $0x4] sm:$0xf]
        %v1487 = vld [vmem:[%s1484 + $0xc] sm:$0xf]
        %v1488 = vld [vmem:[%s1484 + $0x10] sm:$0xf]
        %v1489 = vld [vmem:[%s1484 + $0x18] sm:$0xf]
        %v1490 = vld [vmem:[%s1484 + $0x1c] sm:$0xf]
        %v1491 = vld [vmem:[%s1484 + $0x24] sm:$0xf]
        %v1492 = vld [vmem:[%s1484 + $0x28] sm:$0xf]
        %v1493 = vld [vmem:[%s1484 + $0x30] sm:$0xf]
        %v1494 = vld [vmem:[%s1484 + $0x34] sm:$0xf]
        %v1495 = vld [vmem:[%s1484 + $0x3c] sm:$0xf]
        %v1496 = vld [vmem:[%s1484 + $0x40] sm:$0xf]
        %v1497 = vld [vmem:[%s1484 + $0x48] sm:$0xf]
        %v1498 = vld [vmem:[%s1484 + $0x4c] sm:$0xf]
        %v1499 = vld [vmem:[%s1484 + $0x54] sm:$0xf]
        %v1500 = vld [vmem:[%s1484 + $0x58] sm:$0xf]
        %v1501 = vld [vmem:[%s1484 + $0x60] sm:$0xf]
        %v1502 = vld [vmem:[%s1484 + $0x64] sm:$0xf]
        %v1503 = vld [vmem:[%s1484 + $0x6c] sm:$0xf]
        %v1504 = vld [vmem:[%s1484 + $0x70] sm:$0xf]
        %v1505 = vld [vmem:[%s1484 + $0x78] sm:$0xf]
        %v1506 = vld [vmem:[%s1484 + $0x7c] sm:$0xf]
        %v1507 = vld [vmem:[%s1484 + $0x84] sm:$0xf]
        %v1508 = vld [vmem:[%s1484 + $0x88] sm:$0xf]
        %v1509 = vld [vmem:[%s1484 + $0x90] sm:$0xf]
        %v1510 = vld [vmem:[%s1484 + $0x94] sm:$0xf]
        %v1511 = vld [vmem:[%s1484 + $0x9c] sm:$0xf]
        %v1512 = vld [vmem:[%s1484 + $0xa0] sm:$0xf]
        %v1513 = vld [vmem:[%s1484 + $0xa8] sm:$0xf]
        %v1514 = vld [vmem:[%s1484 + $0xac] sm:$0xf]
        %v1515 = vld [vmem:[%s1484 + $0xb4] sm:$0xf]
        %v1516 = vld [vmem:[%s1484 + $0xb8] sm:$0xf]
        %s1517 = scalar_lea.vmem %s1, 192
        %v1518 = vld [vmem:[%s1517] sm:$0xf]
        %v1519 = vld [vmem:[%s1517 + $0x4] sm:$0xf]
        %v1520 = vld [vmem:[%s1517 + $0x8] sm:$0xf]
        %v1521 = vld [vmem:[%s1517 + $0xc] sm:$0xf]
        %v1522 = vld [vmem:[%s1517 + $0x10] sm:$0xf]
        %v1523 = vld [vmem:[%s1517 + $0x14] sm:$0xf]
        %v1524 = vld [vmem:[%s1517 + $0x18] sm:$0xf]
        %v1525 = vld [vmem:[%s1517 + $0x1c] sm:$0xf]
        %v1526 = vld [vmem:[%s1517 + $0x20] sm:$0xf]
        %v1527 = vld [vmem:[%s1517 + $0x24] sm:$0xf]
        %v1528 = vld [vmem:[%s1517 + $0x28] sm:$0xf]
        %v1529 = vld [vmem:[%s1517 + $0x2c] sm:$0xf]
        %v1530 = vld [vmem:[%s1517 + $0x30] sm:$0xf]
        %v1531 = vld [vmem:[%s1517 + $0x34] sm:$0xf]
        %v1532 = vld [vmem:[%s1517 + $0x38] sm:$0xf]
        %v1533 = vld [vmem:[%s1517 + $0x3c] sm:$0xf]
        %v1566 = vunpack.c.l.b16 %v1485
        %v1567 = vunpack.c.l.b16 %v1486
        %v1568 = vunpack.c.l.b16 %v1487
        %v1569 = vunpack.c.l.b16 %v1488
        %v1570 = vunpack.c.l.b16 %v1489
        %v1571 = vunpack.c.l.b16 %v1490
        %v1572 = vunpack.c.l.b16 %v1491
        %v1573 = vunpack.c.l.b16 %v1492
        %v1574 = vunpack.c.l.b16 %v1493
        %v1575 = vunpack.c.l.b16 %v1494
        %v1576 = vunpack.c.l.b16 %v1495
        %v1577 = vunpack.c.l.b16 %v1496
        %v1578 = vunpack.c.l.b16 %v1497
        %v1579 = vunpack.c.l.b16 %v1498
        %v1580 = vunpack.c.l.b16 %v1499
        %v1581 = vunpack.c.l.b16 %v1500
        %v1582 = vunpack.c.l.b16 %v1501
        %v1583 = vunpack.c.l.b16 %v1502
        %v1584 = vunpack.c.l.b16 %v1503
        %v1585 = vunpack.c.l.b16 %v1504
        %v1586 = vunpack.c.l.b16 %v1505
        %v1587 = vunpack.c.l.b16 %v1506
        %v1588 = vunpack.c.l.b16 %v1507
        %v1589 = vunpack.c.l.b16 %v1508
        %v1590 = vunpack.c.l.b16 %v1509
        %v1591 = vunpack.c.l.b16 %v1510
        %v1592 = vunpack.c.l.b16 %v1511
        %v1593 = vunpack.c.l.b16 %v1512
        %v1594 = vunpack.c.l.b16 %v1513
        %v1595 = vunpack.c.l.b16 %v1514
        %v1596 = vunpack.c.l.b16 %v1515
        %v1597 = vunpack.c.l.b16 %v1516
        %v1598 = vpack.c.b16 %v1567, %v1566
        %v1599 = vpack.c.b16 %v1569, %v1568
        %v1600 = vpack.c.b16 %v1571, %v1570
        %v1601 = vpack.c.b16 %v1573, %v1572
        %v1602 = vpack.c.b16 %v1575, %v1574
        %v1603 = vpack.c.b16 %v1577, %v1576
        %v1604 = vpack.c.b16 %v1579, %v1578
        %v1605 = vpack.c.b16 %v1581, %v1580
        %v1606 = vpack.c.b16 %v1583, %v1582
        %v1607 = vpack.c.b16 %v1585, %v1584
        %v1608 = vpack.c.b16 %v1587, %v1586
        %v1609 = vpack.c.b16 %v1589, %v1588
        %v1610 = vpack.c.b16 %v1591, %v1590
        %v1611 = vpack.c.b16 %v1593, %v1592
        %v1612 = vpack.c.b16 %v1595, %v1594
        %v1613 = vpack.c.b16 %v1597, %v1596
        %v1646 = vunpack.c.l.b16 %v1518
        %v1647 = vunpack.c.l.b16 %v1519
        %v1648 = vunpack.c.l.b16 %v1520
        %v1649 = vunpack.c.l.b16 %v1521
        %v1650 = vunpack.c.l.b16 %v1522
        %v1651 = vunpack.c.l.b16 %v1523
        %v1652 = vunpack.c.l.b16 %v1524
        %v1653 = vunpack.c.l.b16 %v1525
        %v1654 = vunpack.c.l.b16 %v1526
        %v1655 = vunpack.c.l.b16 %v1527
        %v1656 = vunpack.c.l.b16 %v1528
        %v1657 = vunpack.c.l.b16 %v1529
        %v1658 = vunpack.c.l.b16 %v1530
        %v1659 = vunpack.c.l.b16 %v1531
        %v1660 = vunpack.c.l.b16 %v1532
        %v1661 = vunpack.c.l.b16 %v1533
        %v1662 = vpack.c.b16 %v1647, %v1646
        %v1663 = vpack.c.b16 %v1649, %v1648
        %v1664 = vpack.c.b16 %v1651, %v1650
        %v1665 = vpack.c.b16 %v1653, %v1652
        %v1666 = vpack.c.b16 %v1655, %v1654
        %v1667 = vpack.c.b16 %v1657, %v1656
        %v1668 = vpack.c.b16 %v1659, %v1658
        %v1669 = vpack.c.b16 %v1661, %v1660
        %1678 = vmatpush.bf16.msra.mxu0 %v1669
        %1679 = vmatpush.bf16.msra.mxu0 %v1668
        %1680 = vmatpush.bf16.msra.mxu0 %v1667
        %1681 = vmatpush.bf16.msra.mxu0 %v1666
        %1682 = vmatpush.bf16.msra.mxu0 %v1665
        %1683 = vmatpush.bf16.msra.mxu0 %v1664
        %1684 = vmatpush.bf16.msra.mxu0 %v1663
        %1685 = vmatpush.bf16.msra.mxu0 %v1662
        %1686 = vmatmul.bf16.gmra.mxu0 %v1598
        %v1687 = vpop.f32.mrf.mxu0
        %v1688 = vadd.f32 0.0, %v1687
        %v1689 = vpop.f32.mrf.mxu0
        %v1690 = vadd.f32 0.0, %v1689
        %1691 = vmatmul.bf16.gmra.mxu0 %v1599
        %v1692 = vpop.f32.mrf.mxu0
        %v1693 = vadd.f32 0.0, %v1692
        %v1694 = vpop.f32.mrf.mxu0
        %v1695 = vadd.f32 0.0, %v1694
        %1696 = vmatmul.bf16.gmra.mxu0 %v1600
        %v1697 = vpop.f32.mrf.mxu0
        %v1698 = vadd.f32 0.0, %v1697
        %v1699 = vpop.f32.mrf.mxu0
        %v1700 = vadd.f32 0.0, %v1699
        %1701 = vmatmul.bf16.gmra.mxu0 %v1601
        %v1702 = vpop.f32.mrf.mxu0
        %v1703 = vadd.f32 0.0, %v1702
        %v1704 = vpop.f32.mrf.mxu0
        %v1705 = vadd.f32 0.0, %v1704
        %1706 = vmatmul.bf16.gmra.mxu0 %v1602
        %v1707 = vpop.f32.mrf.mxu0
        %v1708 = vadd.f32 0.0, %v1707
        %v1709 = vpop.f32.mrf.mxu0
        %v1710 = vadd.f32 0.0, %v1709
        %1711 = vmatmul.bf16.gmra.mxu0 %v1603
        %v1712 = vpop.f32.mrf.mxu0
        %v1713 = vadd.f32 0.0, %v1712
        %v1714 = vpop.f32.mrf.mxu0
        %v1715 = vadd.f32 0.0, %v1714
        %1716 = vmatmul.bf16.gmra.mxu0 %v1604
        %v1717 = vpop.f32.mrf.mxu0
        %v1718 = vadd.f32 0.0, %v1717
        %v1719 = vpop.f32.mrf.mxu0
        %v1720 = vadd.f32 0.0, %v1719
        %1721 = vmatmul.bf16.gmra.mxu0 %v1605
        %v1722 = vpop.f32.mrf.mxu0
        %v1723 = vadd.f32 0.0, %v1722
        %v1724 = vpop.f32.mrf.mxu0
        %v1725 = vadd.f32 0.0, %v1724
        %1726 = vmatmul.bf16.gmra.mxu0 %v1606
        %v1727 = vpop.f32.mrf.mxu0
        %v1728 = vadd.f32 0.0, %v1727
        %v1729 = vpop.f32.mrf.mxu0
        %v1730 = vadd.f32 0.0, %v1729
        %1731 = vmatmul.bf16.gmra.mxu0 %v1607
        %v1732 = vpop.f32.mrf.mxu0
        %v1733 = vadd.f32 0.0, %v1732
        %v1734 = vpop.f32.mrf.mxu0
        %v1735 = vadd.f32 0.0, %v1734
        %1736 = vmatmul.bf16.gmra.mxu0 %v1608
        %v1737 = vpop.f32.mrf.mxu0
        %v1738 = vadd.f32 0.0, %v1737
        %v1739 = vpop.f32.mrf.mxu0
        %v1740 = vadd.f32 0.0, %v1739
        %1741 = vmatmul.bf16.gmra.mxu0 %v1609
        %v1742 = vpop.f32.mrf.mxu0
        %v1743 = vadd.f32 0.0, %v1742
        %v1744 = vpop.f32.mrf.mxu0
        %v1745 = vadd.f32 0.0, %v1744
        %1746 = vmatmul.bf16.gmra.mxu0 %v1610
        %v1747 = vpop.f32.mrf.mxu0
        %v1748 = vadd.f32 0.0, %v1747
        %v1749 = vpop.f32.mrf.mxu0
        %v1750 = vadd.f32 0.0, %v1749
        %1751 = vmatmul.bf16.gmra.mxu0 %v1611
        %v1752 = vpop.f32.mrf.mxu0
        %v1753 = vadd.f32 0.0, %v1752
        %v1754 = vpop.f32.mrf.mxu0
        %v1755 = vadd.f32 0.0, %v1754
        %1756 = vmatmul.bf16.gmra.mxu0 %v1612
        %v1757 = vpop.f32.mrf.mxu0
        %v1758 = vadd.f32 0.0, %v1757
        %v1759 = vpop.f32.mrf.mxu0
        %v1760 = vadd.f32 0.0, %v1759
        %1761 = vmatmul.bf16.gmra.mxu0 %v1613
        %v1762 = vpop.f32.mrf.mxu0
        %v1763 = vadd.f32 0.0, %v1762
        %v1764 = vpop.f32.mrf.mxu0
        %v1765 = vadd.f32 0.0, %v1764
        %1766 = vdwg.mxu0
        %v1767 = vadd.f32 %v1452, %v1688
        %v1768 = vadd.f32 %v1453, %v1690
        %v1769 = vadd.f32 %v1454, %v1693
        %v1770 = vadd.f32 %v1455, %v1695
        %v1771 = vadd.f32 %v1456, %v1698
        %v1772 = vadd.f32 %v1457, %v1700
        %v1773 = vadd.f32 %v1458, %v1703
        %v1774 = vadd.f32 %v1459, %v1705
        %v1775 = vadd.f32 %v1460, %v1708
        %v1776 = vadd.f32 %v1461, %v1710
        %v1777 = vadd.f32 %v1462, %v1713
        %v1778 = vadd.f32 %v1463, %v1715
        %v1779 = vadd.f32 %v1464, %v1718
        %v1780 = vadd.f32 %v1465, %v1720
        %v1781 = vadd.f32 %v1466, %v1723
        %v1782 = vadd.f32 %v1467, %v1725
        %v1783 = vadd.f32 %v1468, %v1728
        %v1784 = vadd.f32 %v1469, %v1730
        %v1785 = vadd.f32 %v1470, %v1733
        %v1786 = vadd.f32 %v1471, %v1735
        %v1787 = vadd.f32 %v1472, %v1738
        %v1788 = vadd.f32 %v1473, %v1740
        %v1789 = vadd.f32 %v1474, %v1743
        %v1790 = vadd.f32 %v1475, %v1745
        %v1791 = vadd.f32 %v1476, %v1748
        %v1792 = vadd.f32 %v1477, %v1750
        %v1793 = vadd.f32 %v1478, %v1753
        %v1794 = vadd.f32 %v1479, %v1755
        %v1795 = vadd.f32 %v1480, %v1758
        %v1796 = vadd.f32 %v1481, %v1760
        %v1797 = vadd.f32 %v1482, %v1763
        %v1798 = vadd.f32 %v1483, %v1765
        %v1799 = vld [vmem:[%s1484] sm:$0xf]
        %v1800 = vld [vmem:[%s1484 + $0x4] sm:$0xf]
        %v1801 = vld [vmem:[%s1484 + $0x8] sm:$0x1]
        %v1802 = vld [vmem:[%s1484 + $0xc] sm:$0xf]
        %v1803 = vld [vmem:[%s1484 + $0x10] sm:$0xf]
        %v1804 = vld [vmem:[%s1484 + $0x14] sm:$0x1]
        %v1805 = vld [vmem:[%s1484 + $0x18] sm:$0xf]
        %v1806 = vld [vmem:[%s1484 + $0x1c] sm:$0xf]
        %v1807 = vld [vmem:[%s1484 + $0x20] sm:$0x1]
        %v1808 = vld [vmem:[%s1484 + $0x24] sm:$0xf]
        %v1809 = vld [vmem:[%s1484 + $0x28] sm:$0xf]
        %v1810 = vld [vmem:[%s1484 + $0x2c] sm:$0x1]
        %v1811 = vld [vmem:[%s1484 + $0x30] sm:$0xf]
        %v1812 = vld [vmem:[%s1484 + $0x34] sm:$0xf]
        %v1813 = vld [vmem:[%s1484 + $0x38] sm:$0x1]
        %v1814 = vld [vmem:[%s1484 + $0x3c] sm:$0xf]
        %v1815 = vld [vmem:[%s1484 + $0x40] sm:$0xf]
        %v1816 = vld [vmem:[%s1484 + $0x44] sm:$0x1]
        %v1817 = vld [vmem:[%s1484 + $0x48] sm:$0xf]
        %v1818 = vld [vmem:[%s1484 + $0x4c] sm:$0xf]
        %v1819 = vld [vmem:[%s1484 + $0x50] sm:$0x1]
        %v1820 = vld [vmem:[%s1484 + $0x54] sm:$0xf]
        %v1821 = vld [vmem:[%s1484 + $0x58] sm:$0xf]
        %v1822 = vld [vmem:[%s1484 + $0x5c] sm:$0x1]
        %v1823 = vld [vmem:[%s1484 + $0x60] sm:$0xf]
        %v1824 = vld [vmem:[%s1484 + $0x64] sm:$0xf]
        %v1825 = vld [vmem:[%s1484 + $0x68] sm:$0x1]
        %v1826 = vld [vmem:[%s1484 + $0x6c] sm:$0xf]
        %v1827 = vld [vmem:[%s1484 + $0x70] sm:$0xf]
        %v1828 = vld [vmem:[%s1484 + $0x74] sm:$0x1]
        %v1829 = vld [vmem:[%s1484 + $0x78] sm:$0xf]
        %v1830 = vld [vmem:[%s1484 + $0x7c] sm:$0xf]
        %v1831 = vld [vmem:[%s1484 + $0x80] sm:$0x1]
        %v1832 = vld [vmem:[%s1484 + $0x84] sm:$0xf]
        %v1833 = vld [vmem:[%s1484 + $0x88] sm:$0xf]
        %v1834 = vld [vmem:[%s1484 + $0x8c] sm:$0x1]
        %v1835 = vld [vmem:[%s1484 + $0x90] sm:$0xf]
        %v1836 = vld [vmem:[%s1484 + $0x94] sm:$0xf]
        %v1837 = vld [vmem:[%s1484 + $0x98] sm:$0x1]
        %v1838 = vld [vmem:[%s1484 + $0x9c] sm:$0xf]
        %v1839 = vld [vmem:[%s1484 + $0xa0] sm:$0xf]
        %v1840 = vld [vmem:[%s1484 + $0xa4] sm:$0x1]
        %v1841 = vld [vmem:[%s1484 + $0xa8] sm:$0xf]
        %v1842 = vld [vmem:[%s1484 + $0xac] sm:$0xf]
        %v1843 = vld [vmem:[%s1484 + $0xb0] sm:$0x1]
        %v1844 = vld [vmem:[%s1484 + $0xb4] sm:$0xf]
        %v1845 = vld [vmem:[%s1484 + $0xb8] sm:$0xf]
        %v1846 = vld [vmem:[%s1484 + $0xbc] sm:$0x1]
        %v1848 = vshrl.u32 %v1799, 16
        %v1850 = vrot.slane %v1848, 4
        %v1851 = vshll.u32 %v1799, 16
        %v1853 = vrot.slane %v1851, 5
        %v1854 = vor.u32 %v1850, %v1853
        %v1855 = vrot.slane %v1854, 4
        %v1857 = vshll.u32 %v1800, 16
        %v1859 = vrot.slane %v1857, 5
        %v1860 = vsel %vm235, %v1855, %v1859
        %v1861 = vshrl.u32 %v1800, 16
        %v1863 = vrot.slane %v1861, 4
        %v1864 = vor.u32 %v1863, %v1859
        %v1865 = vrot.slane %v1864, 4
        %v1867 = vshll.u32 %v1801, 16
        %v1869 = vrot.slane %v1867, 5
        %v1870 = vsel %vm235, %v1865, %v1869
        %v1872 = vshrl.u32 %v1802, 16
        %v1874 = vrot.slane %v1872, 4
        %v1875 = vshll.u32 %v1802, 16
        %v1877 = vrot.slane %v1875, 5
        %v1878 = vor.u32 %v1874, %v1877
        %v1879 = vrot.slane %v1878, 4
        %v1881 = vshll.u32 %v1803, 16
        %v1883 = vrot.slane %v1881, 5
        %v1884 = vsel %vm235, %v1879, %v1883
        %v1885 = vshrl.u32 %v1803, 16
        %v1887 = vrot.slane %v1885, 4
        %v1888 = vor.u32 %v1887, %v1883
        %v1889 = vrot.slane %v1888, 4
        %v1891 = vshll.u32 %v1804, 16
        %v1893 = vrot.slane %v1891, 5
        %v1894 = vsel %vm235, %v1889, %v1893
        %v1896 = vshrl.u32 %v1805, 16
        %v1898 = vrot.slane %v1896, 4
        %v1899 = vshll.u32 %v1805, 16
        %v1901 = vrot.slane %v1899, 5
        %v1902 = vor.u32 %v1898, %v1901
        %v1903 = vrot.slane %v1902, 4
        %v1905 = vshll.u32 %v1806, 16
        %v1907 = vrot.slane %v1905, 5
        %v1908 = vsel %vm235, %v1903, %v1907
        %v1909 = vshrl.u32 %v1806, 16
        %v1911 = vrot.slane %v1909, 4
        %v1912 = vor.u32 %v1911, %v1907
        %v1913 = vrot.slane %v1912, 4
        %v1915 = vshll.u32 %v1807, 16
        %v1917 = vrot.slane %v1915, 5
        %v1918 = vsel %vm235, %v1913, %v1917
        %v1920 = vshrl.u32 %v1808, 16
        %v1922 = vrot.slane %v1920, 4
        %v1923 = vshll.u32 %v1808, 16
        %v1925 = vrot.slane %v1923, 5
        %v1926 = vor.u32 %v1922, %v1925
        %v1927 = vrot.slane %v1926, 4
        %v1929 = vshll.u32 %v1809, 16
        %v1931 = vrot.slane %v1929, 5
        %v1932 = vsel %vm235, %v1927, %v1931
        %v1933 = vshrl.u32 %v1809, 16
        %v1935 = vrot.slane %v1933, 4
        %v1936 = vor.u32 %v1935, %v1931
        %v1937 = vrot.slane %v1936, 4
        %v1939 = vshll.u32 %v1810, 16
        %v1941 = vrot.slane %v1939, 5
        %v1942 = vsel %vm235, %v1937, %v1941
        %v1944 = vshrl.u32 %v1811, 16
        %v1946 = vrot.slane %v1944, 4
        %v1947 = vshll.u32 %v1811, 16
        %v1949 = vrot.slane %v1947, 5
        %v1950 = vor.u32 %v1946, %v1949
        %v1951 = vrot.slane %v1950, 4
        %v1953 = vshll.u32 %v1812, 16
        %v1955 = vrot.slane %v1953, 5
        %v1956 = vsel %vm235, %v1951, %v1955
        %v1957 = vshrl.u32 %v1812, 16
        %v1959 = vrot.slane %v1957, 4
        %v1960 = vor.u32 %v1959, %v1955
        %v1961 = vrot.slane %v1960, 4
        %v1963 = vshll.u32 %v1813, 16
        %v1965 = vrot.slane %v1963, 5
        %v1966 = vsel %vm235, %v1961, %v1965
        %v1968 = vshrl.u32 %v1814, 16
        %v1970 = vrot.slane %v1968, 4
        %v1971 = vshll.u32 %v1814, 16
        %v1973 = vrot.slane %v1971, 5
        %v1974 = vor.u32 %v1970, %v1973
        %v1975 = vrot.slane %v1974, 4
        %v1977 = vshll.u32 %v1815, 16
        %v1979 = vrot.slane %v1977, 5
        %v1980 = vsel %vm235, %v1975, %v1979
        %v1981 = vshrl.u32 %v1815, 16
        %v1983 = vrot.slane %v1981, 4
        %v1984 = vor.u32 %v1983, %v1979
        %v1985 = vrot.slane %v1984, 4
        %v1987 = vshll.u32 %v1816, 16
        %v1989 = vrot.slane %v1987, 5
        %v1990 = vsel %vm235, %v1985, %v1989
        %v1992 = vshrl.u32 %v1817, 16
        %v1994 = vrot.slane %v1992, 4
        %v1995 = vshll.u32 %v1817, 16
        %v1997 = vrot.slane %v1995, 5
        %v1998 = vor.u32 %v1994, %v1997
        %v1999 = vrot.slane %v1998, 4
        %v2001 = vshll.u32 %v1818, 16
        %v2003 = vrot.slane %v2001, 5
        %v2004 = vsel %vm235, %v1999, %v2003
        %v2005 = vshrl.u32 %v1818, 16
        %v2007 = vrot.slane %v2005, 4
        %v2008 = vor.u32 %v2007, %v2003
        %v2009 = vrot.slane %v2008, 4
        %v2011 = vshll.u32 %v1819, 16
        %v2013 = vrot.slane %v2011, 5
        %v2014 = vsel %vm235, %v2009, %v2013
        %v2016 = vshrl.u32 %v1820, 16
        %v2018 = vrot.slane %v2016, 4
        %v2019 = vshll.u32 %v1820, 16
        %v2021 = vrot.slane %v2019, 5
        %v2022 = vor.u32 %v2018, %v2021
        %v2023 = vrot.slane %v2022, 4
        %v2025 = vshll.u32 %v1821, 16
        %v2027 = vrot.slane %v2025, 5
        %v2028 = vsel %vm235, %v2023, %v2027
        %v2029 = vshrl.u32 %v1821, 16
        %v2031 = vrot.slane %v2029, 4
        %v2032 = vor.u32 %v2031, %v2027
        %v2033 = vrot.slane %v2032, 4
        %v2035 = vshll.u32 %v1822, 16
        %v2037 = vrot.slane %v2035, 5
        %v2038 = vsel %vm235, %v2033, %v2037
        %v2040 = vshrl.u32 %v1823, 16
        %v2042 = vrot.slane %v2040, 4
        %v2043 = vshll.u32 %v1823, 16
        %v2045 = vrot.slane %v2043, 5
        %v2046 = vor.u32 %v2042, %v2045
        %v2047 = vrot.slane %v2046, 4
        %v2049 = vshll.u32 %v1824, 16
        %v2051 = vrot.slane %v2049, 5
        %v2052 = vsel %vm235, %v2047, %v2051
        %v2053 = vshrl.u32 %v1824, 16
        %v2055 = vrot.slane %v2053, 4
        %v2056 = vor.u32 %v2055, %v2051
        %v2057 = vrot.slane %v2056, 4
        %v2059 = vshll.u32 %v1825, 16
        %v2061 = vrot.slane %v2059, 5
        %v2062 = vsel %vm235, %v2057, %v2061
        %v2064 = vshrl.u32 %v1826, 16
        %v2066 = vrot.slane %v2064, 4
        %v2067 = vshll.u32 %v1826, 16
        %v2069 = vrot.slane %v2067, 5
        %v2070 = vor.u32 %v2066, %v2069
        %v2071 = vrot.slane %v2070, 4
        %v2073 = vshll.u32 %v1827, 16
        %v2075 = vrot.slane %v2073, 5
        %v2076 = vsel %vm235, %v2071, %v2075
        %v2077 = vshrl.u32 %v1827, 16
        %v2079 = vrot.slane %v2077, 4
        %v2080 = vor.u32 %v2079, %v2075
        %v2081 = vrot.slane %v2080, 4
        %v2083 = vshll.u32 %v1828, 16
        %v2085 = vrot.slane %v2083, 5
        %v2086 = vsel %vm235, %v2081, %v2085
        %v2088 = vshrl.u32 %v1829, 16
        %v2090 = vrot.slane %v2088, 4
        %v2091 = vshll.u32 %v1829, 16
        %v2093 = vrot.slane %v2091, 5
        %v2094 = vor.u32 %v2090, %v2093
        %v2095 = vrot.slane %v2094, 4
        %v2097 = vshll.u32 %v1830, 16
        %v2099 = vrot.slane %v2097, 5
        %v2100 = vsel %vm235, %v2095, %v2099
        %v2101 = vshrl.u32 %v1830, 16
        %v2103 = vrot.slane %v2101, 4
        %v2104 = vor.u32 %v2103, %v2099
        %v2105 = vrot.slane %v2104, 4
        %v2107 = vshll.u32 %v1831, 16
        %v2109 = vrot.slane %v2107, 5
        %v2110 = vsel %vm235, %v2105, %v2109
        %v2112 = vshrl.u32 %v1832, 16
        %v2114 = vrot.slane %v2112, 4
        %v2115 = vshll.u32 %v1832, 16
        %v2117 = vrot.slane %v2115, 5
        %v2118 = vor.u32 %v2114, %v2117
        %v2119 = vrot.slane %v2118, 4
        %v2121 = vshll.u32 %v1833, 16
        %v2123 = vrot.slane %v2121, 5
        %v2124 = vsel %vm235, %v2119, %v2123
        %v2125 = vshrl.u32 %v1833, 16
        %v2127 = vrot.slane %v2125, 4
        %v2128 = vor.u32 %v2127, %v2123
        %v2129 = vrot.slane %v2128, 4
        %v2131 = vshll.u32 %v1834, 16
        %v2133 = vrot.slane %v2131, 5
        %v2134 = vsel %vm235, %v2129, %v2133
        %v2136 = vshrl.u32 %v1835, 16
        %v2138 = vrot.slane %v2136, 4
        %v2139 = vshll.u32 %v1835, 16
        %v2141 = vrot.slane %v2139, 5
        %v2142 = vor.u32 %v2138, %v2141
        %v2143 = vrot.slane %v2142, 4
        %v2145 = vshll.u32 %v1836, 16
        %v2147 = vrot.slane %v2145, 5
        %v2148 = vsel %vm235, %v2143, %v2147
        %v2149 = vshrl.u32 %v1836, 16
        %v2151 = vrot.slane %v2149, 4
        %v2152 = vor.u32 %v2151, %v2147
        %v2153 = vrot.slane %v2152, 4
        %v2155 = vshll.u32 %v1837, 16
        %v2157 = vrot.slane %v2155, 5
        %v2158 = vsel %vm235, %v2153, %v2157
        %v2160 = vshrl.u32 %v1838, 16
        %v2162 = vrot.slane %v2160, 4
        %v2163 = vshll.u32 %v1838, 16
        %v2165 = vrot.slane %v2163, 5
        %v2166 = vor.u32 %v2162, %v2165
        %v2167 = vrot.slane %v2166, 4
        %v2169 = vshll.u32 %v1839, 16
        %v2171 = vrot.slane %v2169, 5
        %v2172 = vsel %vm235, %v2167, %v2171
        %v2173 = vshrl.u32 %v1839, 16
        %v2175 = vrot.slane %v2173, 4
        %v2176 = vor.u32 %v2175, %v2171
        %v2177 = vrot.slane %v2176, 4
        %v2179 = vshll.u32 %v1840, 16
        %v2181 = vrot.slane %v2179, 5
        %v2182 = vsel %vm235, %v2177, %v2181
        %v2184 = vshrl.u32 %v1841, 16
        %v2186 = vrot.slane %v2184, 4
        %v2187 = vshll.u32 %v1841, 16
        %v2189 = vrot.slane %v2187, 5
        %v2190 = vor.u32 %v2186, %v2189
        %v2191 = vrot.slane %v2190, 4
        %v2193 = vshll.u32 %v1842, 16
        %v2195 = vrot.slane %v2193, 5
        %v2196 = vsel %vm235, %v2191, %v2195
        %v2197 = vshrl.u32 %v1842, 16
        %v2199 = vrot.slane %v2197, 4
        %v2200 = vor.u32 %v2199, %v2195
        %v2201 = vrot.slane %v2200, 4
        %v2203 = vshll.u32 %v1843, 16
        %v2205 = vrot.slane %v2203, 5
        %v2206 = vsel %vm235, %v2201, %v2205
        %v2208 = vshrl.u32 %v1844, 16
        %v2210 = vrot.slane %v2208, 4
        %v2211 = vshll.u32 %v1844, 16
        %v2213 = vrot.slane %v2211, 5
        %v2214 = vor.u32 %v2210, %v2213
        %v2215 = vrot.slane %v2214, 4
        %v2217 = vshll.u32 %v1845, 16
        %v2219 = vrot.slane %v2217, 5
        %v2220 = vsel %vm235, %v2215, %v2219
        %v2221 = vshrl.u32 %v1845, 16
        %v2223 = vrot.slane %v2221, 4
        %v2224 = vor.u32 %v2223, %v2219
        %v2225 = vrot.slane %v2224, 4
        %v2227 = vshll.u32 %v1846, 16
        %v2229 = vrot.slane %v2227, 5
        %v2230 = vsel %vm235, %v2225, %v2229
        %s2231 = scalar_lea.vmem %s1, 256
        %v2232 = vld [vmem:[%s2231] sm:$0xf]
        %v2233 = vld [vmem:[%s2231 + $0x4] sm:$0xf]
        %v2234 = vld [vmem:[%s2231 + $0x8] sm:$0xf]
        %v2235 = vld [vmem:[%s2231 + $0xc] sm:$0xf]
        %v2236 = vld [vmem:[%s2231 + $0x10] sm:$0xf]
        %v2237 = vld [vmem:[%s2231 + $0x14] sm:$0xf]
        %v2238 = vld [vmem:[%s2231 + $0x18] sm:$0xf]
        %v2239 = vld [vmem:[%s2231 + $0x1c] sm:$0xf]
        %v2240 = vld [vmem:[%s2231 + $0x20] sm:$0xf]
        %v2241 = vld [vmem:[%s2231 + $0x24] sm:$0xf]
        %v2242 = vld [vmem:[%s2231 + $0x28] sm:$0xf]
        %v2243 = vld [vmem:[%s2231 + $0x2c] sm:$0xf]
        %v2244 = vld [vmem:[%s2231 + $0x30] sm:$0xf]
        %v2245 = vld [vmem:[%s2231 + $0x34] sm:$0xf]
        %v2246 = vld [vmem:[%s2231 + $0x38] sm:$0xf]
        %v2247 = vld [vmem:[%s2231 + $0x3c] sm:$0xf]
        %v2248 = vunpack.c.l.b16 %v1860
        %v2249 = vunpack.c.l.b16 %v1870
        %v2250 = vunpack.c.l.b16 %v1884
        %v2251 = vunpack.c.l.b16 %v1894
        %v2252 = vunpack.c.l.b16 %v1908
        %v2253 = vunpack.c.l.b16 %v1918
        %v2254 = vunpack.c.l.b16 %v1932
        %v2255 = vunpack.c.l.b16 %v1942
        %v2256 = vunpack.c.l.b16 %v1956
        %v2257 = vunpack.c.l.b16 %v1966
        %v2258 = vunpack.c.l.b16 %v1980
        %v2259 = vunpack.c.l.b16 %v1990
        %v2260 = vunpack.c.l.b16 %v2004
        %v2261 = vunpack.c.l.b16 %v2014
        %v2262 = vunpack.c.l.b16 %v2028
        %v2263 = vunpack.c.l.b16 %v2038
        %v2264 = vunpack.c.l.b16 %v2052
        %v2265 = vunpack.c.l.b16 %v2062
        %v2266 = vunpack.c.l.b16 %v2076
        %v2267 = vunpack.c.l.b16 %v2086
        %v2268 = vunpack.c.l.b16 %v2100
        %v2269 = vunpack.c.l.b16 %v2110
        %v2270 = vunpack.c.l.b16 %v2124
        %v2271 = vunpack.c.l.b16 %v2134
        %v2272 = vunpack.c.l.b16 %v2148
        %v2273 = vunpack.c.l.b16 %v2158
        %v2274 = vunpack.c.l.b16 %v2172
        %v2275 = vunpack.c.l.b16 %v2182
        %v2276 = vunpack.c.l.b16 %v2196
        %v2277 = vunpack.c.l.b16 %v2206
        %v2278 = vunpack.c.l.b16 %v2220
        %v2279 = vunpack.c.l.b16 %v2230
        %v2280 = vpack.c.b16 %v2249, %v2248
        %v2281 = vpack.c.b16 %v2251, %v2250
        %v2282 = vpack.c.b16 %v2253, %v2252
        %v2283 = vpack.c.b16 %v2255, %v2254
        %v2284 = vpack.c.b16 %v2257, %v2256
        %v2285 = vpack.c.b16 %v2259, %v2258
        %v2286 = vpack.c.b16 %v2261, %v2260
        %v2287 = vpack.c.b16 %v2263, %v2262
        %v2288 = vpack.c.b16 %v2265, %v2264
        %v2289 = vpack.c.b16 %v2267, %v2266
        %v2290 = vpack.c.b16 %v2269, %v2268
        %v2291 = vpack.c.b16 %v2271, %v2270
        %v2292 = vpack.c.b16 %v2273, %v2272
        %v2293 = vpack.c.b16 %v2275, %v2274
        %v2294 = vpack.c.b16 %v2277, %v2276
        %v2295 = vpack.c.b16 %v2279, %v2278
        %v2328 = vunpack.c.l.b16 %v2232
        %v2329 = vunpack.c.l.b16 %v2233
        %v2330 = vunpack.c.l.b16 %v2234
        %v2331 = vunpack.c.l.b16 %v2235
        %v2332 = vunpack.c.l.b16 %v2236
        %v2333 = vunpack.c.l.b16 %v2237
        %v2334 = vunpack.c.l.b16 %v2238
        %v2335 = vunpack.c.l.b16 %v2239
        %v2336 = vunpack.c.l.b16 %v2240
        %v2337 = vunpack.c.l.b16 %v2241
        %v2338 = vunpack.c.l.b16 %v2242
        %v2339 = vunpack.c.l.b16 %v2243
        %v2340 = vunpack.c.l.b16 %v2244
        %v2341 = vunpack.c.l.b16 %v2245
        %v2342 = vunpack.c.l.b16 %v2246
        %v2343 = vunpack.c.l.b16 %v2247
        %v2344 = vpack.c.b16 %v2329, %v2328
        %v2345 = vpack.c.b16 %v2331, %v2330
        %v2346 = vpack.c.b16 %v2333, %v2332
        %v2347 = vpack.c.b16 %v2335, %v2334
        %v2348 = vpack.c.b16 %v2337, %v2336
        %v2349 = vpack.c.b16 %v2339, %v2338
        %v2350 = vpack.c.b16 %v2341, %v2340
        %v2351 = vpack.c.b16 %v2343, %v2342
        %2360 = vmatpush.bf16.msra.mxu0 %v2351
        %2361 = vmatpush.bf16.msra.mxu0 %v2350
        %2362 = vmatpush.bf16.msra.mxu0 %v2349
        %2363 = vmatpush.bf16.msra.mxu0 %v2348
        %2364 = vmatpush.bf16.msra.mxu0 %v2347
        %2365 = vmatpush.bf16.msra.mxu0 %v2346
        %2366 = vmatpush.bf16.msra.mxu0 %v2345
        %2367 = vmatpush.bf16.msra.mxu0 %v2344
        %2368 = vmatmul.bf16.gmra.mxu0 %v2280
        %v2369 = vpop.f32.mrf.mxu0
        %v2370 = vadd.f32 0.0, %v2369
        %v2371 = vpop.f32.mrf.mxu0
        %v2372 = vadd.f32 0.0, %v2371
        %2373 = vmatmul.bf16.gmra.mxu0 %v2281
        %v2374 = vpop.f32.mrf.mxu0
        %v2375 = vadd.f32 0.0, %v2374
        %v2376 = vpop.f32.mrf.mxu0
        %v2377 = vadd.f32 0.0, %v2376
        %2378 = vmatmul.bf16.gmra.mxu0 %v2282
        %v2379 = vpop.f32.mrf.mxu0
        %v2380 = vadd.f32 0.0, %v2379
        %v2381 = vpop.f32.mrf.mxu0
        %v2382 = vadd.f32 0.0, %v2381
        %2383 = vmatmul.bf16.gmra.mxu0 %v2283
        %v2384 = vpop.f32.mrf.mxu0
        %v2385 = vadd.f32 0.0, %v2384
        %v2386 = vpop.f32.mrf.mxu0
        %v2387 = vadd.f32 0.0, %v2386
        %2388 = vmatmul.bf16.gmra.mxu0 %v2284
        %v2389 = vpop.f32.mrf.mxu0
        %v2390 = vadd.f32 0.0, %v2389
        %v2391 = vpop.f32.mrf.mxu0
        %v2392 = vadd.f32 0.0, %v2391
        %2393 = vmatmul.bf16.gmra.mxu0 %v2285
        %v2394 = vpop.f32.mrf.mxu0
        %v2395 = vadd.f32 0.0, %v2394
        %v2396 = vpop.f32.mrf.mxu0
        %v2397 = vadd.f32 0.0, %v2396
        %2398 = vmatmul.bf16.gmra.mxu0 %v2286
        %v2399 = vpop.f32.mrf.mxu0
        %v2400 = vadd.f32 0.0, %v2399
        %v2401 = vpop.f32.mrf.mxu0
        %v2402 = vadd.f32 0.0, %v2401
        %2403 = vmatmul.bf16.gmra.mxu0 %v2287
        %v2404 = vpop.f32.mrf.mxu0
        %v2405 = vadd.f32 0.0, %v2404
        %v2406 = vpop.f32.mrf.mxu0
        %v2407 = vadd.f32 0.0, %v2406
        %2408 = vmatmul.bf16.gmra.mxu0 %v2288
        %v2409 = vpop.f32.mrf.mxu0
        %v2410 = vadd.f32 0.0, %v2409
        %v2411 = vpop.f32.mrf.mxu0
        %v2412 = vadd.f32 0.0, %v2411
        %2413 = vmatmul.bf16.gmra.mxu0 %v2289
        %v2414 = vpop.f32.mrf.mxu0
        %v2415 = vadd.f32 0.0, %v2414
        %v2416 = vpop.f32.mrf.mxu0
        %v2417 = vadd.f32 0.0, %v2416
        %2418 = vmatmul.bf16.gmra.mxu0 %v2290
        %v2419 = vpop.f32.mrf.mxu0
        %v2420 = vadd.f32 0.0, %v2419
        %v2421 = vpop.f32.mrf.mxu0
        %v2422 = vadd.f32 0.0, %v2421
        %2423 = vmatmul.bf16.gmra.mxu0 %v2291
        %v2424 = vpop.f32.mrf.mxu0
        %v2425 = vadd.f32 0.0, %v2424
        %v2426 = vpop.f32.mrf.mxu0
        %v2427 = vadd.f32 0.0, %v2426
        %2428 = vmatmul.bf16.gmra.mxu0 %v2292
        %v2429 = vpop.f32.mrf.mxu0
        %v2430 = vadd.f32 0.0, %v2429
        %v2431 = vpop.f32.mrf.mxu0
        %v2432 = vadd.f32 0.0, %v2431
        %2433 = vmatmul.bf16.gmra.mxu0 %v2293
        %v2434 = vpop.f32.mrf.mxu0
        %v2435 = vadd.f32 0.0, %v2434
        %v2436 = vpop.f32.mrf.mxu0
        %v2437 = vadd.f32 0.0, %v2436
        %2438 = vmatmul.bf16.gmra.mxu0 %v2294
        %v2439 = vpop.f32.mrf.mxu0
        %v2440 = vadd.f32 0.0, %v2439
        %v2441 = vpop.f32.mrf.mxu0
        %v2442 = vadd.f32 0.0, %v2441
        %2443 = vmatmul.bf16.gmra.mxu0 %v2295
        %v2444 = vpop.f32.mrf.mxu0
        %v2445 = vadd.f32 0.0, %v2444
        %v2446 = vpop.f32.mrf.mxu0
        %v2447 = vadd.f32 0.0, %v2446
        %2448 = vdwg.mxu0
        %v2449 = vadd.f32 %v1767, %v2370
        %v2450 = vadd.f32 %v1768, %v2372
        %v2451 = vadd.f32 %v1769, %v2375
        %v2452 = vadd.f32 %v1770, %v2377
        %v2453 = vadd.f32 %v1771, %v2380
        %v2454 = vadd.f32 %v1772, %v2382
        %v2455 = vadd.f32 %v1773, %v2385
        %v2456 = vadd.f32 %v1774, %v2387
        %v2457 = vadd.f32 %v1775, %v2390
        %v2458 = vadd.f32 %v1776, %v2392
        %v2459 = vadd.f32 %v1777, %v2395
        %v2460 = vadd.f32 %v1778, %v2397
        %v2461 = vadd.f32 %v1779, %v2400
        %v2462 = vadd.f32 %v1780, %v2402
        %v2463 = vadd.f32 %v1781, %v2405
        %v2464 = vadd.f32 %v1782, %v2407
        %v2465 = vadd.f32 %v1783, %v2410
        %v2466 = vadd.f32 %v1784, %v2412
        %v2467 = vadd.f32 %v1785, %v2415
        %v2468 = vadd.f32 %v1786, %v2417
        %v2469 = vadd.f32 %v1787, %v2420
        %v2470 = vadd.f32 %v1788, %v2422
        %v2471 = vadd.f32 %v1789, %v2425
        %v2472 = vadd.f32 %v1790, %v2427
        %v2473 = vadd.f32 %v1791, %v2430
        %v2474 = vadd.f32 %v1792, %v2432
        %v2475 = vadd.f32 %v1793, %v2435
        %v2476 = vadd.f32 %v1794, %v2437
        %v2477 = vadd.f32 %v1795, %v2440
        %v2478 = vadd.f32 %v1796, %v2442
        %v2479 = vadd.f32 %v1797, %v2445
        %v2480 = vadd.f32 %v1798, %v2447
        %v2481 = vld [vmem:[%s1484] sm:$0xe]
        %v2482 = vld [vmem:[%s1484 + $0xc] sm:$0xe]
        %v2483 = vld [vmem:[%s1484 + $0x18] sm:$0xe]
        %v2484 = vld [vmem:[%s1484 + $0x24] sm:$0xe]
        %v2485 = vld [vmem:[%s1484 + $0x30] sm:$0xe]
        %v2486 = vld [vmem:[%s1484 + $0x3c] sm:$0xe]
        %v2487 = vld [vmem:[%s1484 + $0x48] sm:$0xe]
        %v2488 = vld [vmem:[%s1484 + $0x54] sm:$0xe]
        %v2489 = vld [vmem:[%s1484 + $0x60] sm:$0xe]
        %v2490 = vld [vmem:[%s1484 + $0x6c] sm:$0xe]
        %v2491 = vld [vmem:[%s1484 + $0x78] sm:$0xe]
        %v2492 = vld [vmem:[%s1484 + $0x84] sm:$0xe]
        %v2493 = vld [vmem:[%s1484 + $0x90] sm:$0xe]
        %v2494 = vld [vmem:[%s1484 + $0x9c] sm:$0xe]
        %v2495 = vld [vmem:[%s1484 + $0xa8] sm:$0xe]
        %v2496 = vld [vmem:[%s1484 + $0xb4] sm:$0xe]
        %v2545 = vrot.slane %v2481, 5
        %v2546 = vrot.slane %v2545, 4
        %v2547 = vrot.slane %v1800, 5
        %v2548 = vsel %vm1121, %v2546, %v2547
        %v2549 = vrot.slane %v2547, 4
        %v2550 = vrot.slane %v1801, 5
        %v2551 = vsel %vm1121, %v2549, %v2550
        %v2552 = vrot.slane %v2482, 5
        %v2553 = vrot.slane %v2552, 4
        %v2554 = vrot.slane %v1803, 5
        %v2555 = vsel %vm1121, %v2553, %v2554
        %v2556 = vrot.slane %v2554, 4
        %v2557 = vrot.slane %v1804, 5
        %v2558 = vsel %vm1121, %v2556, %v2557
        %v2559 = vrot.slane %v2483, 5
        %v2560 = vrot.slane %v2559, 4
        %v2561 = vrot.slane %v1806, 5
        %v2562 = vsel %vm1121, %v2560, %v2561
        %v2563 = vrot.slane %v2561, 4
        %v2564 = vrot.slane %v1807, 5
        %v2565 = vsel %vm1121, %v2563, %v2564
        %v2566 = vrot.slane %v2484, 5
        %v2567 = vrot.slane %v2566, 4
        %v2568 = vrot.slane %v1809, 5
        %v2569 = vsel %vm1121, %v2567, %v2568
        %v2570 = vrot.slane %v2568, 4
        %v2571 = vrot.slane %v1810, 5
        %v2572 = vsel %vm1121, %v2570, %v2571
        %v2573 = vrot.slane %v2485, 5
        %v2574 = vrot.slane %v2573, 4
        %v2575 = vrot.slane %v1812, 5
        %v2576 = vsel %vm1121, %v2574, %v2575
        %v2577 = vrot.slane %v2575, 4
        %v2578 = vrot.slane %v1813, 5
        %v2579 = vsel %vm1121, %v2577, %v2578
        %v2580 = vrot.slane %v2486, 5
        %v2581 = vrot.slane %v2580, 4
        %v2582 = vrot.slane %v1815, 5
        %v2583 = vsel %vm1121, %v2581, %v2582
        %v2584 = vrot.slane %v2582, 4
        %v2585 = vrot.slane %v1816, 5
        %v2586 = vsel %vm1121, %v2584, %v2585
        %v2587 = vrot.slane %v2487, 5
        %v2588 = vrot.slane %v2587, 4
        %v2589 = vrot.slane %v1818, 5
        %v2590 = vsel %vm1121, %v2588, %v2589
        %v2591 = vrot.slane %v2589, 4
        %v2592 = vrot.slane %v1819, 5
        %v2593 = vsel %vm1121, %v2591, %v2592
        %v2594 = vrot.slane %v2488, 5
        %v2595 = vrot.slane %v2594, 4
        %v2596 = vrot.slane %v1821, 5
        %v2597 = vsel %vm1121, %v2595, %v2596
        %v2598 = vrot.slane %v2596, 4
        %v2599 = vrot.slane %v1822, 5
        %v2600 = vsel %vm1121, %v2598, %v2599
        %v2601 = vrot.slane %v2489, 5
        %v2602 = vrot.slane %v2601, 4
        %v2603 = vrot.slane %v1824, 5
        %v2604 = vsel %vm1121, %v2602, %v2603
        %v2605 = vrot.slane %v2603, 4
        %v2606 = vrot.slane %v1825, 5
        %v2607 = vsel %vm1121, %v2605, %v2606
        %v2608 = vrot.slane %v2490, 5
        %v2609 = vrot.slane %v2608, 4
        %v2610 = vrot.slane %v1827, 5
        %v2611 = vsel %vm1121, %v2609, %v2610
        %v2612 = vrot.slane %v2610, 4
        %v2613 = vrot.slane %v1828, 5
        %v2614 = vsel %vm1121, %v2612, %v2613
        %v2615 = vrot.slane %v2491, 5
        %v2616 = vrot.slane %v2615, 4
        %v2617 = vrot.slane %v1830, 5
        %v2618 = vsel %vm1121, %v2616, %v2617
        %v2619 = vrot.slane %v2617, 4
        %v2620 = vrot.slane %v1831, 5
        %v2621 = vsel %vm1121, %v2619, %v2620
        %v2622 = vrot.slane %v2492, 5
        %v2623 = vrot.slane %v2622, 4
        %v2624 = vrot.slane %v1833, 5
        %v2625 = vsel %vm1121, %v2623, %v2624
        %v2626 = vrot.slane %v2624, 4
        %v2627 = vrot.slane %v1834, 5
        %v2628 = vsel %vm1121, %v2626, %v2627
        %v2629 = vrot.slane %v2493, 5
        %v2630 = vrot.slane %v2629, 4
        %v2631 = vrot.slane %v1836, 5
        %v2632 = vsel %vm1121, %v2630, %v2631
        %v2633 = vrot.slane %v2631, 4
        %v2634 = vrot.slane %v1837, 5
        %v2635 = vsel %vm1121, %v2633, %v2634
        %v2636 = vrot.slane %v2494, 5
        %v2637 = vrot.slane %v2636, 4
        %v2638 = vrot.slane %v1839, 5
        %v2639 = vsel %vm1121, %v2637, %v2638
        %v2640 = vrot.slane %v2638, 4
        %v2641 = vrot.slane %v1840, 5
        %v2642 = vsel %vm1121, %v2640, %v2641
        %v2643 = vrot.slane %v2495, 5
        %v2644 = vrot.slane %v2643, 4
        %v2645 = vrot.slane %v1842, 5
        %v2646 = vsel %vm1121, %v2644, %v2645
        %v2647 = vrot.slane %v2645, 4
        %v2648 = vrot.slane %v1843, 5
        %v2649 = vsel %vm1121, %v2647, %v2648
        %v2650 = vrot.slane %v2496, 5
        %v2651 = vrot.slane %v2650, 4
        %v2652 = vrot.slane %v1845, 5
        %v2653 = vsel %vm1121, %v2651, %v2652
        %v2654 = vrot.slane %v2652, 4
        %v2655 = vrot.slane %v1846, 5
        %v2656 = vsel %vm1121, %v2654, %v2655
        %s2657 = scalar_lea.vmem %s1, 320
        %v2658 = vld [vmem:[%s2657] sm:$0xf]
        %v2659 = vld [vmem:[%s2657 + $0x4] sm:$0xf]
        %v2660 = vld [vmem:[%s2657 + $0x8] sm:$0xf]
        %v2661 = vld [vmem:[%s2657 + $0xc] sm:$0xf]
        %v2662 = vld [vmem:[%s2657 + $0x10] sm:$0xf]
        %v2663 = vld [vmem:[%s2657 + $0x14] sm:$0xf]
        %v2664 = vld [vmem:[%s2657 + $0x18] sm:$0xf]
        %v2665 = vld [vmem:[%s2657 + $0x1c] sm:$0xf]
        %v2666 = vld [vmem:[%s2657 + $0x20] sm:$0xf]
        %v2667 = vld [vmem:[%s2657 + $0x24] sm:$0xf]
        %v2668 = vld [vmem:[%s2657 + $0x28] sm:$0xf]
        %v2669 = vld [vmem:[%s2657 + $0x2c] sm:$0xf]
        %v2670 = vld [vmem:[%s2657 + $0x30] sm:$0xf]
        %v2671 = vld [vmem:[%s2657 + $0x34] sm:$0xf]
        %v2672 = vld [vmem:[%s2657 + $0x38] sm:$0xf]
        %v2673 = vld [vmem:[%s2657 + $0x3c] sm:$0xf]
        %v2674 = vunpack.c.l.b16 %v2548
        %v2675 = vunpack.c.l.b16 %v2551
        %v2676 = vunpack.c.l.b16 %v2555
        %v2677 = vunpack.c.l.b16 %v2558
        %v2678 = vunpack.c.l.b16 %v2562
        %v2679 = vunpack.c.l.b16 %v2565
        %v2680 = vunpack.c.l.b16 %v2569
        %v2681 = vunpack.c.l.b16 %v2572
        %v2682 = vunpack.c.l.b16 %v2576
        %v2683 = vunpack.c.l.b16 %v2579
        %v2684 = vunpack.c.l.b16 %v2583
        %v2685 = vunpack.c.l.b16 %v2586
        %v2686 = vunpack.c.l.b16 %v2590
        %v2687 = vunpack.c.l.b16 %v2593
        %v2688 = vunpack.c.l.b16 %v2597
        %v2689 = vunpack.c.l.b16 %v2600
        %v2690 = vunpack.c.l.b16 %v2604
        %v2691 = vunpack.c.l.b16 %v2607
        %v2692 = vunpack.c.l.b16 %v2611
        %v2693 = vunpack.c.l.b16 %v2614
        %v2694 = vunpack.c.l.b16 %v2618
        %v2695 = vunpack.c.l.b16 %v2621
        %v2696 = vunpack.c.l.b16 %v2625
        %v2697 = vunpack.c.l.b16 %v2628
        %v2698 = vunpack.c.l.b16 %v2632
        %v2699 = vunpack.c.l.b16 %v2635
        %v2700 = vunpack.c.l.b16 %v2639
        %v2701 = vunpack.c.l.b16 %v2642
        %v2702 = vunpack.c.l.b16 %v2646
        %v2703 = vunpack.c.l.b16 %v2649
        %v2704 = vunpack.c.l.b16 %v2653
        %v2705 = vunpack.c.l.b16 %v2656
        %v2706 = vpack.c.b16 %v2675, %v2674
        %v2707 = vpack.c.b16 %v2677, %v2676
        %v2708 = vpack.c.b16 %v2679, %v2678
        %v2709 = vpack.c.b16 %v2681, %v2680
        %v2710 = vpack.c.b16 %v2683, %v2682
        %v2711 = vpack.c.b16 %v2685, %v2684
        %v2712 = vpack.c.b16 %v2687, %v2686
        %v2713 = vpack.c.b16 %v2689, %v2688
        %v2714 = vpack.c.b16 %v2691, %v2690
        %v2715 = vpack.c.b16 %v2693, %v2692
        %v2716 = vpack.c.b16 %v2695, %v2694
        %v2717 = vpack.c.b16 %v2697, %v2696
        %v2718 = vpack.c.b16 %v2699, %v2698
        %v2719 = vpack.c.b16 %v2701, %v2700
        %v2720 = vpack.c.b16 %v2703, %v2702
        %v2721 = vpack.c.b16 %v2705, %v2704
        %v2754 = vunpack.c.l.b16 %v2658
        %v2755 = vunpack.c.l.b16 %v2659
        %v2756 = vunpack.c.l.b16 %v2660
        %v2757 = vunpack.c.l.b16 %v2661
        %v2758 = vunpack.c.l.b16 %v2662
        %v2759 = vunpack.c.l.b16 %v2663
        %v2760 = vunpack.c.l.b16 %v2664
        %v2761 = vunpack.c.l.b16 %v2665
        %v2762 = vunpack.c.l.b16 %v2666
        %v2763 = vunpack.c.l.b16 %v2667
        %v2764 = vunpack.c.l.b16 %v2668
        %v2765 = vunpack.c.l.b16 %v2669
        %v2766 = vunpack.c.l.b16 %v2670
        %v2767 = vunpack.c.l.b16 %v2671
        %v2768 = vunpack.c.l.b16 %v2672
        %v2769 = vunpack.c.l.b16 %v2673
        %v2770 = vpack.c.b16 %v2755, %v2754
        %v2771 = vpack.c.b16 %v2757, %v2756
        %v2772 = vpack.c.b16 %v2759, %v2758
        %v2773 = vpack.c.b16 %v2761, %v2760
        %v2774 = vpack.c.b16 %v2763, %v2762
        %v2775 = vpack.c.b16 %v2765, %v2764
        %v2776 = vpack.c.b16 %v2767, %v2766
        %v2777 = vpack.c.b16 %v2769, %v2768
        %2786 = vmatpush.bf16.msra.mxu0 %v2777
        %2787 = vmatpush.bf16.msra.mxu0 %v2776
        %2788 = vmatpush.bf16.msra.mxu0 %v2775
        %2789 = vmatpush.bf16.msra.mxu0 %v2774
        %2790 = vmatpush.bf16.msra.mxu0 %v2773
        %2791 = vmatpush.bf16.msra.mxu0 %v2772
        %2792 = vmatpush.bf16.msra.mxu0 %v2771
        %2793 = vmatpush.bf16.msra.mxu0 %v2770
        %2794 = vmatmul.bf16.gmra.mxu0 %v2706
        %v2795 = vpop.f32.mrf.mxu0
        %v2796 = vadd.f32 0.0, %v2795
        %v2797 = vpop.f32.mrf.mxu0
        %v2798 = vadd.f32 0.0, %v2797
        %2799 = vmatmul.bf16.gmra.mxu0 %v2707
        %v2800 = vpop.f32.mrf.mxu0
        %v2801 = vadd.f32 0.0, %v2800
        %v2802 = vpop.f32.mrf.mxu0
        %v2803 = vadd.f32 0.0, %v2802
        %2804 = vmatmul.bf16.gmra.mxu0 %v2708
        %v2805 = vpop.f32.mrf.mxu0
        %v2806 = vadd.f32 0.0, %v2805
        %v2807 = vpop.f32.mrf.mxu0
        %v2808 = vadd.f32 0.0, %v2807
        %2809 = vmatmul.bf16.gmra.mxu0 %v2709
        %v2810 = vpop.f32.mrf.mxu0
        %v2811 = vadd.f32 0.0, %v2810
        %v2812 = vpop.f32.mrf.mxu0
        %v2813 = vadd.f32 0.0, %v2812
        %2814 = vmatmul.bf16.gmra.mxu0 %v2710
        %v2815 = vpop.f32.mrf.mxu0
        %v2816 = vadd.f32 0.0, %v2815
        %v2817 = vpop.f32.mrf.mxu0
        %v2818 = vadd.f32 0.0, %v2817
        %2819 = vmatmul.bf16.gmra.mxu0 %v2711
        %v2820 = vpop.f32.mrf.mxu0
        %v2821 = vadd.f32 0.0, %v2820
        %v2822 = vpop.f32.mrf.mxu0
        %v2823 = vadd.f32 0.0, %v2822
        %2824 = vmatmul.bf16.gmra.mxu0 %v2712
        %v2825 = vpop.f32.mrf.mxu0
        %v2826 = vadd.f32 0.0, %v2825
        %v2827 = vpop.f32.mrf.mxu0
        %v2828 = vadd.f32 0.0, %v2827
        %2829 = vmatmul.bf16.gmra.mxu0 %v2713
        %v2830 = vpop.f32.mrf.mxu0
        %v2831 = vadd.f32 0.0, %v2830
        %v2832 = vpop.f32.mrf.mxu0
        %v2833 = vadd.f32 0.0, %v2832
        %2834 = vmatmul.bf16.gmra.mxu0 %v2714
        %v2835 = vpop.f32.mrf.mxu0
        %v2836 = vadd.f32 0.0, %v2835
        %v2837 = vpop.f32.mrf.mxu0
        %v2838 = vadd.f32 0.0, %v2837
        %2839 = vmatmul.bf16.gmra.mxu0 %v2715
        %v2840 = vpop.f32.mrf.mxu0
        %v2841 = vadd.f32 0.0, %v2840
        %v2842 = vpop.f32.mrf.mxu0
        %v2843 = vadd.f32 0.0, %v2842
        %2844 = vmatmul.bf16.gmra.mxu0 %v2716
        %v2845 = vpop.f32.mrf.mxu0
        %v2846 = vadd.f32 0.0, %v2845
        %v2847 = vpop.f32.mrf.mxu0
        %v2848 = vadd.f32 0.0, %v2847
        %2849 = vmatmul.bf16.gmra.mxu0 %v2717
        %v2850 = vpop.f32.mrf.mxu0
        %v2851 = vadd.f32 0.0, %v2850
        %v2852 = vpop.f32.mrf.mxu0
        %v2853 = vadd.f32 0.0, %v2852
        %2854 = vmatmul.bf16.gmra.mxu0 %v2718
        %v2855 = vpop.f32.mrf.mxu0
        %v2856 = vadd.f32 0.0, %v2855
        %v2857 = vpop.f32.mrf.mxu0
        %v2858 = vadd.f32 0.0, %v2857
        %2859 = vmatmul.bf16.gmra.mxu0 %v2719
        %v2860 = vpop.f32.mrf.mxu0
        %v2861 = vadd.f32 0.0, %v2860
        %v2862 = vpop.f32.mrf.mxu0
        %v2863 = vadd.f32 0.0, %v2862
        %2864 = vmatmul.bf16.gmra.mxu0 %v2720
        %v2865 = vpop.f32.mrf.mxu0
        %v2866 = vadd.f32 0.0, %v2865
        %v2867 = vpop.f32.mrf.mxu0
        %v2868 = vadd.f32 0.0, %v2867
        %2869 = vmatmul.bf16.gmra.mxu0 %v2721
        %v2870 = vpop.f32.mrf.mxu0
        %v2871 = vadd.f32 0.0, %v2870
        %v2872 = vpop.f32.mrf.mxu0
        %v2873 = vadd.f32 0.0, %v2872
        %2874 = vdwg.mxu0
        %v2875 = vadd.f32 %v2449, %v2796
        %v2876 = vadd.f32 %v2450, %v2798
        %v2877 = vadd.f32 %v2451, %v2801
        %v2878 = vadd.f32 %v2452, %v2803
        %v2879 = vadd.f32 %v2453, %v2806
        %v2880 = vadd.f32 %v2454, %v2808
        %v2881 = vadd.f32 %v2455, %v2811
        %v2882 = vadd.f32 %v2456, %v2813
        %v2883 = vadd.f32 %v2457, %v2816
        %v2884 = vadd.f32 %v2458, %v2818
        %v2885 = vadd.f32 %v2459, %v2821
        %v2886 = vadd.f32 %v2460, %v2823
        %v2887 = vadd.f32 %v2461, %v2826
        %v2888 = vadd.f32 %v2462, %v2828
        %v2889 = vadd.f32 %v2463, %v2831
        %v2890 = vadd.f32 %v2464, %v2833
        %v2891 = vadd.f32 %v2465, %v2836
        %v2892 = vadd.f32 %v2466, %v2838
        %v2893 = vadd.f32 %v2467, %v2841
        %v2894 = vadd.f32 %v2468, %v2843
        %v2895 = vadd.f32 %v2469, %v2846
        %v2896 = vadd.f32 %v2470, %v2848
        %v2897 = vadd.f32 %v2471, %v2851
        %v2898 = vadd.f32 %v2472, %v2853
        %v2899 = vadd.f32 %v2473, %v2856
        %v2900 = vadd.f32 %v2474, %v2858
        %v2901 = vadd.f32 %v2475, %v2861
        %v2902 = vadd.f32 %v2476, %v2863
        %v2903 = vadd.f32 %v2477, %v2866
        %v2904 = vadd.f32 %v2478, %v2868
        %v2905 = vadd.f32 %v2479, %v2871
        %v2906 = vadd.f32 %v2480, %v2873
        %s2907 = scalar_lea.vmem %s168, 24
        %v2908 = vld [vmem:[%s2907] sm:$0xf]
        %v2909 = vld [vmem:[%s2907 + $0x4] sm:$0xf]
        %v2910 = vld [vmem:[%s2907 + $0xc] sm:$0xf]
        %v2911 = vld [vmem:[%s2907 + $0x10] sm:$0xf]
        %v2912 = vld [vmem:[%s2907 + $0x18] sm:$0xf]
        %v2913 = vld [vmem:[%s2907 + $0x1c] sm:$0xf]
        %v2914 = vld [vmem:[%s2907 + $0x24] sm:$0xf]
        %v2915 = vld [vmem:[%s2907 + $0x28] sm:$0xf]
        %v2916 = vld [vmem:[%s2907 + $0x30] sm:$0xf]
        %v2917 = vld [vmem:[%s2907 + $0x34] sm:$0xf]
        %v2918 = vld [vmem:[%s2907 + $0x3c] sm:$0xf]
        %v2919 = vld [vmem:[%s2907 + $0x40] sm:$0xf]
        %v2920 = vld [vmem:[%s2907 + $0x48] sm:$0xf]
        %v2921 = vld [vmem:[%s2907 + $0x4c] sm:$0xf]
        %v2922 = vld [vmem:[%s2907 + $0x54] sm:$0xf]
        %v2923 = vld [vmem:[%s2907 + $0x58] sm:$0xf]
        %v2924 = vld [vmem:[%s2907 + $0x60] sm:$0xf]
        %v2925 = vld [vmem:[%s2907 + $0x64] sm:$0xf]
        %v2926 = vld [vmem:[%s2907 + $0x6c] sm:$0xf]
        %v2927 = vld [vmem:[%s2907 + $0x70] sm:$0xf]
        %v2928 = vld [vmem:[%s2907 + $0x78] sm:$0xf]
        %v2929 = vld [vmem:[%s2907 + $0x7c] sm:$0xf]
        %v2930 = vld [vmem:[%s2907 + $0x84] sm:$0xf]
        %v2931 = vld [vmem:[%s2907 + $0x88] sm:$0xf]
        %v2932 = vld [vmem:[%s2907 + $0x90] sm:$0xf]
        %v2933 = vld [vmem:[%s2907 + $0x94] sm:$0xf]
        %v2934 = vld [vmem:[%s2907 + $0x9c] sm:$0xf]
        %v2935 = vld [vmem:[%s2907 + $0xa0] sm:$0xf]
        %v2936 = vld [vmem:[%s2907 + $0xa8] sm:$0xf]
        %v2937 = vld [vmem:[%s2907 + $0xac] sm:$0xf]
        %v2938 = vld [vmem:[%s2907 + $0xb4] sm:$0xf]
        %v2939 = vld [vmem:[%s2907 + $0xb8] sm:$0xf]
        %s2940 = scalar_lea.vmem %s1, 384
        %v2941 = vld [vmem:[%s2940] sm:$0xf]
        %v2942 = vld [vmem:[%s2940 + $0x4] sm:$0xf]
        %v2943 = vld [vmem:[%s2940 + $0x8] sm:$0xf]
        %v2944 = vld [vmem:[%s2940 + $0xc] sm:$0xf]
        %v2945 = vld [vmem:[%s2940 + $0x10] sm:$0xf]
        %v2946 = vld [vmem:[%s2940 + $0x14] sm:$0xf]
        %v2947 = vld [vmem:[%s2940 + $0x18] sm:$0xf]
        %v2948 = vld [vmem:[%s2940 + $0x1c] sm:$0xf]
        %v2949 = vld [vmem:[%s2940 + $0x20] sm:$0xf]
        %v2950 = vld [vmem:[%s2940 + $0x24] sm:$0xf]
        %v2951 = vld [vmem:[%s2940 + $0x28] sm:$0xf]
        %v2952 = vld [vmem:[%s2940 + $0x2c] sm:$0xf]
        %v2953 = vld [vmem:[%s2940 + $0x30] sm:$0xf]
        %v2954 = vld [vmem:[%s2940 + $0x34] sm:$0xf]
        %v2955 = vld [vmem:[%s2940 + $0x38] sm:$0xf]
        %v2956 = vld [vmem:[%s2940 + $0x3c] sm:$0xf]
        %v2989 = vunpack.c.l.b16 %v2908
        %v2990 = vunpack.c.l.b16 %v2909
        %v2991 = vunpack.c.l.b16 %v2910
        %v2992 = vunpack.c.l.b16 %v2911
        %v2993 = vunpack.c.l.b16 %v2912
        %v2994 = vunpack.c.l.b16 %v2913
        %v2995 = vunpack.c.l.b16 %v2914
        %v2996 = vunpack.c.l.b16 %v2915
        %v2997 = vunpack.c.l.b16 %v2916
        %v2998 = vunpack.c.l.b16 %v2917
        %v2999 = vunpack.c.l.b16 %v2918
        %v3000 = vunpack.c.l.b16 %v2919
        %v3001 = vunpack.c.l.b16 %v2920
        %v3002 = vunpack.c.l.b16 %v2921
        %v3003 = vunpack.c.l.b16 %v2922
        %v3004 = vunpack.c.l.b16 %v2923
        %v3005 = vunpack.c.l.b16 %v2924
        %v3006 = vunpack.c.l.b16 %v2925
        %v3007 = vunpack.c.l.b16 %v2926
        %v3008 = vunpack.c.l.b16 %v2927
        %v3009 = vunpack.c.l.b16 %v2928
        %v3010 = vunpack.c.l.b16 %v2929
        %v3011 = vunpack.c.l.b16 %v2930
        %v3012 = vunpack.c.l.b16 %v2931
        %v3013 = vunpack.c.l.b16 %v2932
        %v3014 = vunpack.c.l.b16 %v2933
        %v3015 = vunpack.c.l.b16 %v2934
        %v3016 = vunpack.c.l.b16 %v2935
        %v3017 = vunpack.c.l.b16 %v2936
        %v3018 = vunpack.c.l.b16 %v2937
        %v3019 = vunpack.c.l.b16 %v2938
        %v3020 = vunpack.c.l.b16 %v2939
        %v3021 = vpack.c.b16 %v2990, %v2989
        %v3022 = vpack.c.b16 %v2992, %v2991
        %v3023 = vpack.c.b16 %v2994, %v2993
        %v3024 = vpack.c.b16 %v2996, %v2995
        %v3025 = vpack.c.b16 %v2998, %v2997
        %v3026 = vpack.c.b16 %v3000, %v2999
        %v3027 = vpack.c.b16 %v3002, %v3001
        %v3028 = vpack.c.b16 %v3004, %v3003
        %v3029 = vpack.c.b16 %v3006, %v3005
        %v3030 = vpack.c.b16 %v3008, %v3007
        %v3031 = vpack.c.b16 %v3010, %v3009
        %v3032 = vpack.c.b16 %v3012, %v3011
        %v3033 = vpack.c.b16 %v3014, %v3013
        %v3034 = vpack.c.b16 %v3016, %v3015
        %v3035 = vpack.c.b16 %v3018, %v3017
        %v3036 = vpack.c.b16 %v3020, %v3019
        %v3069 = vunpack.c.l.b16 %v2941
        %v3070 = vunpack.c.l.b16 %v2942
        %v3071 = vunpack.c.l.b16 %v2943
        %v3072 = vunpack.c.l.b16 %v2944
        %v3073 = vunpack.c.l.b16 %v2945
        %v3074 = vunpack.c.l.b16 %v2946
        %v3075 = vunpack.c.l.b16 %v2947
        %v3076 = vunpack.c.l.b16 %v2948
        %v3077 = vunpack.c.l.b16 %v2949
        %v3078 = vunpack.c.l.b16 %v2950
        %v3079 = vunpack.c.l.b16 %v2951
        %v3080 = vunpack.c.l.b16 %v2952
        %v3081 = vunpack.c.l.b16 %v2953
        %v3082 = vunpack.c.l.b16 %v2954
        %v3083 = vunpack.c.l.b16 %v2955
        %v3084 = vunpack.c.l.b16 %v2956
        %v3085 = vpack.c.b16 %v3070, %v3069
        %v3086 = vpack.c.b16 %v3072, %v3071
        %v3087 = vpack.c.b16 %v3074, %v3073
        %v3088 = vpack.c.b16 %v3076, %v3075
        %v3089 = vpack.c.b16 %v3078, %v3077
        %v3090 = vpack.c.b16 %v3080, %v3079
        %v3091 = vpack.c.b16 %v3082, %v3081
        %v3092 = vpack.c.b16 %v3084, %v3083
        %3101 = vmatpush.bf16.msra.mxu0 %v3092
        %3102 = vmatpush.bf16.msra.mxu0 %v3091
        %3103 = vmatpush.bf16.msra.mxu0 %v3090
        %3104 = vmatpush.bf16.msra.mxu0 %v3089
        %3105 = vmatpush.bf16.msra.mxu0 %v3088
        %3106 = vmatpush.bf16.msra.mxu0 %v3087
        %3107 = vmatpush.bf16.msra.mxu0 %v3086
        %3108 = vmatpush.bf16.msra.mxu0 %v3085
        %3109 = vmatmul.bf16.gmra.mxu0 %v3021
        %v3110 = vpop.f32.mrf.mxu0
        %v3111 = vadd.f32 0.0, %v3110
        %v3112 = vpop.f32.mrf.mxu0
        %v3113 = vadd.f32 0.0, %v3112
        %3114 = vmatmul.bf16.gmra.mxu0 %v3022
        %v3115 = vpop.f32.mrf.mxu0
        %v3116 = vadd.f32 0.0, %v3115
        %v3117 = vpop.f32.mrf.mxu0
        %v3118 = vadd.f32 0.0, %v3117
        %3119 = vmatmul.bf16.gmra.mxu0 %v3023
        %v3120 = vpop.f32.mrf.mxu0
        %v3121 = vadd.f32 0.0, %v3120
        %v3122 = vpop.f32.mrf.mxu0
        %v3123 = vadd.f32 0.0, %v3122
        %3124 = vmatmul.bf16.gmra.mxu0 %v3024
        %v3125 = vpop.f32.mrf.mxu0
        %v3126 = vadd.f32 0.0, %v3125
        %v3127 = vpop.f32.mrf.mxu0
        %v3128 = vadd.f32 0.0, %v3127
        %3129 = vmatmul.bf16.gmra.mxu0 %v3025
        %v3130 = vpop.f32.mrf.mxu0
        %v3131 = vadd.f32 0.0, %v3130
        %v3132 = vpop.f32.mrf.mxu0
        %v3133 = vadd.f32 0.0, %v3132
        %3134 = vmatmul.bf16.gmra.mxu0 %v3026
        %v3135 = vpop.f32.mrf.mxu0
        %v3136 = vadd.f32 0.0, %v3135
        %v3137 = vpop.f32.mrf.mxu0
        %v3138 = vadd.f32 0.0, %v3137
        %3139 = vmatmul.bf16.gmra.mxu0 %v3027
        %v3140 = vpop.f32.mrf.mxu0
        %v3141 = vadd.f32 0.0, %v3140
        %v3142 = vpop.f32.mrf.mxu0
        %v3143 = vadd.f32 0.0, %v3142
        %3144 = vmatmul.bf16.gmra.mxu0 %v3028
        %v3145 = vpop.f32.mrf.mxu0
        %v3146 = vadd.f32 0.0, %v3145
        %v3147 = vpop.f32.mrf.mxu0
        %v3148 = vadd.f32 0.0, %v3147
        %3149 = vmatmul.bf16.gmra.mxu0 %v3029
        %v3150 = vpop.f32.mrf.mxu0
        %v3151 = vadd.f32 0.0, %v3150
        %v3152 = vpop.f32.mrf.mxu0
        %v3153 = vadd.f32 0.0, %v3152
        %3154 = vmatmul.bf16.gmra.mxu0 %v3030
        %v3155 = vpop.f32.mrf.mxu0
        %v3156 = vadd.f32 0.0, %v3155
        %v3157 = vpop.f32.mrf.mxu0
        %v3158 = vadd.f32 0.0, %v3157
        %3159 = vmatmul.bf16.gmra.mxu0 %v3031
        %v3160 = vpop.f32.mrf.mxu0
        %v3161 = vadd.f32 0.0, %v3160
        %v3162 = vpop.f32.mrf.mxu0
        %v3163 = vadd.f32 0.0, %v3162
        %3164 = vmatmul.bf16.gmra.mxu0 %v3032
        %v3165 = vpop.f32.mrf.mxu0
        %v3166 = vadd.f32 0.0, %v3165
        %v3167 = vpop.f32.mrf.mxu0
        %v3168 = vadd.f32 0.0, %v3167
        %3169 = vmatmul.bf16.gmra.mxu0 %v3033
        %v3170 = vpop.f32.mrf.mxu0
        %v3171 = vadd.f32 0.0, %v3170
        %v3172 = vpop.f32.mrf.mxu0
        %v3173 = vadd.f32 0.0, %v3172
        %3174 = vmatmul.bf16.gmra.mxu0 %v3034
        %v3175 = vpop.f32.mrf.mxu0
        %v3176 = vadd.f32 0.0, %v3175
        %v3177 = vpop.f32.mrf.mxu0
        %v3178 = vadd.f32 0.0, %v3177
        %3179 = vmatmul.bf16.gmra.mxu0 %v3035
        %v3180 = vpop.f32.mrf.mxu0
        %v3181 = vadd.f32 0.0, %v3180
        %v3182 = vpop.f32.mrf.mxu0
        %v3183 = vadd.f32 0.0, %v3182
        %3184 = vmatmul.bf16.gmra.mxu0 %v3036
        %v3185 = vpop.f32.mrf.mxu0
        %v3186 = vadd.f32 0.0, %v3185
        %v3187 = vpop.f32.mrf.mxu0
        %v3188 = vadd.f32 0.0, %v3187
        %3189 = vdwg.mxu0
        %v3190 = vadd.f32 %v2875, %v3111
        %v3191 = vadd.f32 %v2876, %v3113
        %v3192 = vadd.f32 %v2877, %v3116
        %v3193 = vadd.f32 %v2878, %v3118
        %v3194 = vadd.f32 %v2879, %v3121
        %v3195 = vadd.f32 %v2880, %v3123
        %v3196 = vadd.f32 %v2881, %v3126
        %v3197 = vadd.f32 %v2882, %v3128
        %v3198 = vadd.f32 %v2883, %v3131
        %v3199 = vadd.f32 %v2884, %v3133
        %v3200 = vadd.f32 %v2885, %v3136
        %v3201 = vadd.f32 %v2886, %v3138
        %v3202 = vadd.f32 %v2887, %v3141
        %v3203 = vadd.f32 %v2888, %v3143
        %v3204 = vadd.f32 %v2889, %v3146
        %v3205 = vadd.f32 %v2890, %v3148
        %v3206 = vadd.f32 %v2891, %v3151
        %v3207 = vadd.f32 %v2892, %v3153
        %v3208 = vadd.f32 %v2893, %v3156
        %v3209 = vadd.f32 %v2894, %v3158
        %v3210 = vadd.f32 %v2895, %v3161
        %v3211 = vadd.f32 %v2896, %v3163
        %v3212 = vadd.f32 %v2897, %v3166
        %v3213 = vadd.f32 %v2898, %v3168
        %v3214 = vadd.f32 %v2899, %v3171
        %v3215 = vadd.f32 %v2900, %v3173
        %v3216 = vadd.f32 %v2901, %v3176
        %v3217 = vadd.f32 %v2902, %v3178
        %v3218 = vadd.f32 %v2903, %v3181
        %v3219 = vadd.f32 %v2904, %v3183
        %v3220 = vadd.f32 %v2905, %v3186
        %v3221 = vadd.f32 %v2906, %v3188
        %v3222 = vld [vmem:[%s2907] sm:$0xf]
        %v3223 = vld [vmem:[%s2907 + $0x4] sm:$0xf]
        %v3224 = vld [vmem:[%s2907 + $0x8] sm:$0x1]
        %v3225 = vld [vmem:[%s2907 + $0xc] sm:$0xf]
        %v3226 = vld [vmem:[%s2907 + $0x10] sm:$0xf]
        %v3227 = vld [vmem:[%s2907 + $0x14] sm:$0x1]
        %v3228 = vld [vmem:[%s2907 + $0x18] sm:$0xf]
        %v3229 = vld [vmem:[%s2907 + $0x1c] sm:$0xf]
        %v3230 = vld [vmem:[%s2907 + $0x20] sm:$0x1]
        %v3231 = vld [vmem:[%s2907 + $0x24] sm:$0xf]
        %v3232 = vld [vmem:[%s2907 + $0x28] sm:$0xf]
        %v3233 = vld [vmem:[%s2907 + $0x2c] sm:$0x1]
        %v3234 = vld [vmem:[%s2907 + $0x30] sm:$0xf]
        %v3235 = vld [vmem:[%s2907 + $0x34] sm:$0xf]
        %v3236 = vld [vmem:[%s2907 + $0x38] sm:$0x1]
        %v3237 = vld [vmem:[%s2907 + $0x3c] sm:$0xf]
        %v3238 = vld [vmem:[%s2907 + $0x40] sm:$0xf]
        %v3239 = vld [vmem:[%s2907 + $0x44] sm:$0x1]
        %v3240 = vld [vmem:[%s2907 + $0x48] sm:$0xf]
        %v3241 = vld [vmem:[%s2907 + $0x4c] sm:$0xf]
        %v3242 = vld [vmem:[%s2907 + $0x50] sm:$0x1]
        %v3243 = vld [vmem:[%s2907 + $0x54] sm:$0xf]
        %v3244 = vld [vmem:[%s2907 + $0x58] sm:$0xf]
        %v3245 = vld [vmem:[%s2907 + $0x5c] sm:$0x1]
        %v3246 = vld [vmem:[%s2907 + $0x60] sm:$0xf]
        %v3247 = vld [vmem:[%s2907 + $0x64] sm:$0xf]
        %v3248 = vld [vmem:[%s2907 + $0x68] sm:$0x1]
        %v3249 = vld [vmem:[%s2907 + $0x6c] sm:$0xf]
        %v3250 = vld [vmem:[%s2907 + $0x70] sm:$0xf]
        %v3251 = vld [vmem:[%s2907 + $0x74] sm:$0x1]
        %v3252 = vld [vmem:[%s2907 + $0x78] sm:$0xf]
        %v3253 = vld [vmem:[%s2907 + $0x7c] sm:$0xf]
        %v3254 = vld [vmem:[%s2907 + $0x80] sm:$0x1]
        %v3255 = vld [vmem:[%s2907 + $0x84] sm:$0xf]
        %v3256 = vld [vmem:[%s2907 + $0x88] sm:$0xf]
        %v3257 = vld [vmem:[%s2907 + $0x8c] sm:$0x1]
        %v3258 = vld [vmem:[%s2907 + $0x90] sm:$0xf]
        %v3259 = vld [vmem:[%s2907 + $0x94] sm:$0xf]
        %v3260 = vld [vmem:[%s2907 + $0x98] sm:$0x1]
        %v3261 = vld [vmem:[%s2907 + $0x9c] sm:$0xf]
        %v3262 = vld [vmem:[%s2907 + $0xa0] sm:$0xf]
        %v3263 = vld [vmem:[%s2907 + $0xa4] sm:$0x1]
        %v3264 = vld [vmem:[%s2907 + $0xa8] sm:$0xf]
        %v3265 = vld [vmem:[%s2907 + $0xac] sm:$0xf]
        %v3266 = vld [vmem:[%s2907 + $0xb0] sm:$0x1]
        %v3267 = vld [vmem:[%s2907 + $0xb4] sm:$0xf]
        %v3268 = vld [vmem:[%s2907 + $0xb8] sm:$0xf]
        %v3269 = vld [vmem:[%s2907 + $0xbc] sm:$0x1]
        %v3271 = vshrl.u32 %v3222, 16
        %v3273 = vrot.slane %v3271, 4
        %v3274 = vshll.u32 %v3222, 16
        %v3276 = vrot.slane %v3274, 5
        %v3277 = vor.u32 %v3273, %v3276
        %v3278 = vrot.slane %v3277, 4
        %v3280 = vshll.u32 %v3223, 16
        %v3282 = vrot.slane %v3280, 5
        %v3283 = vsel %vm235, %v3278, %v3282
        %v3284 = vshrl.u32 %v3223, 16
        %v3286 = vrot.slane %v3284, 4
        %v3287 = vor.u32 %v3286, %v3282
        %v3288 = vrot.slane %v3287, 4
        %v3290 = vshll.u32 %v3224, 16
        %v3292 = vrot.slane %v3290, 5
        %v3293 = vsel %vm235, %v3288, %v3292
        %v3295 = vshrl.u32 %v3225, 16
        %v3297 = vrot.slane %v3295, 4
        %v3298 = vshll.u32 %v3225, 16
        %v3300 = vrot.slane %v3298, 5
        %v3301 = vor.u32 %v3297, %v3300
        %v3302 = vrot.slane %v3301, 4
        %v3304 = vshll.u32 %v3226, 16
        %v3306 = vrot.slane %v3304, 5
        %v3307 = vsel %vm235, %v3302, %v3306
        %v3308 = vshrl.u32 %v3226, 16
        %v3310 = vrot.slane %v3308, 4
        %v3311 = vor.u32 %v3310, %v3306
        %v3312 = vrot.slane %v3311, 4
        %v3314 = vshll.u32 %v3227, 16
        %v3316 = vrot.slane %v3314, 5
        %v3317 = vsel %vm235, %v3312, %v3316
        %v3319 = vshrl.u32 %v3228, 16
        %v3321 = vrot.slane %v3319, 4
        %v3322 = vshll.u32 %v3228, 16
        %v3324 = vrot.slane %v3322, 5
        %v3325 = vor.u32 %v3321, %v3324
        %v3326 = vrot.slane %v3325, 4
        %v3328 = vshll.u32 %v3229, 16
        %v3330 = vrot.slane %v3328, 5
        %v3331 = vsel %vm235, %v3326, %v3330
        %v3332 = vshrl.u32 %v3229, 16
        %v3334 = vrot.slane %v3332, 4
        %v3335 = vor.u32 %v3334, %v3330
        %v3336 = vrot.slane %v3335, 4
        %v3338 = vshll.u32 %v3230, 16
        %v3340 = vrot.slane %v3338, 5
        %v3341 = vsel %vm235, %v3336, %v3340
        %v3343 = vshrl.u32 %v3231, 16
        %v3345 = vrot.slane %v3343, 4
        %v3346 = vshll.u32 %v3231, 16
        %v3348 = vrot.slane %v3346, 5
        %v3349 = vor.u32 %v3345, %v3348
        %v3350 = vrot.slane %v3349, 4
        %v3352 = vshll.u32 %v3232, 16
        %v3354 = vrot.slane %v3352, 5
        %v3355 = vsel %vm235, %v3350, %v3354
        %v3356 = vshrl.u32 %v3232, 16
        %v3358 = vrot.slane %v3356, 4
        %v3359 = vor.u32 %v3358, %v3354
        %v3360 = vrot.slane %v3359, 4
        %v3362 = vshll.u32 %v3233, 16
        %v3364 = vrot.slane %v3362, 5
        %v3365 = vsel %vm235, %v3360, %v3364
        %v3367 = vshrl.u32 %v3234, 16
        %v3369 = vrot.slane %v3367, 4
        %v3370 = vshll.u32 %v3234, 16
        %v3372 = vrot.slane %v3370, 5
        %v3373 = vor.u32 %v3369, %v3372
        %v3374 = vrot.slane %v3373, 4
        %v3376 = vshll.u32 %v3235, 16
        %v3378 = vrot.slane %v3376, 5
        %v3379 = vsel %vm235, %v3374, %v3378
        %v3380 = vshrl.u32 %v3235, 16
        %v3382 = vrot.slane %v3380, 4
        %v3383 = vor.u32 %v3382, %v3378
        %v3384 = vrot.slane %v3383, 4
        %v3386 = vshll.u32 %v3236, 16
        %v3388 = vrot.slane %v3386, 5
        %v3389 = vsel %vm235, %v3384, %v3388
        %v3391 = vshrl.u32 %v3237, 16
        %v3393 = vrot.slane %v3391, 4
        %v3394 = vshll.u32 %v3237, 16
        %v3396 = vrot.slane %v3394, 5
        %v3397 = vor.u32 %v3393, %v3396
        %v3398 = vrot.slane %v3397, 4
        %v3400 = vshll.u32 %v3238, 16
        %v3402 = vrot.slane %v3400, 5
        %v3403 = vsel %vm235, %v3398, %v3402
        %v3404 = vshrl.u32 %v3238, 16
        %v3406 = vrot.slane %v3404, 4
        %v3407 = vor.u32 %v3406, %v3402
        %v3408 = vrot.slane %v3407, 4
        %v3410 = vshll.u32 %v3239, 16
        %v3412 = vrot.slane %v3410, 5
        %v3413 = vsel %vm235, %v3408, %v3412
        %v3415 = vshrl.u32 %v3240, 16
        %v3417 = vrot.slane %v3415, 4
        %v3418 = vshll.u32 %v3240, 16
        %v3420 = vrot.slane %v3418, 5
        %v3421 = vor.u32 %v3417, %v3420
        %v3422 = vrot.slane %v3421, 4
        %v3424 = vshll.u32 %v3241, 16
        %v3426 = vrot.slane %v3424, 5
        %v3427 = vsel %vm235, %v3422, %v3426
        %v3428 = vshrl.u32 %v3241, 16
        %v3430 = vrot.slane %v3428, 4
        %v3431 = vor.u32 %v3430, %v3426
        %v3432 = vrot.slane %v3431, 4
        %v3434 = vshll.u32 %v3242, 16
        %v3436 = vrot.slane %v3434, 5
        %v3437 = vsel %vm235, %v3432, %v3436
        %v3439 = vshrl.u32 %v3243, 16
        %v3441 = vrot.slane %v3439, 4
        %v3442 = vshll.u32 %v3243, 16
        %v3444 = vrot.slane %v3442, 5
        %v3445 = vor.u32 %v3441, %v3444
        %v3446 = vrot.slane %v3445, 4
        %v3448 = vshll.u32 %v3244, 16
        %v3450 = vrot.slane %v3448, 5
        %v3451 = vsel %vm235, %v3446, %v3450
        %v3452 = vshrl.u32 %v3244, 16
        %v3454 = vrot.slane %v3452, 4
        %v3455 = vor.u32 %v3454, %v3450
        %v3456 = vrot.slane %v3455, 4
        %v3458 = vshll.u32 %v3245, 16
        %v3460 = vrot.slane %v3458, 5
        %v3461 = vsel %vm235, %v3456, %v3460
        %v3463 = vshrl.u32 %v3246, 16
        %v3465 = vrot.slane %v3463, 4
        %v3466 = vshll.u32 %v3246, 16
        %v3468 = vrot.slane %v3466, 5
        %v3469 = vor.u32 %v3465, %v3468
        %v3470 = vrot.slane %v3469, 4
        %v3472 = vshll.u32 %v3247, 16
        %v3474 = vrot.slane %v3472, 5
        %v3475 = vsel %vm235, %v3470, %v3474
        %v3476 = vshrl.u32 %v3247, 16
        %v3478 = vrot.slane %v3476, 4
        %v3479 = vor.u32 %v3478, %v3474
        %v3480 = vrot.slane %v3479, 4
        %v3482 = vshll.u32 %v3248, 16
        %v3484 = vrot.slane %v3482, 5
        %v3485 = vsel %vm235, %v3480, %v3484
        %v3487 = vshrl.u32 %v3249, 16
        %v3489 = vrot.slane %v3487, 4
        %v3490 = vshll.u32 %v3249, 16
        %v3492 = vrot.slane %v3490, 5
        %v3493 = vor.u32 %v3489, %v3492
        %v3494 = vrot.slane %v3493, 4
        %v3496 = vshll.u32 %v3250, 16
        %v3498 = vrot.slane %v3496, 5
        %v3499 = vsel %vm235, %v3494, %v3498
        %v3500 = vshrl.u32 %v3250, 16
        %v3502 = vrot.slane %v3500, 4
        %v3503 = vor.u32 %v3502, %v3498
        %v3504 = vrot.slane %v3503, 4
        %v3506 = vshll.u32 %v3251, 16
        %v3508 = vrot.slane %v3506, 5
        %v3509 = vsel %vm235, %v3504, %v3508
        %v3511 = vshrl.u32 %v3252, 16
        %v3513 = vrot.slane %v3511, 4
        %v3514 = vshll.u32 %v3252, 16
        %v3516 = vrot.slane %v3514, 5
        %v3517 = vor.u32 %v3513, %v3516
        %v3518 = vrot.slane %v3517, 4
        %v3520 = vshll.u32 %v3253, 16
        %v3522 = vrot.slane %v3520, 5
        %v3523 = vsel %vm235, %v3518, %v3522
        %v3524 = vshrl.u32 %v3253, 16
        %v3526 = vrot.slane %v3524, 4
        %v3527 = vor.u32 %v3526, %v3522
        %v3528 = vrot.slane %v3527, 4
        %v3530 = vshll.u32 %v3254, 16
        %v3532 = vrot.slane %v3530, 5
        %v3533 = vsel %vm235, %v3528, %v3532
        %v3535 = vshrl.u32 %v3255, 16
        %v3537 = vrot.slane %v3535, 4
        %v3538 = vshll.u32 %v3255, 16
        %v3540 = vrot.slane %v3538, 5
        %v3541 = vor.u32 %v3537, %v3540
        %v3542 = vrot.slane %v3541, 4
        %v3544 = vshll.u32 %v3256, 16
        %v3546 = vrot.slane %v3544, 5
        %v3547 = vsel %vm235, %v3542, %v3546
        %v3548 = vshrl.u32 %v3256, 16
        %v3550 = vrot.slane %v3548, 4
        %v3551 = vor.u32 %v3550, %v3546
        %v3552 = vrot.slane %v3551, 4
        %v3554 = vshll.u32 %v3257, 16
        %v3556 = vrot.slane %v3554, 5
        %v3557 = vsel %vm235, %v3552, %v3556
        %v3559 = vshrl.u32 %v3258, 16
        %v3561 = vrot.slane %v3559, 4
        %v3562 = vshll.u32 %v3258, 16
        %v3564 = vrot.slane %v3562, 5
        %v3565 = vor.u32 %v3561, %v3564
        %v3566 = vrot.slane %v3565, 4
        %v3568 = vshll.u32 %v3259, 16
        %v3570 = vrot.slane %v3568, 5
        %v3571 = vsel %vm235, %v3566, %v3570
        %v3572 = vshrl.u32 %v3259, 16
        %v3574 = vrot.slane %v3572, 4
        %v3575 = vor.u32 %v3574, %v3570
        %v3576 = vrot.slane %v3575, 4
        %v3578 = vshll.u32 %v3260, 16
        %v3580 = vrot.slane %v3578, 5
        %v3581 = vsel %vm235, %v3576, %v3580
        %v3583 = vshrl.u32 %v3261, 16
        %v3585 = vrot.slane %v3583, 4
        %v3586 = vshll.u32 %v3261, 16
        %v3588 = vrot.slane %v3586, 5
        %v3589 = vor.u32 %v3585, %v3588
        %v3590 = vrot.slane %v3589, 4
        %v3592 = vshll.u32 %v3262, 16
        %v3594 = vrot.slane %v3592, 5
        %v3595 = vsel %vm235, %v3590, %v3594
        %v3596 = vshrl.u32 %v3262, 16
        %v3598 = vrot.slane %v3596, 4
        %v3599 = vor.u32 %v3598, %v3594
        %v3600 = vrot.slane %v3599, 4
        %v3602 = vshll.u32 %v3263, 16
        %v3604 = vrot.slane %v3602, 5
        %v3605 = vsel %vm235, %v3600, %v3604
        %v3607 = vshrl.u32 %v3264, 16
        %v3609 = vrot.slane %v3607, 4
        %v3610 = vshll.u32 %v3264, 16
        %v3612 = vrot.slane %v3610, 5
        %v3613 = vor.u32 %v3609, %v3612
        %v3614 = vrot.slane %v3613, 4
        %v3616 = vshll.u32 %v3265, 16
        %v3618 = vrot.slane %v3616, 5
        %v3619 = vsel %vm235, %v3614, %v3618
        %v3620 = vshrl.u32 %v3265, 16
        %v3622 = vrot.slane %v3620, 4
        %v3623 = vor.u32 %v3622, %v3618
        %v3624 = vrot.slane %v3623, 4
        %v3626 = vshll.u32 %v3266, 16
        %v3628 = vrot.slane %v3626, 5
        %v3629 = vsel %vm235, %v3624, %v3628
        %v3631 = vshrl.u32 %v3267, 16
        %v3633 = vrot.slane %v3631, 4
        %v3634 = vshll.u32 %v3267, 16
        %v3636 = vrot.slane %v3634, 5
        %v3637 = vor.u32 %v3633, %v3636
        %v3638 = vrot.slane %v3637, 4
        %v3640 = vshll.u32 %v3268, 16
        %v3642 = vrot.slane %v3640, 5
        %v3643 = vsel %vm235, %v3638, %v3642
        %v3644 = vshrl.u32 %v3268, 16
        %v3646 = vrot.slane %v3644, 4
        %v3647 = vor.u32 %v3646, %v3642
        %v3648 = vrot.slane %v3647, 4
        %v3650 = vshll.u32 %v3269, 16
        %v3652 = vrot.slane %v3650, 5
        %v3653 = vsel %vm235, %v3648, %v3652
        %s3654 = scalar_lea.vmem %s1, 448
        %v3655 = vld [vmem:[%s3654] sm:$0xf]
        %v3656 = vld [vmem:[%s3654 + $0x4] sm:$0xf]
        %v3657 = vld [vmem:[%s3654 + $0x8] sm:$0xf]
        %v3658 = vld [vmem:[%s3654 + $0xc] sm:$0xf]
        %v3659 = vld [vmem:[%s3654 + $0x10] sm:$0xf]
        %v3660 = vld [vmem:[%s3654 + $0x14] sm:$0xf]
        %v3661 = vld [vmem:[%s3654 + $0x18] sm:$0xf]
        %v3662 = vld [vmem:[%s3654 + $0x1c] sm:$0xf]
        %v3663 = vld [vmem:[%s3654 + $0x20] sm:$0xf]
        %v3664 = vld [vmem:[%s3654 + $0x24] sm:$0xf]
        %v3665 = vld [vmem:[%s3654 + $0x28] sm:$0xf]
        %v3666 = vld [vmem:[%s3654 + $0x2c] sm:$0xf]
        %v3667 = vld [vmem:[%s3654 + $0x30] sm:$0xf]
        %v3668 = vld [vmem:[%s3654 + $0x34] sm:$0xf]
        %v3669 = vld [vmem:[%s3654 + $0x38] sm:$0xf]
        %v3670 = vld [vmem:[%s3654 + $0x3c] sm:$0xf]
        %v3671 = vunpack.c.l.b16 %v3283
        %v3672 = vunpack.c.l.b16 %v3293
        %v3673 = vunpack.c.l.b16 %v3307
        %v3674 = vunpack.c.l.b16 %v3317
        %v3675 = vunpack.c.l.b16 %v3331
        %v3676 = vunpack.c.l.b16 %v3341
        %v3677 = vunpack.c.l.b16 %v3355
        %v3678 = vunpack.c.l.b16 %v3365
        %v3679 = vunpack.c.l.b16 %v3379
        %v3680 = vunpack.c.l.b16 %v3389
        %v3681 = vunpack.c.l.b16 %v3403
        %v3682 = vunpack.c.l.b16 %v3413
        %v3683 = vunpack.c.l.b16 %v3427
        %v3684 = vunpack.c.l.b16 %v3437
        %v3685 = vunpack.c.l.b16 %v3451
        %v3686 = vunpack.c.l.b16 %v3461
        %v3687 = vunpack.c.l.b16 %v3475
        %v3688 = vunpack.c.l.b16 %v3485
        %v3689 = vunpack.c.l.b16 %v3499
        %v3690 = vunpack.c.l.b16 %v3509
        %v3691 = vunpack.c.l.b16 %v3523
        %v3692 = vunpack.c.l.b16 %v3533
        %v3693 = vunpack.c.l.b16 %v3547
        %v3694 = vunpack.c.l.b16 %v3557
        %v3695 = vunpack.c.l.b16 %v3571
        %v3696 = vunpack.c.l.b16 %v3581
        %v3697 = vunpack.c.l.b16 %v3595
        %v3698 = vunpack.c.l.b16 %v3605
        %v3699 = vunpack.c.l.b16 %v3619
        %v3700 = vunpack.c.l.b16 %v3629
        %v3701 = vunpack.c.l.b16 %v3643
        %v3702 = vunpack.c.l.b16 %v3653
        %v3703 = vpack.c.b16 %v3672, %v3671
        %v3704 = vpack.c.b16 %v3674, %v3673
        %v3705 = vpack.c.b16 %v3676, %v3675
        %v3706 = vpack.c.b16 %v3678, %v3677
        %v3707 = vpack.c.b16 %v3680, %v3679
        %v3708 = vpack.c.b16 %v3682, %v3681
        %v3709 = vpack.c.b16 %v3684, %v3683
        %v3710 = vpack.c.b16 %v3686, %v3685
        %v3711 = vpack.c.b16 %v3688, %v3687
        %v3712 = vpack.c.b16 %v3690, %v3689
        %v3713 = vpack.c.b16 %v3692, %v3691
        %v3714 = vpack.c.b16 %v3694, %v3693
        %v3715 = vpack.c.b16 %v3696, %v3695
        %v3716 = vpack.c.b16 %v3698, %v3697
        %v3717 = vpack.c.b16 %v3700, %v3699
        %v3718 = vpack.c.b16 %v3702, %v3701
        %v3751 = vunpack.c.l.b16 %v3655
        %v3752 = vunpack.c.l.b16 %v3656
        %v3753 = vunpack.c.l.b16 %v3657
        %v3754 = vunpack.c.l.b16 %v3658
        %v3755 = vunpack.c.l.b16 %v3659
        %v3756 = vunpack.c.l.b16 %v3660
        %v3757 = vunpack.c.l.b16 %v3661
        %v3758 = vunpack.c.l.b16 %v3662
        %v3759 = vunpack.c.l.b16 %v3663
        %v3760 = vunpack.c.l.b16 %v3664
        %v3761 = vunpack.c.l.b16 %v3665
        %v3762 = vunpack.c.l.b16 %v3666
        %v3763 = vunpack.c.l.b16 %v3667
        %v3764 = vunpack.c.l.b16 %v3668
        %v3765 = vunpack.c.l.b16 %v3669
        %v3766 = vunpack.c.l.b16 %v3670
        %v3767 = vpack.c.b16 %v3752, %v3751
        %v3768 = vpack.c.b16 %v3754, %v3753
        %v3769 = vpack.c.b16 %v3756, %v3755
        %v3770 = vpack.c.b16 %v3758, %v3757
        %v3771 = vpack.c.b16 %v3760, %v3759
        %v3772 = vpack.c.b16 %v3762, %v3761
        %v3773 = vpack.c.b16 %v3764, %v3763
        %v3774 = vpack.c.b16 %v3766, %v3765
        %3783 = vmatpush.bf16.msra.mxu0 %v3774
        %3784 = vmatpush.bf16.msra.mxu0 %v3773
        %3785 = vmatpush.bf16.msra.mxu0 %v3772
        %3786 = vmatpush.bf16.msra.mxu0 %v3771
        %3787 = vmatpush.bf16.msra.mxu0 %v3770
        %3788 = vmatpush.bf16.msra.mxu0 %v3769
        %3789 = vmatpush.bf16.msra.mxu0 %v3768
        %3790 = vmatpush.bf16.msra.mxu0 %v3767
        %3791 = vmatmul.bf16.gmra.mxu0 %v3703
        %v3792 = vpop.f32.mrf.mxu0
        %v3793 = vadd.f32 0.0, %v3792
        %v3794 = vpop.f32.mrf.mxu0
        %v3795 = vadd.f32 0.0, %v3794
        %3796 = vmatmul.bf16.gmra.mxu0 %v3704
        %v3797 = vpop.f32.mrf.mxu0
        %v3798 = vadd.f32 0.0, %v3797
        %v3799 = vpop.f32.mrf.mxu0
        %v3800 = vadd.f32 0.0, %v3799
        %3801 = vmatmul.bf16.gmra.mxu0 %v3705
        %v3802 = vpop.f32.mrf.mxu0
        %v3803 = vadd.f32 0.0, %v3802
        %v3804 = vpop.f32.mrf.mxu0
        %v3805 = vadd.f32 0.0, %v3804
        %3806 = vmatmul.bf16.gmra.mxu0 %v3706
        %v3807 = vpop.f32.mrf.mxu0
        %v3808 = vadd.f32 0.0, %v3807
        %v3809 = vpop.f32.mrf.mxu0
        %v3810 = vadd.f32 0.0, %v3809
        %3811 = vmatmul.bf16.gmra.mxu0 %v3707
        %v3812 = vpop.f32.mrf.mxu0
        %v3813 = vadd.f32 0.0, %v3812
        %v3814 = vpop.f32.mrf.mxu0
        %v3815 = vadd.f32 0.0, %v3814
        %3816 = vmatmul.bf16.gmra.mxu0 %v3708
        %v3817 = vpop.f32.mrf.mxu0
        %v3818 = vadd.f32 0.0, %v3817
        %v3819 = vpop.f32.mrf.mxu0
        %v3820 = vadd.f32 0.0, %v3819
        %3821 = vmatmul.bf16.gmra.mxu0 %v3709
        %v3822 = vpop.f32.mrf.mxu0
        %v3823 = vadd.f32 0.0, %v3822
        %v3824 = vpop.f32.mrf.mxu0
        %v3825 = vadd.f32 0.0, %v3824
        %3826 = vmatmul.bf16.gmra.mxu0 %v3710
        %v3827 = vpop.f32.mrf.mxu0
        %v3828 = vadd.f32 0.0, %v3827
        %v3829 = vpop.f32.mrf.mxu0
        %v3830 = vadd.f32 0.0, %v3829
        %3831 = vmatmul.bf16.gmra.mxu0 %v3711
        %v3832 = vpop.f32.mrf.mxu0
        %v3833 = vadd.f32 0.0, %v3832
        %v3834 = vpop.f32.mrf.mxu0
        %v3835 = vadd.f32 0.0, %v3834
        %3836 = vmatmul.bf16.gmra.mxu0 %v3712
        %v3837 = vpop.f32.mrf.mxu0
        %v3838 = vadd.f32 0.0, %v3837
        %v3839 = vpop.f32.mrf.mxu0
        %v3840 = vadd.f32 0.0, %v3839
        %3841 = vmatmul.bf16.gmra.mxu0 %v3713
        %v3842 = vpop.f32.mrf.mxu0
        %v3843 = vadd.f32 0.0, %v3842
        %v3844 = vpop.f32.mrf.mxu0
        %v3845 = vadd.f32 0.0, %v3844
        %3846 = vmatmul.bf16.gmra.mxu0 %v3714
        %v3847 = vpop.f32.mrf.mxu0
        %v3848 = vadd.f32 0.0, %v3847
        %v3849 = vpop.f32.mrf.mxu0
        %v3850 = vadd.f32 0.0, %v3849
        %3851 = vmatmul.bf16.gmra.mxu0 %v3715
        %v3852 = vpop.f32.mrf.mxu0
        %v3853 = vadd.f32 0.0, %v3852
        %v3854 = vpop.f32.mrf.mxu0
        %v3855 = vadd.f32 0.0, %v3854
        %3856 = vmatmul.bf16.gmra.mxu0 %v3716
        %v3857 = vpop.f32.mrf.mxu0
        %v3858 = vadd.f32 0.0, %v3857
        %v3859 = vpop.f32.mrf.mxu0
        %v3860 = vadd.f32 0.0, %v3859
        %3861 = vmatmul.bf16.gmra.mxu0 %v3717
        %v3862 = vpop.f32.mrf.mxu0
        %v3863 = vadd.f32 0.0, %v3862
        %v3864 = vpop.f32.mrf.mxu0
        %v3865 = vadd.f32 0.0, %v3864
        %3866 = vmatmul.bf16.gmra.mxu0 %v3718
        %v3867 = vpop.f32.mrf.mxu0
        %v3868 = vadd.f32 0.0, %v3867
        %v3869 = vpop.f32.mrf.mxu0
        %v3870 = vadd.f32 0.0, %v3869
        %3871 = vdwg.mxu0
        %v3872 = vadd.f32 %v3190, %v3793
        %v3873 = vadd.f32 %v3191, %v3795
        %v3874 = vadd.f32 %v3192, %v3798
        %v3875 = vadd.f32 %v3193, %v3800
        %v3876 = vadd.f32 %v3194, %v3803
        %v3877 = vadd.f32 %v3195, %v3805
        %v3878 = vadd.f32 %v3196, %v3808
        %v3879 = vadd.f32 %v3197, %v3810
        %v3880 = vadd.f32 %v3198, %v3813
        %v3881 = vadd.f32 %v3199, %v3815
        %v3882 = vadd.f32 %v3200, %v3818
        %v3883 = vadd.f32 %v3201, %v3820
        %v3884 = vadd.f32 %v3202, %v3823
        %v3885 = vadd.f32 %v3203, %v3825
        %v3886 = vadd.f32 %v3204, %v3828
        %v3887 = vadd.f32 %v3205, %v3830
        %v3888 = vadd.f32 %v3206, %v3833
        %v3889 = vadd.f32 %v3207, %v3835
        %v3890 = vadd.f32 %v3208, %v3838
        %v3891 = vadd.f32 %v3209, %v3840
        %v3892 = vadd.f32 %v3210, %v3843
        %v3893 = vadd.f32 %v3211, %v3845
        %v3894 = vadd.f32 %v3212, %v3848
        %v3895 = vadd.f32 %v3213, %v3850
        %v3896 = vadd.f32 %v3214, %v3853
        %v3897 = vadd.f32 %v3215, %v3855
        %v3898 = vadd.f32 %v3216, %v3858
        %v3899 = vadd.f32 %v3217, %v3860
        %v3900 = vadd.f32 %v3218, %v3863
        %v3901 = vadd.f32 %v3219, %v3865
        %v3902 = vadd.f32 %v3220, %v3868
        %v3903 = vadd.f32 %v3221, %v3870
        %v3904 = vld [vmem:[%s2907] sm:$0xe]
        %v3905 = vld [vmem:[%s2907 + $0xc] sm:$0xe]
        %v3906 = vld [vmem:[%s2907 + $0x18] sm:$0xe]
        %v3907 = vld [vmem:[%s2907 + $0x24] sm:$0xe]
        %v3908 = vld [vmem:[%s2907 + $0x30] sm:$0xe]
        %v3909 = vld [vmem:[%s2907 + $0x3c] sm:$0xe]
        %v3910 = vld [vmem:[%s2907 + $0x48] sm:$0xe]
        %v3911 = vld [vmem:[%s2907 + $0x54] sm:$0xe]
        %v3912 = vld [vmem:[%s2907 + $0x60] sm:$0xe]
        %v3913 = vld [vmem:[%s2907 + $0x6c] sm:$0xe]
        %v3914 = vld [vmem:[%s2907 + $0x78] sm:$0xe]
        %v3915 = vld [vmem:[%s2907 + $0x84] sm:$0xe]
        %v3916 = vld [vmem:[%s2907 + $0x90] sm:$0xe]
        %v3917 = vld [vmem:[%s2907 + $0x9c] sm:$0xe]
        %v3918 = vld [vmem:[%s2907 + $0xa8] sm:$0xe]
        %v3919 = vld [vmem:[%s2907 + $0xb4] sm:$0xe]
        %v3968 = vrot.slane %v3904, 5
        %v3969 = vrot.slane %v3968, 4
        %v3970 = vrot.slane %v3223, 5
        %v3971 = vsel %vm1121, %v3969, %v3970
        %v3972 = vrot.slane %v3970, 4
        %v3973 = vrot.slane %v3224, 5
        %v3974 = vsel %vm1121, %v3972, %v3973
        %v3975 = vrot.slane %v3905, 5
        %v3976 = vrot.slane %v3975, 4
        %v3977 = vrot.slane %v3226, 5
        %v3978 = vsel %vm1121, %v3976, %v3977
        %v3979 = vrot.slane %v3977, 4
        %v3980 = vrot.slane %v3227, 5
        %v3981 = vsel %vm1121, %v3979, %v3980
        %v3982 = vrot.slane %v3906, 5
        %v3983 = vrot.slane %v3982, 4
        %v3984 = vrot.slane %v3229, 5
        %v3985 = vsel %vm1121, %v3983, %v3984
        %v3986 = vrot.slane %v3984, 4
        %v3987 = vrot.slane %v3230, 5
        %v3988 = vsel %vm1121, %v3986, %v3987
        %v3989 = vrot.slane %v3907, 5
        %v3990 = vrot.slane %v3989, 4
        %v3991 = vrot.slane %v3232, 5
        %v3992 = vsel %vm1121, %v3990, %v3991
        %v3993 = vrot.slane %v3991, 4
        %v3994 = vrot.slane %v3233, 5
        %v3995 = vsel %vm1121, %v3993, %v3994
        %v3996 = vrot.slane %v3908, 5
        %v3997 = vrot.slane %v3996, 4
        %v3998 = vrot.slane %v3235, 5
        %v3999 = vsel %vm1121, %v3997, %v3998
        %v4000 = vrot.slane %v3998, 4
        %v4001 = vrot.slane %v3236, 5
        %v4002 = vsel %vm1121, %v4000, %v4001
        %v4003 = vrot.slane %v3909, 5
        %v4004 = vrot.slane %v4003, 4
        %v4005 = vrot.slane %v3238, 5
        %v4006 = vsel %vm1121, %v4004, %v4005
        %v4007 = vrot.slane %v4005, 4
        %v4008 = vrot.slane %v3239, 5
        %v4009 = vsel %vm1121, %v4007, %v4008
        %v4010 = vrot.slane %v3910, 5
        %v4011 = vrot.slane %v4010, 4
        %v4012 = vrot.slane %v3241, 5
        %v4013 = vsel %vm1121, %v4011, %v4012
        %v4014 = vrot.slane %v4012, 4
        %v4015 = vrot.slane %v3242, 5
        %v4016 = vsel %vm1121, %v4014, %v4015
        %v4017 = vrot.slane %v3911, 5
        %v4018 = vrot.slane %v4017, 4
        %v4019 = vrot.slane %v3244, 5
        %v4020 = vsel %vm1121, %v4018, %v4019
        %v4021 = vrot.slane %v4019, 4
        %v4022 = vrot.slane %v3245, 5
        %v4023 = vsel %vm1121, %v4021, %v4022
        %v4024 = vrot.slane %v3912, 5
        %v4025 = vrot.slane %v4024, 4
        %v4026 = vrot.slane %v3247, 5
        %v4027 = vsel %vm1121, %v4025, %v4026
        %v4028 = vrot.slane %v4026, 4
        %v4029 = vrot.slane %v3248, 5
        %v4030 = vsel %vm1121, %v4028, %v4029
        %v4031 = vrot.slane %v3913, 5
        %v4032 = vrot.slane %v4031, 4
        %v4033 = vrot.slane %v3250, 5
        %v4034 = vsel %vm1121, %v4032, %v4033
        %v4035 = vrot.slane %v4033, 4
        %v4036 = vrot.slane %v3251, 5
        %v4037 = vsel %vm1121, %v4035, %v4036
        %v4038 = vrot.slane %v3914, 5
        %v4039 = vrot.slane %v4038, 4
        %v4040 = vrot.slane %v3253, 5
        %v4041 = vsel %vm1121, %v4039, %v4040
        %v4042 = vrot.slane %v4040, 4
        %v4043 = vrot.slane %v3254, 5
        %v4044 = vsel %vm1121, %v4042, %v4043
        %v4045 = vrot.slane %v3915, 5
        %v4046 = vrot.slane %v4045, 4
        %v4047 = vrot.slane %v3256, 5
        %v4048 = vsel %vm1121, %v4046, %v4047
        %v4049 = vrot.slane %v4047, 4
        %v4050 = vrot.slane %v3257, 5
        %v4051 = vsel %vm1121, %v4049, %v4050
        %v4052 = vrot.slane %v3916, 5
        %v4053 = vrot.slane %v4052, 4
        %v4054 = vrot.slane %v3259, 5
        %v4055 = vsel %vm1121, %v4053, %v4054
        %v4056 = vrot.slane %v4054, 4
        %v4057 = vrot.slane %v3260, 5
        %v4058 = vsel %vm1121, %v4056, %v4057
        %v4059 = vrot.slane %v3917, 5
        %v4060 = vrot.slane %v4059, 4
        %v4061 = vrot.slane %v3262, 5
        %v4062 = vsel %vm1121, %v4060, %v4061
        %v4063 = vrot.slane %v4061, 4
        %v4064 = vrot.slane %v3263, 5
        %v4065 = vsel %vm1121, %v4063, %v4064
        %v4066 = vrot.slane %v3918, 5
        %v4067 = vrot.slane %v4066, 4
        %v4068 = vrot.slane %v3265, 5
        %v4069 = vsel %vm1121, %v4067, %v4068
        %v4070 = vrot.slane %v4068, 4
        %v4071 = vrot.slane %v3266, 5
        %v4072 = vsel %vm1121, %v4070, %v4071
        %v4073 = vrot.slane %v3919, 5
        %v4074 = vrot.slane %v4073, 4
        %v4075 = vrot.slane %v3268, 5
        %v4076 = vsel %vm1121, %v4074, %v4075
        %v4077 = vrot.slane %v4075, 4
        %v4078 = vrot.slane %v3269, 5
        %v4079 = vsel %vm1121, %v4077, %v4078
        %s4080 = scalar_lea.vmem %s1, 512
        %v4081 = vld [vmem:[%s4080] sm:$0xf]
        %v4082 = vld [vmem:[%s4080 + $0x4] sm:$0xf]
        %v4083 = vld [vmem:[%s4080 + $0x8] sm:$0xf]
        %v4084 = vld [vmem:[%s4080 + $0xc] sm:$0xf]
        %v4085 = vld [vmem:[%s4080 + $0x10] sm:$0xf]
        %v4086 = vld [vmem:[%s4080 + $0x14] sm:$0xf]
        %v4087 = vld [vmem:[%s4080 + $0x18] sm:$0xf]
        %v4088 = vld [vmem:[%s4080 + $0x1c] sm:$0xf]
        %v4089 = vld [vmem:[%s4080 + $0x20] sm:$0xf]
        %v4090 = vld [vmem:[%s4080 + $0x24] sm:$0xf]
        %v4091 = vld [vmem:[%s4080 + $0x28] sm:$0xf]
        %v4092 = vld [vmem:[%s4080 + $0x2c] sm:$0xf]
        %v4093 = vld [vmem:[%s4080 + $0x30] sm:$0xf]
        %v4094 = vld [vmem:[%s4080 + $0x34] sm:$0xf]
        %v4095 = vld [vmem:[%s4080 + $0x38] sm:$0xf]
        %v4096 = vld [vmem:[%s4080 + $0x3c] sm:$0xf]
        %v4097 = vunpack.c.l.b16 %v3971
        %v4098 = vunpack.c.l.b16 %v3974
        %v4099 = vunpack.c.l.b16 %v3978
        %v4100 = vunpack.c.l.b16 %v3981
        %v4101 = vunpack.c.l.b16 %v3985
        %v4102 = vunpack.c.l.b16 %v3988
        %v4103 = vunpack.c.l.b16 %v3992
        %v4104 = vunpack.c.l.b16 %v3995
        %v4105 = vunpack.c.l.b16 %v3999
        %v4106 = vunpack.c.l.b16 %v4002
        %v4107 = vunpack.c.l.b16 %v4006
        %v4108 = vunpack.c.l.b16 %v4009
        %v4109 = vunpack.c.l.b16 %v4013
        %v4110 = vunpack.c.l.b16 %v4016
        %v4111 = vunpack.c.l.b16 %v4020
        %v4112 = vunpack.c.l.b16 %v4023
        %v4113 = vunpack.c.l.b16 %v4027
        %v4114 = vunpack.c.l.b16 %v4030
        %v4115 = vunpack.c.l.b16 %v4034
        %v4116 = vunpack.c.l.b16 %v4037
        %v4117 = vunpack.c.l.b16 %v4041
        %v4118 = vunpack.c.l.b16 %v4044
        %v4119 = vunpack.c.l.b16 %v4048
        %v4120 = vunpack.c.l.b16 %v4051
        %v4121 = vunpack.c.l.b16 %v4055
        %v4122 = vunpack.c.l.b16 %v4058
        %v4123 = vunpack.c.l.b16 %v4062
        %v4124 = vunpack.c.l.b16 %v4065
        %v4125 = vunpack.c.l.b16 %v4069
        %v4126 = vunpack.c.l.b16 %v4072
        %v4127 = vunpack.c.l.b16 %v4076
        %v4128 = vunpack.c.l.b16 %v4079
        %v4129 = vpack.c.b16 %v4098, %v4097
        %v4130 = vpack.c.b16 %v4100, %v4099
        %v4131 = vpack.c.b16 %v4102, %v4101
        %v4132 = vpack.c.b16 %v4104, %v4103
        %v4133 = vpack.c.b16 %v4106, %v4105
        %v4134 = vpack.c.b16 %v4108, %v4107
        %v4135 = vpack.c.b16 %v4110, %v4109
        %v4136 = vpack.c.b16 %v4112, %v4111
        %v4137 = vpack.c.b16 %v4114, %v4113
        %v4138 = vpack.c.b16 %v4116, %v4115
        %v4139 = vpack.c.b16 %v4118, %v4117
        %v4140 = vpack.c.b16 %v4120, %v4119
        %v4141 = vpack.c.b16 %v4122, %v4121
        %v4142 = vpack.c.b16 %v4124, %v4123
        %v4143 = vpack.c.b16 %v4126, %v4125
        %v4144 = vpack.c.b16 %v4128, %v4127
        %v4177 = vunpack.c.l.b16 %v4081
        %v4178 = vunpack.c.l.b16 %v4082
        %v4179 = vunpack.c.l.b16 %v4083
        %v4180 = vunpack.c.l.b16 %v4084
        %v4181 = vunpack.c.l.b16 %v4085
        %v4182 = vunpack.c.l.b16 %v4086
        %v4183 = vunpack.c.l.b16 %v4087
        %v4184 = vunpack.c.l.b16 %v4088
        %v4185 = vunpack.c.l.b16 %v4089
        %v4186 = vunpack.c.l.b16 %v4090
        %v4187 = vunpack.c.l.b16 %v4091
        %v4188 = vunpack.c.l.b16 %v4092
        %v4189 = vunpack.c.l.b16 %v4093
        %v4190 = vunpack.c.l.b16 %v4094
        %v4191 = vunpack.c.l.b16 %v4095
        %v4192 = vunpack.c.l.b16 %v4096
        %v4193 = vpack.c.b16 %v4178, %v4177
        %v4194 = vpack.c.b16 %v4180, %v4179
        %v4195 = vpack.c.b16 %v4182, %v4181
        %v4196 = vpack.c.b16 %v4184, %v4183
        %v4197 = vpack.c.b16 %v4186, %v4185
        %v4198 = vpack.c.b16 %v4188, %v4187
        %v4199 = vpack.c.b16 %v4190, %v4189
        %v4200 = vpack.c.b16 %v4192, %v4191
        %4209 = vmatpush.bf16.msra.mxu0 %v4200
        %4210 = vmatpush.bf16.msra.mxu0 %v4199
        %4211 = vmatpush.bf16.msra.mxu0 %v4198
        %4212 = vmatpush.bf16.msra.mxu0 %v4197
        %4213 = vmatpush.bf16.msra.mxu0 %v4196
        %4214 = vmatpush.bf16.msra.mxu0 %v4195
        %4215 = vmatpush.bf16.msra.mxu0 %v4194
        %4216 = vmatpush.bf16.msra.mxu0 %v4193
        %4217 = vmatmul.bf16.gmra.mxu0 %v4129
        %v4218 = vpop.f32.mrf.mxu0
        %v4219 = vadd.f32 0.0, %v4218
        %v4220 = vpop.f32.mrf.mxu0
        %v4221 = vadd.f32 0.0, %v4220
        %4222 = vmatmul.bf16.gmra.mxu0 %v4130
        %v4223 = vpop.f32.mrf.mxu0
        %v4224 = vadd.f32 0.0, %v4223
        %v4225 = vpop.f32.mrf.mxu0
        %v4226 = vadd.f32 0.0, %v4225
        %4227 = vmatmul.bf16.gmra.mxu0 %v4131
        %v4228 = vpop.f32.mrf.mxu0
        %v4229 = vadd.f32 0.0, %v4228
        %v4230 = vpop.f32.mrf.mxu0
        %v4231 = vadd.f32 0.0, %v4230
        %4232 = vmatmul.bf16.gmra.mxu0 %v4132
        %v4233 = vpop.f32.mrf.mxu0
        %v4234 = vadd.f32 0.0, %v4233
        %v4235 = vpop.f32.mrf.mxu0
        %v4236 = vadd.f32 0.0, %v4235
        %4237 = vmatmul.bf16.gmra.mxu0 %v4133
        %v4238 = vpop.f32.mrf.mxu0
        %v4239 = vadd.f32 0.0, %v4238
        %v4240 = vpop.f32.mrf.mxu0
        %v4241 = vadd.f32 0.0, %v4240
        %4242 = vmatmul.bf16.gmra.mxu0 %v4134
        %v4243 = vpop.f32.mrf.mxu0
        %v4244 = vadd.f32 0.0, %v4243
        %v4245 = vpop.f32.mrf.mxu0
        %v4246 = vadd.f32 0.0, %v4245
        %4247 = vmatmul.bf16.gmra.mxu0 %v4135
        %v4248 = vpop.f32.mrf.mxu0
        %v4249 = vadd.f32 0.0, %v4248
        %v4250 = vpop.f32.mrf.mxu0
        %v4251 = vadd.f32 0.0, %v4250
        %4252 = vmatmul.bf16.gmra.mxu0 %v4136
        %v4253 = vpop.f32.mrf.mxu0
        %v4254 = vadd.f32 0.0, %v4253
        %v4255 = vpop.f32.mrf.mxu0
        %v4256 = vadd.f32 0.0, %v4255
        %4257 = vmatmul.bf16.gmra.mxu0 %v4137
        %v4258 = vpop.f32.mrf.mxu0
        %v4259 = vadd.f32 0.0, %v4258
        %v4260 = vpop.f32.mrf.mxu0
        %v4261 = vadd.f32 0.0, %v4260
        %4262 = vmatmul.bf16.gmra.mxu0 %v4138
        %v4263 = vpop.f32.mrf.mxu0
        %v4264 = vadd.f32 0.0, %v4263
        %v4265 = vpop.f32.mrf.mxu0
        %v4266 = vadd.f32 0.0, %v4265
        %4267 = vmatmul.bf16.gmra.mxu0 %v4139
        %v4268 = vpop.f32.mrf.mxu0
        %v4269 = vadd.f32 0.0, %v4268
        %v4270 = vpop.f32.mrf.mxu0
        %v4271 = vadd.f32 0.0, %v4270
        %4272 = vmatmul.bf16.gmra.mxu0 %v4140
        %v4273 = vpop.f32.mrf.mxu0
        %v4274 = vadd.f32 0.0, %v4273
        %v4275 = vpop.f32.mrf.mxu0
        %v4276 = vadd.f32 0.0, %v4275
        %4277 = vmatmul.bf16.gmra.mxu0 %v4141
        %v4278 = vpop.f32.mrf.mxu0
        %v4279 = vadd.f32 0.0, %v4278
        %v4280 = vpop.f32.mrf.mxu0
        %v4281 = vadd.f32 0.0, %v4280
        %4282 = vmatmul.bf16.gmra.mxu0 %v4142
        %v4283 = vpop.f32.mrf.mxu0
        %v4284 = vadd.f32 0.0, %v4283
        %v4285 = vpop.f32.mrf.mxu0
        %v4286 = vadd.f32 0.0, %v4285
        %4287 = vmatmul.bf16.gmra.mxu0 %v4143
        %v4288 = vpop.f32.mrf.mxu0
        %v4289 = vadd.f32 0.0, %v4288
        %v4290 = vpop.f32.mrf.mxu0
        %v4291 = vadd.f32 0.0, %v4290
        %4292 = vmatmul.bf16.gmra.mxu0 %v4144
        %v4293 = vpop.f32.mrf.mxu0
        %v4294 = vadd.f32 0.0, %v4293
        %v4295 = vpop.f32.mrf.mxu0
        %v4296 = vadd.f32 0.0, %v4295
        %4297 = vdwg.mxu0
        %v4298 = vadd.f32 %v3872, %v4219
        %v4299 = vadd.f32 %v3873, %v4221
        %v4300 = vadd.f32 %v3874, %v4224
        %v4301 = vadd.f32 %v3875, %v4226
        %v4302 = vadd.f32 %v3876, %v4229
        %v4303 = vadd.f32 %v3877, %v4231
        %v4304 = vadd.f32 %v3878, %v4234
        %v4305 = vadd.f32 %v3879, %v4236
        %v4306 = vadd.f32 %v3880, %v4239
        %v4307 = vadd.f32 %v3881, %v4241
        %v4308 = vadd.f32 %v3882, %v4244
        %v4309 = vadd.f32 %v3883, %v4246
        %v4310 = vadd.f32 %v3884, %v4249
        %v4311 = vadd.f32 %v3885, %v4251
        %v4312 = vadd.f32 %v3886, %v4254
        %v4313 = vadd.f32 %v3887, %v4256
        %v4314 = vadd.f32 %v3888, %v4259
        %v4315 = vadd.f32 %v3889, %v4261
        %v4316 = vadd.f32 %v3890, %v4264
        %v4317 = vadd.f32 %v3891, %v4266
        %v4318 = vadd.f32 %v3892, %v4269
        %v4319 = vadd.f32 %v3893, %v4271
        %v4320 = vadd.f32 %v3894, %v4274
        %v4321 = vadd.f32 %v3895, %v4276
        %v4322 = vadd.f32 %v3896, %v4279
        %v4323 = vadd.f32 %v3897, %v4281
        %v4324 = vadd.f32 %v3898, %v4284
        %v4325 = vadd.f32 %v3899, %v4286
        %v4326 = vadd.f32 %v3900, %v4289
        %v4327 = vadd.f32 %v3901, %v4291
        %v4328 = vadd.f32 %v3902, %v4294
        %v4329 = vadd.f32 %v3903, %v4296
        %v4330 = vld [vmem:[%s2] sm:$0x1]
        %v4332 = vperm.slane %v4330, 0
        %v4334 = vadd.f32 %v4298, %v4332
        %v4335 = vadd.f32 %v4299, %v4332
        %v4336 = vadd.f32 %v4300, %v4332
        %v4337 = vadd.f32 %v4301, %v4332
        %v4338 = vadd.f32 %v4302, %v4332
        %v4339 = vadd.f32 %v4303, %v4332
        %v4340 = vadd.f32 %v4304, %v4332
        %v4341 = vadd.f32 %v4305, %v4332
        %v4342 = vadd.f32 %v4306, %v4332
        %v4343 = vadd.f32 %v4307, %v4332
        %v4344 = vadd.f32 %v4308, %v4332
        %v4345 = vadd.f32 %v4309, %v4332
        %v4346 = vadd.f32 %v4310, %v4332
        %v4347 = vadd.f32 %v4311, %v4332
        %v4348 = vadd.f32 %v4312, %v4332
        %v4349 = vadd.f32 %v4313, %v4332
        %v4350 = vadd.f32 %v4314, %v4332
        %v4351 = vadd.f32 %v4315, %v4332
        %v4352 = vadd.f32 %v4316, %v4332
        %v4353 = vadd.f32 %v4317, %v4332
        %v4354 = vadd.f32 %v4318, %v4332
        %v4355 = vadd.f32 %v4319, %v4332
        %v4356 = vadd.f32 %v4320, %v4332
        %v4357 = vadd.f32 %v4321, %v4332
        %v4358 = vadd.f32 %v4322, %v4332
        %v4359 = vadd.f32 %v4323, %v4332
        %v4360 = vadd.f32 %v4324, %v4332
        %v4361 = vadd.f32 %v4325, %v4332
        %v4362 = vadd.f32 %v4326, %v4332
        %v4363 = vadd.f32 %v4327, %v4332
        %v4364 = vadd.f32 %v4328, %v4332
        %v4365 = vadd.f32 %v4329, %v4332
        %v4366 = vmax.f32 %v4334, 0.0
        %v4367 = vmax.f32 %v4335, 0.0
        %v4368 = vmax.f32 %v4336, 0.0
        %v4369 = vmax.f32 %v4337, 0.0
        %v4370 = vmax.f32 %v4338, 0.0
        %v4371 = vmax.f32 %v4339, 0.0
        %v4372 = vmax.f32 %v4340, 0.0
        %v4373 = vmax.f32 %v4341, 0.0
        %v4374 = vmax.f32 %v4342, 0.0
        %v4375 = vmax.f32 %v4343, 0.0
        %v4376 = vmax.f32 %v4344, 0.0
        %v4377 = vmax.f32 %v4345, 0.0
        %v4378 = vmax.f32 %v4346, 0.0
        %v4379 = vmax.f32 %v4347, 0.0
        %v4380 = vmax.f32 %v4348, 0.0
        %v4381 = vmax.f32 %v4349, 0.0
        %v4382 = vmax.f32 %v4350, 0.0
        %v4383 = vmax.f32 %v4351, 0.0
        %v4384 = vmax.f32 %v4352, 0.0
        %v4385 = vmax.f32 %v4353, 0.0
        %v4386 = vmax.f32 %v4354, 0.0
        %v4387 = vmax.f32 %v4355, 0.0
        %v4388 = vmax.f32 %v4356, 0.0
        %v4389 = vmax.f32 %v4357, 0.0
        %v4390 = vmax.f32 %v4358, 0.0
        %v4391 = vmax.f32 %v4359, 0.0
        %v4392 = vmax.f32 %v4360, 0.0
        %v4393 = vmax.f32 %v4361, 0.0
        %v4394 = vmax.f32 %v4362, 0.0
        %v4395 = vmax.f32 %v4363, 0.0
        %v4396 = vmax.f32 %v4364, 0.0
        %v4397 = vmax.f32 %v4365, 0.0
        %4398 = vst [vmem:[%s163] sm:$0xff] %v4366
        %4399 = vst [vmem:[%s163 + $0x8] sm:$0xff] %v4367
        %4400 = vst [vmem:[%s163 + $0x10] sm:$0xff] %v4368
        %4401 = vst [vmem:[%s163 + $0x18] sm:$0xff] %v4369
        %4402 = vst [vmem:[%s163 + $0x20] sm:$0xff] %v4370
        %4403 = vst [vmem:[%s163 + $0x28] sm:$0xff] %v4371
        %4404 = vst [vmem:[%s163 + $0x30] sm:$0xff] %v4372
        %4405 = vst [vmem:[%s163 + $0x38] sm:$0xff] %v4373
        %4406 = vst [vmem:[%s163 + $0x40] sm:$0xff] %v4374
        %4407 = vst [vmem:[%s163 + $0x48] sm:$0xff] %v4375
        %4408 = vst [vmem:[%s163 + $0x50] sm:$0xff] %v4376
        %4409 = vst [vmem:[%s163 + $0x58] sm:$0xff] %v4377
        %4410 = vst [vmem:[%s163 + $0x60] sm:$0xff] %v4378
        %4411 = vst [vmem:[%s163 + $0x68] sm:$0xff] %v4379
        %4412 = vst [vmem:[%s163 + $0x70] sm:$0xff] %v4380
        %4413 = vst [vmem:[%s163 + $0x78] sm:$0xff] %v4381
        %4414 = vst [vmem:[%s163 + $0x80] sm:$0xff] %v4382
        %4415 = vst [vmem:[%s163 + $0x88] sm:$0xff] %v4383
        %4416 = vst [vmem:[%s163 + $0x90] sm:$0xff] %v4384
        %4417 = vst [vmem:[%s163 + $0x98] sm:$0xff] %v4385
        %4418 = vst [vmem:[%s163 + $0xa0] sm:$0xff] %v4386
        %4419 = vst [vmem:[%s163 + $0xa8] sm:$0xff] %v4387
        %4420 = vst [vmem:[%s163 + $0xb0] sm:$0xff] %v4388
        %4421 = vst [vmem:[%s163 + $0xb8] sm:$0xff] %v4389
        %4422 = vst [vmem:[%s163 + $0xc0] sm:$0xff] %v4390
        %4423 = vst [vmem:[%s163 + $0xc8] sm:$0xff] %v4391
        %4424 = vst [vmem:[%s163 + $0xd0] sm:$0xff] %v4392
        %4425 = vst [vmem:[%s163 + $0xd8] sm:$0xff] %v4393
        %4426 = vst [vmem:[%s163 + $0xe0] sm:$0xff] %v4394
        %4427 = vst [vmem:[%s163 + $0xe8] sm:$0xff] %v4395
        %4428 = vst [vmem:[%s163 + $0xf0] sm:$0xff] %v4396
        %4429 = vst [vmem:[%s163 + $0xf8] sm:$0xff] %v4397
        %s4430 = sand.u32 %s93, 1
        %s4431 = scalar_lea.sflag [#allocation3], %s4430
        %s4432 = sand.u32 %s93, 1
        %s4433 = smul.addr %s4432, 256
        %s4434 = scalar_lea.vmem [#allocation2], %s4433
        // Predicated region
        $region33: #{up_forward.3} parent=31 // pred_check
          %p4435 = pneg %p103
        $region34: #{up_forward.3} parent=31 // pred_check_branch
          %4437 = sbr.rel (%p4435) target = $region36
        $region35: #{up_forward.3} parent=31 // pred_region
          %4439 = vsyncadd %s4431, 0
          %s4440 = smul.addr %s17, 32
          %s4441 = smul.addr %s4440, 8
          %s4442 = scalar_lea.hbm %s3, %s4441
          %s4443 = sshll.u32 %s4434, 4
          %s4444 = int_to_ptr.vmem [resolvable:$true] %s4443
          %s4445 = sshll.u32 %s4442, 4
          %s4446 = int_to_ptr.hbm [resolvable:$true] %s4445
          %4451 = dma.vmem_to_hbm [thread:$0]  %s4444, 4096, %s4446, %s4431, 128, 128, 8
        $region36: #{up_forward.3} parent=31 // pred_fallthru
          _
      $region32: #{up_forward.3} parent=5 // pred_fallthru
        _
      %p4452 = scmp.le.s32.totalorder 2, %s12
      // Predicated region
      $region37: #{up_forward.3} parent=5 // pred_check
        %p4453 = pneg %p4452
      $region38: #{up_forward.3} parent=5 // pred_check_branch
        %4455 = sbr.rel (%p4453) target = $region40
      $region39: #{up_forward.3} parent=5 // pred_region
        %s4456 = ssub.s32 %s12, 2
        // Predicated region
        $region41: #{up_forward.3} parent=39 // pred_check
          %p4457 = pneg %p109
        $region42: #{up_forward.3} parent=39 // pred_check_branch
          %4459 = sbr.rel (%p4457) target = $region44
        $region43: #{up_forward.3} parent=39 // pred_region
          %s4460 = sand.u32 %s94, 1
          %s4461 = scalar_lea.sflag [#allocation3], %s4460
          %s4462 = sand.u32 %s94, 1
          %s4463 = smul.addr %s4462, 256
          %s4464 = scalar_lea.vmem [#allocation2], %s4463
          %4466 = dma.done %s4461, 4096
        $region44: #{up_forward.3} parent=39 // pred_fallthru
          _
      $region40: #{up_forward.3} parent=5 // pred_fallthru
        _
    $region6: #{up_forward.3} parent=1 // loop_footer
      %s16 = sadd.s32 1, %s12
    $region7: #{up_forward.3} parent=1 // loop_footer_branch
      %11 = sbr.rel target = $region3
    $region8: #{up_forward.3} parent=1 // loop_exit
      _
    %4467 = vsyncpa [#allocation3], 1
    %s4468 = scalar_lea.sflag [#allocation3], 1
    %4469 = vsyncpa %s4468, 1

// kernel: up_forward.2
$region0: #{up_forward.2}
  #allocation0 [shape = 'u32[]', space=smem, size = 0x4, offset = 0x4, fixed_abs, tag = 'smem constant byte address 0x4 - core index']
  #allocation1 [shape = 'u32[72,128]{1,0:T(1,128)}', space=vmem, size = 0x9000, scoped, tag = 'internal scratch']
  %s0 = inlined_call_operand.vmem [shape: bf16[2,18,18,128], index: 0, kind: input, shape index: {}]
  %s1 = inlined_call_operand.vmem [shape: bf16[2,18,18,128], index: 1, kind: input, shape index: {}]
  %s2 = inlined_call_operand.vmem [shape: bf16[3,3,128,128], index: 2, kind: input, shape index: {}]
  %s3 = inlined_call_operand.vmem [shape: bf16[3,3,128,128], index: 3, kind: input, shape index: {}]
  %s4 = inlined_call_operand.vmem [shape: f32[1,128], index: 4, kind: input, shape index: {}]
  %s5 = inlined_call_operand.vmem [shape: bf16[2,16,16,128], index: 5, kind: output, shape index: {}]
  %s6 = sld [smem:[#allocation0]]
  $region53: #{up_forward.2} parent=0
    _
  %s8 = ssub.s32 1, %s6
  %s9 = scalar_select 0, %s8, %s6
  loop: start=0, step=1, limit=4
  $region2: #{up_forward.2} parent=0 // loop_pre_header
    _
  $region3: #{up_forward.2} parent=0 // loop_header
    %s11 = sphi 0, %s15
    %p12 = scmp.ge.s32.totalorder %s11, 4
    %s21 = sphi 0, %s23
    %s24 = sphi 0, %s21
    %s25 = sphi 0, %s24
    %s41 = sphi 0, %s25
    %s47 = sphi 0, %s49
    %s50 = sphi 0, %s47
    %s51 = sphi 0, %s50
    %s67 = sphi 0, %s51
    %s71 = sphi 0, %s71
    %s73 = sphi 0, %s71
    %s74 = sphi 0, %s73
    %s88 = sphi 0, %s74
    %s92 = sphi 0, %s92
    %s94 = sphi 0, %s92
    %s95 = sphi 0, %s94
    %s109 = sphi 0, %s95
    %s113 = sphi 0, %s113
    %s115 = sphi 0, %s113
    %s116 = sphi 0, %s115
    %s130 = sphi 0, %s116
    %s136 = sphi 0, %s138
    %s139 = sphi 0, %s136
    %s140 = sphi 0, %s139
    %s156 = sphi 0, %s140
  $region4: #{up_forward.2} parent=0 // loop_header_branch
    %14 = sbr.rel (%p12) target = $region8
  $region5: #{up_forward.2} parent=0 // loop_body
    %s16 = ssub.s32 %s11, 1
    %s17 = ssub.s32 %s11, 2
    %s18 = sadd.s32 %s11, 1
    %s19 = ssub.s32 %s11, %s18
    %p20 = scmp.eq.s32.totalorder %s19, 0
    %s22 = sadd.s32 %s21, 1
    %s23 = scalar_select %p20, %s21, %s22
    %p26 = pneg %p20
    %p27 = scmp.eq.s32.totalorder %s11, 1
    %p28 = por %p26, %p27
    %p29 = scmp.ne.s32.totalorder %s21, %s24
    %p30 = scmp.eq.s32.totalorder %s11, 0
    %p31 = por %p29, %p30
    %p32 = scmp.ne.s32.totalorder %s21, %s24
    %p33 = scmp.eq.s32.totalorder %s16, 1
    %p34 = por %p32, %p33
    %p35 = scmp.ne.s32.totalorder %s24, %s25
    %p36 = scmp.eq.s32.totalorder %s16, 0
    %p37 = por %p35, %p36
    %p38 = scmp.ne.s32.totalorder %s24, %s25
    %p39 = scmp.eq.s32.totalorder %s17, 1
    %p40 = por %p38, %p39
    %p42 = scmp.ne.s32.totalorder %s25, %s41
    %p43 = scmp.eq.s32.totalorder %s17, 0
    %p44 = por %p42, %p43
    %s45 = ssub.s32 %s11, %s18
    %p46 = scmp.eq.s32.totalorder %s45, 0
    %s48 = sadd.s32 %s47, 1
    %s49 = scalar_select %p46, %s47, %s48
    %p52 = pneg %p46
    %p53 = scmp.eq.s32.totalorder %s11, 1
    %p54 = por %p52, %p53
    %p55 = scmp.ne.s32.totalorder %s47, %s50
    %p56 = scmp.eq.s32.totalorder %s11, 0
    %p57 = por %p55, %p56
    %p58 = scmp.ne.s32.totalorder %s47, %s50
    %p59 = scmp.eq.s32.totalorder %s16, 1
    %p60 = por %p58, %p59
    %p61 = scmp.ne.s32.totalorder %s50, %s51
    %p62 = scmp.eq.s32.totalorder %s16, 0
    %p63 = por %p61, %p62
    %p64 = scmp.ne.s32.totalorder %s50, %s51
    %p65 = scmp.eq.s32.totalorder %s17, 1
    %p66 = por %p64, %p65
    %p68 = scmp.ne.s32.totalorder %s51, %s67
    %p69 = scmp.eq.s32.totalorder %s17, 0
    %p70 = por %p68, %p69
    %s72 = sadd.s32 %s71, 1
    %p75 = scmp.eq.s32.totalorder %s11, 1
    %p76 = scmp.ne.s32.totalorder %s71, %s73
    %p77 = scmp.eq.s32.totalorder %s11, 0
    %p78 = por %p76, %p77
    %p79 = scmp.ne.s32.totalorder %s71, %s73
    %p80 = scmp.eq.s32.totalorder %s16, 1
    %p81 = por %p79, %p80
    %p82 = scmp.ne.s32.totalorder %s73, %s74
    %p83 = scmp.eq.s32.totalorder %s16, 0
    %p84 = por %p82, %p83
    %p85 = scmp.ne.s32.totalorder %s73, %s74
    %p86 = scmp.eq.s32.totalorder %s17, 1
    %p87 = por %p85, %p86
    %p89 = scmp.ne.s32.totalorder %s74, %s88
    %p90 = scmp.eq.s32.totalorder %s17, 0
    %p91 = por %p89, %p90
    %s93 = sadd.s32 %s92, 1
    %p96 = scmp.eq.s32.totalorder %s11, 1
    %p97 = scmp.ne.s32.totalorder %s92, %s94
    %p98 = scmp.eq.s32.totalorder %s11, 0
    %p99 = por %p97, %p98
    %p100 = scmp.ne.s32.totalorder %s92, %s94
    %p101 = scmp.eq.s32.totalorder %s16, 1
    %p102 = por %p100, %p101
    %p103 = scmp.ne.s32.totalorder %s94, %s95
    %p104 = scmp.eq.s32.totalorder %s16, 0
    %p105 = por %p103, %p104
    %p106 = scmp.ne.s32.totalorder %s94, %s95
    %p107 = scmp.eq.s32.totalorder %s17, 1
    %p108 = por %p106, %p107
    %p110 = scmp.ne.s32.totalorder %s95, %s109
    %p111 = scmp.eq.s32.totalorder %s17, 0
    %p112 = por %p110, %p111
    %s114 = sadd.s32 %s113, 1
    %p117 = scmp.eq.s32.totalorder %s11, 1
    %p118 = scmp.ne.s32.totalorder %s113, %s115
    %p119 = scmp.eq.s32.totalorder %s11, 0
    %p120 = por %p118, %p119
    %p121 = scmp.ne.s32.totalorder %s113, %s115
    %p122 = scmp.eq.s32.totalorder %s16, 1
    %p123 = por %p121, %p122
    %p124 = scmp.ne.s32.totalorder %s115, %s116
    %p125 = scmp.eq.s32.totalorder %s16, 0
    %p126 = por %p124, %p125
    %p127 = scmp.ne.s32.totalorder %s115, %s116
    %p128 = scmp.eq.s32.totalorder %s17, 1
    %p129 = por %p127, %p128
    %p131 = scmp.ne.s32.totalorder %s116, %s130
    %p132 = scmp.eq.s32.totalorder %s17, 0
    %p133 = por %p131, %p132
    %s134 = ssub.s32 %s11, %s18
    %p135 = scmp.eq.s32.totalorder %s134, 0
    %s137 = sadd.s32 %s136, 1
    %s138 = scalar_select %p135, %s136, %s137
    %p141 = pneg %p135
    %p142 = scmp.eq.s32.totalorder %s11, 1
    %p143 = por %p141, %p142
    %p144 = scmp.ne.s32.totalorder %s136, %s139
    %p145 = scmp.eq.s32.totalorder %s11, 0
    %p146 = por %p144, %p145
    %p147 = scmp.ne.s32.totalorder %s136, %s139
    %p148 = scmp.eq.s32.totalorder %s16, 1
    %p149 = por %p147, %p148
    %p150 = scmp.ne.s32.totalorder %s139, %s140
    %p151 = scmp.eq.s32.totalorder %s16, 0
    %p152 = por %p150, %p151
    %p153 = scmp.ne.s32.totalorder %s139, %s140
    %p154 = scmp.eq.s32.totalorder %s17, 1
    %p155 = por %p153, %p154
    %p157 = scmp.ne.s32.totalorder %s140, %s156
    %p158 = scmp.eq.s32.totalorder %s17, 0
    %p159 = por %p157, %p158
    %p160 = scmp.le.s32.totalorder 1, %s11
    %p161 = scmp.lt.s32.totalorder %s11, 3
    %p162 = pnand %p160, %p161
    %p163 = pneg %p162
    // Predicated region
    $region9: #{up_forward.2} parent=5 // pred_check
      _
    $region10: #{up_forward.2} parent=5 // pred_check_branch
      %165 = sbr.rel (%p162) target = $region12
    $region11: #{up_forward.2} parent=5 // pred_region
      %s166 = ssub.s32 %s11, 1
      // Predicated region
      $region13: #{up_forward.2} parent=11 // pred_check
        %p167 = pneg %p84
      $region14: #{up_forward.2} parent=11 // pred_check_branch
        %169 = sbr.rel (%p167) target = $region16
      $region15: #{up_forward.2} parent=11 // pred_region
        _
      $region16: #{up_forward.2} parent=11 // pred_fallthru
        _
      // Predicated region
      $region17: #{up_forward.2} parent=11 // pred_check
        %p170 = pneg %p105
      $region18: #{up_forward.2} parent=11 // pred_check_branch
        %172 = sbr.rel (%p170) target = $region20
      $region19: #{up_forward.2} parent=11 // pred_region
        _
      $region20: #{up_forward.2} parent=11 // pred_fallthru
        _
      // Predicated region
      $region21: #{up_forward.2} parent=11 // pred_check
        %p173 = pneg %p126
      $region22: #{up_forward.2} parent=11 // pred_check_branch
        %175 = sbr.rel (%p173) target = $region24
      $region23: #{up_forward.2} parent=11 // pred_region
        _
      $region24: #{up_forward.2} parent=11 // pred_fallthru
        _
    $region12: #{up_forward.2} parent=5 // pred_fallthru
      _
    %p176 = scmp.lt.s32.totalorder %s11, 2
    // Predicated region
    $region25: #{up_forward.2} parent=5 // pred_check
      %p177 = pneg %p176
    $region26: #{up_forward.2} parent=5 // pred_check_branch
      %179 = sbr.rel (%p177) target = $region28
    $region27: #{up_forward.2} parent=5 // pred_region
      // Predicated region
      $region29: #{up_forward.2} parent=27 // pred_check
        %p180 = pneg %p31
      $region30: #{up_forward.2} parent=27 // pred_check_branch
        %182 = sbr.rel (%p180) target = $region32
      $region31: #{up_forward.2} parent=27 // pred_region
        %p183 = scmp.lt.s32.totalorder %s11, 1
        %s184 = scalar_select %p183, %s11, 1
        %s185 = smul.addr %s184, 54
        %s186 = smul.addr %s185, 4
        %s187 = scalar_lea.vmem %s0, %s186
      $region32: #{up_forward.2} parent=27 // pred_fallthru
        _
      // Predicated region
      $region33: #{up_forward.2} parent=27 // pred_check
        %p188 = pneg %p57
      $region34: #{up_forward.2} parent=27 // pred_check_branch
        %190 = sbr.rel (%p188) target = $region36
      $region35: #{up_forward.2} parent=27 // pred_region
        %p191 = scmp.lt.s32.totalorder %s11, 1
        %s192 = scalar_select %p191, %s11, 1
        %s193 = smul.addr %s192, 54
        %s194 = smul.addr %s193, 4
        %s195 = scalar_lea.vmem %s1, %s194
      $region36: #{up_forward.2} parent=27 // pred_fallthru
        _
    $region28: #{up_forward.2} parent=5 // pred_fallthru
      _
    %p196 = scmp.le.s32.totalorder 1, %s11
    %p197 = scmp.lt.s32.totalorder %s11, 3
    %p198 = pnand %p196, %p197
    %p199 = pneg %p198
    // Predicated region
    $region37: #{up_forward.2} parent=5 // pred_check
      _
    $region38: #{up_forward.2} parent=5 // pred_check_branch
      %201 = sbr.rel (%p198) target = $region40
    $region39: #{up_forward.2} parent=5 // pred_region
      %s202 = ssub.s32 %s11, 1
      %p203 = scmp.lt.s32.totalorder %s16, 1
      %s204 = scalar_select %p203, %s16, 1
      %s205 = smul.addr %s204, 54
      %s206 = smul.addr %s205, 4
      %s207 = scalar_lea.vmem %s0, %s206
      %p208 = pneg %p37
      %p209 = pneg %p34
      %p210 = scmp.lt.s32.totalorder %s16, 1
      %s211 = scalar_select %p210, %s16, 1
      %s212 = smul.addr %s211, 54
      %s213 = smul.addr %s212, 4
      %s214 = scalar_lea.vmem %s1, %s213
      %p215 = pneg %p63
      %p216 = pneg %p60
      %p217 = pneg %p84
      %p218 = pneg %p81
      %p219 = pneg %p105
      %p220 = pneg %p102
      %p221 = pneg %p126
      %p222 = pneg %p123
      %p223 = pneg %p152
      %p224 = pneg %p149
      %p225 = scmp.lt.s32.totalorder %s16, 1
      %s226 = scalar_select %p225, %s16, 1
      %s227 = smul.addr %s226, 32
      %s228 = smul.addr %s227, 4
      %s229 = scalar_lea.vmem %s5, %s228
      %p230 = scmp.lt.s32.totalorder %s16, 1
      %s231 = scalar_select %p230, %s16, 1
      %s232 = smul.addr %s231, 54
      %s233 = smul.addr %s232, 4
      %s234 = scalar_lea.vmem %s0, %s233
      %p235 = scmp.lt.s32.totalorder %s16, 1
      %s236 = scalar_select %p235, %s16, 1
      %s237 = smul.addr %s236, 54
      %s238 = smul.addr %s237, 4
      %s239 = scalar_lea.vmem %s1, %s238
      %p240 = scmp.lt.s32.totalorder %s16, 1
      %s241 = scalar_select %p240, %s16, 1
      %s242 = smul.addr %s241, 32
      %s243 = smul.addr %s242, 4
      %s244 = scalar_lea.vmem %s5, %s243
      %v245 = vld [vmem:[%s234] sm:$0xf]
      %v246 = vld [vmem:[%s234 + $0x4] sm:$0xf]
      %v247 = vld [vmem:[%s234 + $0xc] sm:$0xf]
      %v248 = vld [vmem:[%s234 + $0x10] sm:$0xf]
      %v249 = vld [vmem:[%s234 + $0x18] sm:$0xf]
      %v250 = vld [vmem:[%s234 + $0x1c] sm:$0xf]
      %v251 = vld [vmem:[%s234 + $0x24] sm:$0xf]
      %v252 = vld [vmem:[%s234 + $0x28] sm:$0xf]
      %v253 = vld [vmem:[%s234 + $0x30] sm:$0xf]
      %v254 = vld [vmem:[%s234 + $0x34] sm:$0xf]
      %v255 = vld [vmem:[%s234 + $0x3c] sm:$0xf]
      %v256 = vld [vmem:[%s234 + $0x40] sm:$0xf]
      %v257 = vld [vmem:[%s234 + $0x48] sm:$0xf]
      %v258 = vld [vmem:[%s234 + $0x4c] sm:$0xf]
      %v259 = vld [vmem:[%s234 + $0x54] sm:$0xf]
      %v260 = vld [vmem:[%s234 + $0x58] sm:$0xf]
      %v261 = vld [vmem:[%s234 + $0x60] sm:$0xf]
      %v262 = vld [vmem:[%s234 + $0x64] sm:$0xf]
      %v263 = vld [vmem:[%s234 + $0x6c] sm:$0xf]
      %v264 = vld [vmem:[%s234 + $0x70] sm:$0xf]
      %v265 = vld [vmem:[%s234 + $0x78] sm:$0xf]
      %v266 = vld [vmem:[%s234 + $0x7c] sm:$0xf]
      %v267 = vld [vmem:[%s234 + $0x84] sm:$0xf]
      %v268 = vld [vmem:[%s234 + $0x88] sm:$0xf]
      %v269 = vld [vmem:[%s234 + $0x90] sm:$0xf]
      %v270 = vld [vmem:[%s234 + $0x94] sm:$0xf]
      %v271 = vld [vmem:[%s234 + $0x9c] sm:$0xf]
      %v272 = vld [vmem:[%s234 + $0xa0] sm:$0xf]
      %v273 = vld [vmem:[%s234 + $0xa8] sm:$0xf]
      %v274 = vld [vmem:[%s234 + $0xac] sm:$0xf]
      %v275 = vld [vmem:[%s234 + $0xb4] sm:$0xf]
      %v276 = vld [vmem:[%s234 + $0xb8] sm:$0xf]
      %v277 = vld [vmem:[%s2] sm:$0xf]
      %v278 = vld [vmem:[%s2 + $0x4] sm:$0xf]
      %v279 = vld [vmem:[%s2 + $0x8] sm:$0xf]
      %v280 = vld [vmem:[%s2 + $0xc] sm:$0xf]
      %v281 = vld [vmem:[%s2 + $0x10] sm:$0xf]
      %v282 = vld [vmem:[%s2 + $0x14] sm:$0xf]
      %v283 = vld [vmem:[%s2 + $0x18] sm:$0xf]
      %v284 = vld [vmem:[%s2 + $0x1c] sm:$0xf]
      %v285 = vld [vmem:[%s2 + $0x20] sm:$0xf]
      %v286 = vld [vmem:[%s2 + $0x24] sm:$0xf]
      %v287 = vld [vmem:[%s2 + $0x28] sm:$0xf]
      %v288 = vld [vmem:[%s2 + $0x2c] sm:$0xf]
      %v289 = vld [vmem:[%s2 + $0x30] sm:$0xf]
      %v290 = vld [vmem:[%s2 + $0x34] sm:$0xf]
      %v291 = vld [vmem:[%s2 + $0x38] sm:$0xf]
      %v292 = vld [vmem:[%s2 + $0x3c] sm:$0xf]
      %v293 = vld [vmem:[%s234 + $0x8] sm:$0x1]
      %v294 = vld [vmem:[%s234 + $0x14] sm:$0x1]
      %v295 = vld [vmem:[%s234 + $0x20] sm:$0x1]
      %v296 = vld [vmem:[%s234 + $0x2c] sm:$0x1]
      %v297 = vld [vmem:[%s234 + $0x38] sm:$0x1]
      %v298 = vld [vmem:[%s234 + $0x44] sm:$0x1]
      %v299 = vld [vmem:[%s234 + $0x50] sm:$0x1]
      %v300 = vld [vmem:[%s234 + $0x5c] sm:$0x1]
      %v301 = vld [vmem:[%s234 + $0x68] sm:$0x1]
      %v302 = vld [vmem:[%s234 + $0x74] sm:$0x1]
      %v303 = vld [vmem:[%s234 + $0x80] sm:$0x1]
      %v304 = vld [vmem:[%s234 + $0x8c] sm:$0x1]
      %v305 = vld [vmem:[%s234 + $0x98] sm:$0x1]
      %v306 = vld [vmem:[%s234 + $0xa4] sm:$0x1]
      %v307 = vld [vmem:[%s234 + $0xb0] sm:$0x1]
      %v308 = vld [vmem:[%s234 + $0xbc] sm:$0x1]
      %vm309 = vsmask.f32 3328
      %vm310 = vsmask.f32 7440
      %vm311 = vmor %vm309, %vm310
      %v313 = vshrl.u32 %v245, 16
      %v315 = vrot.slane %v313, 4
      %v316 = vshll.u32 %v245, 16
      %v318 = vrot.slane %v316, 5
      %v319 = vor.u32 %v315, %v318
      %v320 = vrot.slane %v319, 4
      %v322 = vshll.u32 %v246, 16
      %v324 = vrot.slane %v322, 5
      %v325 = vsel %vm311, %v320, %v324
      %v326 = vshrl.u32 %v246, 16
      %v328 = vrot.slane %v326, 4
      %v329 = vor.u32 %v328, %v324
      %v330 = vrot.slane %v329, 4
      %v332 = vshll.u32 %v293, 16
      %v334 = vrot.slane %v332, 5
      %v335 = vsel %vm311, %v330, %v334
      %v337 = vshrl.u32 %v247, 16
      %v339 = vrot.slane %v337, 4
      %v340 = vshll.u32 %v247, 16
      %v342 = vrot.slane %v340, 5
      %v343 = vor.u32 %v339, %v342
      %v344 = vrot.slane %v343, 4
      %v346 = vshll.u32 %v248, 16
      %v348 = vrot.slane %v346, 5
      %v349 = vsel %vm311, %v344, %v348
      %v350 = vshrl.u32 %v248, 16
      %v352 = vrot.slane %v350, 4
      %v353 = vor.u32 %v352, %v348
      %v354 = vrot.slane %v353, 4
      %v356 = vshll.u32 %v294, 16
      %v358 = vrot.slane %v356, 5
      %v359 = vsel %vm311, %v354, %v358
      %v361 = vshrl.u32 %v249, 16
      %v363 = vrot.slane %v361, 4
      %v364 = vshll.u32 %v249, 16
      %v366 = vrot.slane %v364, 5
      %v367 = vor.u32 %v363, %v366
      %v368 = vrot.slane %v367, 4
      %v370 = vshll.u32 %v250, 16
      %v372 = vrot.slane %v370, 5
      %v373 = vsel %vm311, %v368, %v372
      %v374 = vshrl.u32 %v250, 16
      %v376 = vrot.slane %v374, 4
      %v377 = vor.u32 %v376, %v372
      %v378 = vrot.slane %v377, 4
      %v380 = vshll.u32 %v295, 16
      %v382 = vrot.slane %v380, 5
      %v383 = vsel %vm311, %v378, %v382
      %v385 = vshrl.u32 %v251, 16
      %v387 = vrot.slane %v385, 4
      %v388 = vshll.u32 %v251, 16
      %v390 = vrot.slane %v388, 5
      %v391 = vor.u32 %v387, %v390
      %v392 = vrot.slane %v391, 4
      %v394 = vshll.u32 %v252, 16
      %v396 = vrot.slane %v394, 5
      %v397 = vsel %vm311, %v392, %v396
      %v398 = vshrl.u32 %v252, 16
      %v400 = vrot.slane %v398, 4
      %v401 = vor.u32 %v400, %v396
      %v402 = vrot.slane %v401, 4
      %v404 = vshll.u32 %v296, 16
      %v406 = vrot.slane %v404, 5
      %v407 = vsel %vm311, %v402, %v406
      %v409 = vshrl.u32 %v253, 16
      %v411 = vrot.slane %v409, 4
      %v412 = vshll.u32 %v253, 16
      %v414 = vrot.slane %v412, 5
      %v415 = vor.u32 %v411, %v414
      %v416 = vrot.slane %v415, 4
      %v418 = vshll.u32 %v254, 16
      %v420 = vrot.slane %v418, 5
      %v421 = vsel %vm311, %v416, %v420
      %v422 = vshrl.u32 %v254, 16
      %v424 = vrot.slane %v422, 4
      %v425 = vor.u32 %v424, %v420
      %v426 = vrot.slane %v425, 4
      %v428 = vshll.u32 %v297, 16
      %v430 = vrot.slane %v428, 5
      %v431 = vsel %vm311, %v426, %v430
      %v433 = vshrl.u32 %v255, 16
      %v435 = vrot.slane %v433, 4
      %v436 = vshll.u32 %v255, 16
      %v438 = vrot.slane %v436, 5
      %v439 = vor.u32 %v435, %v438
      %v440 = vrot.slane %v439, 4
      %v442 = vshll.u32 %v256, 16
      %v444 = vrot.slane %v442, 5
      %v445 = vsel %vm311, %v440, %v444
      %v446 = vshrl.u32 %v256, 16
      %v448 = vrot.slane %v446, 4
      %v449 = vor.u32 %v448, %v444
      %v450 = vrot.slane %v449, 4
      %v452 = vshll.u32 %v298, 16
      %v454 = vrot.slane %v452, 5
      %v455 = vsel %vm311, %v450, %v454
      %v457 = vshrl.u32 %v257, 16
      %v459 = vrot.slane %v457, 4
      %v460 = vshll.u32 %v257, 16
      %v462 = vrot.slane %v460, 5
      %v463 = vor.u32 %v459, %v462
      %v464 = vrot.slane %v463, 4
      %v466 = vshll.u32 %v258, 16
      %v468 = vrot.slane %v466, 5
      %v469 = vsel %vm311, %v464, %v468
      %v470 = vshrl.u32 %v258, 16
      %v472 = vrot.slane %v470, 4
      %v473 = vor.u32 %v472, %v468
      %v474 = vrot.slane %v473, 4
      %v476 = vshll.u32 %v299, 16
      %v478 = vrot.slane %v476, 5
      %v479 = vsel %vm311, %v474, %v478
      %v481 = vshrl.u32 %v259, 16
      %v483 = vrot.slane %v481, 4
      %v484 = vshll.u32 %v259, 16
      %v486 = vrot.slane %v484, 5
      %v487 = vor.u32 %v483, %v486
      %v488 = vrot.slane %v487, 4
      %v490 = vshll.u32 %v260, 16
      %v492 = vrot.slane %v490, 5
      %v493 = vsel %vm311, %v488, %v492
      %v494 = vshrl.u32 %v260, 16
      %v496 = vrot.slane %v494, 4
      %v497 = vor.u32 %v496, %v492
      %v498 = vrot.slane %v497, 4
      %v500 = vshll.u32 %v300, 16
      %v502 = vrot.slane %v500, 5
      %v503 = vsel %vm311, %v498, %v502
      %v505 = vshrl.u32 %v261, 16
      %v507 = vrot.slane %v505, 4
      %v508 = vshll.u32 %v261, 16
      %v510 = vrot.slane %v508, 5
      %v511 = vor.u32 %v507, %v510
      %v512 = vrot.slane %v511, 4
      %v514 = vshll.u32 %v262, 16
      %v516 = vrot.slane %v514, 5
      %v517 = vsel %vm311, %v512, %v516
      %v518 = vshrl.u32 %v262, 16
      %v520 = vrot.slane %v518, 4
      %v521 = vor.u32 %v520, %v516
      %v522 = vrot.slane %v521, 4
      %v524 = vshll.u32 %v301, 16
      %v526 = vrot.slane %v524, 5
      %v527 = vsel %vm311, %v522, %v526
      %v529 = vshrl.u32 %v263, 16
      %v531 = vrot.slane %v529, 4
      %v532 = vshll.u32 %v263, 16
      %v534 = vrot.slane %v532, 5
      %v535 = vor.u32 %v531, %v534
      %v536 = vrot.slane %v535, 4
      %v538 = vshll.u32 %v264, 16
      %v540 = vrot.slane %v538, 5
      %v541 = vsel %vm311, %v536, %v540
      %v542 = vshrl.u32 %v264, 16
      %v544 = vrot.slane %v542, 4
      %v545 = vor.u32 %v544, %v540
      %v546 = vrot.slane %v545, 4
      %v548 = vshll.u32 %v302, 16
      %v550 = vrot.slane %v548, 5
      %v551 = vsel %vm311, %v546, %v550
      %v553 = vshrl.u32 %v265, 16
      %v555 = vrot.slane %v553, 4
      %v556 = vshll.u32 %v265, 16
      %v558 = vrot.slane %v556, 5
      %v559 = vor.u32 %v555, %v558
      %v560 = vrot.slane %v559, 4
      %v562 = vshll.u32 %v266, 16
      %v564 = vrot.slane %v562, 5
      %v565 = vsel %vm311, %v560, %v564
      %v566 = vshrl.u32 %v266, 16
      %v568 = vrot.slane %v566, 4
      %v569 = vor.u32 %v568, %v564
      %v570 = vrot.slane %v569, 4
      %v572 = vshll.u32 %v303, 16
      %v574 = vrot.slane %v572, 5
      %v575 = vsel %vm311, %v570, %v574
      %v577 = vshrl.u32 %v267, 16
      %v579 = vrot.slane %v577, 4
      %v580 = vshll.u32 %v267, 16
      %v582 = vrot.slane %v580, 5
      %v583 = vor.u32 %v579, %v582
      %v584 = vrot.slane %v583, 4
      %v586 = vshll.u32 %v268, 16
      %v588 = vrot.slane %v586, 5
      %v589 = vsel %vm311, %v584, %v588
      %v590 = vshrl.u32 %v268, 16
      %v592 = vrot.slane %v590, 4
      %v593 = vor.u32 %v592, %v588
      %v594 = vrot.slane %v593, 4
      %v596 = vshll.u32 %v304, 16
      %v598 = vrot.slane %v596, 5
      %v599 = vsel %vm311, %v594, %v598
      %v601 = vshrl.u32 %v269, 16
      %v603 = vrot.slane %v601, 4
      %v604 = vshll.u32 %v269, 16
      %v606 = vrot.slane %v604, 5
      %v607 = vor.u32 %v603, %v606
      %v608 = vrot.slane %v607, 4
      %v610 = vshll.u32 %v270, 16
      %v612 = vrot.slane %v610, 5
      %v613 = vsel %vm311, %v608, %v612
      %v614 = vshrl.u32 %v270, 16
      %v616 = vrot.slane %v614, 4
      %v617 = vor.u32 %v616, %v612
      %v618 = vrot.slane %v617, 4
      %v620 = vshll.u32 %v305, 16
      %v622 = vrot.slane %v620, 5
      %v623 = vsel %vm311, %v618, %v622
      %v625 = vshrl.u32 %v271, 16
      %v627 = vrot.slane %v625, 4
      %v628 = vshll.u32 %v271, 16
      %v630 = vrot.slane %v628, 5
      %v631 = vor.u32 %v627, %v630
      %v632 = vrot.slane %v631, 4
      %v634 = vshll.u32 %v272, 16
      %v636 = vrot.slane %v634, 5
      %v637 = vsel %vm311, %v632, %v636
      %v638 = vshrl.u32 %v272, 16
      %v640 = vrot.slane %v638, 4
      %v641 = vor.u32 %v640, %v636
      %v642 = vrot.slane %v641, 4
      %v644 = vshll.u32 %v306, 16
      %v646 = vrot.slane %v644, 5
      %v647 = vsel %vm311, %v642, %v646
      %v649 = vshrl.u32 %v273, 16
      %v651 = vrot.slane %v649, 4
      %v652 = vshll.u32 %v273, 16
      %v654 = vrot.slane %v652, 5
      %v655 = vor.u32 %v651, %v654
      %v656 = vrot.slane %v655, 4
      %v658 = vshll.u32 %v274, 16
      %v660 = vrot.slane %v658, 5
      %v661 = vsel %vm311, %v656, %v660
      %v662 = vshrl.u32 %v274, 16
      %v664 = vrot.slane %v662, 4
      %v665 = vor.u32 %v664, %v660
      %v666 = vrot.slane %v665, 4
      %v668 = vshll.u32 %v307, 16
      %v670 = vrot.slane %v668, 5
      %v671 = vsel %vm311, %v666, %v670
      %v673 = vshrl.u32 %v275, 16
      %v675 = vrot.slane %v673, 4
      %v676 = vshll.u32 %v275, 16
      %v678 = vrot.slane %v676, 5
      %v679 = vor.u32 %v675, %v678
      %v680 = vrot.slane %v679, 4
      %v682 = vshll.u32 %v276, 16
      %v684 = vrot.slane %v682, 5
      %v685 = vsel %vm311, %v680, %v684
      %v686 = vshrl.u32 %v276, 16
      %v688 = vrot.slane %v686, 4
      %v689 = vor.u32 %v688, %v684
      %v690 = vrot.slane %v689, 4
      %v692 = vshll.u32 %v308, 16
      %v694 = vrot.slane %v692, 5
      %v695 = vsel %vm311, %v690, %v694
      %s696 = scalar_lea.vmem %s2, 64
      %v697 = vld [vmem:[%s696] sm:$0xf]
      %v698 = vld [vmem:[%s696 + $0x4] sm:$0xf]
      %v699 = vld [vmem:[%s696 + $0x8] sm:$0xf]
      %v700 = vld [vmem:[%s696 + $0xc] sm:$0xf]
      %v701 = vld [vmem:[%s696 + $0x10] sm:$0xf]
      %v702 = vld [vmem:[%s696 + $0x14] sm:$0xf]
      %v703 = vld [vmem:[%s696 + $0x18] sm:$0xf]
      %v704 = vld [vmem:[%s696 + $0x1c] sm:$0xf]
      %v705 = vld [vmem:[%s696 + $0x20] sm:$0xf]
      %v706 = vld [vmem:[%s696 + $0x24] sm:$0xf]
      %v707 = vld [vmem:[%s696 + $0x28] sm:$0xf]
      %v708 = vld [vmem:[%s696 + $0x2c] sm:$0xf]
      %v709 = vld [vmem:[%s696 + $0x30] sm:$0xf]
      %v710 = vld [vmem:[%s696 + $0x34] sm:$0xf]
      %v711 = vld [vmem:[%s696 + $0x38] sm:$0xf]
      %v712 = vld [vmem:[%s696 + $0x3c] sm:$0xf]
      %v713 = vunpack.c.l.b16 %v325
      %v714 = vunpack.c.l.b16 %v335
      %v715 = vunpack.c.l.b16 %v349
      %v716 = vunpack.c.l.b16 %v359
      %v717 = vunpack.c.l.b16 %v373
      %v718 = vunpack.c.l.b16 %v383
      %v719 = vunpack.c.l.b16 %v397
      %v720 = vunpack.c.l.b16 %v407
      %v721 = vunpack.c.l.b16 %v421
      %v722 = vunpack.c.l.b16 %v431
      %v723 = vunpack.c.l.b16 %v445
      %v724 = vunpack.c.l.b16 %v455
      %v725 = vunpack.c.l.b16 %v469
      %v726 = vunpack.c.l.b16 %v479
      %v727 = vunpack.c.l.b16 %v493
      %v728 = vunpack.c.l.b16 %v503
      %v729 = vunpack.c.l.b16 %v517
      %v730 = vunpack.c.l.b16 %v527
      %v731 = vunpack.c.l.b16 %v541
      %v732 = vunpack.c.l.b16 %v551
      %v733 = vunpack.c.l.b16 %v565
      %v734 = vunpack.c.l.b16 %v575
      %v735 = vunpack.c.l.b16 %v589
      %v736 = vunpack.c.l.b16 %v599
      %v737 = vunpack.c.l.b16 %v613
      %v738 = vunpack.c.l.b16 %v623
      %v739 = vunpack.c.l.b16 %v637
      %v740 = vunpack.c.l.b16 %v647
      %v741 = vunpack.c.l.b16 %v661
      %v742 = vunpack.c.l.b16 %v671
      %v743 = vunpack.c.l.b16 %v685
      %v744 = vunpack.c.l.b16 %v695
      %v745 = vpack.c.b16 %v714, %v713
      %v746 = vpack.c.b16 %v716, %v715
      %v747 = vpack.c.b16 %v718, %v717
      %v748 = vpack.c.b16 %v720, %v719
      %v749 = vpack.c.b16 %v722, %v721
      %v750 = vpack.c.b16 %v724, %v723
      %v751 = vpack.c.b16 %v726, %v725
      %v752 = vpack.c.b16 %v728, %v727
      %v753 = vpack.c.b16 %v730, %v729
      %v754 = vpack.c.b16 %v732, %v731
      %v755 = vpack.c.b16 %v734, %v733
      %v756 = vpack.c.b16 %v736, %v735
      %v757 = vpack.c.b16 %v738, %v737
      %v758 = vpack.c.b16 %v740, %v739
      %v759 = vpack.c.b16 %v742, %v741
      %v760 = vpack.c.b16 %v744, %v743
      %v793 = vunpack.c.l.b16 %v697
      %v794 = vunpack.c.l.b16 %v698
      %v795 = vunpack.c.l.b16 %v699
      %v796 = vunpack.c.l.b16 %v700
      %v797 = vunpack.c.l.b16 %v701
      %v798 = vunpack.c.l.b16 %v702
      %v799 = vunpack.c.l.b16 %v703
      %v800 = vunpack.c.l.b16 %v704
      %v801 = vunpack.c.l.b16 %v705
      %v802 = vunpack.c.l.b16 %v706
      %v803 = vunpack.c.l.b16 %v707
      %v804 = vunpack.c.l.b16 %v708
      %v805 = vunpack.c.l.b16 %v709
      %v806 = vunpack.c.l.b16 %v710
      %v807 = vunpack.c.l.b16 %v711
      %v808 = vunpack.c.l.b16 %v712
      %v809 = vpack.c.b16 %v794, %v793
      %v810 = vpack.c.b16 %v796, %v795
      %v811 = vpack.c.b16 %v798, %v797
      %v812 = vpack.c.b16 %v800, %v799
      %v813 = vpack.c.b16 %v802, %v801
      %v814 = vpack.c.b16 %v804, %v803
      %v815 = vpack.c.b16 %v806, %v805
      %v816 = vpack.c.b16 %v808, %v807
      %825 = vmatpush.bf16.msra.mxu0 %v816
      %826 = vmatpush.bf16.msra.mxu0 %v815
      %827 = vmatpush.bf16.msra.mxu0 %v814
      %828 = vmatpush.bf16.msra.mxu0 %v813
      %829 = vmatpush.bf16.msra.mxu0 %v812
      %830 = vmatpush.bf16.msra.mxu0 %v811
      %831 = vmatpush.bf16.msra.mxu0 %v810
      %832 = vmatpush.bf16.msra.mxu0 %v809
      %833 = vmatmul.bf16.gmra.mxu0 %v745
      %v834 = vpop.f32.mrf.mxu0
      %v835 = vadd.f32 0.0, %v834
      %v836 = vpop.f32.mrf.mxu0
      %v837 = vadd.f32 0.0, %v836
      %838 = vmatmul.bf16.gmra.mxu0 %v746
      %v839 = vpop.f32.mrf.mxu0
      %v840 = vadd.f32 0.0, %v839
      %v841 = vpop.f32.mrf.mxu0
      %v842 = vadd.f32 0.0, %v841
      %843 = vmatmul.bf16.gmra.mxu0 %v747
      %v844 = vpop.f32.mrf.mxu0
      %v845 = vadd.f32 0.0, %v844
      %v846 = vpop.f32.mrf.mxu0
      %v847 = vadd.f32 0.0, %v846
      %848 = vmatmul.bf16.gmra.mxu0 %v748
      %v849 = vpop.f32.mrf.mxu0
      %v850 = vadd.f32 0.0, %v849
      %v851 = vpop.f32.mrf.mxu0
      %v852 = vadd.f32 0.0, %v851
      %853 = vmatmul.bf16.gmra.mxu0 %v749
      %v854 = vpop.f32.mrf.mxu0
      %v855 = vadd.f32 0.0, %v854
      %v856 = vpop.f32.mrf.mxu0
      %v857 = vadd.f32 0.0, %v856
      %858 = vmatmul.bf16.gmra.mxu0 %v750
      %v859 = vpop.f32.mrf.mxu0
      %v860 = vadd.f32 0.0, %v859
      %v861 = vpop.f32.mrf.mxu0
      %v862 = vadd.f32 0.0, %v861
      %863 = vmatmul.bf16.gmra.mxu0 %v751
      %v864 = vpop.f32.mrf.mxu0
      %v865 = vadd.f32 0.0, %v864
      %v866 = vpop.f32.mrf.mxu0
      %v867 = vadd.f32 0.0, %v866
      %868 = vmatmul.bf16.gmra.mxu0 %v752
      %v869 = vpop.f32.mrf.mxu0
      %v870 = vadd.f32 0.0, %v869
      %v871 = vpop.f32.mrf.mxu0
      %v872 = vadd.f32 0.0, %v871
      %873 = vmatmul.bf16.gmra.mxu0 %v753
      %v874 = vpop.f32.mrf.mxu0
      %v875 = vadd.f32 0.0, %v874
      %v876 = vpop.f32.mrf.mxu0
      %v877 = vadd.f32 0.0, %v876
      %878 = vmatmul.bf16.gmra.mxu0 %v754
      %v879 = vpop.f32.mrf.mxu0
      %v880 = vadd.f32 0.0, %v879
      %v881 = vpop.f32.mrf.mxu0
      %v882 = vadd.f32 0.0, %v881
      %883 = vmatmul.bf16.gmra.mxu0 %v755
      %v884 = vpop.f32.mrf.mxu0
      %v885 = vadd.f32 0.0, %v884
      %v886 = vpop.f32.mrf.mxu0
      %v887 = vadd.f32 0.0, %v886
      %888 = vmatmul.bf16.gmra.mxu0 %v756
      %v889 = vpop.f32.mrf.mxu0
      %v890 = vadd.f32 0.0, %v889
      %v891 = vpop.f32.mrf.mxu0
      %v892 = vadd.f32 0.0, %v891
      %893 = vmatmul.bf16.gmra.mxu0 %v757
      %v894 = vpop.f32.mrf.mxu0
      %v895 = vadd.f32 0.0, %v894
      %v896 = vpop.f32.mrf.mxu0
      %v897 = vadd.f32 0.0, %v896
      %898 = vmatmul.bf16.gmra.mxu0 %v758
      %v899 = vpop.f32.mrf.mxu0
      %v900 = vadd.f32 0.0, %v899
      %v901 = vpop.f32.mrf.mxu0
      %v902 = vadd.f32 0.0, %v901
      %903 = vmatmul.bf16.gmra.mxu0 %v759
      %v904 = vpop.f32.mrf.mxu0
      %v905 = vadd.f32 0.0, %v904
      %v906 = vpop.f32.mrf.mxu0
      %v907 = vadd.f32 0.0, %v906
      %908 = vmatmul.bf16.gmra.mxu0 %v760
      %v909 = vpop.f32.mrf.mxu0
      %v910 = vadd.f32 0.0, %v909
      %v911 = vpop.f32.mrf.mxu0
      %v912 = vadd.f32 0.0, %v911
      %913 = vdwg.mxu0
      %v946 = vunpack.c.l.b16 %v245
      %v947 = vunpack.c.l.b16 %v246
      %v948 = vunpack.c.l.b16 %v247
      %v949 = vunpack.c.l.b16 %v248
      %v950 = vunpack.c.l.b16 %v249
      %v951 = vunpack.c.l.b16 %v250
      %v952 = vunpack.c.l.b16 %v251
      %v953 = vunpack.c.l.b16 %v252
      %v954 = vunpack.c.l.b16 %v253
      %v955 = vunpack.c.l.b16 %v254
      %v956 = vunpack.c.l.b16 %v255
      %v957 = vunpack.c.l.b16 %v256
      %v958 = vunpack.c.l.b16 %v257
      %v959 = vunpack.c.l.b16 %v258
      %v960 = vunpack.c.l.b16 %v259
      %v961 = vunpack.c.l.b16 %v260
      %v962 = vunpack.c.l.b16 %v261
      %v963 = vunpack.c.l.b16 %v262
      %v964 = vunpack.c.l.b16 %v263
      %v965 = vunpack.c.l.b16 %v264
      %v966 = vunpack.c.l.b16 %v265
      %v967 = vunpack.c.l.b16 %v266
      %v968 = vunpack.c.l.b16 %v267
      %v969 = vunpack.c.l.b16 %v268
      %v970 = vunpack.c.l.b16 %v269
      %v971 = vunpack.c.l.b16 %v270
      %v972 = vunpack.c.l.b16 %v271
      %v973 = vunpack.c.l.b16 %v272
      %v974 = vunpack.c.l.b16 %v273
      %v975 = vunpack.c.l.b16 %v274
      %v976 = vunpack.c.l.b16 %v275
      %v977 = vunpack.c.l.b16 %v276
      %v978 = vpack.c.b16 %v947, %v946
      %v979 = vpack.c.b16 %v949, %v948
      %v980 = vpack.c.b16 %v951, %v950
      %v981 = vpack.c.b16 %v953, %v952
      %v982 = vpack.c.b16 %v955, %v954
      %v983 = vpack.c.b16 %v957, %v956
      %v984 = vpack.c.b16 %v959, %v958
      %v985 = vpack.c.b16 %v961, %v960
      %v986 = vpack.c.b16 %v963, %v962
      %v987 = vpack.c.b16 %v965, %v964
      %v988 = vpack.c.b16 %v967, %v966
      %v989 = vpack.c.b16 %v969, %v968
      %v990 = vpack.c.b16 %v971, %v970
      %v991 = vpack.c.b16 %v973, %v972
      %v992 = vpack.c.b16 %v975, %v974
      %v993 = vpack.c.b16 %v977, %v976
      %v1026 = vunpack.c.l.b16 %v277
      %v1027 = vunpack.c.l.b16 %v278
      %v1028 = vunpack.c.l.b16 %v279
      %v1029 = vunpack.c.l.b16 %v280
      %v1030 = vunpack.c.l.b16 %v281
      %v1031 = vunpack.c.l.b16 %v282
      %v1032 = vunpack.c.l.b16 %v283
      %v1033 = vunpack.c.l.b16 %v284
      %v1034 = vunpack.c.l.b16 %v285
      %v1035 = vunpack.c.l.b16 %v286
      %v1036 = vunpack.c.l.b16 %v287
      %v1037 = vunpack.c.l.b16 %v288
      %v1038 = vunpack.c.l.b16 %v289
      %v1039 = vunpack.c.l.b16 %v290
      %v1040 = vunpack.c.l.b16 %v291
      %v1041 = vunpack.c.l.b16 %v292
      %v1042 = vpack.c.b16 %v1027, %v1026
      %v1043 = vpack.c.b16 %v1029, %v1028
      %v1044 = vpack.c.b16 %v1031, %v1030
      %v1045 = vpack.c.b16 %v1033, %v1032
      %v1046 = vpack.c.b16 %v1035, %v1034
      %v1047 = vpack.c.b16 %v1037, %v1036
      %v1048 = vpack.c.b16 %v1039, %v1038
      %v1049 = vpack.c.b16 %v1041, %v1040
      %1058 = vmatpush.bf16.msra.mxu0 %v1049
      %1059 = vmatpush.bf16.msra.mxu0 %v1048
      %1060 = vmatpush.bf16.msra.mxu0 %v1047
      %1061 = vmatpush.bf16.msra.mxu0 %v1046
      %1062 = vmatpush.bf16.msra.mxu0 %v1045
      %1063 = vmatpush.bf16.msra.mxu0 %v1044
      %1064 = vmatpush.bf16.msra.mxu0 %v1043
      %1065 = vmatpush.bf16.msra.mxu0 %v1042
      %1066 = vmatmul.bf16.gmra.mxu0 %v978
      %v1067 = vpop.f32.mrf.mxu0
      %v1068 = vadd.f32 %v835, %v1067
      %v1069 = vpop.f32.mrf.mxu0
      %v1070 = vadd.f32 %v837, %v1069
      %1071 = vmatmul.bf16.gmra.mxu0 %v979
      %v1072 = vpop.f32.mrf.mxu0
      %v1073 = vadd.f32 %v840, %v1072
      %v1074 = vpop.f32.mrf.mxu0
      %v1075 = vadd.f32 %v842, %v1074
      %1076 = vmatmul.bf16.gmra.mxu0 %v980
      %v1077 = vpop.f32.mrf.mxu0
      %v1078 = vadd.f32 %v845, %v1077
      %v1079 = vpop.f32.mrf.mxu0
      %v1080 = vadd.f32 %v847, %v1079
      %1081 = vmatmul.bf16.gmra.mxu0 %v981
      %v1082 = vpop.f32.mrf.mxu0
      %v1083 = vadd.f32 %v850, %v1082
      %v1084 = vpop.f32.mrf.mxu0
      %v1085 = vadd.f32 %v852, %v1084
      %1086 = vmatmul.bf16.gmra.mxu0 %v982
      %v1087 = vpop.f32.mrf.mxu0
      %v1088 = vadd.f32 %v855, %v1087
      %v1089 = vpop.f32.mrf.mxu0
      %v1090 = vadd.f32 %v857, %v1089
      %1091 = vmatmul.bf16.gmra.mxu0 %v983
      %v1092 = vpop.f32.mrf.mxu0
      %v1093 = vadd.f32 %v860, %v1092
      %v1094 = vpop.f32.mrf.mxu0
      %v1095 = vadd.f32 %v862, %v1094
      %1096 = vmatmul.bf16.gmra.mxu0 %v984
      %v1097 = vpop.f32.mrf.mxu0
      %v1098 = vadd.f32 %v865, %v1097
      %v1099 = vpop.f32.mrf.mxu0
      %v1100 = vadd.f32 %v867, %v1099
      %1101 = vmatmul.bf16.gmra.mxu0 %v985
      %v1102 = vpop.f32.mrf.mxu0
      %v1103 = vadd.f32 %v870, %v1102
      %v1104 = vpop.f32.mrf.mxu0
      %v1105 = vadd.f32 %v872, %v1104
      %1106 = vmatmul.bf16.gmra.mxu0 %v986
      %v1107 = vpop.f32.mrf.mxu0
      %v1108 = vadd.f32 %v875, %v1107
      %v1109 = vpop.f32.mrf.mxu0
      %v1110 = vadd.f32 %v877, %v1109
      %1111 = vmatmul.bf16.gmra.mxu0 %v987
      %v1112 = vpop.f32.mrf.mxu0
      %v1113 = vadd.f32 %v880, %v1112
      %v1114 = vpop.f32.mrf.mxu0
      %v1115 = vadd.f32 %v882, %v1114
      %1116 = vmatmul.bf16.gmra.mxu0 %v988
      %v1117 = vpop.f32.mrf.mxu0
      %v1118 = vadd.f32 %v885, %v1117
      %v1119 = vpop.f32.mrf.mxu0
      %v1120 = vadd.f32 %v887, %v1119
      %1121 = vmatmul.bf16.gmra.mxu0 %v989
      %v1122 = vpop.f32.mrf.mxu0
      %v1123 = vadd.f32 %v890, %v1122
      %v1124 = vpop.f32.mrf.mxu0
      %v1125 = vadd.f32 %v892, %v1124
      %1126 = vmatmul.bf16.gmra.mxu0 %v990
      %v1127 = vpop.f32.mrf.mxu0
      %v1128 = vadd.f32 %v895, %v1127
      %v1129 = vpop.f32.mrf.mxu0
      %v1130 = vadd.f32 %v897, %v1129
      %1131 = vmatmul.bf16.gmra.mxu0 %v991
      %v1132 = vpop.f32.mrf.mxu0
      %v1133 = vadd.f32 %v900, %v1132
      %v1134 = vpop.f32.mrf.mxu0
      %v1135 = vadd.f32 %v902, %v1134
      %1136 = vmatmul.bf16.gmra.mxu0 %v992
      %v1137 = vpop.f32.mrf.mxu0
      %v1138 = vadd.f32 %v905, %v1137
      %v1139 = vpop.f32.mrf.mxu0
      %v1140 = vadd.f32 %v907, %v1139
      %1141 = vmatmul.bf16.gmra.mxu0 %v993
      %v1142 = vpop.f32.mrf.mxu0
      %v1143 = vadd.f32 %v910, %v1142
      %v1144 = vpop.f32.mrf.mxu0
      %v1145 = vadd.f32 %v912, %v1144
      %1146 = vdwg.mxu0
      %v1147 = vld [vmem:[%s234] sm:$0xe]
      %v1148 = vld [vmem:[%s234 + $0xc] sm:$0xe]
      %v1149 = vld [vmem:[%s234 + $0x18] sm:$0xe]
      %v1150 = vld [vmem:[%s234 + $0x24] sm:$0xe]
      %v1151 = vld [vmem:[%s234 + $0x30] sm:$0xe]
      %v1152 = vld [vmem:[%s234 + $0x3c] sm:$0xe]
      %v1153 = vld [vmem:[%s234 + $0x48] sm:$0xe]
      %v1154 = vld [vmem:[%s234 + $0x54] sm:$0xe]
      %v1155 = vld [vmem:[%s234 + $0x60] sm:$0xe]
      %v1156 = vld [vmem:[%s234 + $0x6c] sm:$0xe]
      %v1157 = vld [vmem:[%s234 + $0x78] sm:$0xe]
      %v1158 = vld [vmem:[%s234 + $0x84] sm:$0xe]
      %v1159 = vld [vmem:[%s234 + $0x90] sm:$0xe]
      %v1160 = vld [vmem:[%s234 + $0x9c] sm:$0xe]
      %v1161 = vld [vmem:[%s234 + $0xa8] sm:$0xe]
      %v1162 = vld [vmem:[%s234 + $0xb4] sm:$0xe]
      %vm1195 = vcmask 1042432
      %vm1196 = vcmask 1046532
      %vm1197 = vmor %vm1195, %vm1196
      %v1198 = vrot.slane %v1147, 5
      %v1199 = vrot.slane %v1198, 4
      %v1200 = vrot.slane %v246, 5
      %v1201 = vsel %vm1197, %v1199, %v1200
      %v1202 = vrot.slane %v1200, 4
      %v1203 = vrot.slane %v293, 5
      %v1204 = vsel %vm1197, %v1202, %v1203
      %v1205 = vrot.slane %v1148, 5
      %v1206 = vrot.slane %v1205, 4
      %v1207 = vrot.slane %v248, 5
      %v1208 = vsel %vm1197, %v1206, %v1207
      %v1209 = vrot.slane %v1207, 4
      %v1210 = vrot.slane %v294, 5
      %v1211 = vsel %vm1197, %v1209, %v1210
      %v1212 = vrot.slane %v1149, 5
      %v1213 = vrot.slane %v1212, 4
      %v1214 = vrot.slane %v250, 5
      %v1215 = vsel %vm1197, %v1213, %v1214
      %v1216 = vrot.slane %v1214, 4
      %v1217 = vrot.slane %v295, 5
      %v1218 = vsel %vm1197, %v1216, %v1217
      %v1219 = vrot.slane %v1150, 5
      %v1220 = vrot.slane %v1219, 4
      %v1221 = vrot.slane %v252, 5
      %v1222 = vsel %vm1197, %v1220, %v1221
      %v1223 = vrot.slane %v1221, 4
      %v1224 = vrot.slane %v296, 5
      %v1225 = vsel %vm1197, %v1223, %v1224
      %v1226 = vrot.slane %v1151, 5
      %v1227 = vrot.slane %v1226, 4
      %v1228 = vrot.slane %v254, 5
      %v1229 = vsel %vm1197, %v1227, %v1228
      %v1230 = vrot.slane %v1228, 4
      %v1231 = vrot.slane %v297, 5
      %v1232 = vsel %vm1197, %v1230, %v1231
      %v1233 = vrot.slane %v1152, 5
      %v1234 = vrot.slane %v1233, 4
      %v1235 = vrot.slane %v256, 5
      %v1236 = vsel %vm1197, %v1234, %v1235
      %v1237 = vrot.slane %v1235, 4
      %v1238 = vrot.slane %v298, 5
      %v1239 = vsel %vm1197, %v1237, %v1238
      %v1240 = vrot.slane %v1153, 5
      %v1241 = vrot.slane %v1240, 4
      %v1242 = vrot.slane %v258, 5
      %v1243 = vsel %vm1197, %v1241, %v1242
      %v1244 = vrot.slane %v1242, 4
      %v1245 = vrot.slane %v299, 5
      %v1246 = vsel %vm1197, %v1244, %v1245
      %v1247 = vrot.slane %v1154, 5
      %v1248 = vrot.slane %v1247, 4
      %v1249 = vrot.slane %v260, 5
      %v1250 = vsel %vm1197, %v1248, %v1249
      %v1251 = vrot.slane %v1249, 4
      %v1252 = vrot.slane %v300, 5
      %v1253 = vsel %vm1197, %v1251, %v1252
      %v1254 = vrot.slane %v1155, 5
      %v1255 = vrot.slane %v1254, 4
      %v1256 = vrot.slane %v262, 5
      %v1257 = vsel %vm1197, %v1255, %v1256
      %v1258 = vrot.slane %v1256, 4
      %v1259 = vrot.slane %v301, 5
      %v1260 = vsel %vm1197, %v1258, %v1259
      %v1261 = vrot.slane %v1156, 5
      %v1262 = vrot.slane %v1261, 4
      %v1263 = vrot.slane %v264, 5
      %v1264 = vsel %vm1197, %v1262, %v1263
      %v1265 = vrot.slane %v1263, 4
      %v1266 = vrot.slane %v302, 5
      %v1267 = vsel %vm1197, %v1265, %v1266
      %v1268 = vrot.slane %v1157, 5
      %v1269 = vrot.slane %v1268, 4
      %v1270 = vrot.slane %v266, 5
      %v1271 = vsel %vm1197, %v1269, %v1270
      %v1272 = vrot.slane %v1270, 4
      %v1273 = vrot.slane %v303, 5
      %v1274 = vsel %vm1197, %v1272, %v1273
      %v1275 = vrot.slane %v1158, 5
      %v1276 = vrot.slane %v1275, 4
      %v1277 = vrot.slane %v268, 5
      %v1278 = vsel %vm1197, %v1276, %v1277
      %v1279 = vrot.slane %v1277, 4
      %v1280 = vrot.slane %v304, 5
      %v1281 = vsel %vm1197, %v1279, %v1280
      %v1282 = vrot.slane %v1159, 5
      %v1283 = vrot.slane %v1282, 4
      %v1284 = vrot.slane %v270, 5
      %v1285 = vsel %vm1197, %v1283, %v1284
      %v1286 = vrot.slane %v1284, 4
      %v1287 = vrot.slane %v305, 5
      %v1288 = vsel %vm1197, %v1286, %v1287
      %v1289 = vrot.slane %v1160, 5
      %v1290 = vrot.slane %v1289, 4
      %v1291 = vrot.slane %v272, 5
      %v1292 = vsel %vm1197, %v1290, %v1291
      %v1293 = vrot.slane %v1291, 4
      %v1294 = vrot.slane %v306, 5
      %v1295 = vsel %vm1197, %v1293, %v1294
      %v1296 = vrot.slane %v1161, 5
      %v1297 = vrot.slane %v1296, 4
      %v1298 = vrot.slane %v274, 5
      %v1299 = vsel %vm1197, %v1297, %v1298
      %v1300 = vrot.slane %v1298, 4
      %v1301 = vrot.slane %v307, 5
      %v1302 = vsel %vm1197, %v1300, %v1301
      %v1303 = vrot.slane %v1162, 5
      %v1304 = vrot.slane %v1303, 4
      %v1305 = vrot.slane %v276, 5
      %v1306 = vsel %vm1197, %v1304, %v1305
      %v1307 = vrot.slane %v1305, 4
      %v1308 = vrot.slane %v308, 5
      %v1309 = vsel %vm1197, %v1307, %v1308
      %s1310 = scalar_lea.vmem %s2, 128
      %v1311 = vld [vmem:[%s1310] sm:$0xf]
      %v1312 = vld [vmem:[%s1310 + $0x4] sm:$0xf]
      %v1313 = vld [vmem:[%s1310 + $0x8] sm:$0xf]
      %v1314 = vld [vmem:[%s1310 + $0xc] sm:$0xf]
      %v1315 = vld [vmem:[%s1310 + $0x10] sm:$0xf]
      %v1316 = vld [vmem:[%s1310 + $0x14] sm:$0xf]
      %v1317 = vld [vmem:[%s1310 + $0x18] sm:$0xf]
      %v1318 = vld [vmem:[%s1310 + $0x1c] sm:$0xf]
      %v1319 = vld [vmem:[%s1310 + $0x20] sm:$0xf]
      %v1320 = vld [vmem:[%s1310 + $0x24] sm:$0xf]
      %v1321 = vld [vmem:[%s1310 + $0x28] sm:$0xf]
      %v1322 = vld [vmem:[%s1310 + $0x2c] sm:$0xf]
      %v1323 = vld [vmem:[%s1310 + $0x30] sm:$0xf]
      %v1324 = vld [vmem:[%s1310 + $0x34] sm:$0xf]
      %v1325 = vld [vmem:[%s1310 + $0x38] sm:$0xf]
      %v1326 = vld [vmem:[%s1310 + $0x3c] sm:$0xf]
      %v1327 = vunpack.c.l.b16 %v1201
      %v1328 = vunpack.c.l.b16 %v1204
      %v1329 = vunpack.c.l.b16 %v1208
      %v1330 = vunpack.c.l.b16 %v1211
      %v1331 = vunpack.c.l.b16 %v1215
      %v1332 = vunpack.c.l.b16 %v1218
      %v1333 = vunpack.c.l.b16 %v1222
      %v1334 = vunpack.c.l.b16 %v1225
      %v1335 = vunpack.c.l.b16 %v1229
      %v1336 = vunpack.c.l.b16 %v1232
      %v1337 = vunpack.c.l.b16 %v1236
      %v1338 = vunpack.c.l.b16 %v1239
      %v1339 = vunpack.c.l.b16 %v1243
      %v1340 = vunpack.c.l.b16 %v1246
      %v1341 = vunpack.c.l.b16 %v1250
      %v1342 = vunpack.c.l.b16 %v1253
      %v1343 = vunpack.c.l.b16 %v1257
      %v1344 = vunpack.c.l.b16 %v1260
      %v1345 = vunpack.c.l.b16 %v1264
      %v1346 = vunpack.c.l.b16 %v1267
      %v1347 = vunpack.c.l.b16 %v1271
      %v1348 = vunpack.c.l.b16 %v1274
      %v1349 = vunpack.c.l.b16 %v1278
      %v1350 = vunpack.c.l.b16 %v1281
      %v1351 = vunpack.c.l.b16 %v1285
      %v1352 = vunpack.c.l.b16 %v1288
      %v1353 = vunpack.c.l.b16 %v1292
      %v1354 = vunpack.c.l.b16 %v1295
      %v1355 = vunpack.c.l.b16 %v1299
      %v1356 = vunpack.c.l.b16 %v1302
      %v1357 = vunpack.c.l.b16 %v1306
      %v1358 = vunpack.c.l.b16 %v1309
      %v1359 = vpack.c.b16 %v1328, %v1327
      %v1360 = vpack.c.b16 %v1330, %v1329
      %v1361 = vpack.c.b16 %v1332, %v1331
      %v1362 = vpack.c.b16 %v1334, %v1333
      %v1363 = vpack.c.b16 %v1336, %v1335
      %v1364 = vpack.c.b16 %v1338, %v1337
      %v1365 = vpack.c.b16 %v1340, %v1339
      %v1366 = vpack.c.b16 %v1342, %v1341
      %v1367 = vpack.c.b16 %v1344, %v1343
      %v1368 = vpack.c.b16 %v1346, %v1345
      %v1369 = vpack.c.b16 %v1348, %v1347
      %v1370 = vpack.c.b16 %v1350, %v1349
      %v1371 = vpack.c.b16 %v1352, %v1351
      %v1372 = vpack.c.b16 %v1354, %v1353
      %v1373 = vpack.c.b16 %v1356, %v1355
      %v1374 = vpack.c.b16 %v1358, %v1357
      %v1407 = vunpack.c.l.b16 %v1311
      %v1408 = vunpack.c.l.b16 %v1312
      %v1409 = vunpack.c.l.b16 %v1313
      %v1410 = vunpack.c.l.b16 %v1314
      %v1411 = vunpack.c.l.b16 %v1315
      %v1412 = vunpack.c.l.b16 %v1316
      %v1413 = vunpack.c.l.b16 %v1317
      %v1414 = vunpack.c.l.b16 %v1318
      %v1415 = vunpack.c.l.b16 %v1319
      %v1416 = vunpack.c.l.b16 %v1320
      %v1417 = vunpack.c.l.b16 %v1321
      %v1418 = vunpack.c.l.b16 %v1322
      %v1419 = vunpack.c.l.b16 %v1323
      %v1420 = vunpack.c.l.b16 %v1324
      %v1421 = vunpack.c.l.b16 %v1325
      %v1422 = vunpack.c.l.b16 %v1326
      %v1423 = vpack.c.b16 %v1408, %v1407
      %v1424 = vpack.c.b16 %v1410, %v1409
      %v1425 = vpack.c.b16 %v1412, %v1411
      %v1426 = vpack.c.b16 %v1414, %v1413
      %v1427 = vpack.c.b16 %v1416, %v1415
      %v1428 = vpack.c.b16 %v1418, %v1417
      %v1429 = vpack.c.b16 %v1420, %v1419
      %v1430 = vpack.c.b16 %v1422, %v1421
      %1439 = vmatpush.bf16.msra.mxu0 %v1430
      %1440 = vmatpush.bf16.msra.mxu0 %v1429
      %1441 = vmatpush.bf16.msra.mxu0 %v1428
      %1442 = vmatpush.bf16.msra.mxu0 %v1427
      %1443 = vmatpush.bf16.msra.mxu0 %v1426
      %1444 = vmatpush.bf16.msra.mxu0 %v1425
      %1445 = vmatpush.bf16.msra.mxu0 %v1424
      %1446 = vmatpush.bf16.msra.mxu0 %v1423
      %1447 = vmatmul.bf16.gmra.mxu0 %v1359
      %v1448 = vpop.f32.mrf.mxu0
      %v1449 = vadd.f32 0.0, %v1448
      %v1450 = vpop.f32.mrf.mxu0
      %v1451 = vadd.f32 0.0, %v1450
      %1452 = vmatmul.bf16.gmra.mxu0 %v1360
      %v1453 = vpop.f32.mrf.mxu0
      %v1454 = vadd.f32 0.0, %v1453
      %v1455 = vpop.f32.mrf.mxu0
      %v1456 = vadd.f32 0.0, %v1455
      %1457 = vmatmul.bf16.gmra.mxu0 %v1361
      %v1458 = vpop.f32.mrf.mxu0
      %v1459 = vadd.f32 0.0, %v1458
      %v1460 = vpop.f32.mrf.mxu0
      %v1461 = vadd.f32 0.0, %v1460
      %1462 = vmatmul.bf16.gmra.mxu0 %v1362
      %v1463 = vpop.f32.mrf.mxu0
      %v1464 = vadd.f32 0.0, %v1463
      %v1465 = vpop.f32.mrf.mxu0
      %v1466 = vadd.f32 0.0, %v1465
      %1467 = vmatmul.bf16.gmra.mxu0 %v1363
      %v1468 = vpop.f32.mrf.mxu0
      %v1469 = vadd.f32 0.0, %v1468
      %v1470 = vpop.f32.mrf.mxu0
      %v1471 = vadd.f32 0.0, %v1470
      %1472 = vmatmul.bf16.gmra.mxu0 %v1364
      %v1473 = vpop.f32.mrf.mxu0
      %v1474 = vadd.f32 0.0, %v1473
      %v1475 = vpop.f32.mrf.mxu0
      %v1476 = vadd.f32 0.0, %v1475
      %1477 = vmatmul.bf16.gmra.mxu0 %v1365
      %v1478 = vpop.f32.mrf.mxu0
      %v1479 = vadd.f32 0.0, %v1478
      %v1480 = vpop.f32.mrf.mxu0
      %v1481 = vadd.f32 0.0, %v1480
      %1482 = vmatmul.bf16.gmra.mxu0 %v1366
      %v1483 = vpop.f32.mrf.mxu0
      %v1484 = vadd.f32 0.0, %v1483
      %v1485 = vpop.f32.mrf.mxu0
      %v1486 = vadd.f32 0.0, %v1485
      %1487 = vmatmul.bf16.gmra.mxu0 %v1367
      %v1488 = vpop.f32.mrf.mxu0
      %v1489 = vadd.f32 0.0, %v1488
      %v1490 = vpop.f32.mrf.mxu0
      %v1491 = vadd.f32 0.0, %v1490
      %1492 = vmatmul.bf16.gmra.mxu0 %v1368
      %v1493 = vpop.f32.mrf.mxu0
      %v1494 = vadd.f32 0.0, %v1493
      %v1495 = vpop.f32.mrf.mxu0
      %v1496 = vadd.f32 0.0, %v1495
      %1497 = vmatmul.bf16.gmra.mxu0 %v1369
      %v1498 = vpop.f32.mrf.mxu0
      %v1499 = vadd.f32 0.0, %v1498
      %v1500 = vpop.f32.mrf.mxu0
      %v1501 = vadd.f32 0.0, %v1500
      %1502 = vmatmul.bf16.gmra.mxu0 %v1370
      %v1503 = vpop.f32.mrf.mxu0
      %v1504 = vadd.f32 0.0, %v1503
      %v1505 = vpop.f32.mrf.mxu0
      %v1506 = vadd.f32 0.0, %v1505
      %1507 = vmatmul.bf16.gmra.mxu0 %v1371
      %v1508 = vpop.f32.mrf.mxu0
      %v1509 = vadd.f32 0.0, %v1508
      %v1510 = vpop.f32.mrf.mxu0
      %v1511 = vadd.f32 0.0, %v1510
      %1512 = vmatmul.bf16.gmra.mxu0 %v1372
      %v1513 = vpop.f32.mrf.mxu0
      %v1514 = vadd.f32 0.0, %v1513
      %v1515 = vpop.f32.mrf.mxu0
      %v1516 = vadd.f32 0.0, %v1515
      %1517 = vmatmul.bf16.gmra.mxu0 %v1373
      %v1518 = vpop.f32.mrf.mxu0
      %v1519 = vadd.f32 0.0, %v1518
      %v1520 = vpop.f32.mrf.mxu0
      %v1521 = vadd.f32 0.0, %v1520
      %1522 = vmatmul.bf16.gmra.mxu0 %v1374
      %v1523 = vpop.f32.mrf.mxu0
      %v1524 = vadd.f32 0.0, %v1523
      %v1525 = vpop.f32.mrf.mxu0
      %v1526 = vadd.f32 0.0, %v1525
      %1527 = vdwg.mxu0
      %v1528 = vadd.f32 %v1068, %v1449
      %v1529 = vadd.f32 %v1070, %v1451
      %v1530 = vadd.f32 %v1073, %v1454
      %v1531 = vadd.f32 %v1075, %v1456
      %v1532 = vadd.f32 %v1078, %v1459
      %v1533 = vadd.f32 %v1080, %v1461
      %v1534 = vadd.f32 %v1083, %v1464
      %v1535 = vadd.f32 %v1085, %v1466
      %v1536 = vadd.f32 %v1088, %v1469
      %v1537 = vadd.f32 %v1090, %v1471
      %v1538 = vadd.f32 %v1093, %v1474
      %v1539 = vadd.f32 %v1095, %v1476
      %v1540 = vadd.f32 %v1098, %v1479
      %v1541 = vadd.f32 %v1100, %v1481
      %v1542 = vadd.f32 %v1103, %v1484
      %v1543 = vadd.f32 %v1105, %v1486
      %v1544 = vadd.f32 %v1108, %v1489
      %v1545 = vadd.f32 %v1110, %v1491
      %v1546 = vadd.f32 %v1113, %v1494
      %v1547 = vadd.f32 %v1115, %v1496
      %v1548 = vadd.f32 %v1118, %v1499
      %v1549 = vadd.f32 %v1120, %v1501
      %v1550 = vadd.f32 %v1123, %v1504
      %v1551 = vadd.f32 %v1125, %v1506
      %v1552 = vadd.f32 %v1128, %v1509
      %v1553 = vadd.f32 %v1130, %v1511
      %v1554 = vadd.f32 %v1133, %v1514
      %v1555 = vadd.f32 %v1135, %v1516
      %v1556 = vadd.f32 %v1138, %v1519
      %v1557 = vadd.f32 %v1140, %v1521
      %v1558 = vadd.f32 %v1143, %v1524
      %v1559 = vadd.f32 %v1145, %v1526
      %s1560 = scalar_lea.vmem %s234, 12
      %v1561 = vld [vmem:[%s1560] sm:$0xf]
      %v1562 = vld [vmem:[%s1560 + $0x4] sm:$0xf]
      %v1563 = vld [vmem:[%s1560 + $0xc] sm:$0xf]
      %v1564 = vld [vmem:[%s1560 + $0x10] sm:$0xf]
      %v1565 = vld [vmem:[%s1560 + $0x18] sm:$0xf]
      %v1566 = vld [vmem:[%s1560 + $0x1c] sm:$0xf]
      %v1567 = vld [vmem:[%s1560 + $0x24] sm:$0xf]
      %v1568 = vld [vmem:[%s1560 + $0x28] sm:$0xf]
      %v1569 = vld [vmem:[%s1560 + $0x30] sm:$0xf]
      %v1570 = vld [vmem:[%s1560 + $0x34] sm:$0xf]
      %v1571 = vld [vmem:[%s1560 + $0x3c] sm:$0xf]
      %v1572 = vld [vmem:[%s1560 + $0x40] sm:$0xf]
      %v1573 = vld [vmem:[%s1560 + $0x48] sm:$0xf]
      %v1574 = vld [vmem:[%s1560 + $0x4c] sm:$0xf]
      %v1575 = vld [vmem:[%s1560 + $0x54] sm:$0xf]
      %v1576 = vld [vmem:[%s1560 + $0x58] sm:$0xf]
      %v1577 = vld [vmem:[%s1560 + $0x60] sm:$0xf]
      %v1578 = vld [vmem:[%s1560 + $0x64] sm:$0xf]
      %v1579 = vld [vmem:[%s1560 + $0x6c] sm:$0xf]
      %v1580 = vld [vmem:[%s1560 + $0x70] sm:$0xf]
      %v1581 = vld [vmem:[%s1560 + $0x78] sm:$0xf]
      %v1582 = vld [vmem:[%s1560 + $0x7c] sm:$0xf]
      %v1583 = vld [vmem:[%s1560 + $0x84] sm:$0xf]
      %v1584 = vld [vmem:[%s1560 + $0x88] sm:$0xf]
      %v1585 = vld [vmem:[%s1560 + $0x90] sm:$0xf]
      %v1586 = vld [vmem:[%s1560 + $0x94] sm:$0xf]
      %v1587 = vld [vmem:[%s1560 + $0x9c] sm:$0xf]
      %v1588 = vld [vmem:[%s1560 + $0xa0] sm:$0xf]
      %v1589 = vld [vmem:[%s1560 + $0xa8] sm:$0xf]
      %v1590 = vld [vmem:[%s1560 + $0xac] sm:$0xf]
      %v1591 = vld [vmem:[%s1560 + $0xb4] sm:$0xf]
      %v1592 = vld [vmem:[%s1560 + $0xb8] sm:$0xf]
      %s1593 = scalar_lea.vmem %s2, 192
      %v1594 = vld [vmem:[%s1593] sm:$0xf]
      %v1595 = vld [vmem:[%s1593 + $0x4] sm:$0xf]
      %v1596 = vld [vmem:[%s1593 + $0x8] sm:$0xf]
      %v1597 = vld [vmem:[%s1593 + $0xc] sm:$0xf]
      %v1598 = vld [vmem:[%s1593 + $0x10] sm:$0xf]
      %v1599 = vld [vmem:[%s1593 + $0x14] sm:$0xf]
      %v1600 = vld [vmem:[%s1593 + $0x18] sm:$0xf]
      %v1601 = vld [vmem:[%s1593 + $0x1c] sm:$0xf]
      %v1602 = vld [vmem:[%s1593 + $0x20] sm:$0xf]
      %v1603 = vld [vmem:[%s1593 + $0x24] sm:$0xf]
      %v1604 = vld [vmem:[%s1593 + $0x28] sm:$0xf]
      %v1605 = vld [vmem:[%s1593 + $0x2c] sm:$0xf]
      %v1606 = vld [vmem:[%s1593 + $0x30] sm:$0xf]
      %v1607 = vld [vmem:[%s1593 + $0x34] sm:$0xf]
      %v1608 = vld [vmem:[%s1593 + $0x38] sm:$0xf]
      %v1609 = vld [vmem:[%s1593 + $0x3c] sm:$0xf]
      %v1642 = vunpack.c.l.b16 %v1561
      %v1643 = vunpack.c.l.b16 %v1562
      %v1644 = vunpack.c.l.b16 %v1563
      %v1645 = vunpack.c.l.b16 %v1564
      %v1646 = vunpack.c.l.b16 %v1565
      %v1647 = vunpack.c.l.b16 %v1566
      %v1648 = vunpack.c.l.b16 %v1567
      %v1649 = vunpack.c.l.b16 %v1568
      %v1650 = vunpack.c.l.b16 %v1569
      %v1651 = vunpack.c.l.b16 %v1570
      %v1652 = vunpack.c.l.b16 %v1571
      %v1653 = vunpack.c.l.b16 %v1572
      %v1654 = vunpack.c.l.b16 %v1573
      %v1655 = vunpack.c.l.b16 %v1574
      %v1656 = vunpack.c.l.b16 %v1575
      %v1657 = vunpack.c.l.b16 %v1576
      %v1658 = vunpack.c.l.b16 %v1577
      %v1659 = vunpack.c.l.b16 %v1578
      %v1660 = vunpack.c.l.b16 %v1579
      %v1661 = vunpack.c.l.b16 %v1580
      %v1662 = vunpack.c.l.b16 %v1581
      %v1663 = vunpack.c.l.b16 %v1582
      %v1664 = vunpack.c.l.b16 %v1583
      %v1665 = vunpack.c.l.b16 %v1584
      %v1666 = vunpack.c.l.b16 %v1585
      %v1667 = vunpack.c.l.b16 %v1586
      %v1668 = vunpack.c.l.b16 %v1587
      %v1669 = vunpack.c.l.b16 %v1588
      %v1670 = vunpack.c.l.b16 %v1589
      %v1671 = vunpack.c.l.b16 %v1590
      %v1672 = vunpack.c.l.b16 %v1591
      %v1673 = vunpack.c.l.b16 %v1592
      %v1674 = vpack.c.b16 %v1643, %v1642
      %v1675 = vpack.c.b16 %v1645, %v1644
      %v1676 = vpack.c.b16 %v1647, %v1646
      %v1677 = vpack.c.b16 %v1649, %v1648
      %v1678 = vpack.c.b16 %v1651, %v1650
      %v1679 = vpack.c.b16 %v1653, %v1652
      %v1680 = vpack.c.b16 %v1655, %v1654
      %v1681 = vpack.c.b16 %v1657, %v1656
      %v1682 = vpack.c.b16 %v1659, %v1658
      %v1683 = vpack.c.b16 %v1661, %v1660
      %v1684 = vpack.c.b16 %v1663, %v1662
      %v1685 = vpack.c.b16 %v1665, %v1664
      %v1686 = vpack.c.b16 %v1667, %v1666
      %v1687 = vpack.c.b16 %v1669, %v1668
      %v1688 = vpack.c.b16 %v1671, %v1670
      %v1689 = vpack.c.b16 %v1673, %v1672
      %v1722 = vunpack.c.l.b16 %v1594
      %v1723 = vunpack.c.l.b16 %v1595
      %v1724 = vunpack.c.l.b16 %v1596
      %v1725 = vunpack.c.l.b16 %v1597
      %v1726 = vunpack.c.l.b16 %v1598
      %v1727 = vunpack.c.l.b16 %v1599
      %v1728 = vunpack.c.l.b16 %v1600
      %v1729 = vunpack.c.l.b16 %v1601
      %v1730 = vunpack.c.l.b16 %v1602
      %v1731 = vunpack.c.l.b16 %v1603
      %v1732 = vunpack.c.l.b16 %v1604
      %v1733 = vunpack.c.l.b16 %v1605
      %v1734 = vunpack.c.l.b16 %v1606
      %v1735 = vunpack.c.l.b16 %v1607
      %v1736 = vunpack.c.l.b16 %v1608
      %v1737 = vunpack.c.l.b16 %v1609
      %v1738 = vpack.c.b16 %v1723, %v1722
      %v1739 = vpack.c.b16 %v1725, %v1724
      %v1740 = vpack.c.b16 %v1727, %v1726
      %v1741 = vpack.c.b16 %v1729, %v1728
      %v1742 = vpack.c.b16 %v1731, %v1730
      %v1743 = vpack.c.b16 %v1733, %v1732
      %v1744 = vpack.c.b16 %v1735, %v1734
      %v1745 = vpack.c.b16 %v1737, %v1736
      %1754 = vmatpush.bf16.msra.mxu0 %v1745
      %1755 = vmatpush.bf16.msra.mxu0 %v1744
      %1756 = vmatpush.bf16.msra.mxu0 %v1743
      %1757 = vmatpush.bf16.msra.mxu0 %v1742
      %1758 = vmatpush.bf16.msra.mxu0 %v1741
      %1759 = vmatpush.bf16.msra.mxu0 %v1740
      %1760 = vmatpush.bf16.msra.mxu0 %v1739
      %1761 = vmatpush.bf16.msra.mxu0 %v1738
      %1762 = vmatmul.bf16.gmra.mxu0 %v1674
      %v1763 = vpop.f32.mrf.mxu0
      %v1764 = vadd.f32 0.0, %v1763
      %v1765 = vpop.f32.mrf.mxu0
      %v1766 = vadd.f32 0.0, %v1765
      %1767 = vmatmul.bf16.gmra.mxu0 %v1675
      %v1768 = vpop.f32.mrf.mxu0
      %v1769 = vadd.f32 0.0, %v1768
      %v1770 = vpop.f32.mrf.mxu0
      %v1771 = vadd.f32 0.0, %v1770
      %1772 = vmatmul.bf16.gmra.mxu0 %v1676
      %v1773 = vpop.f32.mrf.mxu0
      %v1774 = vadd.f32 0.0, %v1773
      %v1775 = vpop.f32.mrf.mxu0
      %v1776 = vadd.f32 0.0, %v1775
      %1777 = vmatmul.bf16.gmra.mxu0 %v1677
      %v1778 = vpop.f32.mrf.mxu0
      %v1779 = vadd.f32 0.0, %v1778
      %v1780 = vpop.f32.mrf.mxu0
      %v1781 = vadd.f32 0.0, %v1780
      %1782 = vmatmul.bf16.gmra.mxu0 %v1678
      %v1783 = vpop.f32.mrf.mxu0
      %v1784 = vadd.f32 0.0, %v1783
      %v1785 = vpop.f32.mrf.mxu0
      %v1786 = vadd.f32 0.0, %v1785
      %1787 = vmatmul.bf16.gmra.mxu0 %v1679
      %v1788 = vpop.f32.mrf.mxu0
      %v1789 = vadd.f32 0.0, %v1788
      %v1790 = vpop.f32.mrf.mxu0
      %v1791 = vadd.f32 0.0, %v1790
      %1792 = vmatmul.bf16.gmra.mxu0 %v1680
      %v1793 = vpop.f32.mrf.mxu0
      %v1794 = vadd.f32 0.0, %v1793
      %v1795 = vpop.f32.mrf.mxu0
      %v1796 = vadd.f32 0.0, %v1795
      %1797 = vmatmul.bf16.gmra.mxu0 %v1681
      %v1798 = vpop.f32.mrf.mxu0
      %v1799 = vadd.f32 0.0, %v1798
      %v1800 = vpop.f32.mrf.mxu0
      %v1801 = vadd.f32 0.0, %v1800
      %1802 = vmatmul.bf16.gmra.mxu0 %v1682
      %v1803 = vpop.f32.mrf.mxu0
      %v1804 = vadd.f32 0.0, %v1803
      %v1805 = vpop.f32.mrf.mxu0
      %v1806 = vadd.f32 0.0, %v1805
      %1807 = vmatmul.bf16.gmra.mxu0 %v1683
      %v1808 = vpop.f32.mrf.mxu0
      %v1809 = vadd.f32 0.0, %v1808
      %v1810 = vpop.f32.mrf.mxu0
      %v1811 = vadd.f32 0.0, %v1810
      %1812 = vmatmul.bf16.gmra.mxu0 %v1684
      %v1813 = vpop.f32.mrf.mxu0
      %v1814 = vadd.f32 0.0, %v1813
      %v1815 = vpop.f32.mrf.mxu0
      %v1816 = vadd.f32 0.0, %v1815
      %1817 = vmatmul.bf16.gmra.mxu0 %v1685
      %v1818 = vpop.f32.mrf.mxu0
      %v1819 = vadd.f32 0.0, %v1818
      %v1820 = vpop.f32.mrf.mxu0
      %v1821 = vadd.f32 0.0, %v1820
      %1822 = vmatmul.bf16.gmra.mxu0 %v1686
      %v1823 = vpop.f32.mrf.mxu0
      %v1824 = vadd.f32 0.0, %v1823
      %v1825 = vpop.f32.mrf.mxu0
      %v1826 = vadd.f32 0.0, %v1825
      %1827 = vmatmul.bf16.gmra.mxu0 %v1687
      %v1828 = vpop.f32.mrf.mxu0
      %v1829 = vadd.f32 0.0, %v1828
      %v1830 = vpop.f32.mrf.mxu0
      %v1831 = vadd.f32 0.0, %v1830
      %1832 = vmatmul.bf16.gmra.mxu0 %v1688
      %v1833 = vpop.f32.mrf.mxu0
      %v1834 = vadd.f32 0.0, %v1833
      %v1835 = vpop.f32.mrf.mxu0
      %v1836 = vadd.f32 0.0, %v1835
      %1837 = vmatmul.bf16.gmra.mxu0 %v1689
      %v1838 = vpop.f32.mrf.mxu0
      %v1839 = vadd.f32 0.0, %v1838
      %v1840 = vpop.f32.mrf.mxu0
      %v1841 = vadd.f32 0.0, %v1840
      %1842 = vdwg.mxu0
      %v1843 = vadd.f32 %v1528, %v1764
      %v1844 = vadd.f32 %v1529, %v1766
      %v1845 = vadd.f32 %v1530, %v1769
      %v1846 = vadd.f32 %v1531, %v1771
      %v1847 = vadd.f32 %v1532, %v1774
      %v1848 = vadd.f32 %v1533, %v1776
      %v1849 = vadd.f32 %v1534, %v1779
      %v1850 = vadd.f32 %v1535, %v1781
      %v1851 = vadd.f32 %v1536, %v1784
      %v1852 = vadd.f32 %v1537, %v1786
      %v1853 = vadd.f32 %v1538, %v1789
      %v1854 = vadd.f32 %v1539, %v1791
      %v1855 = vadd.f32 %v1540, %v1794
      %v1856 = vadd.f32 %v1541, %v1796
      %v1857 = vadd.f32 %v1542, %v1799
      %v1858 = vadd.f32 %v1543, %v1801
      %v1859 = vadd.f32 %v1544, %v1804
      %v1860 = vadd.f32 %v1545, %v1806
      %v1861 = vadd.f32 %v1546, %v1809
      %v1862 = vadd.f32 %v1547, %v1811
      %v1863 = vadd.f32 %v1548, %v1814
      %v1864 = vadd.f32 %v1549, %v1816
      %v1865 = vadd.f32 %v1550, %v1819
      %v1866 = vadd.f32 %v1551, %v1821
      %v1867 = vadd.f32 %v1552, %v1824
      %v1868 = vadd.f32 %v1553, %v1826
      %v1869 = vadd.f32 %v1554, %v1829
      %v1870 = vadd.f32 %v1555, %v1831
      %v1871 = vadd.f32 %v1556, %v1834
      %v1872 = vadd.f32 %v1557, %v1836
      %v1873 = vadd.f32 %v1558, %v1839
      %v1874 = vadd.f32 %v1559, %v1841
      %v1875 = vld [vmem:[%s1560] sm:$0xf]
      %v1876 = vld [vmem:[%s1560 + $0x4] sm:$0xf]
      %v1877 = vld [vmem:[%s1560 + $0x8] sm:$0x1]
      %v1878 = vld [vmem:[%s1560 + $0xc] sm:$0xf]
      %v1879 = vld [vmem:[%s1560 + $0x10] sm:$0xf]
      %v1880 = vld [vmem:[%s1560 + $0x14] sm:$0x1]
      %v1881 = vld [vmem:[%s1560 + $0x18] sm:$0xf]
      %v1882 = vld [vmem:[%s1560 + $0x1c] sm:$0xf]
      %v1883 = vld [vmem:[%s1560 + $0x20] sm:$0x1]
      %v1884 = vld [vmem:[%s1560 + $0x24] sm:$0xf]
      %v1885 = vld [vmem:[%s1560 + $0x28] sm:$0xf]
      %v1886 = vld [vmem:[%s1560 + $0x2c] sm:$0x1]
      %v1887 = vld [vmem:[%s1560 + $0x30] sm:$0xf]
      %v1888 = vld [vmem:[%s1560 + $0x34] sm:$0xf]
      %v1889 = vld [vmem:[%s1560 + $0x38] sm:$0x1]
      %v1890 = vld [vmem:[%s1560 + $0x3c] sm:$0xf]
      %v1891 = vld [vmem:[%s1560 + $0x40] sm:$0xf]
      %v1892 = vld [vmem:[%s1560 + $0x44] sm:$0x1]
      %v1893 = vld [vmem:[%s1560 + $0x48] sm:$0xf]
      %v1894 = vld [vmem:[%s1560 + $0x4c] sm:$0xf]
      %v1895 = vld [vmem:[%s1560 + $0x50] sm:$0x1]
      %v1896 = vld [vmem:[%s1560 + $0x54] sm:$0xf]
      %v1897 = vld [vmem:[%s1560 + $0x58] sm:$0xf]
      %v1898 = vld [vmem:[%s1560 + $0x5c] sm:$0x1]
      %v1899 = vld [vmem:[%s1560 + $0x60] sm:$0xf]
      %v1900 = vld [vmem:[%s1560 + $0x64] sm:$0xf]
      %v1901 = vld [vmem:[%s1560 + $0x68] sm:$0x1]
      %v1902 = vld [vmem:[%s1560 + $0x6c] sm:$0xf]
      %v1903 = vld [vmem:[%s1560 + $0x70] sm:$0xf]
      %v1904 = vld [vmem:[%s1560 + $0x74] sm:$0x1]
      %v1905 = vld [vmem:[%s1560 + $0x78] sm:$0xf]
      %v1906 = vld [vmem:[%s1560 + $0x7c] sm:$0xf]
      %v1907 = vld [vmem:[%s1560 + $0x80] sm:$0x1]
      %v1908 = vld [vmem:[%s1560 + $0x84] sm:$0xf]
      %v1909 = vld [vmem:[%s1560 + $0x88] sm:$0xf]
      %v1910 = vld [vmem:[%s1560 + $0x8c] sm:$0x1]
      %v1911 = vld [vmem:[%s1560 + $0x90] sm:$0xf]
      %v1912 = vld [vmem:[%s1560 + $0x94] sm:$0xf]
      %v1913 = vld [vmem:[%s1560 + $0x98] sm:$0x1]
      %v1914 = vld [vmem:[%s1560 + $0x9c] sm:$0xf]
      %v1915 = vld [vmem:[%s1560 + $0xa0] sm:$0xf]
      %v1916 = vld [vmem:[%s1560 + $0xa4] sm:$0x1]
      %v1917 = vld [vmem:[%s1560 + $0xa8] sm:$0xf]
      %v1918 = vld [vmem:[%s1560 + $0xac] sm:$0xf]
      %v1919 = vld [vmem:[%s1560 + $0xb0] sm:$0x1]
      %v1920 = vld [vmem:[%s1560 + $0xb4] sm:$0xf]
      %v1921 = vld [vmem:[%s1560 + $0xb8] sm:$0xf]
      %v1922 = vld [vmem:[%s1560 + $0xbc] sm:$0x1]
      %v1924 = vshrl.u32 %v1875, 16
      %v1926 = vrot.slane %v1924, 4
      %v1927 = vshll.u32 %v1875, 16
      %v1929 = vrot.slane %v1927, 5
      %v1930 = vor.u32 %v1926, %v1929
      %v1931 = vrot.slane %v1930, 4
      %v1933 = vshll.u32 %v1876, 16
      %v1935 = vrot.slane %v1933, 5
      %v1936 = vsel %vm311, %v1931, %v1935
      %v1937 = vshrl.u32 %v1876, 16
      %v1939 = vrot.slane %v1937, 4
      %v1940 = vor.u32 %v1939, %v1935
      %v1941 = vrot.slane %v1940, 4
      %v1943 = vshll.u32 %v1877, 16
      %v1945 = vrot.slane %v1943, 5
      %v1946 = vsel %vm311, %v1941, %v1945
      %v1948 = vshrl.u32 %v1878, 16
      %v1950 = vrot.slane %v1948, 4
      %v1951 = vshll.u32 %v1878, 16
      %v1953 = vrot.slane %v1951, 5
      %v1954 = vor.u32 %v1950, %v1953
      %v1955 = vrot.slane %v1954, 4
      %v1957 = vshll.u32 %v1879, 16
      %v1959 = vrot.slane %v1957, 5
      %v1960 = vsel %vm311, %v1955, %v1959
      %v1961 = vshrl.u32 %v1879, 16
      %v1963 = vrot.slane %v1961, 4
      %v1964 = vor.u32 %v1963, %v1959
      %v1965 = vrot.slane %v1964, 4
      %v1967 = vshll.u32 %v1880, 16
      %v1969 = vrot.slane %v1967, 5
      %v1970 = vsel %vm311, %v1965, %v1969
      %v1972 = vshrl.u32 %v1881, 16
      %v1974 = vrot.slane %v1972, 4
      %v1975 = vshll.u32 %v1881, 16
      %v1977 = vrot.slane %v1975, 5
      %v1978 = vor.u32 %v1974, %v1977
      %v1979 = vrot.slane %v1978, 4
      %v1981 = vshll.u32 %v1882, 16
      %v1983 = vrot.slane %v1981, 5
      %v1984 = vsel %vm311, %v1979, %v1983
      %v1985 = vshrl.u32 %v1882, 16
      %v1987 = vrot.slane %v1985, 4
      %v1988 = vor.u32 %v1987, %v1983
      %v1989 = vrot.slane %v1988, 4
      %v1991 = vshll.u32 %v1883, 16
      %v1993 = vrot.slane %v1991, 5
      %v1994 = vsel %vm311, %v1989, %v1993
      %v1996 = vshrl.u32 %v1884, 16
      %v1998 = vrot.slane %v1996, 4
      %v1999 = vshll.u32 %v1884, 16
      %v2001 = vrot.slane %v1999, 5
      %v2002 = vor.u32 %v1998, %v2001
      %v2003 = vrot.slane %v2002, 4
      %v2005 = vshll.u32 %v1885, 16
      %v2007 = vrot.slane %v2005, 5
      %v2008 = vsel %vm311, %v2003, %v2007
      %v2009 = vshrl.u32 %v1885, 16
      %v2011 = vrot.slane %v2009, 4
      %v2012 = vor.u32 %v2011, %v2007
      %v2013 = vrot.slane %v2012, 4
      %v2015 = vshll.u32 %v1886, 16
      %v2017 = vrot.slane %v2015, 5
      %v2018 = vsel %vm311, %v2013, %v2017
      %v2020 = vshrl.u32 %v1887, 16
      %v2022 = vrot.slane %v2020, 4
      %v2023 = vshll.u32 %v1887, 16
      %v2025 = vrot.slane %v2023, 5
      %v2026 = vor.u32 %v2022, %v2025
      %v2027 = vrot.slane %v2026, 4
      %v2029 = vshll.u32 %v1888, 16
      %v2031 = vrot.slane %v2029, 5
      %v2032 = vsel %vm311, %v2027, %v2031
      %v2033 = vshrl.u32 %v1888, 16
      %v2035 = vrot.slane %v2033, 4
      %v2036 = vor.u32 %v2035, %v2031
      %v2037 = vrot.slane %v2036, 4
      %v2039 = vshll.u32 %v1889, 16
      %v2041 = vrot.slane %v2039, 5
      %v2042 = vsel %vm311, %v2037, %v2041
      %v2044 = vshrl.u32 %v1890, 16
      %v2046 = vrot.slane %v2044, 4
      %v2047 = vshll.u32 %v1890, 16
      %v2049 = vrot.slane %v2047, 5
      %v2050 = vor.u32 %v2046, %v2049
      %v2051 = vrot.slane %v2050, 4
      %v2053 = vshll.u32 %v1891, 16
      %v2055 = vrot.slane %v2053, 5
      %v2056 = vsel %vm311, %v2051, %v2055
      %v2057 = vshrl.u32 %v1891, 16
      %v2059 = vrot.slane %v2057, 4
      %v2060 = vor.u32 %v2059, %v2055
      %v2061 = vrot.slane %v2060, 4
      %v2063 = vshll.u32 %v1892, 16
      %v2065 = vrot.slane %v2063, 5
      %v2066 = vsel %vm311, %v2061, %v2065
      %v2068 = vshrl.u32 %v1893, 16
      %v2070 = vrot.slane %v2068, 4
      %v2071 = vshll.u32 %v1893, 16
      %v2073 = vrot.slane %v2071, 5
      %v2074 = vor.u32 %v2070, %v2073
      %v2075 = vrot.slane %v2074, 4
      %v2077 = vshll.u32 %v1894, 16
      %v2079 = vrot.slane %v2077, 5
      %v2080 = vsel %vm311, %v2075, %v2079
      %v2081 = vshrl.u32 %v1894, 16
      %v2083 = vrot.slane %v2081, 4
      %v2084 = vor.u32 %v2083, %v2079
      %v2085 = vrot.slane %v2084, 4
      %v2087 = vshll.u32 %v1895, 16
      %v2089 = vrot.slane %v2087, 5
      %v2090 = vsel %vm311, %v2085, %v2089
      %v2092 = vshrl.u32 %v1896, 16
      %v2094 = vrot.slane %v2092, 4
      %v2095 = vshll.u32 %v1896, 16
      %v2097 = vrot.slane %v2095, 5
      %v2098 = vor.u32 %v2094, %v2097
      %v2099 = vrot.slane %v2098, 4
      %v2101 = vshll.u32 %v1897, 16
      %v2103 = vrot.slane %v2101, 5
      %v2104 = vsel %vm311, %v2099, %v2103
      %v2105 = vshrl.u32 %v1897, 16
      %v2107 = vrot.slane %v2105, 4
      %v2108 = vor.u32 %v2107, %v2103
      %v2109 = vrot.slane %v2108, 4
      %v2111 = vshll.u32 %v1898, 16
      %v2113 = vrot.slane %v2111, 5
      %v2114 = vsel %vm311, %v2109, %v2113
      %v2116 = vshrl.u32 %v1899, 16
      %v2118 = vrot.slane %v2116, 4
      %v2119 = vshll.u32 %v1899, 16
      %v2121 = vrot.slane %v2119, 5
      %v2122 = vor.u32 %v2118, %v2121
      %v2123 = vrot.slane %v2122, 4
      %v2125 = vshll.u32 %v1900, 16
      %v2127 = vrot.slane %v2125, 5
      %v2128 = vsel %vm311, %v2123, %v2127
      %v2129 = vshrl.u32 %v1900, 16
      %v2131 = vrot.slane %v2129, 4
      %v2132 = vor.u32 %v2131, %v2127
      %v2133 = vrot.slane %v2132, 4
      %v2135 = vshll.u32 %v1901, 16
      %v2137 = vrot.slane %v2135, 5
      %v2138 = vsel %vm311, %v2133, %v2137
      %v2140 = vshrl.u32 %v1902, 16
      %v2142 = vrot.slane %v2140, 4
      %v2143 = vshll.u32 %v1902, 16
      %v2145 = vrot.slane %v2143, 5
      %v2146 = vor.u32 %v2142, %v2145
      %v2147 = vrot.slane %v2146, 4
      %v2149 = vshll.u32 %v1903, 16
      %v2151 = vrot.slane %v2149, 5
      %v2152 = vsel %vm311, %v2147, %v2151
      %v2153 = vshrl.u32 %v1903, 16
      %v2155 = vrot.slane %v2153, 4
      %v2156 = vor.u32 %v2155, %v2151
      %v2157 = vrot.slane %v2156, 4
      %v2159 = vshll.u32 %v1904, 16
      %v2161 = vrot.slane %v2159, 5
      %v2162 = vsel %vm311, %v2157, %v2161
      %v2164 = vshrl.u32 %v1905, 16
      %v2166 = vrot.slane %v2164, 4
      %v2167 = vshll.u32 %v1905, 16
      %v2169 = vrot.slane %v2167, 5
      %v2170 = vor.u32 %v2166, %v2169
      %v2171 = vrot.slane %v2170, 4
      %v2173 = vshll.u32 %v1906, 16
      %v2175 = vrot.slane %v2173, 5
      %v2176 = vsel %vm311, %v2171, %v2175
      %v2177 = vshrl.u32 %v1906, 16
      %v2179 = vrot.slane %v2177, 4
      %v2180 = vor.u32 %v2179, %v2175
      %v2181 = vrot.slane %v2180, 4
      %v2183 = vshll.u32 %v1907, 16
      %v2185 = vrot.slane %v2183, 5
      %v2186 = vsel %vm311, %v2181, %v2185
      %v2188 = vshrl.u32 %v1908, 16
      %v2190 = vrot.slane %v2188, 4
      %v2191 = vshll.u32 %v1908, 16
      %v2193 = vrot.slane %v2191, 5
      %v2194 = vor.u32 %v2190, %v2193
      %v2195 = vrot.slane %v2194, 4
      %v2197 = vshll.u32 %v1909, 16
      %v2199 = vrot.slane %v2197, 5
      %v2200 = vsel %vm311, %v2195, %v2199
      %v2201 = vshrl.u32 %v1909, 16
      %v2203 = vrot.slane %v2201, 4
      %v2204 = vor.u32 %v2203, %v2199
      %v2205 = vrot.slane %v2204, 4
      %v2207 = vshll.u32 %v1910, 16
      %v2209 = vrot.slane %v2207, 5
      %v2210 = vsel %vm311, %v2205, %v2209
      %v2212 = vshrl.u32 %v1911, 16
      %v2214 = vrot.slane %v2212, 4
      %v2215 = vshll.u32 %v1911, 16
      %v2217 = vrot.slane %v2215, 5
      %v2218 = vor.u32 %v2214, %v2217
      %v2219 = vrot.slane %v2218, 4
      %v2221 = vshll.u32 %v1912, 16
      %v2223 = vrot.slane %v2221, 5
      %v2224 = vsel %vm311, %v2219, %v2223
      %v2225 = vshrl.u32 %v1912, 16
      %v2227 = vrot.slane %v2225, 4
      %v2228 = vor.u32 %v2227, %v2223
      %v2229 = vrot.slane %v2228, 4
      %v2231 = vshll.u32 %v1913, 16
      %v2233 = vrot.slane %v2231, 5
      %v2234 = vsel %vm311, %v2229, %v2233
      %v2236 = vshrl.u32 %v1914, 16
      %v2238 = vrot.slane %v2236, 4
      %v2239 = vshll.u32 %v1914, 16
      %v2241 = vrot.slane %v2239, 5
      %v2242 = vor.u32 %v2238, %v2241
      %v2243 = vrot.slane %v2242, 4
      %v2245 = vshll.u32 %v1915, 16
      %v2247 = vrot.slane %v2245, 5
      %v2248 = vsel %vm311, %v2243, %v2247
      %v2249 = vshrl.u32 %v1915, 16
      %v2251 = vrot.slane %v2249, 4
      %v2252 = vor.u32 %v2251, %v2247
      %v2253 = vrot.slane %v2252, 4
      %v2255 = vshll.u32 %v1916, 16
      %v2257 = vrot.slane %v2255, 5
      %v2258 = vsel %vm311, %v2253, %v2257
      %v2260 = vshrl.u32 %v1917, 16
      %v2262 = vrot.slane %v2260, 4
      %v2263 = vshll.u32 %v1917, 16
      %v2265 = vrot.slane %v2263, 5
      %v2266 = vor.u32 %v2262, %v2265
      %v2267 = vrot.slane %v2266, 4
      %v2269 = vshll.u32 %v1918, 16
      %v2271 = vrot.slane %v2269, 5
      %v2272 = vsel %vm311, %v2267, %v2271
      %v2273 = vshrl.u32 %v1918, 16
      %v2275 = vrot.slane %v2273, 4
      %v2276 = vor.u32 %v2275, %v2271
      %v2277 = vrot.slane %v2276, 4
      %v2279 = vshll.u32 %v1919, 16
      %v2281 = vrot.slane %v2279, 5
      %v2282 = vsel %vm311, %v2277, %v2281
      %v2284 = vshrl.u32 %v1920, 16
      %v2286 = vrot.slane %v2284, 4
      %v2287 = vshll.u32 %v1920, 16
      %v2289 = vrot.slane %v2287, 5
      %v2290 = vor.u32 %v2286, %v2289
      %v2291 = vrot.slane %v2290, 4
      %v2293 = vshll.u32 %v1921, 16
      %v2295 = vrot.slane %v2293, 5
      %v2296 = vsel %vm311, %v2291, %v2295
      %v2297 = vshrl.u32 %v1921, 16
      %v2299 = vrot.slane %v2297, 4
      %v2300 = vor.u32 %v2299, %v2295
      %v2301 = vrot.slane %v2300, 4
      %v2303 = vshll.u32 %v1922, 16
      %v2305 = vrot.slane %v2303, 5
      %v2306 = vsel %vm311, %v2301, %v2305
      %s2307 = scalar_lea.vmem %s2, 256
      %v2308 = vld [vmem:[%s2307] sm:$0xf]
      %v2309 = vld [vmem:[%s2307 + $0x4] sm:$0xf]
      %v2310 = vld [vmem:[%s2307 + $0x8] sm:$0xf]
      %v2311 = vld [vmem:[%s2307 + $0xc] sm:$0xf]
      %v2312 = vld [vmem:[%s2307 + $0x10] sm:$0xf]
      %v2313 = vld [vmem:[%s2307 + $0x14] sm:$0xf]
      %v2314 = vld [vmem:[%s2307 + $0x18] sm:$0xf]
      %v2315 = vld [vmem:[%s2307 + $0x1c] sm:$0xf]
      %v2316 = vld [vmem:[%s2307 + $0x20] sm:$0xf]
      %v2317 = vld [vmem:[%s2307 + $0x24] sm:$0xf]
      %v2318 = vld [vmem:[%s2307 + $0x28] sm:$0xf]
      %v2319 = vld [vmem:[%s2307 + $0x2c] sm:$0xf]
      %v2320 = vld [vmem:[%s2307 + $0x30] sm:$0xf]
      %v2321 = vld [vmem:[%s2307 + $0x34] sm:$0xf]
      %v2322 = vld [vmem:[%s2307 + $0x38] sm:$0xf]
      %v2323 = vld [vmem:[%s2307 + $0x3c] sm:$0xf]
      %v2324 = vunpack.c.l.b16 %v1936
      %v2325 = vunpack.c.l.b16 %v1946
      %v2326 = vunpack.c.l.b16 %v1960
      %v2327 = vunpack.c.l.b16 %v1970
      %v2328 = vunpack.c.l.b16 %v1984
      %v2329 = vunpack.c.l.b16 %v1994
      %v2330 = vunpack.c.l.b16 %v2008
      %v2331 = vunpack.c.l.b16 %v2018
      %v2332 = vunpack.c.l.b16 %v2032
      %v2333 = vunpack.c.l.b16 %v2042
      %v2334 = vunpack.c.l.b16 %v2056
      %v2335 = vunpack.c.l.b16 %v2066
      %v2336 = vunpack.c.l.b16 %v2080
      %v2337 = vunpack.c.l.b16 %v2090
      %v2338 = vunpack.c.l.b16 %v2104
      %v2339 = vunpack.c.l.b16 %v2114
      %v2340 = vunpack.c.l.b16 %v2128
      %v2341 = vunpack.c.l.b16 %v2138
      %v2342 = vunpack.c.l.b16 %v2152
      %v2343 = vunpack.c.l.b16 %v2162
      %v2344 = vunpack.c.l.b16 %v2176
      %v2345 = vunpack.c.l.b16 %v2186
      %v2346 = vunpack.c.l.b16 %v2200
      %v2347 = vunpack.c.l.b16 %v2210
      %v2348 = vunpack.c.l.b16 %v2224
      %v2349 = vunpack.c.l.b16 %v2234
      %v2350 = vunpack.c.l.b16 %v2248
      %v2351 = vunpack.c.l.b16 %v2258
      %v2352 = vunpack.c.l.b16 %v2272
      %v2353 = vunpack.c.l.b16 %v2282
      %v2354 = vunpack.c.l.b16 %v2296
      %v2355 = vunpack.c.l.b16 %v2306
      %v2356 = vpack.c.b16 %v2325, %v2324
      %v2357 = vpack.c.b16 %v2327, %v2326
      %v2358 = vpack.c.b16 %v2329, %v2328
      %v2359 = vpack.c.b16 %v2331, %v2330
      %v2360 = vpack.c.b16 %v2333, %v2332
      %v2361 = vpack.c.b16 %v2335, %v2334
      %v2362 = vpack.c.b16 %v2337, %v2336
      %v2363 = vpack.c.b16 %v2339, %v2338
      %v2364 = vpack.c.b16 %v2341, %v2340
      %v2365 = vpack.c.b16 %v2343, %v2342
      %v2366 = vpack.c.b16 %v2345, %v2344
      %v2367 = vpack.c.b16 %v2347, %v2346
      %v2368 = vpack.c.b16 %v2349, %v2348
      %v2369 = vpack.c.b16 %v2351, %v2350
      %v2370 = vpack.c.b16 %v2353, %v2352
      %v2371 = vpack.c.b16 %v2355, %v2354
      %v2404 = vunpack.c.l.b16 %v2308
      %v2405 = vunpack.c.l.b16 %v2309
      %v2406 = vunpack.c.l.b16 %v2310
      %v2407 = vunpack.c.l.b16 %v2311
      %v2408 = vunpack.c.l.b16 %v2312
      %v2409 = vunpack.c.l.b16 %v2313
      %v2410 = vunpack.c.l.b16 %v2314
      %v2411 = vunpack.c.l.b16 %v2315
      %v2412 = vunpack.c.l.b16 %v2316
      %v2413 = vunpack.c.l.b16 %v2317
      %v2414 = vunpack.c.l.b16 %v2318
      %v2415 = vunpack.c.l.b16 %v2319
      %v2416 = vunpack.c.l.b16 %v2320
      %v2417 = vunpack.c.l.b16 %v2321
      %v2418 = vunpack.c.l.b16 %v2322
      %v2419 = vunpack.c.l.b16 %v2323
      %v2420 = vpack.c.b16 %v2405, %v2404
      %v2421 = vpack.c.b16 %v2407, %v2406
      %v2422 = vpack.c.b16 %v2409, %v2408
      %v2423 = vpack.c.b16 %v2411, %v2410
      %v2424 = vpack.c.b16 %v2413, %v2412
      %v2425 = vpack.c.b16 %v2415, %v2414
      %v2426 = vpack.c.b16 %v2417, %v2416
      %v2427 = vpack.c.b16 %v2419, %v2418
      %2436 = vmatpush.bf16.msra.mxu0 %v2427
      %2437 = vmatpush.bf16.msra.mxu0 %v2426
      %2438 = vmatpush.bf16.msra.mxu0 %v2425
      %2439 = vmatpush.bf16.msra.mxu0 %v2424
      %2440 = vmatpush.bf16.msra.mxu0 %v2423
      %2441 = vmatpush.bf16.msra.mxu0 %v2422
      %2442 = vmatpush.bf16.msra.mxu0 %v2421
      %2443 = vmatpush.bf16.msra.mxu0 %v2420
      %2444 = vmatmul.bf16.gmra.mxu0 %v2356
      %v2445 = vpop.f32.mrf.mxu0
      %v2446 = vadd.f32 0.0, %v2445
      %v2447 = vpop.f32.mrf.mxu0
      %v2448 = vadd.f32 0.0, %v2447
      %2449 = vmatmul.bf16.gmra.mxu0 %v2357
      %v2450 = vpop.f32.mrf.mxu0
      %v2451 = vadd.f32 0.0, %v2450
      %v2452 = vpop.f32.mrf.mxu0
      %v2453 = vadd.f32 0.0, %v2452
      %2454 = vmatmul.bf16.gmra.mxu0 %v2358
      %v2455 = vpop.f32.mrf.mxu0
      %v2456 = vadd.f32 0.0, %v2455
      %v2457 = vpop.f32.mrf.mxu0
      %v2458 = vadd.f32 0.0, %v2457
      %2459 = vmatmul.bf16.gmra.mxu0 %v2359
      %v2460 = vpop.f32.mrf.mxu0
      %v2461 = vadd.f32 0.0, %v2460
      %v2462 = vpop.f32.mrf.mxu0
      %v2463 = vadd.f32 0.0, %v2462
      %2464 = vmatmul.bf16.gmra.mxu0 %v2360
      %v2465 = vpop.f32.mrf.mxu0
      %v2466 = vadd.f32 0.0, %v2465
      %v2467 = vpop.f32.mrf.mxu0
      %v2468 = vadd.f32 0.0, %v2467
      %2469 = vmatmul.bf16.gmra.mxu0 %v2361
      %v2470 = vpop.f32.mrf.mxu0
      %v2471 = vadd.f32 0.0, %v2470
      %v2472 = vpop.f32.mrf.mxu0
      %v2473 = vadd.f32 0.0, %v2472
      %2474 = vmatmul.bf16.gmra.mxu0 %v2362
      %v2475 = vpop.f32.mrf.mxu0
      %v2476 = vadd.f32 0.0, %v2475
      %v2477 = vpop.f32.mrf.mxu0
      %v2478 = vadd.f32 0.0, %v2477
      %2479 = vmatmul.bf16.gmra.mxu0 %v2363
      %v2480 = vpop.f32.mrf.mxu0
      %v2481 = vadd.f32 0.0, %v2480
      %v2482 = vpop.f32.mrf.mxu0
      %v2483 = vadd.f32 0.0, %v2482
      %2484 = vmatmul.bf16.gmra.mxu0 %v2364
      %v2485 = vpop.f32.mrf.mxu0
      %v2486 = vadd.f32 0.0, %v2485
      %v2487 = vpop.f32.mrf.mxu0
      %v2488 = vadd.f32 0.0, %v2487
      %2489 = vmatmul.bf16.gmra.mxu0 %v2365
      %v2490 = vpop.f32.mrf.mxu0
      %v2491 = vadd.f32 0.0, %v2490
      %v2492 = vpop.f32.mrf.mxu0
      %v2493 = vadd.f32 0.0, %v2492
      %2494 = vmatmul.bf16.gmra.mxu0 %v2366
      %v2495 = vpop.f32.mrf.mxu0
      %v2496 = vadd.f32 0.0, %v2495
      %v2497 = vpop.f32.mrf.mxu0
      %v2498 = vadd.f32 0.0, %v2497
      %2499 = vmatmul.bf16.gmra.mxu0 %v2367
      %v2500 = vpop.f32.mrf.mxu0
      %v2501 = vadd.f32 0.0, %v2500
      %v2502 = vpop.f32.mrf.mxu0
      %v2503 = vadd.f32 0.0, %v2502
      %2504 = vmatmul.bf16.gmra.mxu0 %v2368
      %v2505 = vpop.f32.mrf.mxu0
      %v2506 = vadd.f32 0.0, %v2505
      %v2507 = vpop.f32.mrf.mxu0
      %v2508 = vadd.f32 0.0, %v2507
      %2509 = vmatmul.bf16.gmra.mxu0 %v2369
      %v2510 = vpop.f32.mrf.mxu0
      %v2511 = vadd.f32 0.0, %v2510
      %v2512 = vpop.f32.mrf.mxu0
      %v2513 = vadd.f32 0.0, %v2512
      %2514 = vmatmul.bf16.gmra.mxu0 %v2370
      %v2515 = vpop.f32.mrf.mxu0
      %v2516 = vadd.f32 0.0, %v2515
      %v2517 = vpop.f32.mrf.mxu0
      %v2518 = vadd.f32 0.0, %v2517
      %2519 = vmatmul.bf16.gmra.mxu0 %v2371
      %v2520 = vpop.f32.mrf.mxu0
      %v2521 = vadd.f32 0.0, %v2520
      %v2522 = vpop.f32.mrf.mxu0
      %v2523 = vadd.f32 0.0, %v2522
      %2524 = vdwg.mxu0
      %v2525 = vadd.f32 %v1843, %v2446
      %v2526 = vadd.f32 %v1844, %v2448
      %v2527 = vadd.f32 %v1845, %v2451
      %v2528 = vadd.f32 %v1846, %v2453
      %v2529 = vadd.f32 %v1847, %v2456
      %v2530 = vadd.f32 %v1848, %v2458
      %v2531 = vadd.f32 %v1849, %v2461
      %v2532 = vadd.f32 %v1850, %v2463
      %v2533 = vadd.f32 %v1851, %v2466
      %v2534 = vadd.f32 %v1852, %v2468
      %v2535 = vadd.f32 %v1853, %v2471
      %v2536 = vadd.f32 %v1854, %v2473
      %v2537 = vadd.f32 %v1855, %v2476
      %v2538 = vadd.f32 %v1856, %v2478
      %v2539 = vadd.f32 %v1857, %v2481
      %v2540 = vadd.f32 %v1858, %v2483
      %v2541 = vadd.f32 %v1859, %v2486
      %v2542 = vadd.f32 %v1860, %v2488
      %v2543 = vadd.f32 %v1861, %v2491
      %v2544 = vadd.f32 %v1862, %v2493
      %v2545 = vadd.f32 %v1863, %v2496
      %v2546 = vadd.f32 %v1864, %v2498
      %v2547 = vadd.f32 %v1865, %v2501
      %v2548 = vadd.f32 %v1866, %v2503
      %v2549 = vadd.f32 %v1867, %v2506
      %v2550 = vadd.f32 %v1868, %v2508
      %v2551 = vadd.f32 %v1869, %v2511
      %v2552 = vadd.f32 %v1870, %v2513
      %v2553 = vadd.f32 %v1871, %v2516
      %v2554 = vadd.f32 %v1872, %v2518
      %v2555 = vadd.f32 %v1873, %v2521
      %v2556 = vadd.f32 %v1874, %v2523
      %v2557 = vld [vmem:[%s1560] sm:$0xe]
      %v2558 = vld [vmem:[%s1560 + $0xc] sm:$0xe]
      %v2559 = vld [vmem:[%s1560 + $0x18] sm:$0xe]
      %v2560 = vld [vmem:[%s1560 + $0x24] sm:$0xe]
      %v2561 = vld [vmem:[%s1560 + $0x30] sm:$0xe]
      %v2562 = vld [vmem:[%s1560 + $0x3c] sm:$0xe]
      %v2563 = vld [vmem:[%s1560 + $0x48] sm:$0xe]
      %v2564 = vld [vmem:[%s1560 + $0x54] sm:$0xe]
      %v2565 = vld [vmem:[%s1560 + $0x60] sm:$0xe]
      %v2566 = vld [vmem:[%s1560 + $0x6c] sm:$0xe]
      %v2567 = vld [vmem:[%s1560 + $0x78] sm:$0xe]
      %v2568 = vld [vmem:[%s1560 + $0x84] sm:$0xe]
      %v2569 = vld [vmem:[%s1560 + $0x90] sm:$0xe]
      %v2570 = vld [vmem:[%s1560 + $0x9c] sm:$0xe]
      %v2571 = vld [vmem:[%s1560 + $0xa8] sm:$0xe]
      %v2572 = vld [vmem:[%s1560 + $0xb4] sm:$0xe]
      %v2621 = vrot.slane %v2557, 5
      %v2622 = vrot.slane %v2621, 4
      %v2623 = vrot.slane %v1876, 5
      %v2624 = vsel %vm1197, %v2622, %v2623
      %v2625 = vrot.slane %v2623, 4
      %v2626 = vrot.slane %v1877, 5
      %v2627 = vsel %vm1197, %v2625, %v2626
      %v2628 = vrot.slane %v2558, 5
      %v2629 = vrot.slane %v2628, 4
      %v2630 = vrot.slane %v1879, 5
      %v2631 = vsel %vm1197, %v2629, %v2630
      %v2632 = vrot.slane %v2630, 4
      %v2633 = vrot.slane %v1880, 5
      %v2634 = vsel %vm1197, %v2632, %v2633
      %v2635 = vrot.slane %v2559, 5
      %v2636 = vrot.slane %v2635, 4
      %v2637 = vrot.slane %v1882, 5
      %v2638 = vsel %vm1197, %v2636, %v2637
      %v2639 = vrot.slane %v2637, 4
      %v2640 = vrot.slane %v1883, 5
      %v2641 = vsel %vm1197, %v2639, %v2640
      %v2642 = vrot.slane %v2560, 5
      %v2643 = vrot.slane %v2642, 4
      %v2644 = vrot.slane %v1885, 5
      %v2645 = vsel %vm1197, %v2643, %v2644
      %v2646 = vrot.slane %v2644, 4
      %v2647 = vrot.slane %v1886, 5
      %v2648 = vsel %vm1197, %v2646, %v2647
      %v2649 = vrot.slane %v2561, 5
      %v2650 = vrot.slane %v2649, 4
      %v2651 = vrot.slane %v1888, 5
      %v2652 = vsel %vm1197, %v2650, %v2651
      %v2653 = vrot.slane %v2651, 4
      %v2654 = vrot.slane %v1889, 5
      %v2655 = vsel %vm1197, %v2653, %v2654
      %v2656 = vrot.slane %v2562, 5
      %v2657 = vrot.slane %v2656, 4
      %v2658 = vrot.slane %v1891, 5
      %v2659 = vsel %vm1197, %v2657, %v2658
      %v2660 = vrot.slane %v2658, 4
      %v2661 = vrot.slane %v1892, 5
      %v2662 = vsel %vm1197, %v2660, %v2661
      %v2663 = vrot.slane %v2563, 5
      %v2664 = vrot.slane %v2663, 4
      %v2665 = vrot.slane %v1894, 5
      %v2666 = vsel %vm1197, %v2664, %v2665
      %v2667 = vrot.slane %v2665, 4
      %v2668 = vrot.slane %v1895, 5
      %v2669 = vsel %vm1197, %v2667, %v2668
      %v2670 = vrot.slane %v2564, 5
      %v2671 = vrot.slane %v2670, 4
      %v2672 = vrot.slane %v1897, 5
      %v2673 = vsel %vm1197, %v2671, %v2672
      %v2674 = vrot.slane %v2672, 4
      %v2675 = vrot.slane %v1898, 5
      %v2676 = vsel %vm1197, %v2674, %v2675
      %v2677 = vrot.slane %v2565, 5
      %v2678 = vrot.slane %v2677, 4
      %v2679 = vrot.slane %v1900, 5
      %v2680 = vsel %vm1197, %v2678, %v2679
      %v2681 = vrot.slane %v2679, 4
      %v2682 = vrot.slane %v1901, 5
      %v2683 = vsel %vm1197, %v2681, %v2682
      %v2684 = vrot.slane %v2566, 5
      %v2685 = vrot.slane %v2684, 4
      %v2686 = vrot.slane %v1903, 5
      %v2687 = vsel %vm1197, %v2685, %v2686
      %v2688 = vrot.slane %v2686, 4
      %v2689 = vrot.slane %v1904, 5
      %v2690 = vsel %vm1197, %v2688, %v2689
      %v2691 = vrot.slane %v2567, 5
      %v2692 = vrot.slane %v2691, 4
      %v2693 = vrot.slane %v1906, 5
      %v2694 = vsel %vm1197, %v2692, %v2693
      %v2695 = vrot.slane %v2693, 4
      %v2696 = vrot.slane %v1907, 5
      %v2697 = vsel %vm1197, %v2695, %v2696
      %v2698 = vrot.slane %v2568, 5
      %v2699 = vrot.slane %v2698, 4
      %v2700 = vrot.slane %v1909, 5
      %v2701 = vsel %vm1197, %v2699, %v2700
      %v2702 = vrot.slane %v2700, 4
      %v2703 = vrot.slane %v1910, 5
      %v2704 = vsel %vm1197, %v2702, %v2703
      %v2705 = vrot.slane %v2569, 5
      %v2706 = vrot.slane %v2705, 4
      %v2707 = vrot.slane %v1912, 5
      %v2708 = vsel %vm1197, %v2706, %v2707
      %v2709 = vrot.slane %v2707, 4
      %v2710 = vrot.slane %v1913, 5
      %v2711 = vsel %vm1197, %v2709, %v2710
      %v2712 = vrot.slane %v2570, 5
      %v2713 = vrot.slane %v2712, 4
      %v2714 = vrot.slane %v1915, 5
      %v2715 = vsel %vm1197, %v2713, %v2714
      %v2716 = vrot.slane %v2714, 4
      %v2717 = vrot.slane %v1916, 5
      %v2718 = vsel %vm1197, %v2716, %v2717
      %v2719 = vrot.slane %v2571, 5
      %v2720 = vrot.slane %v2719, 4
      %v2721 = vrot.slane %v1918, 5
      %v2722 = vsel %vm1197, %v2720, %v2721
      %v2723 = vrot.slane %v2721, 4
      %v2724 = vrot.slane %v1919, 5
      %v2725 = vsel %vm1197, %v2723, %v2724
      %v2726 = vrot.slane %v2572, 5
      %v2727 = vrot.slane %v2726, 4
      %v2728 = vrot.slane %v1921, 5
      %v2729 = vsel %vm1197, %v2727, %v2728
      %v2730 = vrot.slane %v2728, 4
      %v2731 = vrot.slane %v1922, 5
      %v2732 = vsel %vm1197, %v2730, %v2731
      %s2733 = scalar_lea.vmem %s2, 320
      %v2734 = vld [vmem:[%s2733] sm:$0xf]
      %v2735 = vld [vmem:[%s2733 + $0x4] sm:$0xf]
      %v2736 = vld [vmem:[%s2733 + $0x8] sm:$0xf]
      %v2737 = vld [vmem:[%s2733 + $0xc] sm:$0xf]
      %v2738 = vld [vmem:[%s2733 + $0x10] sm:$0xf]
      %v2739 = vld [vmem:[%s2733 + $0x14] sm:$0xf]
      %v2740 = vld [vmem:[%s2733 + $0x18] sm:$0xf]
      %v2741 = vld [vmem:[%s2733 + $0x1c] sm:$0xf]
      %v2742 = vld [vmem:[%s2733 + $0x20] sm:$0xf]
      %v2743 = vld [vmem:[%s2733 + $0x24] sm:$0xf]
      %v2744 = vld [vmem:[%s2733 + $0x28] sm:$0xf]
      %v2745 = vld [vmem:[%s2733 + $0x2c] sm:$0xf]
      %v2746 = vld [vmem:[%s2733 + $0x30] sm:$0xf]
      %v2747 = vld [vmem:[%s2733 + $0x34] sm:$0xf]
      %v2748 = vld [vmem:[%s2733 + $0x38] sm:$0xf]
      %v2749 = vld [vmem:[%s2733 + $0x3c] sm:$0xf]
      %v2750 = vunpack.c.l.b16 %v2624
      %v2751 = vunpack.c.l.b16 %v2627
      %v2752 = vunpack.c.l.b16 %v2631
      %v2753 = vunpack.c.l.b16 %v2634
      %v2754 = vunpack.c.l.b16 %v2638
      %v2755 = vunpack.c.l.b16 %v2641
      %v2756 = vunpack.c.l.b16 %v2645
      %v2757 = vunpack.c.l.b16 %v2648
      %v2758 = vunpack.c.l.b16 %v2652
      %v2759 = vunpack.c.l.b16 %v2655
      %v2760 = vunpack.c.l.b16 %v2659
      %v2761 = vunpack.c.l.b16 %v2662
      %v2762 = vunpack.c.l.b16 %v2666
      %v2763 = vunpack.c.l.b16 %v2669
      %v2764 = vunpack.c.l.b16 %v2673
      %v2765 = vunpack.c.l.b16 %v2676
      %v2766 = vunpack.c.l.b16 %v2680
      %v2767 = vunpack.c.l.b16 %v2683
      %v2768 = vunpack.c.l.b16 %v2687
      %v2769 = vunpack.c.l.b16 %v2690
      %v2770 = vunpack.c.l.b16 %v2694
      %v2771 = vunpack.c.l.b16 %v2697
      %v2772 = vunpack.c.l.b16 %v2701
      %v2773 = vunpack.c.l.b16 %v2704
      %v2774 = vunpack.c.l.b16 %v2708
      %v2775 = vunpack.c.l.b16 %v2711
      %v2776 = vunpack.c.l.b16 %v2715
      %v2777 = vunpack.c.l.b16 %v2718
      %v2778 = vunpack.c.l.b16 %v2722
      %v2779 = vunpack.c.l.b16 %v2725
      %v2780 = vunpack.c.l.b16 %v2729
      %v2781 = vunpack.c.l.b16 %v2732
      %v2782 = vpack.c.b16 %v2751, %v2750
      %v2783 = vpack.c.b16 %v2753, %v2752
      %v2784 = vpack.c.b16 %v2755, %v2754
      %v2785 = vpack.c.b16 %v2757, %v2756
      %v2786 = vpack.c.b16 %v2759, %v2758
      %v2787 = vpack.c.b16 %v2761, %v2760
      %v2788 = vpack.c.b16 %v2763, %v2762
      %v2789 = vpack.c.b16 %v2765, %v2764
      %v2790 = vpack.c.b16 %v2767, %v2766
      %v2791 = vpack.c.b16 %v2769, %v2768
      %v2792 = vpack.c.b16 %v2771, %v2770
      %v2793 = vpack.c.b16 %v2773, %v2772
      %v2794 = vpack.c.b16 %v2775, %v2774
      %v2795 = vpack.c.b16 %v2777, %v2776
      %v2796 = vpack.c.b16 %v2779, %v2778
      %v2797 = vpack.c.b16 %v2781, %v2780
      %v2830 = vunpack.c.l.b16 %v2734
      %v2831 = vunpack.c.l.b16 %v2735
      %v2832 = vunpack.c.l.b16 %v2736
      %v2833 = vunpack.c.l.b16 %v2737
      %v2834 = vunpack.c.l.b16 %v2738
      %v2835 = vunpack.c.l.b16 %v2739
      %v2836 = vunpack.c.l.b16 %v2740
      %v2837 = vunpack.c.l.b16 %v2741
      %v2838 = vunpack.c.l.b16 %v2742
      %v2839 = vunpack.c.l.b16 %v2743
      %v2840 = vunpack.c.l.b16 %v2744
      %v2841 = vunpack.c.l.b16 %v2745
      %v2842 = vunpack.c.l.b16 %v2746
      %v2843 = vunpack.c.l.b16 %v2747
      %v2844 = vunpack.c.l.b16 %v2748
      %v2845 = vunpack.c.l.b16 %v2749
      %v2846 = vpack.c.b16 %v2831, %v2830
      %v2847 = vpack.c.b16 %v2833, %v2832
      %v2848 = vpack.c.b16 %v2835, %v2834
      %v2849 = vpack.c.b16 %v2837, %v2836
      %v2850 = vpack.c.b16 %v2839, %v2838
      %v2851 = vpack.c.b16 %v2841, %v2840
      %v2852 = vpack.c.b16 %v2843, %v2842
      %v2853 = vpack.c.b16 %v2845, %v2844
      %2862 = vmatpush.bf16.msra.mxu0 %v2853
      %2863 = vmatpush.bf16.msra.mxu0 %v2852
      %2864 = vmatpush.bf16.msra.mxu0 %v2851
      %2865 = vmatpush.bf16.msra.mxu0 %v2850
      %2866 = vmatpush.bf16.msra.mxu0 %v2849
      %2867 = vmatpush.bf16.msra.mxu0 %v2848
      %2868 = vmatpush.bf16.msra.mxu0 %v2847
      %2869 = vmatpush.bf16.msra.mxu0 %v2846
      %2870 = vmatmul.bf16.gmra.mxu0 %v2782
      %v2871 = vpop.f32.mrf.mxu0
      %v2872 = vadd.f32 0.0, %v2871
      %v2873 = vpop.f32.mrf.mxu0
      %v2874 = vadd.f32 0.0, %v2873
      %2875 = vmatmul.bf16.gmra.mxu0 %v2783
      %v2876 = vpop.f32.mrf.mxu0
      %v2877 = vadd.f32 0.0, %v2876
      %v2878 = vpop.f32.mrf.mxu0
      %v2879 = vadd.f32 0.0, %v2878
      %2880 = vmatmul.bf16.gmra.mxu0 %v2784
      %v2881 = vpop.f32.mrf.mxu0
      %v2882 = vadd.f32 0.0, %v2881
      %v2883 = vpop.f32.mrf.mxu0
      %v2884 = vadd.f32 0.0, %v2883
      %2885 = vmatmul.bf16.gmra.mxu0 %v2785
      %v2886 = vpop.f32.mrf.mxu0
      %v2887 = vadd.f32 0.0, %v2886
      %v2888 = vpop.f32.mrf.mxu0
      %v2889 = vadd.f32 0.0, %v2888
      %2890 = vmatmul.bf16.gmra.mxu0 %v2786
      %v2891 = vpop.f32.mrf.mxu0
      %v2892 = vadd.f32 0.0, %v2891
      %v2893 = vpop.f32.mrf.mxu0
      %v2894 = vadd.f32 0.0, %v2893
      %2895 = vmatmul.bf16.gmra.mxu0 %v2787
      %v2896 = vpop.f32.mrf.mxu0
      %v2897 = vadd.f32 0.0, %v2896
      %v2898 = vpop.f32.mrf.mxu0
      %v2899 = vadd.f32 0.0, %v2898
      %2900 = vmatmul.bf16.gmra.mxu0 %v2788
      %v2901 = vpop.f32.mrf.mxu0
      %v2902 = vadd.f32 0.0, %v2901
      %v2903 = vpop.f32.mrf.mxu0
      %v2904 = vadd.f32 0.0, %v2903
      %2905 = vmatmul.bf16.gmra.mxu0 %v2789
      %v2906 = vpop.f32.mrf.mxu0
      %v2907 = vadd.f32 0.0, %v2906
      %v2908 = vpop.f32.mrf.mxu0
      %v2909 = vadd.f32 0.0, %v2908
      %2910 = vmatmul.bf16.gmra.mxu0 %v2790
      %v2911 = vpop.f32.mrf.mxu0
      %v2912 = vadd.f32 0.0, %v2911
      %v2913 = vpop.f32.mrf.mxu0
      %v2914 = vadd.f32 0.0, %v2913
      %2915 = vmatmul.bf16.gmra.mxu0 %v2791
      %v2916 = vpop.f32.mrf.mxu0
      %v2917 = vadd.f32 0.0, %v2916
      %v2918 = vpop.f32.mrf.mxu0
      %v2919 = vadd.f32 0.0, %v2918
      %2920 = vmatmul.bf16.gmra.mxu0 %v2792
      %v2921 = vpop.f32.mrf.mxu0
      %v2922 = vadd.f32 0.0, %v2921
      %v2923 = vpop.f32.mrf.mxu0
      %v2924 = vadd.f32 0.0, %v2923
      %2925 = vmatmul.bf16.gmra.mxu0 %v2793
      %v2926 = vpop.f32.mrf.mxu0
      %v2927 = vadd.f32 0.0, %v2926
      %v2928 = vpop.f32.mrf.mxu0
      %v2929 = vadd.f32 0.0, %v2928
      %2930 = vmatmul.bf16.gmra.mxu0 %v2794
      %v2931 = vpop.f32.mrf.mxu0
      %v2932 = vadd.f32 0.0, %v2931
      %v2933 = vpop.f32.mrf.mxu0
      %v2934 = vadd.f32 0.0, %v2933
      %2935 = vmatmul.bf16.gmra.mxu0 %v2795
      %v2936 = vpop.f32.mrf.mxu0
      %v2937 = vadd.f32 0.0, %v2936
      %v2938 = vpop.f32.mrf.mxu0
      %v2939 = vadd.f32 0.0, %v2938
      %2940 = vmatmul.bf16.gmra.mxu0 %v2796
      %v2941 = vpop.f32.mrf.mxu0
      %v2942 = vadd.f32 0.0, %v2941
      %v2943 = vpop.f32.mrf.mxu0
      %v2944 = vadd.f32 0.0, %v2943
      %2945 = vmatmul.bf16.gmra.mxu0 %v2797
      %v2946 = vpop.f32.mrf.mxu0
      %v2947 = vadd.f32 0.0, %v2946
      %v2948 = vpop.f32.mrf.mxu0
      %v2949 = vadd.f32 0.0, %v2948
      %2950 = vdwg.mxu0
      %v2951 = vadd.f32 %v2525, %v2872
      %v2952 = vadd.f32 %v2526, %v2874
      %v2953 = vadd.f32 %v2527, %v2877
      %v2954 = vadd.f32 %v2528, %v2879
      %v2955 = vadd.f32 %v2529, %v2882
      %v2956 = vadd.f32 %v2530, %v2884
      %v2957 = vadd.f32 %v2531, %v2887
      %v2958 = vadd.f32 %v2532, %v2889
      %v2959 = vadd.f32 %v2533, %v2892
      %v2960 = vadd.f32 %v2534, %v2894
      %v2961 = vadd.f32 %v2535, %v2897
      %v2962 = vadd.f32 %v2536, %v2899
      %v2963 = vadd.f32 %v2537, %v2902
      %v2964 = vadd.f32 %v2538, %v2904
      %v2965 = vadd.f32 %v2539, %v2907
      %v2966 = vadd.f32 %v2540, %v2909
      %v2967 = vadd.f32 %v2541, %v2912
      %v2968 = vadd.f32 %v2542, %v2914
      %v2969 = vadd.f32 %v2543, %v2917
      %v2970 = vadd.f32 %v2544, %v2919
      %v2971 = vadd.f32 %v2545, %v2922
      %v2972 = vadd.f32 %v2546, %v2924
      %v2973 = vadd.f32 %v2547, %v2927
      %v2974 = vadd.f32 %v2548, %v2929
      %v2975 = vadd.f32 %v2549, %v2932
      %v2976 = vadd.f32 %v2550, %v2934
      %v2977 = vadd.f32 %v2551, %v2937
      %v2978 = vadd.f32 %v2552, %v2939
      %v2979 = vadd.f32 %v2553, %v2942
      %v2980 = vadd.f32 %v2554, %v2944
      %v2981 = vadd.f32 %v2555, %v2947
      %v2982 = vadd.f32 %v2556, %v2949
      %s2983 = scalar_lea.vmem %s234, 24
      %v2984 = vld [vmem:[%s2983] sm:$0xf]
      %v2985 = vld [vmem:[%s2983 + $0x4] sm:$0xf]
      %v2986 = vld [vmem:[%s2983 + $0xc] sm:$0xf]
      %v2987 = vld [vmem:[%s2983 + $0x10] sm:$0xf]
      %v2988 = vld [vmem:[%s2983 + $0x18] sm:$0xf]
      %v2989 = vld [vmem:[%s2983 + $0x1c] sm:$0xf]
      %v2990 = vld [vmem:[%s2983 + $0x24] sm:$0xf]
      %v2991 = vld [vmem:[%s2983 + $0x28] sm:$0xf]
      %v2992 = vld [vmem:[%s2983 + $0x30] sm:$0xf]
      %v2993 = vld [vmem:[%s2983 + $0x34] sm:$0xf]
      %v2994 = vld [vmem:[%s2983 + $0x3c] sm:$0xf]
      %v2995 = vld [vmem:[%s2983 + $0x40] sm:$0xf]
      %v2996 = vld [vmem:[%s2983 + $0x48] sm:$0xf]
      %v2997 = vld [vmem:[%s2983 + $0x4c] sm:$0xf]
      %v2998 = vld [vmem:[%s2983 + $0x54] sm:$0xf]
      %v2999 = vld [vmem:[%s2983 + $0x58] sm:$0xf]
      %v3000 = vld [vmem:[%s2983 + $0x60] sm:$0xf]
      %v3001 = vld [vmem:[%s2983 + $0x64] sm:$0xf]
      %v3002 = vld [vmem:[%s2983 + $0x6c] sm:$0xf]
      %v3003 = vld [vmem:[%s2983 + $0x70] sm:$0xf]
      %v3004 = vld [vmem:[%s2983 + $0x78] sm:$0xf]
      %v3005 = vld [vmem:[%s2983 + $0x7c] sm:$0xf]
      %v3006 = vld [vmem:[%s2983 + $0x84] sm:$0xf]
      %v3007 = vld [vmem:[%s2983 + $0x88] sm:$0xf]
      %v3008 = vld [vmem:[%s2983 + $0x90] sm:$0xf]
      %v3009 = vld [vmem:[%s2983 + $0x94] sm:$0xf]
      %v3010 = vld [vmem:[%s2983 + $0x9c] sm:$0xf]
      %v3011 = vld [vmem:[%s2983 + $0xa0] sm:$0xf]
      %v3012 = vld [vmem:[%s2983 + $0xa8] sm:$0xf]
      %v3013 = vld [vmem:[%s2983 + $0xac] sm:$0xf]
      %v3014 = vld [vmem:[%s2983 + $0xb4] sm:$0xf]
      %v3015 = vld [vmem:[%s2983 + $0xb8] sm:$0xf]
      %s3016 = scalar_lea.vmem %s2, 384
      %v3017 = vld [vmem:[%s3016] sm:$0xf]
      %v3018 = vld [vmem:[%s3016 + $0x4] sm:$0xf]
      %v3019 = vld [vmem:[%s3016 + $0x8] sm:$0xf]
      %v3020 = vld [vmem:[%s3016 + $0xc] sm:$0xf]
      %v3021 = vld [vmem:[%s3016 + $0x10] sm:$0xf]
      %v3022 = vld [vmem:[%s3016 + $0x14] sm:$0xf]
      %v3023 = vld [vmem:[%s3016 + $0x18] sm:$0xf]
      %v3024 = vld [vmem:[%s3016 + $0x1c] sm:$0xf]
      %v3025 = vld [vmem:[%s3016 + $0x20] sm:$0xf]
      %v3026 = vld [vmem:[%s3016 + $0x24] sm:$0xf]
      %v3027 = vld [vmem:[%s3016 + $0x28] sm:$0xf]
      %v3028 = vld [vmem:[%s3016 + $0x2c] sm:$0xf]
      %v3029 = vld [vmem:[%s3016 + $0x30] sm:$0xf]
      %v3030 = vld [vmem:[%s3016 + $0x34] sm:$0xf]
      %v3031 = vld [vmem:[%s3016 + $0x38] sm:$0xf]
      %v3032 = vld [vmem:[%s3016 + $0x3c] sm:$0xf]
      %v3065 = vunpack.c.l.b16 %v2984
      %v3066 = vunpack.c.l.b16 %v2985
      %v3067 = vunpack.c.l.b16 %v2986
      %v3068 = vunpack.c.l.b16 %v2987
      %v3069 = vunpack.c.l.b16 %v2988
      %v3070 = vunpack.c.l.b16 %v2989
      %v3071 = vunpack.c.l.b16 %v2990
      %v3072 = vunpack.c.l.b16 %v2991
      %v3073 = vunpack.c.l.b16 %v2992
      %v3074 = vunpack.c.l.b16 %v2993
      %v3075 = vunpack.c.l.b16 %v2994
      %v3076 = vunpack.c.l.b16 %v2995
      %v3077 = vunpack.c.l.b16 %v2996
      %v3078 = vunpack.c.l.b16 %v2997
      %v3079 = vunpack.c.l.b16 %v2998
      %v3080 = vunpack.c.l.b16 %v2999
      %v3081 = vunpack.c.l.b16 %v3000
      %v3082 = vunpack.c.l.b16 %v3001
      %v3083 = vunpack.c.l.b16 %v3002
      %v3084 = vunpack.c.l.b16 %v3003
      %v3085 = vunpack.c.l.b16 %v3004
      %v3086 = vunpack.c.l.b16 %v3005
      %v3087 = vunpack.c.l.b16 %v3006
      %v3088 = vunpack.c.l.b16 %v3007
      %v3089 = vunpack.c.l.b16 %v3008
      %v3090 = vunpack.c.l.b16 %v3009
      %v3091 = vunpack.c.l.b16 %v3010
      %v3092 = vunpack.c.l.b16 %v3011
      %v3093 = vunpack.c.l.b16 %v3012
      %v3094 = vunpack.c.l.b16 %v3013
      %v3095 = vunpack.c.l.b16 %v3014
      %v3096 = vunpack.c.l.b16 %v3015
      %v3097 = vpack.c.b16 %v3066, %v3065
      %v3098 = vpack.c.b16 %v3068, %v3067
      %v3099 = vpack.c.b16 %v3070, %v3069
      %v3100 = vpack.c.b16 %v3072, %v3071
      %v3101 = vpack.c.b16 %v3074, %v3073
      %v3102 = vpack.c.b16 %v3076, %v3075
      %v3103 = vpack.c.b16 %v3078, %v3077
      %v3104 = vpack.c.b16 %v3080, %v3079
      %v3105 = vpack.c.b16 %v3082, %v3081
      %v3106 = vpack.c.b16 %v3084, %v3083
      %v3107 = vpack.c.b16 %v3086, %v3085
      %v3108 = vpack.c.b16 %v3088, %v3087
      %v3109 = vpack.c.b16 %v3090, %v3089
      %v3110 = vpack.c.b16 %v3092, %v3091
      %v3111 = vpack.c.b16 %v3094, %v3093
      %v3112 = vpack.c.b16 %v3096, %v3095
      %v3145 = vunpack.c.l.b16 %v3017
      %v3146 = vunpack.c.l.b16 %v3018
      %v3147 = vunpack.c.l.b16 %v3019
      %v3148 = vunpack.c.l.b16 %v3020
      %v3149 = vunpack.c.l.b16 %v3021
      %v3150 = vunpack.c.l.b16 %v3022
      %v3151 = vunpack.c.l.b16 %v3023
      %v3152 = vunpack.c.l.b16 %v3024
      %v3153 = vunpack.c.l.b16 %v3025
      %v3154 = vunpack.c.l.b16 %v3026
      %v3155 = vunpack.c.l.b16 %v3027
      %v3156 = vunpack.c.l.b16 %v3028
      %v3157 = vunpack.c.l.b16 %v3029
      %v3158 = vunpack.c.l.b16 %v3030
      %v3159 = vunpack.c.l.b16 %v3031
      %v3160 = vunpack.c.l.b16 %v3032
      %v3161 = vpack.c.b16 %v3146, %v3145
      %v3162 = vpack.c.b16 %v3148, %v3147
      %v3163 = vpack.c.b16 %v3150, %v3149
      %v3164 = vpack.c.b16 %v3152, %v3151
      %v3165 = vpack.c.b16 %v3154, %v3153
      %v3166 = vpack.c.b16 %v3156, %v3155
      %v3167 = vpack.c.b16 %v3158, %v3157
      %v3168 = vpack.c.b16 %v3160, %v3159
      %3177 = vmatpush.bf16.msra.mxu0 %v3168
      %3178 = vmatpush.bf16.msra.mxu0 %v3167
      %3179 = vmatpush.bf16.msra.mxu0 %v3166
      %3180 = vmatpush.bf16.msra.mxu0 %v3165
      %3181 = vmatpush.bf16.msra.mxu0 %v3164
      %3182 = vmatpush.bf16.msra.mxu0 %v3163
      %3183 = vmatpush.bf16.msra.mxu0 %v3162
      %3184 = vmatpush.bf16.msra.mxu0 %v3161
      %3185 = vmatmul.bf16.gmra.mxu0 %v3097
      %v3186 = vpop.f32.mrf.mxu0
      %v3187 = vadd.f32 0.0, %v3186
      %v3188 = vpop.f32.mrf.mxu0
      %v3189 = vadd.f32 0.0, %v3188
      %3190 = vmatmul.bf16.gmra.mxu0 %v3098
      %v3191 = vpop.f32.mrf.mxu0
      %v3192 = vadd.f32 0.0, %v3191
      %v3193 = vpop.f32.mrf.mxu0
      %v3194 = vadd.f32 0.0, %v3193
      %3195 = vmatmul.bf16.gmra.mxu0 %v3099
      %v3196 = vpop.f32.mrf.mxu0
      %v3197 = vadd.f32 0.0, %v3196
      %v3198 = vpop.f32.mrf.mxu0
      %v3199 = vadd.f32 0.0, %v3198
      %3200 = vmatmul.bf16.gmra.mxu0 %v3100
      %v3201 = vpop.f32.mrf.mxu0
      %v3202 = vadd.f32 0.0, %v3201
      %v3203 = vpop.f32.mrf.mxu0
      %v3204 = vadd.f32 0.0, %v3203
      %3205 = vmatmul.bf16.gmra.mxu0 %v3101
      %v3206 = vpop.f32.mrf.mxu0
      %v3207 = vadd.f32 0.0, %v3206
      %v3208 = vpop.f32.mrf.mxu0
      %v3209 = vadd.f32 0.0, %v3208
      %3210 = vmatmul.bf16.gmra.mxu0 %v3102
      %v3211 = vpop.f32.mrf.mxu0
      %v3212 = vadd.f32 0.0, %v3211
      %v3213 = vpop.f32.mrf.mxu0
      %v3214 = vadd.f32 0.0, %v3213
      %3215 = vmatmul.bf16.gmra.mxu0 %v3103
      %v3216 = vpop.f32.mrf.mxu0
      %v3217 = vadd.f32 0.0, %v3216
      %v3218 = vpop.f32.mrf.mxu0
      %v3219 = vadd.f32 0.0, %v3218
      %3220 = vmatmul.bf16.gmra.mxu0 %v3104
      %v3221 = vpop.f32.mrf.mxu0
      %v3222 = vadd.f32 0.0, %v3221
      %v3223 = vpop.f32.mrf.mxu0
      %v3224 = vadd.f32 0.0, %v3223
      %3225 = vmatmul.bf16.gmra.mxu0 %v3105
      %v3226 = vpop.f32.mrf.mxu0
      %v3227 = vadd.f32 0.0, %v3226
      %v3228 = vpop.f32.mrf.mxu0
      %v3229 = vadd.f32 0.0, %v3228
      %3230 = vmatmul.bf16.gmra.mxu0 %v3106
      %v3231 = vpop.f32.mrf.mxu0
      %v3232 = vadd.f32 0.0, %v3231
      %v3233 = vpop.f32.mrf.mxu0
      %v3234 = vadd.f32 0.0, %v3233
      %3235 = vmatmul.bf16.gmra.mxu0 %v3107
      %v3236 = vpop.f32.mrf.mxu0
      %v3237 = vadd.f32 0.0, %v3236
      %v3238 = vpop.f32.mrf.mxu0
      %v3239 = vadd.f32 0.0, %v3238
      %3240 = vmatmul.bf16.gmra.mxu0 %v3108
      %v3241 = vpop.f32.mrf.mxu0
      %v3242 = vadd.f32 0.0, %v3241
      %v3243 = vpop.f32.mrf.mxu0
      %v3244 = vadd.f32 0.0, %v3243
      %3245 = vmatmul.bf16.gmra.mxu0 %v3109
      %v3246 = vpop.f32.mrf.mxu0
      %v3247 = vadd.f32 0.0, %v3246
      %v3248 = vpop.f32.mrf.mxu0
      %v3249 = vadd.f32 0.0, %v3248
      %3250 = vmatmul.bf16.gmra.mxu0 %v3110
      %v3251 = vpop.f32.mrf.mxu0
      %v3252 = vadd.f32 0.0, %v3251
      %v3253 = vpop.f32.mrf.mxu0
      %v3254 = vadd.f32 0.0, %v3253
      %3255 = vmatmul.bf16.gmra.mxu0 %v3111
      %v3256 = vpop.f32.mrf.mxu0
      %v3257 = vadd.f32 0.0, %v3256
      %v3258 = vpop.f32.mrf.mxu0
      %v3259 = vadd.f32 0.0, %v3258
      %3260 = vmatmul.bf16.gmra.mxu0 %v3112
      %v3261 = vpop.f32.mrf.mxu0
      %v3262 = vadd.f32 0.0, %v3261
      %v3263 = vpop.f32.mrf.mxu0
      %v3264 = vadd.f32 0.0, %v3263
      %3265 = vdwg.mxu0
      %v3266 = vadd.f32 %v2951, %v3187
      %v3267 = vadd.f32 %v2952, %v3189
      %v3268 = vadd.f32 %v2953, %v3192
      %v3269 = vadd.f32 %v2954, %v3194
      %v3270 = vadd.f32 %v2955, %v3197
      %v3271 = vadd.f32 %v2956, %v3199
      %v3272 = vadd.f32 %v2957, %v3202
      %v3273 = vadd.f32 %v2958, %v3204
      %v3274 = vadd.f32 %v2959, %v3207
      %v3275 = vadd.f32 %v2960, %v3209
      %v3276 = vadd.f32 %v2961, %v3212
      %v3277 = vadd.f32 %v2962, %v3214
      %v3278 = vadd.f32 %v2963, %v3217
      %v3279 = vadd.f32 %v2964, %v3219
      %v3280 = vadd.f32 %v2965, %v3222
      %v3281 = vadd.f32 %v2966, %v3224
      %v3282 = vadd.f32 %v2967, %v3227
      %v3283 = vadd.f32 %v2968, %v3229
      %v3284 = vadd.f32 %v2969, %v3232
      %v3285 = vadd.f32 %v2970, %v3234
      %v3286 = vadd.f32 %v2971, %v3237
      %v3287 = vadd.f32 %v2972, %v3239
      %v3288 = vadd.f32 %v2973, %v3242
      %v3289 = vadd.f32 %v2974, %v3244
      %v3290 = vadd.f32 %v2975, %v3247
      %v3291 = vadd.f32 %v2976, %v3249
      %v3292 = vadd.f32 %v2977, %v3252
      %v3293 = vadd.f32 %v2978, %v3254
      %v3294 = vadd.f32 %v2979, %v3257
      %v3295 = vadd.f32 %v2980, %v3259
      %v3296 = vadd.f32 %v2981, %v3262
      %v3297 = vadd.f32 %v2982, %v3264
      %v3298 = vld [vmem:[%s2983] sm:$0xf]
      %v3299 = vld [vmem:[%s2983 + $0x4] sm:$0xf]
      %v3300 = vld [vmem:[%s2983 + $0x8] sm:$0x1]
      %v3301 = vld [vmem:[%s2983 + $0xc] sm:$0xf]
      %v3302 = vld [vmem:[%s2983 + $0x10] sm:$0xf]
      %v3303 = vld [vmem:[%s2983 + $0x14] sm:$0x1]
      %v3304 = vld [vmem:[%s2983 + $0x18] sm:$0xf]
      %v3305 = vld [vmem:[%s2983 + $0x1c] sm:$0xf]
      %v3306 = vld [vmem:[%s2983 + $0x20] sm:$0x1]
      %v3307 = vld [vmem:[%s2983 + $0x24] sm:$0xf]
      %v3308 = vld [vmem:[%s2983 + $0x28] sm:$0xf]
      %v3309 = vld [vmem:[%s2983 + $0x2c] sm:$0x1]
      %v3310 = vld [vmem:[%s2983 + $0x30] sm:$0xf]
      %v3311 = vld [vmem:[%s2983 + $0x34] sm:$0xf]
      %v3312 = vld [vmem:[%s2983 + $0x38] sm:$0x1]
      %v3313 = vld [vmem:[%s2983 + $0x3c] sm:$0xf]
      %v3314 = vld [vmem:[%s2983 + $0x40] sm:$0xf]
      %v3315 = vld [vmem:[%s2983 + $0x44] sm:$0x1]
      %v3316 = vld [vmem:[%s2983 + $0x48] sm:$0xf]
      %v3317 = vld [vmem:[%s2983 + $0x4c] sm:$0xf]
      %v3318 = vld [vmem:[%s2983 + $0x50] sm:$0x1]
      %v3319 = vld [vmem:[%s2983 + $0x54] sm:$0xf]
      %v3320 = vld [vmem:[%s2983 + $0x58] sm:$0xf]
      %v3321 = vld [vmem:[%s2983 + $0x5c] sm:$0x1]
      %v3322 = vld [vmem:[%s2983 + $0x60] sm:$0xf]
      %v3323 = vld [vmem:[%s2983 + $0x64] sm:$0xf]
      %v3324 = vld [vmem:[%s2983 + $0x68] sm:$0x1]
      %v3325 = vld [vmem:[%s2983 + $0x6c] sm:$0xf]
      %v3326 = vld [vmem:[%s2983 + $0x70] sm:$0xf]
      %v3327 = vld [vmem:[%s2983 + $0x74] sm:$0x1]
      %v3328 = vld [vmem:[%s2983 + $0x78] sm:$0xf]
      %v3329 = vld [vmem:[%s2983 + $0x7c] sm:$0xf]
      %v3330 = vld [vmem:[%s2983 + $0x80] sm:$0x1]
      %v3331 = vld [vmem:[%s2983 + $0x84] sm:$0xf]
      %v3332 = vld [vmem:[%s2983 + $0x88] sm:$0xf]
      %v3333 = vld [vmem:[%s2983 + $0x8c] sm:$0x1]
      %v3334 = vld [vmem:[%s2983 + $0x90] sm:$0xf]
      %v3335 = vld [vmem:[%s2983 + $0x94] sm:$0xf]
      %v3336 = vld [vmem:[%s2983 + $0x98] sm:$0x1]
      %v3337 = vld [vmem:[%s2983 + $0x9c] sm:$0xf]
      %v3338 = vld [vmem:[%s2983 + $0xa0] sm:$0xf]
      %v3339 = vld [vmem:[%s2983 + $0xa4] sm:$0x1]
      %v3340 = vld [vmem:[%s2983 + $0xa8] sm:$0xf]
      %v3341 = vld [vmem:[%s2983 + $0xac] sm:$0xf]
      %v3342 = vld [vmem:[%s2983 + $0xb0] sm:$0x1]
      %v3343 = vld [vmem:[%s2983 + $0xb4] sm:$0xf]
      %v3344 = vld [vmem:[%s2983 + $0xb8] sm:$0xf]
      %v3345 = vld [vmem:[%s2983 + $0xbc] sm:$0x1]
      %v3347 = vshrl.u32 %v3298, 16
      %v3349 = vrot.slane %v3347, 4
      %v3350 = vshll.u32 %v3298, 16
      %v3352 = vrot.slane %v3350, 5
      %v3353 = vor.u32 %v3349, %v3352
      %v3354 = vrot.slane %v3353, 4
      %v3356 = vshll.u32 %v3299, 16
      %v3358 = vrot.slane %v3356, 5
      %v3359 = vsel %vm311, %v3354, %v3358
      %v3360 = vshrl.u32 %v3299, 16
      %v3362 = vrot.slane %v3360, 4
      %v3363 = vor.u32 %v3362, %v3358
      %v3364 = vrot.slane %v3363, 4
      %v3366 = vshll.u32 %v3300, 16
      %v3368 = vrot.slane %v3366, 5
      %v3369 = vsel %vm311, %v3364, %v3368
      %v3371 = vshrl.u32 %v3301, 16
      %v3373 = vrot.slane %v3371, 4
      %v3374 = vshll.u32 %v3301, 16
      %v3376 = vrot.slane %v3374, 5
      %v3377 = vor.u32 %v3373, %v3376
      %v3378 = vrot.slane %v3377, 4
      %v3380 = vshll.u32 %v3302, 16
      %v3382 = vrot.slane %v3380, 5
      %v3383 = vsel %vm311, %v3378, %v3382
      %v3384 = vshrl.u32 %v3302, 16
      %v3386 = vrot.slane %v3384, 4
      %v3387 = vor.u32 %v3386, %v3382
      %v3388 = vrot.slane %v3387, 4
      %v3390 = vshll.u32 %v3303, 16
      %v3392 = vrot.slane %v3390, 5
      %v3393 = vsel %vm311, %v3388, %v3392
      %v3395 = vshrl.u32 %v3304, 16
      %v3397 = vrot.slane %v3395, 4
      %v3398 = vshll.u32 %v3304, 16
      %v3400 = vrot.slane %v3398, 5
      %v3401 = vor.u32 %v3397, %v3400
      %v3402 = vrot.slane %v3401, 4
      %v3404 = vshll.u32 %v3305, 16
      %v3406 = vrot.slane %v3404, 5
      %v3407 = vsel %vm311, %v3402, %v3406
      %v3408 = vshrl.u32 %v3305, 16
      %v3410 = vrot.slane %v3408, 4
      %v3411 = vor.u32 %v3410, %v3406
      %v3412 = vrot.slane %v3411, 4
      %v3414 = vshll.u32 %v3306, 16
      %v3416 = vrot.slane %v3414, 5
      %v3417 = vsel %vm311, %v3412, %v3416
      %v3419 = vshrl.u32 %v3307, 16
      %v3421 = vrot.slane %v3419, 4
      %v3422 = vshll.u32 %v3307, 16
      %v3424 = vrot.slane %v3422, 5
      %v3425 = vor.u32 %v3421, %v3424
      %v3426 = vrot.slane %v3425, 4
      %v3428 = vshll.u32 %v3308, 16
      %v3430 = vrot.slane %v3428, 5
      %v3431 = vsel %vm311, %v3426, %v3430
      %v3432 = vshrl.u32 %v3308, 16
      %v3434 = vrot.slane %v3432, 4
      %v3435 = vor.u32 %v3434, %v3430
      %v3436 = vrot.slane %v3435, 4
      %v3438 = vshll.u32 %v3309, 16
      %v3440 = vrot.slane %v3438, 5
      %v3441 = vsel %vm311, %v3436, %v3440
      %v3443 = vshrl.u32 %v3310, 16
      %v3445 = vrot.slane %v3443, 4
      %v3446 = vshll.u32 %v3310, 16
      %v3448 = vrot.slane %v3446, 5
      %v3449 = vor.u32 %v3445, %v3448
      %v3450 = vrot.slane %v3449, 4
      %v3452 = vshll.u32 %v3311, 16
      %v3454 = vrot.slane %v3452, 5
      %v3455 = vsel %vm311, %v3450, %v3454
      %v3456 = vshrl.u32 %v3311, 16
      %v3458 = vrot.slane %v3456, 4
      %v3459 = vor.u32 %v3458, %v3454
      %v3460 = vrot.slane %v3459, 4
      %v3462 = vshll.u32 %v3312, 16
      %v3464 = vrot.slane %v3462, 5
      %v3465 = vsel %vm311, %v3460, %v3464
      %v3467 = vshrl.u32 %v3313, 16
      %v3469 = vrot.slane %v3467, 4
      %v3470 = vshll.u32 %v3313, 16
      %v3472 = vrot.slane %v3470, 5
      %v3473 = vor.u32 %v3469, %v3472
      %v3474 = vrot.slane %v3473, 4
      %v3476 = vshll.u32 %v3314, 16
      %v3478 = vrot.slane %v3476, 5
      %v3479 = vsel %vm311, %v3474, %v3478
      %v3480 = vshrl.u32 %v3314, 16
      %v3482 = vrot.slane %v3480, 4
      %v3483 = vor.u32 %v3482, %v3478
      %v3484 = vrot.slane %v3483, 4
      %v3486 = vshll.u32 %v3315, 16
      %v3488 = vrot.slane %v3486, 5
      %v3489 = vsel %vm311, %v3484, %v3488
      %v3491 = vshrl.u32 %v3316, 16
      %v3493 = vrot.slane %v3491, 4
      %v3494 = vshll.u32 %v3316, 16
      %v3496 = vrot.slane %v3494, 5
      %v3497 = vor.u32 %v3493, %v3496
      %v3498 = vrot.slane %v3497, 4
      %v3500 = vshll.u32 %v3317, 16
      %v3502 = vrot.slane %v3500, 5
      %v3503 = vsel %vm311, %v3498, %v3502
      %v3504 = vshrl.u32 %v3317, 16
      %v3506 = vrot.slane %v3504, 4
      %v3507 = vor.u32 %v3506, %v3502
      %v3508 = vrot.slane %v3507, 4
      %v3510 = vshll.u32 %v3318, 16
      %v3512 = vrot.slane %v3510, 5
      %v3513 = vsel %vm311, %v3508, %v3512
      %v3515 = vshrl.u32 %v3319, 16
      %v3517 = vrot.slane %v3515, 4
      %v3518 = vshll.u32 %v3319, 16
      %v3520 = vrot.slane %v3518, 5
      %v3521 = vor.u32 %v3517, %v3520
      %v3522 = vrot.slane %v3521, 4
      %v3524 = vshll.u32 %v3320, 16
      %v3526 = vrot.slane %v3524, 5
      %v3527 = vsel %vm311, %v3522, %v3526
      %v3528 = vshrl.u32 %v3320, 16
      %v3530 = vrot.slane %v3528, 4
      %v3531 = vor.u32 %v3530, %v3526
      %v3532 = vrot.slane %v3531, 4
      %v3534 = vshll.u32 %v3321, 16
      %v3536 = vrot.slane %v3534, 5
      %v3537 = vsel %vm311, %v3532, %v3536
      %v3539 = vshrl.u32 %v3322, 16
      %v3541 = vrot.slane %v3539, 4
      %v3542 = vshll.u32 %v3322, 16
      %v3544 = vrot.slane %v3542, 5
      %v3545 = vor.u32 %v3541, %v3544
      %v3546 = vrot.slane %v3545, 4
      %v3548 = vshll.u32 %v3323, 16
      %v3550 = vrot.slane %v3548, 5
      %v3551 = vsel %vm311, %v3546, %v3550
      %v3552 = vshrl.u32 %v3323, 16
      %v3554 = vrot.slane %v3552, 4
      %v3555 = vor.u32 %v3554, %v3550
      %v3556 = vrot.slane %v3555, 4
      %v3558 = vshll.u32 %v3324, 16
      %v3560 = vrot.slane %v3558, 5
      %v3561 = vsel %vm311, %v3556, %v3560
      %v3563 = vshrl.u32 %v3325, 16
      %v3565 = vrot.slane %v3563, 4
      %v3566 = vshll.u32 %v3325, 16
      %v3568 = vrot.slane %v3566, 5
      %v3569 = vor.u32 %v3565, %v3568
      %v3570 = vrot.slane %v3569, 4
      %v3572 = vshll.u32 %v3326, 16
      %v3574 = vrot.slane %v3572, 5
      %v3575 = vsel %vm311, %v3570, %v3574
      %v3576 = vshrl.u32 %v3326, 16
      %v3578 = vrot.slane %v3576, 4
      %v3579 = vor.u32 %v3578, %v3574
      %v3580 = vrot.slane %v3579, 4
      %v3582 = vshll.u32 %v3327, 16
      %v3584 = vrot.slane %v3582, 5
      %v3585 = vsel %vm311, %v3580, %v3584
      %v3587 = vshrl.u32 %v3328, 16
      %v3589 = vrot.slane %v3587, 4
      %v3590 = vshll.u32 %v3328, 16
      %v3592 = vrot.slane %v3590, 5
      %v3593 = vor.u32 %v3589, %v3592
      %v3594 = vrot.slane %v3593, 4
      %v3596 = vshll.u32 %v3329, 16
      %v3598 = vrot.slane %v3596, 5
      %v3599 = vsel %vm311, %v3594, %v3598
      %v3600 = vshrl.u32 %v3329, 16
      %v3602 = vrot.slane %v3600, 4
      %v3603 = vor.u32 %v3602, %v3598
      %v3604 = vrot.slane %v3603, 4
      %v3606 = vshll.u32 %v3330, 16
      %v3608 = vrot.slane %v3606, 5
      %v3609 = vsel %vm311, %v3604, %v3608
      %v3611 = vshrl.u32 %v3331, 16
      %v3613 = vrot.slane %v3611, 4
      %v3614 = vshll.u32 %v3331, 16
      %v3616 = vrot.slane %v3614, 5
      %v3617 = vor.u32 %v3613, %v3616
      %v3618 = vrot.slane %v3617, 4
      %v3620 = vshll.u32 %v3332, 16
      %v3622 = vrot.slane %v3620, 5
      %v3623 = vsel %vm311, %v3618, %v3622
      %v3624 = vshrl.u32 %v3332, 16
      %v3626 = vrot.slane %v3624, 4
      %v3627 = vor.u32 %v3626, %v3622
      %v3628 = vrot.slane %v3627, 4
      %v3630 = vshll.u32 %v3333, 16
      %v3632 = vrot.slane %v3630, 5
      %v3633 = vsel %vm311, %v3628, %v3632
      %v3635 = vshrl.u32 %v3334, 16
      %v3637 = vrot.slane %v3635, 4
      %v3638 = vshll.u32 %v3334, 16
      %v3640 = vrot.slane %v3638, 5
      %v3641 = vor.u32 %v3637, %v3640
      %v3642 = vrot.slane %v3641, 4
      %v3644 = vshll.u32 %v3335, 16
      %v3646 = vrot.slane %v3644, 5
      %v3647 = vsel %vm311, %v3642, %v3646
      %v3648 = vshrl.u32 %v3335, 16
      %v3650 = vrot.slane %v3648, 4
      %v3651 = vor.u32 %v3650, %v3646
      %v3652 = vrot.slane %v3651, 4
      %v3654 = vshll.u32 %v3336, 16
      %v3656 = vrot.slane %v3654, 5
      %v3657 = vsel %vm311, %v3652, %v3656
      %v3659 = vshrl.u32 %v3337, 16
      %v3661 = vrot.slane %v3659, 4
      %v3662 = vshll.u32 %v3337, 16
      %v3664 = vrot.slane %v3662, 5
      %v3665 = vor.u32 %v3661, %v3664
      %v3666 = vrot.slane %v3665, 4
      %v3668 = vshll.u32 %v3338, 16
      %v3670 = vrot.slane %v3668, 5
      %v3671 = vsel %vm311, %v3666, %v3670
      %v3672 = vshrl.u32 %v3338, 16
      %v3674 = vrot.slane %v3672, 4
      %v3675 = vor.u32 %v3674, %v3670
      %v3676 = vrot.slane %v3675, 4
      %v3678 = vshll.u32 %v3339, 16
      %v3680 = vrot.slane %v3678, 5
      %v3681 = vsel %vm311, %v3676, %v3680
      %v3683 = vshrl.u32 %v3340, 16
      %v3685 = vrot.slane %v3683, 4
      %v3686 = vshll.u32 %v3340, 16
      %v3688 = vrot.slane %v3686, 5
      %v3689 = vor.u32 %v3685, %v3688
      %v3690 = vrot.slane %v3689, 4
      %v3692 = vshll.u32 %v3341, 16
      %v3694 = vrot.slane %v3692, 5
      %v3695 = vsel %vm311, %v3690, %v3694
      %v3696 = vshrl.u32 %v3341, 16
      %v3698 = vrot.slane %v3696, 4
      %v3699 = vor.u32 %v3698, %v3694
      %v3700 = vrot.slane %v3699, 4
      %v3702 = vshll.u32 %v3342, 16
      %v3704 = vrot.slane %v3702, 5
      %v3705 = vsel %vm311, %v3700, %v3704
      %v3707 = vshrl.u32 %v3343, 16
      %v3709 = vrot.slane %v3707, 4
      %v3710 = vshll.u32 %v3343, 16
      %v3712 = vrot.slane %v3710, 5
      %v3713 = vor.u32 %v3709, %v3712
      %v3714 = vrot.slane %v3713, 4
      %v3716 = vshll.u32 %v3344, 16
      %v3718 = vrot.slane %v3716, 5
      %v3719 = vsel %vm311, %v3714, %v3718
      %v3720 = vshrl.u32 %v3344, 16
      %v3722 = vrot.slane %v3720, 4
      %v3723 = vor.u32 %v3722, %v3718
      %v3724 = vrot.slane %v3723, 4
      %v3726 = vshll.u32 %v3345, 16
      %v3728 = vrot.slane %v3726, 5
      %v3729 = vsel %vm311, %v3724, %v3728
      %s3730 = scalar_lea.vmem %s2, 448
      %v3731 = vld [vmem:[%s3730] sm:$0xf]
      %v3732 = vld [vmem:[%s3730 + $0x4] sm:$0xf]
      %v3733 = vld [vmem:[%s3730 + $0x8] sm:$0xf]
      %v3734 = vld [vmem:[%s3730 + $0xc] sm:$0xf]
      %v3735 = vld [vmem:[%s3730 + $0x10] sm:$0xf]
      %v3736 = vld [vmem:[%s3730 + $0x14] sm:$0xf]
      %v3737 = vld [vmem:[%s3730 + $0x18] sm:$0xf]
      %v3738 = vld [vmem:[%s3730 + $0x1c] sm:$0xf]
      %v3739 = vld [vmem:[%s3730 + $0x20] sm:$0xf]
      %v3740 = vld [vmem:[%s3730 + $0x24] sm:$0xf]
      %v3741 = vld [vmem:[%s3730 + $0x28] sm:$0xf]
      %v3742 = vld [vmem:[%s3730 + $0x2c] sm:$0xf]
      %v3743 = vld [vmem:[%s3730 + $0x30] sm:$0xf]
      %v3744 = vld [vmem:[%s3730 + $0x34] sm:$0xf]
      %v3745 = vld [vmem:[%s3730 + $0x38] sm:$0xf]
      %v3746 = vld [vmem:[%s3730 + $0x3c] sm:$0xf]
      %v3747 = vunpack.c.l.b16 %v3359
      %v3748 = vunpack.c.l.b16 %v3369
      %v3749 = vunpack.c.l.b16 %v3383
      %v3750 = vunpack.c.l.b16 %v3393
      %v3751 = vunpack.c.l.b16 %v3407
      %v3752 = vunpack.c.l.b16 %v3417
      %v3753 = vunpack.c.l.b16 %v3431
      %v3754 = vunpack.c.l.b16 %v3441
      %v3755 = vunpack.c.l.b16 %v3455
      %v3756 = vunpack.c.l.b16 %v3465
      %v3757 = vunpack.c.l.b16 %v3479
      %v3758 = vunpack.c.l.b16 %v3489
      %v3759 = vunpack.c.l.b16 %v3503
      %v3760 = vunpack.c.l.b16 %v3513
      %v3761 = vunpack.c.l.b16 %v3527
      %v3762 = vunpack.c.l.b16 %v3537
      %v3763 = vunpack.c.l.b16 %v3551
      %v3764 = vunpack.c.l.b16 %v3561
      %v3765 = vunpack.c.l.b16 %v3575
      %v3766 = vunpack.c.l.b16 %v3585
      %v3767 = vunpack.c.l.b16 %v3599
      %v3768 = vunpack.c.l.b16 %v3609
      %v3769 = vunpack.c.l.b16 %v3623
      %v3770 = vunpack.c.l.b16 %v3633
      %v3771 = vunpack.c.l.b16 %v3647
      %v3772 = vunpack.c.l.b16 %v3657
      %v3773 = vunpack.c.l.b16 %v3671
      %v3774 = vunpack.c.l.b16 %v3681
      %v3775 = vunpack.c.l.b16 %v3695
      %v3776 = vunpack.c.l.b16 %v3705
      %v3777 = vunpack.c.l.b16 %v3719
      %v3778 = vunpack.c.l.b16 %v3729
      %v3779 = vpack.c.b16 %v3748, %v3747
      %v3780 = vpack.c.b16 %v3750, %v3749
      %v3781 = vpack.c.b16 %v3752, %v3751
      %v3782 = vpack.c.b16 %v3754, %v3753
      %v3783 = vpack.c.b16 %v3756, %v3755
      %v3784 = vpack.c.b16 %v3758, %v3757
      %v3785 = vpack.c.b16 %v3760, %v3759
      %v3786 = vpack.c.b16 %v3762, %v3761
      %v3787 = vpack.c.b16 %v3764, %v3763
      %v3788 = vpack.c.b16 %v3766, %v3765
      %v3789 = vpack.c.b16 %v3768, %v3767
      %v3790 = vpack.c.b16 %v3770, %v3769
      %v3791 = vpack.c.b16 %v3772, %v3771
      %v3792 = vpack.c.b16 %v3774, %v3773
      %v3793 = vpack.c.b16 %v3776, %v3775
      %v3794 = vpack.c.b16 %v3778, %v3777
      %v3827 = vunpack.c.l.b16 %v3731
      %v3828 = vunpack.c.l.b16 %v3732
      %v3829 = vunpack.c.l.b16 %v3733
      %v3830 = vunpack.c.l.b16 %v3734
      %v3831 = vunpack.c.l.b16 %v3735
      %v3832 = vunpack.c.l.b16 %v3736
      %v3833 = vunpack.c.l.b16 %v3737
      %v3834 = vunpack.c.l.b16 %v3738
      %v3835 = vunpack.c.l.b16 %v3739
      %v3836 = vunpack.c.l.b16 %v3740
      %v3837 = vunpack.c.l.b16 %v3741
      %v3838 = vunpack.c.l.b16 %v3742
      %v3839 = vunpack.c.l.b16 %v3743
      %v3840 = vunpack.c.l.b16 %v3744
      %v3841 = vunpack.c.l.b16 %v3745
      %v3842 = vunpack.c.l.b16 %v3746
      %v3843 = vpack.c.b16 %v3828, %v3827
      %v3844 = vpack.c.b16 %v3830, %v3829
      %v3845 = vpack.c.b16 %v3832, %v3831
      %v3846 = vpack.c.b16 %v3834, %v3833
      %v3847 = vpack.c.b16 %v3836, %v3835
      %v3848 = vpack.c.b16 %v3838, %v3837
      %v3849 = vpack.c.b16 %v3840, %v3839
      %v3850 = vpack.c.b16 %v3842, %v3841
      %3859 = vmatpush.bf16.msra.mxu0 %v3850
      %3860 = vmatpush.bf16.msra.mxu0 %v3849
      %3861 = vmatpush.bf16.msra.mxu0 %v3848
      %3862 = vmatpush.bf16.msra.mxu0 %v3847
      %3863 = vmatpush.bf16.msra.mxu0 %v3846
      %3864 = vmatpush.bf16.msra.mxu0 %v3845
      %3865 = vmatpush.bf16.msra.mxu0 %v3844
      %3866 = vmatpush.bf16.msra.mxu0 %v3843
      %3867 = vmatmul.bf16.gmra.mxu0 %v3779
      %v3868 = vpop.f32.mrf.mxu0
      %v3869 = vadd.f32 0.0, %v3868
      %v3870 = vpop.f32.mrf.mxu0
      %v3871 = vadd.f32 0.0, %v3870
      %3872 = vmatmul.bf16.gmra.mxu0 %v3780
      %v3873 = vpop.f32.mrf.mxu0
      %v3874 = vadd.f32 0.0, %v3873
      %v3875 = vpop.f32.mrf.mxu0
      %v3876 = vadd.f32 0.0, %v3875
      %3877 = vmatmul.bf16.gmra.mxu0 %v3781
      %v3878 = vpop.f32.mrf.mxu0
      %v3879 = vadd.f32 0.0, %v3878
      %v3880 = vpop.f32.mrf.mxu0
      %v3881 = vadd.f32 0.0, %v3880
      %3882 = vmatmul.bf16.gmra.mxu0 %v3782
      %v3883 = vpop.f32.mrf.mxu0
      %v3884 = vadd.f32 0.0, %v3883
      %v3885 = vpop.f32.mrf.mxu0
      %v3886 = vadd.f32 0.0, %v3885
      %3887 = vmatmul.bf16.gmra.mxu0 %v3783
      %v3888 = vpop.f32.mrf.mxu0
      %v3889 = vadd.f32 0.0, %v3888
      %v3890 = vpop.f32.mrf.mxu0
      %v3891 = vadd.f32 0.0, %v3890
      %3892 = vmatmul.bf16.gmra.mxu0 %v3784
      %v3893 = vpop.f32.mrf.mxu0
      %v3894 = vadd.f32 0.0, %v3893
      %v3895 = vpop.f32.mrf.mxu0
      %v3896 = vadd.f32 0.0, %v3895
      %3897 = vmatmul.bf16.gmra.mxu0 %v3785
      %v3898 = vpop.f32.mrf.mxu0
      %v3899 = vadd.f32 0.0, %v3898
      %v3900 = vpop.f32.mrf.mxu0
      %v3901 = vadd.f32 0.0, %v3900
      %3902 = vmatmul.bf16.gmra.mxu0 %v3786
      %v3903 = vpop.f32.mrf.mxu0
      %v3904 = vadd.f32 0.0, %v3903
      %v3905 = vpop.f32.mrf.mxu0
      %v3906 = vadd.f32 0.0, %v3905
      %3907 = vmatmul.bf16.gmra.mxu0 %v3787
      %v3908 = vpop.f32.mrf.mxu0
      %v3909 = vadd.f32 0.0, %v3908
      %v3910 = vpop.f32.mrf.mxu0
      %v3911 = vadd.f32 0.0, %v3910
      %3912 = vmatmul.bf16.gmra.mxu0 %v3788
      %v3913 = vpop.f32.mrf.mxu0
      %v3914 = vadd.f32 0.0, %v3913
      %v3915 = vpop.f32.mrf.mxu0
      %v3916 = vadd.f32 0.0, %v3915
      %3917 = vmatmul.bf16.gmra.mxu0 %v3789
      %v3918 = vpop.f32.mrf.mxu0
      %v3919 = vadd.f32 0.0, %v3918
      %v3920 = vpop.f32.mrf.mxu0
      %v3921 = vadd.f32 0.0, %v3920
      %3922 = vmatmul.bf16.gmra.mxu0 %v3790
      %v3923 = vpop.f32.mrf.mxu0
      %v3924 = vadd.f32 0.0, %v3923
      %v3925 = vpop.f32.mrf.mxu0
      %v3926 = vadd.f32 0.0, %v3925
      %3927 = vmatmul.bf16.gmra.mxu0 %v3791
      %v3928 = vpop.f32.mrf.mxu0
      %v3929 = vadd.f32 0.0, %v3928
      %v3930 = vpop.f32.mrf.mxu0
      %v3931 = vadd.f32 0.0, %v3930
      %3932 = vmatmul.bf16.gmra.mxu0 %v3792
      %v3933 = vpop.f32.mrf.mxu0
      %v3934 = vadd.f32 0.0, %v3933
      %v3935 = vpop.f32.mrf.mxu0
      %v3936 = vadd.f32 0.0, %v3935
      %3937 = vmatmul.bf16.gmra.mxu0 %v3793
      %v3938 = vpop.f32.mrf.mxu0
      %v3939 = vadd.f32 0.0, %v3938
      %v3940 = vpop.f32.mrf.mxu0
      %v3941 = vadd.f32 0.0, %v3940
      %3942 = vmatmul.bf16.gmra.mxu0 %v3794
      %v3943 = vpop.f32.mrf.mxu0
      %v3944 = vadd.f32 0.0, %v3943
      %v3945 = vpop.f32.mrf.mxu0
      %v3946 = vadd.f32 0.0, %v3945
      %3947 = vdwg.mxu0
      %v3948 = vadd.f32 %v3266, %v3869
      %v3949 = vadd.f32 %v3267, %v3871
      %v3950 = vadd.f32 %v3268, %v3874
      %v3951 = vadd.f32 %v3269, %v3876
      %v3952 = vadd.f32 %v3270, %v3879
      %v3953 = vadd.f32 %v3271, %v3881
      %v3954 = vadd.f32 %v3272, %v3884
      %v3955 = vadd.f32 %v3273, %v3886
      %v3956 = vadd.f32 %v3274, %v3889
      %v3957 = vadd.f32 %v3275, %v3891
      %v3958 = vadd.f32 %v3276, %v3894
      %v3959 = vadd.f32 %v3277, %v3896
      %v3960 = vadd.f32 %v3278, %v3899
      %v3961 = vadd.f32 %v3279, %v3901
      %v3962 = vadd.f32 %v3280, %v3904
      %v3963 = vadd.f32 %v3281, %v3906
      %v3964 = vadd.f32 %v3282, %v3909
      %v3965 = vadd.f32 %v3283, %v3911
      %v3966 = vadd.f32 %v3284, %v3914
      %v3967 = vadd.f32 %v3285, %v3916
      %v3968 = vadd.f32 %v3286, %v3919
      %v3969 = vadd.f32 %v3287, %v3921
      %v3970 = vadd.f32 %v3288, %v3924
      %v3971 = vadd.f32 %v3289, %v3926
      %v3972 = vadd.f32 %v3290, %v3929
      %v3973 = vadd.f32 %v3291, %v3931
      %v3974 = vadd.f32 %v3292, %v3934
      %v3975 = vadd.f32 %v3293, %v3936
      %v3976 = vadd.f32 %v3294, %v3939
      %v3977 = vadd.f32 %v3295, %v3941
      %v3978 = vadd.f32 %v3296, %v3944
      %v3979 = vadd.f32 %v3297, %v3946
      %v3980 = vld [vmem:[%s2983] sm:$0xe]
      %v3981 = vld [vmem:[%s2983 + $0xc] sm:$0xe]
      %v3982 = vld [vmem:[%s2983 + $0x18] sm:$0xe]
      %v3983 = vld [vmem:[%s2983 + $0x24] sm:$0xe]
      %v3984 = vld [vmem:[%s2983 + $0x30] sm:$0xe]
      %v3985 = vld [vmem:[%s2983 + $0x3c] sm:$0xe]
      %v3986 = vld [vmem:[%s2983 + $0x48] sm:$0xe]
      %v3987 = vld [vmem:[%s2983 + $0x54] sm:$0xe]
      %v3988 = vld [vmem:[%s2983 + $0x60] sm:$0xe]
      %v3989 = vld [vmem:[%s2983 + $0x6c] sm:$0xe]
      %v3990 = vld [vmem:[%s2983 + $0x78] sm:$0xe]
      %v3991 = vld [vmem:[%s2983 + $0x84] sm:$0xe]
      %v3992 = vld [vmem:[%s2983 + $0x90] sm:$0xe]
      %v3993 = vld [vmem:[%s2983 + $0x9c] sm:$0xe]
      %v3994 = vld [vmem:[%s2983 + $0xa8] sm:$0xe]
      %v3995 = vld [vmem:[%s2983 + $0xb4] sm:$0xe]
      %v4044 = vrot.slane %v3980, 5
      %v4045 = vrot.slane %v4044, 4
      %v4046 = vrot.slane %v3299, 5
      %v4047 = vsel %vm1197, %v4045, %v4046
      %v4048 = vrot.slane %v4046, 4
      %v4049 = vrot.slane %v3300, 5
      %v4050 = vsel %vm1197, %v4048, %v4049
      %v4051 = vrot.slane %v3981, 5
      %v4052 = vrot.slane %v4051, 4
      %v4053 = vrot.slane %v3302, 5
      %v4054 = vsel %vm1197, %v4052, %v4053
      %v4055 = vrot.slane %v4053, 4
      %v4056 = vrot.slane %v3303, 5
      %v4057 = vsel %vm1197, %v4055, %v4056
      %v4058 = vrot.slane %v3982, 5
      %v4059 = vrot.slane %v4058, 4
      %v4060 = vrot.slane %v3305, 5
      %v4061 = vsel %vm1197, %v4059, %v4060
      %v4062 = vrot.slane %v4060, 4
      %v4063 = vrot.slane %v3306, 5
      %v4064 = vsel %vm1197, %v4062, %v4063
      %v4065 = vrot.slane %v3983, 5
      %v4066 = vrot.slane %v4065, 4
      %v4067 = vrot.slane %v3308, 5
      %v4068 = vsel %vm1197, %v4066, %v4067
      %v4069 = vrot.slane %v4067, 4
      %v4070 = vrot.slane %v3309, 5
      %v4071 = vsel %vm1197, %v4069, %v4070
      %v4072 = vrot.slane %v3984, 5
      %v4073 = vrot.slane %v4072, 4
      %v4074 = vrot.slane %v3311, 5
      %v4075 = vsel %vm1197, %v4073, %v4074
      %v4076 = vrot.slane %v4074, 4
      %v4077 = vrot.slane %v3312, 5
      %v4078 = vsel %vm1197, %v4076, %v4077
      %v4079 = vrot.slane %v3985, 5
      %v4080 = vrot.slane %v4079, 4
      %v4081 = vrot.slane %v3314, 5
      %v4082 = vsel %vm1197, %v4080, %v4081
      %v4083 = vrot.slane %v4081, 4
      %v4084 = vrot.slane %v3315, 5
      %v4085 = vsel %vm1197, %v4083, %v4084
      %v4086 = vrot.slane %v3986, 5
      %v4087 = vrot.slane %v4086, 4
      %v4088 = vrot.slane %v3317, 5
      %v4089 = vsel %vm1197, %v4087, %v4088
      %v4090 = vrot.slane %v4088, 4
      %v4091 = vrot.slane %v3318, 5
      %v4092 = vsel %vm1197, %v4090, %v4091
      %v4093 = vrot.slane %v3987, 5
      %v4094 = vrot.slane %v4093, 4
      %v4095 = vrot.slane %v3320, 5
      %v4096 = vsel %vm1197, %v4094, %v4095
      %v4097 = vrot.slane %v4095, 4
      %v4098 = vrot.slane %v3321, 5
      %v4099 = vsel %vm1197, %v4097, %v4098
      %v4100 = vrot.slane %v3988, 5
      %v4101 = vrot.slane %v4100, 4
      %v4102 = vrot.slane %v3323, 5
      %v4103 = vsel %vm1197, %v4101, %v4102
      %v4104 = vrot.slane %v4102, 4
      %v4105 = vrot.slane %v3324, 5
      %v4106 = vsel %vm1197, %v4104, %v4105
      %v4107 = vrot.slane %v3989, 5
      %v4108 = vrot.slane %v4107, 4
      %v4109 = vrot.slane %v3326, 5
      %v4110 = vsel %vm1197, %v4108, %v4109
      %v4111 = vrot.slane %v4109, 4
      %v4112 = vrot.slane %v3327, 5
      %v4113 = vsel %vm1197, %v4111, %v4112
      %v4114 = vrot.slane %v3990, 5
      %v4115 = vrot.slane %v4114, 4
      %v4116 = vrot.slane %v3329, 5
      %v4117 = vsel %vm1197, %v4115, %v4116
      %v4118 = vrot.slane %v4116, 4
      %v4119 = vrot.slane %v3330, 5
      %v4120 = vsel %vm1197, %v4118, %v4119
      %v4121 = vrot.slane %v3991, 5
      %v4122 = vrot.slane %v4121, 4
      %v4123 = vrot.slane %v3332, 5
      %v4124 = vsel %vm1197, %v4122, %v4123
      %v4125 = vrot.slane %v4123, 4
      %v4126 = vrot.slane %v3333, 5
      %v4127 = vsel %vm1197, %v4125, %v4126
      %v4128 = vrot.slane %v3992, 5
      %v4129 = vrot.slane %v4128, 4
      %v4130 = vrot.slane %v3335, 5
      %v4131 = vsel %vm1197, %v4129, %v4130
      %v4132 = vrot.slane %v4130, 4
      %v4133 = vrot.slane %v3336, 5
      %v4134 = vsel %vm1197, %v4132, %v4133
      %v4135 = vrot.slane %v3993, 5
      %v4136 = vrot.slane %v4135, 4
      %v4137 = vrot.slane %v3338, 5
      %v4138 = vsel %vm1197, %v4136, %v4137
      %v4139 = vrot.slane %v4137, 4
      %v4140 = vrot.slane %v3339, 5
      %v4141 = vsel %vm1197, %v4139, %v4140
      %v4142 = vrot.slane %v3994, 5
      %v4143 = vrot.slane %v4142, 4
      %v4144 = vrot.slane %v3341, 5
      %v4145 = vsel %vm1197, %v4143, %v4144
      %v4146 = vrot.slane %v4144, 4
      %v4147 = vrot.slane %v3342, 5
      %v4148 = vsel %vm1197, %v4146, %v4147
      %v4149 = vrot.slane %v3995, 5
      %v4150 = vrot.slane %v4149, 4
      %v4151 = vrot.slane %v3344, 5
      %v4152 = vsel %vm1197, %v4150, %v4151
      %v4153 = vrot.slane %v4151, 4
      %v4154 = vrot.slane %v3345, 5
      %v4155 = vsel %vm1197, %v4153, %v4154
      %s4156 = scalar_lea.vmem %s2, 512
      %v4157 = vld [vmem:[%s4156] sm:$0xf]
      %v4158 = vld [vmem:[%s4156 + $0x4] sm:$0xf]
      %v4159 = vld [vmem:[%s4156 + $0x8] sm:$0xf]
      %v4160 = vld [vmem:[%s4156 + $0xc] sm:$0xf]
      %v4161 = vld [vmem:[%s4156 + $0x10] sm:$0xf]
      %v4162 = vld [vmem:[%s4156 + $0x14] sm:$0xf]
      %v4163 = vld [vmem:[%s4156 + $0x18] sm:$0xf]
      %v4164 = vld [vmem:[%s4156 + $0x1c] sm:$0xf]
      %v4165 = vld [vmem:[%s4156 + $0x20] sm:$0xf]
      %v4166 = vld [vmem:[%s4156 + $0x24] sm:$0xf]
      %v4167 = vld [vmem:[%s4156 + $0x28] sm:$0xf]
      %v4168 = vld [vmem:[%s4156 + $0x2c] sm:$0xf]
      %v4169 = vld [vmem:[%s4156 + $0x30] sm:$0xf]
      %v4170 = vld [vmem:[%s4156 + $0x34] sm:$0xf]
      %v4171 = vld [vmem:[%s4156 + $0x38] sm:$0xf]
      %v4172 = vld [vmem:[%s4156 + $0x3c] sm:$0xf]
      %v4173 = vunpack.c.l.b16 %v4047
      %v4174 = vunpack.c.l.b16 %v4050
      %v4175 = vunpack.c.l.b16 %v4054
      %v4176 = vunpack.c.l.b16 %v4057
      %v4177 = vunpack.c.l.b16 %v4061
      %v4178 = vunpack.c.l.b16 %v4064
      %v4179 = vunpack.c.l.b16 %v4068
      %v4180 = vunpack.c.l.b16 %v4071
      %v4181 = vunpack.c.l.b16 %v4075
      %v4182 = vunpack.c.l.b16 %v4078
      %v4183 = vunpack.c.l.b16 %v4082
      %v4184 = vunpack.c.l.b16 %v4085
      %v4185 = vunpack.c.l.b16 %v4089
      %v4186 = vunpack.c.l.b16 %v4092
      %v4187 = vunpack.c.l.b16 %v4096
      %v4188 = vunpack.c.l.b16 %v4099
      %v4189 = vunpack.c.l.b16 %v4103
      %v4190 = vunpack.c.l.b16 %v4106
      %v4191 = vunpack.c.l.b16 %v4110
      %v4192 = vunpack.c.l.b16 %v4113
      %v4193 = vunpack.c.l.b16 %v4117
      %v4194 = vunpack.c.l.b16 %v4120
      %v4195 = vunpack.c.l.b16 %v4124
      %v4196 = vunpack.c.l.b16 %v4127
      %v4197 = vunpack.c.l.b16 %v4131
      %v4198 = vunpack.c.l.b16 %v4134
      %v4199 = vunpack.c.l.b16 %v4138
      %v4200 = vunpack.c.l.b16 %v4141
      %v4201 = vunpack.c.l.b16 %v4145
      %v4202 = vunpack.c.l.b16 %v4148
      %v4203 = vunpack.c.l.b16 %v4152
      %v4204 = vunpack.c.l.b16 %v4155
      %v4205 = vpack.c.b16 %v4174, %v4173
      %v4206 = vpack.c.b16 %v4176, %v4175
      %v4207 = vpack.c.b16 %v4178, %v4177
      %v4208 = vpack.c.b16 %v4180, %v4179
      %v4209 = vpack.c.b16 %v4182, %v4181
      %v4210 = vpack.c.b16 %v4184, %v4183
      %v4211 = vpack.c.b16 %v4186, %v4185
      %v4212 = vpack.c.b16 %v4188, %v4187
      %v4213 = vpack.c.b16 %v4190, %v4189
      %v4214 = vpack.c.b16 %v4192, %v4191
      %v4215 = vpack.c.b16 %v4194, %v4193
      %v4216 = vpack.c.b16 %v4196, %v4195
      %v4217 = vpack.c.b16 %v4198, %v4197
      %v4218 = vpack.c.b16 %v4200, %v4199
      %v4219 = vpack.c.b16 %v4202, %v4201
      %v4220 = vpack.c.b16 %v4204, %v4203
      %v4253 = vunpack.c.l.b16 %v4157
      %v4254 = vunpack.c.l.b16 %v4158
      %v4255 = vunpack.c.l.b16 %v4159
      %v4256 = vunpack.c.l.b16 %v4160
      %v4257 = vunpack.c.l.b16 %v4161
      %v4258 = vunpack.c.l.b16 %v4162
      %v4259 = vunpack.c.l.b16 %v4163
      %v4260 = vunpack.c.l.b16 %v4164
      %v4261 = vunpack.c.l.b16 %v4165
      %v4262 = vunpack.c.l.b16 %v4166
      %v4263 = vunpack.c.l.b16 %v4167
      %v4264 = vunpack.c.l.b16 %v4168
      %v4265 = vunpack.c.l.b16 %v4169
      %v4266 = vunpack.c.l.b16 %v4170
      %v4267 = vunpack.c.l.b16 %v4171
      %v4268 = vunpack.c.l.b16 %v4172
      %v4269 = vpack.c.b16 %v4254, %v4253
      %v4270 = vpack.c.b16 %v4256, %v4255
      %v4271 = vpack.c.b16 %v4258, %v4257
      %v4272 = vpack.c.b16 %v4260, %v4259
      %v4273 = vpack.c.b16 %v4262, %v4261
      %v4274 = vpack.c.b16 %v4264, %v4263
      %v4275 = vpack.c.b16 %v4266, %v4265
      %v4276 = vpack.c.b16 %v4268, %v4267
      %4285 = vmatpush.bf16.msra.mxu0 %v4276
      %4286 = vmatpush.bf16.msra.mxu0 %v4275
      %4287 = vmatpush.bf16.msra.mxu0 %v4274
      %4288 = vmatpush.bf16.msra.mxu0 %v4273
      %4289 = vmatpush.bf16.msra.mxu0 %v4272
      %4290 = vmatpush.bf16.msra.mxu0 %v4271
      %4291 = vmatpush.bf16.msra.mxu0 %v4270
      %4292 = vmatpush.bf16.msra.mxu0 %v4269
      %4293 = vmatmul.bf16.gmra.mxu0 %v4205
      %v4294 = vpop.f32.mrf.mxu0
      %v4295 = vadd.f32 0.0, %v4294
      %v4296 = vpop.f32.mrf.mxu0
      %v4297 = vadd.f32 0.0, %v4296
      %4298 = vmatmul.bf16.gmra.mxu0 %v4206
      %v4299 = vpop.f32.mrf.mxu0
      %v4300 = vadd.f32 0.0, %v4299
      %v4301 = vpop.f32.mrf.mxu0
      %v4302 = vadd.f32 0.0, %v4301
      %4303 = vmatmul.bf16.gmra.mxu0 %v4207
      %v4304 = vpop.f32.mrf.mxu0
      %v4305 = vadd.f32 0.0, %v4304
      %v4306 = vpop.f32.mrf.mxu0
      %v4307 = vadd.f32 0.0, %v4306
      %4308 = vmatmul.bf16.gmra.mxu0 %v4208
      %v4309 = vpop.f32.mrf.mxu0
      %v4310 = vadd.f32 0.0, %v4309
      %v4311 = vpop.f32.mrf.mxu0
      %v4312 = vadd.f32 0.0, %v4311
      %4313 = vmatmul.bf16.gmra.mxu0 %v4209
      %v4314 = vpop.f32.mrf.mxu0
      %v4315 = vadd.f32 0.0, %v4314
      %v4316 = vpop.f32.mrf.mxu0
      %v4317 = vadd.f32 0.0, %v4316
      %4318 = vmatmul.bf16.gmra.mxu0 %v4210
      %v4319 = vpop.f32.mrf.mxu0
      %v4320 = vadd.f32 0.0, %v4319
      %v4321 = vpop.f32.mrf.mxu0
      %v4322 = vadd.f32 0.0, %v4321
      %4323 = vmatmul.bf16.gmra.mxu0 %v4211
      %v4324 = vpop.f32.mrf.mxu0
      %v4325 = vadd.f32 0.0, %v4324
      %v4326 = vpop.f32.mrf.mxu0
      %v4327 = vadd.f32 0.0, %v4326
      %4328 = vmatmul.bf16.gmra.mxu0 %v4212
      %v4329 = vpop.f32.mrf.mxu0
      %v4330 = vadd.f32 0.0, %v4329
      %v4331 = vpop.f32.mrf.mxu0
      %v4332 = vadd.f32 0.0, %v4331
      %4333 = vmatmul.bf16.gmra.mxu0 %v4213
      %v4334 = vpop.f32.mrf.mxu0
      %v4335 = vadd.f32 0.0, %v4334
      %v4336 = vpop.f32.mrf.mxu0
      %v4337 = vadd.f32 0.0, %v4336
      %4338 = vmatmul.bf16.gmra.mxu0 %v4214
      %v4339 = vpop.f32.mrf.mxu0
      %v4340 = vadd.f32 0.0, %v4339
      %v4341 = vpop.f32.mrf.mxu0
      %v4342 = vadd.f32 0.0, %v4341
      %4343 = vmatmul.bf16.gmra.mxu0 %v4215
      %v4344 = vpop.f32.mrf.mxu0
      %v4345 = vadd.f32 0.0, %v4344
      %v4346 = vpop.f32.mrf.mxu0
      %v4347 = vadd.f32 0.0, %v4346
      %4348 = vmatmul.bf16.gmra.mxu0 %v4216
      %v4349 = vpop.f32.mrf.mxu0
      %v4350 = vadd.f32 0.0, %v4349
      %v4351 = vpop.f32.mrf.mxu0
      %v4352 = vadd.f32 0.0, %v4351
      %4353 = vmatmul.bf16.gmra.mxu0 %v4217
      %v4354 = vpop.f32.mrf.mxu0
      %v4355 = vadd.f32 0.0, %v4354
      %v4356 = vpop.f32.mrf.mxu0
      %v4357 = vadd.f32 0.0, %v4356
      %4358 = vmatmul.bf16.gmra.mxu0 %v4218
      %v4359 = vpop.f32.mrf.mxu0
      %v4360 = vadd.f32 0.0, %v4359
      %v4361 = vpop.f32.mrf.mxu0
      %v4362 = vadd.f32 0.0, %v4361
      %4363 = vmatmul.bf16.gmra.mxu0 %v4219
      %v4364 = vpop.f32.mrf.mxu0
      %v4365 = vadd.f32 0.0, %v4364
      %v4366 = vpop.f32.mrf.mxu0
      %v4367 = vadd.f32 0.0, %v4366
      %4368 = vmatmul.bf16.gmra.mxu0 %v4220
      %v4369 = vpop.f32.mrf.mxu0
      %v4370 = vadd.f32 0.0, %v4369
      %v4371 = vpop.f32.mrf.mxu0
      %v4372 = vadd.f32 0.0, %v4371
      %4373 = vdwg.mxu0
      %v4374 = vadd.f32 %v3948, %v4295
      %v4375 = vadd.f32 %v3949, %v4297
      %v4376 = vadd.f32 %v3950, %v4300
      %v4377 = vadd.f32 %v3951, %v4302
      %v4378 = vadd.f32 %v3952, %v4305
      %v4379 = vadd.f32 %v3953, %v4307
      %v4380 = vadd.f32 %v3954, %v4310
      %v4381 = vadd.f32 %v3955, %v4312
      %v4382 = vadd.f32 %v3956, %v4315
      %v4383 = vadd.f32 %v3957, %v4317
      %v4384 = vadd.f32 %v3958, %v4320
      %v4385 = vadd.f32 %v3959, %v4322
      %v4386 = vadd.f32 %v3960, %v4325
      %v4387 = vadd.f32 %v3961, %v4327
      %v4388 = vadd.f32 %v3962, %v4330
      %v4389 = vadd.f32 %v3963, %v4332
      %v4390 = vadd.f32 %v3964, %v4335
      %v4391 = vadd.f32 %v3965, %v4337
      %v4392 = vadd.f32 %v3966, %v4340
      %v4393 = vadd.f32 %v3967, %v4342
      %v4394 = vadd.f32 %v3968, %v4345
      %v4395 = vadd.f32 %v3969, %v4347
      %v4396 = vadd.f32 %v3970, %v4350
      %v4397 = vadd.f32 %v3971, %v4352
      %v4398 = vadd.f32 %v3972, %v4355
      %v4399 = vadd.f32 %v3973, %v4357
      %v4400 = vadd.f32 %v3974, %v4360
      %v4401 = vadd.f32 %v3975, %v4362
      %v4402 = vadd.f32 %v3976, %v4365
      %v4403 = vadd.f32 %v3977, %v4367
      %v4404 = vadd.f32 %v3978, %v4370
      %v4405 = vadd.f32 %v3979, %v4372
      %v4406 = vld [vmem:[%s239] sm:$0xf]
      %v4407 = vld [vmem:[%s239 + $0x4] sm:$0xf]
      %v4408 = vld [vmem:[%s239 + $0xc] sm:$0xf]
      %v4409 = vld [vmem:[%s239 + $0x10] sm:$0xf]
      %v4410 = vld [vmem:[%s239 + $0x18] sm:$0xf]
      %v4411 = vld [vmem:[%s239 + $0x1c] sm:$0xf]
      %v4412 = vld [vmem:[%s239 + $0x24] sm:$0xf]
      %v4413 = vld [vmem:[%s239 + $0x28] sm:$0xf]
      %v4414 = vld [vmem:[%s239 + $0x30] sm:$0xf]
      %v4415 = vld [vmem:[%s239 + $0x34] sm:$0xf]
      %v4416 = vld [vmem:[%s239 + $0x3c] sm:$0xf]
      %v4417 = vld [vmem:[%s239 + $0x40] sm:$0xf]
      %v4418 = vld [vmem:[%s239 + $0x48] sm:$0xf]
      %v4419 = vld [vmem:[%s239 + $0x4c] sm:$0xf]
      %v4420 = vld [vmem:[%s239 + $0x54] sm:$0xf]
      %v4421 = vld [vmem:[%s239 + $0x58] sm:$0xf]
      %v4422 = vld [vmem:[%s239 + $0x60] sm:$0xf]
      %v4423 = vld [vmem:[%s239 + $0x64] sm:$0xf]
      %v4424 = vld [vmem:[%s239 + $0x6c] sm:$0xf]
      %v4425 = vld [vmem:[%s239 + $0x70] sm:$0xf]
      %v4426 = vld [vmem:[%s239 + $0x78] sm:$0xf]
      %v4427 = vld [vmem:[%s239 + $0x7c] sm:$0xf]
      %v4428 = vld [vmem:[%s239 + $0x84] sm:$0xf]
      %v4429 = vld [vmem:[%s239 + $0x88] sm:$0xf]
      %v4430 = vld [vmem:[%s239 + $0x90] sm:$0xf]
      %v4431 = vld [vmem:[%s239 + $0x94] sm:$0xf]
      %v4432 = vld [vmem:[%s239 + $0x9c] sm:$0xf]
      %v4433 = vld [vmem:[%s239 + $0xa0] sm:$0xf]
      %v4434 = vld [vmem:[%s239 + $0xa8] sm:$0xf]
      %v4435 = vld [vmem:[%s239 + $0xac] sm:$0xf]
      %v4436 = vld [vmem:[%s239 + $0xb4] sm:$0xf]
      %v4437 = vld [vmem:[%s239 + $0xb8] sm:$0xf]
      %v4438 = vld [vmem:[%s3] sm:$0xf]
      %v4439 = vld [vmem:[%s3 + $0x4] sm:$0xf]
      %v4440 = vld [vmem:[%s3 + $0x8] sm:$0xf]
      %v4441 = vld [vmem:[%s3 + $0xc] sm:$0xf]
      %v4442 = vld [vmem:[%s3 + $0x10] sm:$0xf]
      %v4443 = vld [vmem:[%s3 + $0x14] sm:$0xf]
      %v4444 = vld [vmem:[%s3 + $0x18] sm:$0xf]
      %v4445 = vld [vmem:[%s3 + $0x1c] sm:$0xf]
      %v4446 = vld [vmem:[%s3 + $0x20] sm:$0xf]
      %v4447 = vld [vmem:[%s3 + $0x24] sm:$0xf]
      %v4448 = vld [vmem:[%s3 + $0x28] sm:$0xf]
      %v4449 = vld [vmem:[%s3 + $0x2c] sm:$0xf]
      %v4450 = vld [vmem:[%s3 + $0x30] sm:$0xf]
      %v4451 = vld [vmem:[%s3 + $0x34] sm:$0xf]
      %v4452 = vld [vmem:[%s3 + $0x38] sm:$0xf]
      %v4453 = vld [vmem:[%s3 + $0x3c] sm:$0xf]
      %v4486 = vunpack.c.l.b16 %v4406
      %v4487 = vunpack.c.l.b16 %v4407
      %v4488 = vunpack.c.l.b16 %v4408
      %v4489 = vunpack.c.l.b16 %v4409
      %v4490 = vunpack.c.l.b16 %v4410
      %v4491 = vunpack.c.l.b16 %v4411
      %v4492 = vunpack.c.l.b16 %v4412
      %v4493 = vunpack.c.l.b16 %v4413
      %v4494 = vunpack.c.l.b16 %v4414
      %v4495 = vunpack.c.l.b16 %v4415
      %v4496 = vunpack.c.l.b16 %v4416
      %v4497 = vunpack.c.l.b16 %v4417
      %v4498 = vunpack.c.l.b16 %v4418
      %v4499 = vunpack.c.l.b16 %v4419
      %v4500 = vunpack.c.l.b16 %v4420
      %v4501 = vunpack.c.l.b16 %v4421
      %v4502 = vunpack.c.l.b16 %v4422
      %v4503 = vunpack.c.l.b16 %v4423
      %v4504 = vunpack.c.l.b16 %v4424
      %v4505 = vunpack.c.l.b16 %v4425
      %v4506 = vunpack.c.l.b16 %v4426
      %v4507 = vunpack.c.l.b16 %v4427
      %v4508 = vunpack.c.l.b16 %v4428
      %v4509 = vunpack.c.l.b16 %v4429
      %v4510 = vunpack.c.l.b16 %v4430
      %v4511 = vunpack.c.l.b16 %v4431
      %v4512 = vunpack.c.l.b16 %v4432
      %v4513 = vunpack.c.l.b16 %v4433
      %v4514 = vunpack.c.l.b16 %v4434
      %v4515 = vunpack.c.l.b16 %v4435
      %v4516 = vunpack.c.l.b16 %v4436
      %v4517 = vunpack.c.l.b16 %v4437
      %v4518 = vpack.c.b16 %v4487, %v4486
      %v4519 = vpack.c.b16 %v4489, %v4488
      %v4520 = vpack.c.b16 %v4491, %v4490
      %v4521 = vpack.c.b16 %v4493, %v4492
      %v4522 = vpack.c.b16 %v4495, %v4494
      %v4523 = vpack.c.b16 %v4497, %v4496
      %v4524 = vpack.c.b16 %v4499, %v4498
      %v4525 = vpack.c.b16 %v4501, %v4500
      %v4526 = vpack.c.b16 %v4503, %v4502
      %v4527 = vpack.c.b16 %v4505, %v4504
      %v4528 = vpack.c.b16 %v4507, %v4506
      %v4529 = vpack.c.b16 %v4509, %v4508
      %v4530 = vpack.c.b16 %v4511, %v4510
      %v4531 = vpack.c.b16 %v4513, %v4512
      %v4532 = vpack.c.b16 %v4515, %v4514
      %v4533 = vpack.c.b16 %v4517, %v4516
      %v4566 = vunpack.c.l.b16 %v4438
      %v4567 = vunpack.c.l.b16 %v4439
      %v4568 = vunpack.c.l.b16 %v4440
      %v4569 = vunpack.c.l.b16 %v4441
      %v4570 = vunpack.c.l.b16 %v4442
      %v4571 = vunpack.c.l.b16 %v4443
      %v4572 = vunpack.c.l.b16 %v4444
      %v4573 = vunpack.c.l.b16 %v4445
      %v4574 = vunpack.c.l.b16 %v4446
      %v4575 = vunpack.c.l.b16 %v4447
      %v4576 = vunpack.c.l.b16 %v4448
      %v4577 = vunpack.c.l.b16 %v4449
      %v4578 = vunpack.c.l.b16 %v4450
      %v4579 = vunpack.c.l.b16 %v4451
      %v4580 = vunpack.c.l.b16 %v4452
      %v4581 = vunpack.c.l.b16 %v4453
      %v4582 = vpack.c.b16 %v4567, %v4566
      %v4583 = vpack.c.b16 %v4569, %v4568
      %v4584 = vpack.c.b16 %v4571, %v4570
      %v4585 = vpack.c.b16 %v4573, %v4572
      %v4586 = vpack.c.b16 %v4575, %v4574
      %v4587 = vpack.c.b16 %v4577, %v4576
      %v4588 = vpack.c.b16 %v4579, %v4578
      %v4589 = vpack.c.b16 %v4581, %v4580
      %4598 = vmatpush.bf16.msra.mxu0 %v4589
      %4599 = vmatpush.bf16.msra.mxu0 %v4588
      %4600 = vmatpush.bf16.msra.mxu0 %v4587
      %4601 = vmatpush.bf16.msra.mxu0 %v4586
      %4602 = vmatpush.bf16.msra.mxu0 %v4585
      %4603 = vmatpush.bf16.msra.mxu0 %v4584
      %4604 = vmatpush.bf16.msra.mxu0 %v4583
      %4605 = vmatpush.bf16.msra.mxu0 %v4582
      %4606 = vmatmul.bf16.gmra.mxu0 %v4518
      %v4607 = vpop.f32.mrf.mxu0
      %v4608 = vadd.f32 0.0, %v4607
      %v4609 = vpop.f32.mrf.mxu0
      %v4610 = vadd.f32 0.0, %v4609
      %4611 = vmatmul.bf16.gmra.mxu0 %v4519
      %v4612 = vpop.f32.mrf.mxu0
      %v4613 = vadd.f32 0.0, %v4612
      %v4614 = vpop.f32.mrf.mxu0
      %v4615 = vadd.f32 0.0, %v4614
      %4616 = vmatmul.bf16.gmra.mxu0 %v4520
      %v4617 = vpop.f32.mrf.mxu0
      %v4618 = vadd.f32 0.0, %v4617
      %v4619 = vpop.f32.mrf.mxu0
      %v4620 = vadd.f32 0.0, %v4619
      %4621 = vmatmul.bf16.gmra.mxu0 %v4521
      %v4622 = vpop.f32.mrf.mxu0
      %v4623 = vadd.f32 0.0, %v4622
      %v4624 = vpop.f32.mrf.mxu0
      %v4625 = vadd.f32 0.0, %v4624
      %4626 = vmatmul.bf16.gmra.mxu0 %v4522
      %v4627 = vpop.f32.mrf.mxu0
      %v4628 = vadd.f32 0.0, %v4627
      %v4629 = vpop.f32.mrf.mxu0
      %v4630 = vadd.f32 0.0, %v4629
      %4631 = vmatmul.bf16.gmra.mxu0 %v4523
      %v4632 = vpop.f32.mrf.mxu0
      %v4633 = vadd.f32 0.0, %v4632
      %v4634 = vpop.f32.mrf.mxu0
      %v4635 = vadd.f32 0.0, %v4634
      %4636 = vmatmul.bf16.gmra.mxu0 %v4524
      %v4637 = vpop.f32.mrf.mxu0
      %v4638 = vadd.f32 0.0, %v4637
      %v4639 = vpop.f32.mrf.mxu0
      %v4640 = vadd.f32 0.0, %v4639
      %4641 = vmatmul.bf16.gmra.mxu0 %v4525
      %v4642 = vpop.f32.mrf.mxu0
      %v4643 = vadd.f32 0.0, %v4642
      %v4644 = vpop.f32.mrf.mxu0
      %v4645 = vadd.f32 0.0, %v4644
      %4646 = vmatmul.bf16.gmra.mxu0 %v4526
      %v4647 = vpop.f32.mrf.mxu0
      %v4648 = vadd.f32 0.0, %v4647
      %v4649 = vpop.f32.mrf.mxu0
      %v4650 = vadd.f32 0.0, %v4649
      %4651 = vmatmul.bf16.gmra.mxu0 %v4527
      %v4652 = vpop.f32.mrf.mxu0
      %v4653 = vadd.f32 0.0, %v4652
      %v4654 = vpop.f32.mrf.mxu0
      %v4655 = vadd.f32 0.0, %v4654
      %4656 = vmatmul.bf16.gmra.mxu0 %v4528
      %v4657 = vpop.f32.mrf.mxu0
      %v4658 = vadd.f32 0.0, %v4657
      %v4659 = vpop.f32.mrf.mxu0
      %v4660 = vadd.f32 0.0, %v4659
      %4661 = vmatmul.bf16.gmra.mxu0 %v4529
      %v4662 = vpop.f32.mrf.mxu0
      %v4663 = vadd.f32 0.0, %v4662
      %v4664 = vpop.f32.mrf.mxu0
      %v4665 = vadd.f32 0.0, %v4664
      %4666 = vmatmul.bf16.gmra.mxu0 %v4530
      %v4667 = vpop.f32.mrf.mxu0
      %v4668 = vadd.f32 0.0, %v4667
      %v4669 = vpop.f32.mrf.mxu0
      %v4670 = vadd.f32 0.0, %v4669
      %4671 = vmatmul.bf16.gmra.mxu0 %v4531
      %v4672 = vpop.f32.mrf.mxu0
      %v4673 = vadd.f32 0.0, %v4672
      %v4674 = vpop.f32.mrf.mxu0
      %v4675 = vadd.f32 0.0, %v4674
      %4676 = vmatmul.bf16.gmra.mxu0 %v4532
      %v4677 = vpop.f32.mrf.mxu0
      %v4678 = vadd.f32 0.0, %v4677
      %v4679 = vpop.f32.mrf.mxu0
      %v4680 = vadd.f32 0.0, %v4679
      %4681 = vmatmul.bf16.gmra.mxu0 %v4533
      %v4682 = vpop.f32.mrf.mxu0
      %v4683 = vadd.f32 0.0, %v4682
      %v4684 = vpop.f32.mrf.mxu0
      %v4685 = vadd.f32 0.0, %v4684
      %4686 = vdwg.mxu0
      %v4687 = vadd.f32 %v4374, %v4608
      %v4688 = vadd.f32 %v4375, %v4610
      %v4689 = vadd.f32 %v4376, %v4613
      %v4690 = vadd.f32 %v4377, %v4615
      %v4691 = vadd.f32 %v4378, %v4618
      %v4692 = vadd.f32 %v4379, %v4620
      %v4693 = vadd.f32 %v4380, %v4623
      %v4694 = vadd.f32 %v4381, %v4625
      %v4695 = vadd.f32 %v4382, %v4628
      %v4696 = vadd.f32 %v4383, %v4630
      %v4697 = vadd.f32 %v4384, %v4633
      %v4698 = vadd.f32 %v4385, %v4635
      %v4699 = vadd.f32 %v4386, %v4638
      %v4700 = vadd.f32 %v4387, %v4640
      %v4701 = vadd.f32 %v4388, %v4643
      %v4702 = vadd.f32 %v4389, %v4645
      %v4703 = vadd.f32 %v4390, %v4648
      %v4704 = vadd.f32 %v4391, %v4650
      %v4705 = vadd.f32 %v4392, %v4653
      %v4706 = vadd.f32 %v4393, %v4655
      %v4707 = vadd.f32 %v4394, %v4658
      %v4708 = vadd.f32 %v4395, %v4660
      %v4709 = vadd.f32 %v4396, %v4663
      %v4710 = vadd.f32 %v4397, %v4665
      %v4711 = vadd.f32 %v4398, %v4668
      %v4712 = vadd.f32 %v4399, %v4670
      %v4713 = vadd.f32 %v4400, %v4673
      %v4714 = vadd.f32 %v4401, %v4675
      %v4715 = vadd.f32 %v4402, %v4678
      %v4716 = vadd.f32 %v4403, %v4680
      %v4717 = vadd.f32 %v4404, %v4683
      %v4718 = vadd.f32 %v4405, %v4685
      %v4719 = vld [vmem:[%s239] sm:$0xf]
      %v4720 = vld [vmem:[%s239 + $0x4] sm:$0xf]
      %v4721 = vld [vmem:[%s239 + $0x8] sm:$0x1]
      %v4722 = vld [vmem:[%s239 + $0xc] sm:$0xf]
      %v4723 = vld [vmem:[%s239 + $0x10] sm:$0xf]
      %v4724 = vld [vmem:[%s239 + $0x14] sm:$0x1]
      %v4725 = vld [vmem:[%s239 + $0x18] sm:$0xf]
      %v4726 = vld [vmem:[%s239 + $0x1c] sm:$0xf]
      %v4727 = vld [vmem:[%s239 + $0x20] sm:$0x1]
      %v4728 = vld [vmem:[%s239 + $0x24] sm:$0xf]
      %v4729 = vld [vmem:[%s239 + $0x28] sm:$0xf]
      %v4730 = vld [vmem:[%s239 + $0x2c] sm:$0x1]
      %v4731 = vld [vmem:[%s239 + $0x30] sm:$0xf]
      %v4732 = vld [vmem:[%s239 + $0x34] sm:$0xf]
      %v4733 = vld [vmem:[%s239 + $0x38] sm:$0x1]
      %v4734 = vld [vmem:[%s239 + $0x3c] sm:$0xf]
      %v4735 = vld [vmem:[%s239 + $0x40] sm:$0xf]
      %v4736 = vld [vmem:[%s239 + $0x44] sm:$0x1]
      %v4737 = vld [vmem:[%s239 + $0x48] sm:$0xf]
      %v4738 = vld [vmem:[%s239 + $0x4c] sm:$0xf]
      %v4739 = vld [vmem:[%s239 + $0x50] sm:$0x1]
      %v4740 = vld [vmem:[%s239 + $0x54] sm:$0xf]
      %v4741 = vld [vmem:[%s239 + $0x58] sm:$0xf]
      %v4742 = vld [vmem:[%s239 + $0x5c] sm:$0x1]
      %v4743 = vld [vmem:[%s239 + $0x60] sm:$0xf]
      %v4744 = vld [vmem:[%s239 + $0x64] sm:$0xf]
      %v4745 = vld [vmem:[%s239 + $0x68] sm:$0x1]
      %v4746 = vld [vmem:[%s239 + $0x6c] sm:$0xf]
      %v4747 = vld [vmem:[%s239 + $0x70] sm:$0xf]
      %v4748 = vld [vmem:[%s239 + $0x74] sm:$0x1]
      %v4749 = vld [vmem:[%s239 + $0x78] sm:$0xf]
      %v4750 = vld [vmem:[%s239 + $0x7c] sm:$0xf]
      %v4751 = vld [vmem:[%s239 + $0x80] sm:$0x1]
      %v4752 = vld [vmem:[%s239 + $0x84] sm:$0xf]
      %v4753 = vld [vmem:[%s239 + $0x88] sm:$0xf]
      %v4754 = vld [vmem:[%s239 + $0x8c] sm:$0x1]
      %v4755 = vld [vmem:[%s239 + $0x90] sm:$0xf]
      %v4756 = vld [vmem:[%s239 + $0x94] sm:$0xf]
      %v4757 = vld [vmem:[%s239 + $0x98] sm:$0x1]
      %v4758 = vld [vmem:[%s239 + $0x9c] sm:$0xf]
      %v4759 = vld [vmem:[%s239 + $0xa0] sm:$0xf]
      %v4760 = vld [vmem:[%s239 + $0xa4] sm:$0x1]
      %v4761 = vld [vmem:[%s239 + $0xa8] sm:$0xf]
      %v4762 = vld [vmem:[%s239 + $0xac] sm:$0xf]
      %v4763 = vld [vmem:[%s239 + $0xb0] sm:$0x1]
      %v4764 = vld [vmem:[%s239 + $0xb4] sm:$0xf]
      %v4765 = vld [vmem:[%s239 + $0xb8] sm:$0xf]
      %v4766 = vld [vmem:[%s239 + $0xbc] sm:$0x1]
      %v4768 = vshrl.u32 %v4719, 16
      %v4770 = vrot.slane %v4768, 4
      %v4771 = vshll.u32 %v4719, 16
      %v4773 = vrot.slane %v4771, 5
      %v4774 = vor.u32 %v4770, %v4773
      %v4775 = vrot.slane %v4774, 4
      %v4777 = vshll.u32 %v4720, 16
      %v4779 = vrot.slane %v4777, 5
      %v4780 = vsel %vm311, %v4775, %v4779
      %v4781 = vshrl.u32 %v4720, 16
      %v4783 = vrot.slane %v4781, 4
      %v4784 = vor.u32 %v4783, %v4779
      %v4785 = vrot.slane %v4784, 4
      %v4787 = vshll.u32 %v4721, 16
      %v4789 = vrot.slane %v4787, 5
      %v4790 = vsel %vm311, %v4785, %v4789
      %v4792 = vshrl.u32 %v4722, 16
      %v4794 = vrot.slane %v4792, 4
      %v4795 = vshll.u32 %v4722, 16
      %v4797 = vrot.slane %v4795, 5
      %v4798 = vor.u32 %v4794, %v4797
      %v4799 = vrot.slane %v4798, 4
      %v4801 = vshll.u32 %v4723, 16
      %v4803 = vrot.slane %v4801, 5
      %v4804 = vsel %vm311, %v4799, %v4803
      %v4805 = vshrl.u32 %v4723, 16
      %v4807 = vrot.slane %v4805, 4
      %v4808 = vor.u32 %v4807, %v4803
      %v4809 = vrot.slane %v4808, 4
      %v4811 = vshll.u32 %v4724, 16
      %v4813 = vrot.slane %v4811, 5
      %v4814 = vsel %vm311, %v4809, %v4813
      %v4816 = vshrl.u32 %v4725, 16
      %v4818 = vrot.slane %v4816, 4
      %v4819 = vshll.u32 %v4725, 16
      %v4821 = vrot.slane %v4819, 5
      %v4822 = vor.u32 %v4818, %v4821
      %v4823 = vrot.slane %v4822, 4
      %v4825 = vshll.u32 %v4726, 16
      %v4827 = vrot.slane %v4825, 5
      %v4828 = vsel %vm311, %v4823, %v4827
      %v4829 = vshrl.u32 %v4726, 16
      %v4831 = vrot.slane %v4829, 4
      %v4832 = vor.u32 %v4831, %v4827
      %v4833 = vrot.slane %v4832, 4
      %v4835 = vshll.u32 %v4727, 16
      %v4837 = vrot.slane %v4835, 5
      %v4838 = vsel %vm311, %v4833, %v4837
      %v4840 = vshrl.u32 %v4728, 16
      %v4842 = vrot.slane %v4840, 4
      %v4843 = vshll.u32 %v4728, 16
      %v4845 = vrot.slane %v4843, 5
      %v4846 = vor.u32 %v4842, %v4845
      %v4847 = vrot.slane %v4846, 4
      %v4849 = vshll.u32 %v4729, 16
      %v4851 = vrot.slane %v4849, 5
      %v4852 = vsel %vm311, %v4847, %v4851
      %v4853 = vshrl.u32 %v4729, 16
      %v4855 = vrot.slane %v4853, 4
      %v4856 = vor.u32 %v4855, %v4851
      %v4857 = vrot.slane %v4856, 4
      %v4859 = vshll.u32 %v4730, 16
      %v4861 = vrot.slane %v4859, 5
      %v4862 = vsel %vm311, %v4857, %v4861
      %v4864 = vshrl.u32 %v4731, 16
      %v4866 = vrot.slane %v4864, 4
      %v4867 = vshll.u32 %v4731, 16
      %v4869 = vrot.slane %v4867, 5
      %v4870 = vor.u32 %v4866, %v4869
      %v4871 = vrot.slane %v4870, 4
      %v4873 = vshll.u32 %v4732, 16
      %v4875 = vrot.slane %v4873, 5
      %v4876 = vsel %vm311, %v4871, %v4875
      %v4877 = vshrl.u32 %v4732, 16
      %v4879 = vrot.slane %v4877, 4
      %v4880 = vor.u32 %v4879, %v4875
      %v4881 = vrot.slane %v4880, 4
      %v4883 = vshll.u32 %v4733, 16
      %v4885 = vrot.slane %v4883, 5
      %v4886 = vsel %vm311, %v4881, %v4885
      %v4888 = vshrl.u32 %v4734, 16
      %v4890 = vrot.slane %v4888, 4
      %v4891 = vshll.u32 %v4734, 16
      %v4893 = vrot.slane %v4891, 5
      %v4894 = vor.u32 %v4890, %v4893
      %v4895 = vrot.slane %v4894, 4
      %v4897 = vshll.u32 %v4735, 16
      %v4899 = vrot.slane %v4897, 5
      %v4900 = vsel %vm311, %v4895, %v4899
      %v4901 = vshrl.u32 %v4735, 16
      %v4903 = vrot.slane %v4901, 4
      %v4904 = vor.u32 %v4903, %v4899
      %v4905 = vrot.slane %v4904, 4
      %v4907 = vshll.u32 %v4736, 16
      %v4909 = vrot.slane %v4907, 5
      %v4910 = vsel %vm311, %v4905, %v4909
      %v4912 = vshrl.u32 %v4737, 16
      %v4914 = vrot.slane %v4912, 4
      %v4915 = vshll.u32 %v4737, 16
      %v4917 = vrot.slane %v4915, 5
      %v4918 = vor.u32 %v4914, %v4917
      %v4919 = vrot.slane %v4918, 4
      %v4921 = vshll.u32 %v4738, 16
      %v4923 = vrot.slane %v4921, 5
      %v4924 = vsel %vm311, %v4919, %v4923
      %v4925 = vshrl.u32 %v4738, 16
      %v4927 = vrot.slane %v4925, 4
      %v4928 = vor.u32 %v4927, %v4923
      %v4929 = vrot.slane %v4928, 4
      %v4931 = vshll.u32 %v4739, 16
      %v4933 = vrot.slane %v4931, 5
      %v4934 = vsel %vm311, %v4929, %v4933
      %v4936 = vshrl.u32 %v4740, 16
      %v4938 = vrot.slane %v4936, 4
      %v4939 = vshll.u32 %v4740, 16
      %v4941 = vrot.slane %v4939, 5
      %v4942 = vor.u32 %v4938, %v4941
      %v4943 = vrot.slane %v4942, 4
      %v4945 = vshll.u32 %v4741, 16
      %v4947 = vrot.slane %v4945, 5
      %v4948 = vsel %vm311, %v4943, %v4947
      %v4949 = vshrl.u32 %v4741, 16
      %v4951 = vrot.slane %v4949, 4
      %v4952 = vor.u32 %v4951, %v4947
      %v4953 = vrot.slane %v4952, 4
      %v4955 = vshll.u32 %v4742, 16
      %v4957 = vrot.slane %v4955, 5
      %v4958 = vsel %vm311, %v4953, %v4957
      %v4960 = vshrl.u32 %v4743, 16
      %v4962 = vrot.slane %v4960, 4
      %v4963 = vshll.u32 %v4743, 16
      %v4965 = vrot.slane %v4963, 5
      %v4966 = vor.u32 %v4962, %v4965
      %v4967 = vrot.slane %v4966, 4
      %v4969 = vshll.u32 %v4744, 16
      %v4971 = vrot.slane %v4969, 5
      %v4972 = vsel %vm311, %v4967, %v4971
      %v4973 = vshrl.u32 %v4744, 16
      %v4975 = vrot.slane %v4973, 4
      %v4976 = vor.u32 %v4975, %v4971
      %v4977 = vrot.slane %v4976, 4
      %v4979 = vshll.u32 %v4745, 16
      %v4981 = vrot.slane %v4979, 5
      %v4982 = vsel %vm311, %v4977, %v4981
      %v4984 = vshrl.u32 %v4746, 16
      %v4986 = vrot.slane %v4984, 4
      %v4987 = vshll.u32 %v4746, 16
      %v4989 = vrot.slane %v4987, 5
      %v4990 = vor.u32 %v4986, %v4989
      %v4991 = vrot.slane %v4990, 4
      %v4993 = vshll.u32 %v4747, 16
      %v4995 = vrot.slane %v4993, 5
      %v4996 = vsel %vm311, %v4991, %v4995
      %v4997 = vshrl.u32 %v4747, 16
      %v4999 = vrot.slane %v4997, 4
      %v5000 = vor.u32 %v4999, %v4995
      %v5001 = vrot.slane %v5000, 4
      %v5003 = vshll.u32 %v4748, 16
      %v5005 = vrot.slane %v5003, 5
      %v5006 = vsel %vm311, %v5001, %v5005
      %v5008 = vshrl.u32 %v4749, 16
      %v5010 = vrot.slane %v5008, 4
      %v5011 = vshll.u32 %v4749, 16
      %v5013 = vrot.slane %v5011, 5
      %v5014 = vor.u32 %v5010, %v5013
      %v5015 = vrot.slane %v5014, 4
      %v5017 = vshll.u32 %v4750, 16
      %v5019 = vrot.slane %v5017, 5
      %v5020 = vsel %vm311, %v5015, %v5019
      %v5021 = vshrl.u32 %v4750, 16
      %v5023 = vrot.slane %v5021, 4
      %v5024 = vor.u32 %v5023, %v5019
      %v5025 = vrot.slane %v5024, 4
      %v5027 = vshll.u32 %v4751, 16
      %v5029 = vrot.slane %v5027, 5
      %v5030 = vsel %vm311, %v5025, %v5029
      %v5032 = vshrl.u32 %v4752, 16
      %v5034 = vrot.slane %v5032, 4
      %v5035 = vshll.u32 %v4752, 16
      %v5037 = vrot.slane %v5035, 5
      %v5038 = vor.u32 %v5034, %v5037
      %v5039 = vrot.slane %v5038, 4
      %v5041 = vshll.u32 %v4753, 16
      %v5043 = vrot.slane %v5041, 5
      %v5044 = vsel %vm311, %v5039, %v5043
      %v5045 = vshrl.u32 %v4753, 16
      %v5047 = vrot.slane %v5045, 4
      %v5048 = vor.u32 %v5047, %v5043
      %v5049 = vrot.slane %v5048, 4
      %v5051 = vshll.u32 %v4754, 16
      %v5053 = vrot.slane %v5051, 5
      %v5054 = vsel %vm311, %v5049, %v5053
      %v5056 = vshrl.u32 %v4755, 16
      %v5058 = vrot.slane %v5056, 4
      %v5059 = vshll.u32 %v4755, 16
      %v5061 = vrot.slane %v5059, 5
      %v5062 = vor.u32 %v5058, %v5061
      %v5063 = vrot.slane %v5062, 4
      %v5065 = vshll.u32 %v4756, 16
      %v5067 = vrot.slane %v5065, 5
      %v5068 = vsel %vm311, %v5063, %v5067
      %v5069 = vshrl.u32 %v4756, 16
      %v5071 = vrot.slane %v5069, 4
      %v5072 = vor.u32 %v5071, %v5067
      %v5073 = vrot.slane %v5072, 4
      %v5075 = vshll.u32 %v4757, 16
      %v5077 = vrot.slane %v5075, 5
      %v5078 = vsel %vm311, %v5073, %v5077
      %v5080 = vshrl.u32 %v4758, 16
      %v5082 = vrot.slane %v5080, 4
      %v5083 = vshll.u32 %v4758, 16
      %v5085 = vrot.slane %v5083, 5
      %v5086 = vor.u32 %v5082, %v5085
      %v5087 = vrot.slane %v5086, 4
      %v5089 = vshll.u32 %v4759, 16
      %v5091 = vrot.slane %v5089, 5
      %v5092 = vsel %vm311, %v5087, %v5091
      %v5093 = vshrl.u32 %v4759, 16
      %v5095 = vrot.slane %v5093, 4
      %v5096 = vor.u32 %v5095, %v5091
      %v5097 = vrot.slane %v5096, 4
      %v5099 = vshll.u32 %v4760, 16
      %v5101 = vrot.slane %v5099, 5
      %v5102 = vsel %vm311, %v5097, %v5101
      %v5104 = vshrl.u32 %v4761, 16
      %v5106 = vrot.slane %v5104, 4
      %v5107 = vshll.u32 %v4761, 16
      %v5109 = vrot.slane %v5107, 5
      %v5110 = vor.u32 %v5106, %v5109
      %v5111 = vrot.slane %v5110, 4
      %v5113 = vshll.u32 %v4762, 16
      %v5115 = vrot.slane %v5113, 5
      %v5116 = vsel %vm311, %v5111, %v5115
      %v5117 = vshrl.u32 %v4762, 16
      %v5119 = vrot.slane %v5117, 4
      %v5120 = vor.u32 %v5119, %v5115
      %v5121 = vrot.slane %v5120, 4
      %v5123 = vshll.u32 %v4763, 16
      %v5125 = vrot.slane %v5123, 5
      %v5126 = vsel %vm311, %v5121, %v5125
      %v5128 = vshrl.u32 %v4764, 16
      %v5130 = vrot.slane %v5128, 4
      %v5131 = vshll.u32 %v4764, 16
      %v5133 = vrot.slane %v5131, 5
      %v5134 = vor.u32 %v5130, %v5133
      %v5135 = vrot.slane %v5134, 4
      %v5137 = vshll.u32 %v4765, 16
      %v5139 = vrot.slane %v5137, 5
      %v5140 = vsel %vm311, %v5135, %v5139
      %v5141 = vshrl.u32 %v4765, 16
      %v5143 = vrot.slane %v5141, 4
      %v5144 = vor.u32 %v5143, %v5139
      %v5145 = vrot.slane %v5144, 4
      %v5147 = vshll.u32 %v4766, 16
      %v5149 = vrot.slane %v5147, 5
      %v5150 = vsel %vm311, %v5145, %v5149
      %s5151 = scalar_lea.vmem %s3, 64
      %v5152 = vld [vmem:[%s5151] sm:$0xf]
      %v5153 = vld [vmem:[%s5151 + $0x4] sm:$0xf]
      %v5154 = vld [vmem:[%s5151 + $0x8] sm:$0xf]
      %v5155 = vld [vmem:[%s5151 + $0xc] sm:$0xf]
      %v5156 = vld [vmem:[%s5151 + $0x10] sm:$0xf]
      %v5157 = vld [vmem:[%s5151 + $0x14] sm:$0xf]
      %v5158 = vld [vmem:[%s5151 + $0x18] sm:$0xf]
      %v5159 = vld [vmem:[%s5151 + $0x1c] sm:$0xf]
      %v5160 = vld [vmem:[%s5151 + $0x20] sm:$0xf]
      %v5161 = vld [vmem:[%s5151 + $0x24] sm:$0xf]
      %v5162 = vld [vmem:[%s5151 + $0x28] sm:$0xf]
      %v5163 = vld [vmem:[%s5151 + $0x2c] sm:$0xf]
      %v5164 = vld [vmem:[%s5151 + $0x30] sm:$0xf]
      %v5165 = vld [vmem:[%s5151 + $0x34] sm:$0xf]
      %v5166 = vld [vmem:[%s5151 + $0x38] sm:$0xf]
      %v5167 = vld [vmem:[%s5151 + $0x3c] sm:$0xf]
      %v5168 = vunpack.c.l.b16 %v4780
      %v5169 = vunpack.c.l.b16 %v4790
      %v5170 = vunpack.c.l.b16 %v4804
      %v5171 = vunpack.c.l.b16 %v4814
      %v5172 = vunpack.c.l.b16 %v4828
      %v5173 = vunpack.c.l.b16 %v4838
      %v5174 = vunpack.c.l.b16 %v4852
      %v5175 = vunpack.c.l.b16 %v4862
      %v5176 = vunpack.c.l.b16 %v4876
      %v5177 = vunpack.c.l.b16 %v4886
      %v5178 = vunpack.c.l.b16 %v4900
      %v5179 = vunpack.c.l.b16 %v4910
      %v5180 = vunpack.c.l.b16 %v4924
      %v5181 = vunpack.c.l.b16 %v4934
      %v5182 = vunpack.c.l.b16 %v4948
      %v5183 = vunpack.c.l.b16 %v4958
      %v5184 = vunpack.c.l.b16 %v4972
      %v5185 = vunpack.c.l.b16 %v4982
      %v5186 = vunpack.c.l.b16 %v4996
      %v5187 = vunpack.c.l.b16 %v5006
      %v5188 = vunpack.c.l.b16 %v5020
      %v5189 = vunpack.c.l.b16 %v5030
      %v5190 = vunpack.c.l.b16 %v5044
      %v5191 = vunpack.c.l.b16 %v5054
      %v5192 = vunpack.c.l.b16 %v5068
      %v5193 = vunpack.c.l.b16 %v5078
      %v5194 = vunpack.c.l.b16 %v5092
      %v5195 = vunpack.c.l.b16 %v5102
      %v5196 = vunpack.c.l.b16 %v5116
      %v5197 = vunpack.c.l.b16 %v5126
      %v5198 = vunpack.c.l.b16 %v5140
      %v5199 = vunpack.c.l.b16 %v5150
      %v5200 = vpack.c.b16 %v5169, %v5168
      %v5201 = vpack.c.b16 %v5171, %v5170
      %v5202 = vpack.c.b16 %v5173, %v5172
      %v5203 = vpack.c.b16 %v5175, %v5174
      %v5204 = vpack.c.b16 %v5177, %v5176
      %v5205 = vpack.c.b16 %v5179, %v5178
      %v5206 = vpack.c.b16 %v5181, %v5180
      %v5207 = vpack.c.b16 %v5183, %v5182
      %v5208 = vpack.c.b16 %v5185, %v5184
      %v5209 = vpack.c.b16 %v5187, %v5186
      %v5210 = vpack.c.b16 %v5189, %v5188
      %v5211 = vpack.c.b16 %v5191, %v5190
      %v5212 = vpack.c.b16 %v5193, %v5192
      %v5213 = vpack.c.b16 %v5195, %v5194
      %v5214 = vpack.c.b16 %v5197, %v5196
      %v5215 = vpack.c.b16 %v5199, %v5198
      %v5248 = vunpack.c.l.b16 %v5152
      %v5249 = vunpack.c.l.b16 %v5153
      %v5250 = vunpack.c.l.b16 %v5154
      %v5251 = vunpack.c.l.b16 %v5155
      %v5252 = vunpack.c.l.b16 %v5156
      %v5253 = vunpack.c.l.b16 %v5157
      %v5254 = vunpack.c.l.b16 %v5158
      %v5255 = vunpack.c.l.b16 %v5159
      %v5256 = vunpack.c.l.b16 %v5160
      %v5257 = vunpack.c.l.b16 %v5161
      %v5258 = vunpack.c.l.b16 %v5162
      %v5259 = vunpack.c.l.b16 %v5163
      %v5260 = vunpack.c.l.b16 %v5164
      %v5261 = vunpack.c.l.b16 %v5165
      %v5262 = vunpack.c.l.b16 %v5166
      %v5263 = vunpack.c.l.b16 %v5167
      %v5264 = vpack.c.b16 %v5249, %v5248
      %v5265 = vpack.c.b16 %v5251, %v5250
      %v5266 = vpack.c.b16 %v5253, %v5252
      %v5267 = vpack.c.b16 %v5255, %v5254
      %v5268 = vpack.c.b16 %v5257, %v5256
      %v5269 = vpack.c.b16 %v5259, %v5258
      %v5270 = vpack.c.b16 %v5261, %v5260
      %v5271 = vpack.c.b16 %v5263, %v5262
      %5280 = vmatpush.bf16.msra.mxu0 %v5271
      %5281 = vmatpush.bf16.msra.mxu0 %v5270
      %5282 = vmatpush.bf16.msra.mxu0 %v5269
      %5283 = vmatpush.bf16.msra.mxu0 %v5268
      %5284 = vmatpush.bf16.msra.mxu0 %v5267
      %5285 = vmatpush.bf16.msra.mxu0 %v5266
      %5286 = vmatpush.bf16.msra.mxu0 %v5265
      %5287 = vmatpush.bf16.msra.mxu0 %v5264
      %5288 = vmatmul.bf16.gmra.mxu0 %v5200
      %v5289 = vpop.f32.mrf.mxu0
      %v5290 = vadd.f32 0.0, %v5289
      %v5291 = vpop.f32.mrf.mxu0
      %v5292 = vadd.f32 0.0, %v5291
      %5293 = vmatmul.bf16.gmra.mxu0 %v5201
      %v5294 = vpop.f32.mrf.mxu0
      %v5295 = vadd.f32 0.0, %v5294
      %v5296 = vpop.f32.mrf.mxu0
      %v5297 = vadd.f32 0.0, %v5296
      %5298 = vmatmul.bf16.gmra.mxu0 %v5202
      %v5299 = vpop.f32.mrf.mxu0
      %v5300 = vadd.f32 0.0, %v5299
      %v5301 = vpop.f32.mrf.mxu0
      %v5302 = vadd.f32 0.0, %v5301
      %5303 = vmatmul.bf16.gmra.mxu0 %v5203
      %v5304 = vpop.f32.mrf.mxu0
      %v5305 = vadd.f32 0.0, %v5304
      %v5306 = vpop.f32.mrf.mxu0
      %v5307 = vadd.f32 0.0, %v5306
      %5308 = vmatmul.bf16.gmra.mxu0 %v5204
      %v5309 = vpop.f32.mrf.mxu0
      %v5310 = vadd.f32 0.0, %v5309
      %v5311 = vpop.f32.mrf.mxu0
      %v5312 = vadd.f32 0.0, %v5311
      %5313 = vmatmul.bf16.gmra.mxu0 %v5205
      %v5314 = vpop.f32.mrf.mxu0
      %v5315 = vadd.f32 0.0, %v5314
      %v5316 = vpop.f32.mrf.mxu0
      %v5317 = vadd.f32 0.0, %v5316
      %5318 = vmatmul.bf16.gmra.mxu0 %v5206
      %v5319 = vpop.f32.mrf.mxu0
      %v5320 = vadd.f32 0.0, %v5319
      %v5321 = vpop.f32.mrf.mxu0
      %v5322 = vadd.f32 0.0, %v5321
      %5323 = vmatmul.bf16.gmra.mxu0 %v5207
      %v5324 = vpop.f32.mrf.mxu0
      %v5325 = vadd.f32 0.0, %v5324
      %v5326 = vpop.f32.mrf.mxu0
      %v5327 = vadd.f32 0.0, %v5326
      %5328 = vmatmul.bf16.gmra.mxu0 %v5208
      %v5329 = vpop.f32.mrf.mxu0
      %v5330 = vadd.f32 0.0, %v5329
      %v5331 = vpop.f32.mrf.mxu0
      %v5332 = vadd.f32 0.0, %v5331
      %5333 = vmatmul.bf16.gmra.mxu0 %v5209
      %v5334 = vpop.f32.mrf.mxu0
      %v5335 = vadd.f32 0.0, %v5334
      %v5336 = vpop.f32.mrf.mxu0
      %v5337 = vadd.f32 0.0, %v5336
      %5338 = vmatmul.bf16.gmra.mxu0 %v5210
      %v5339 = vpop.f32.mrf.mxu0
      %v5340 = vadd.f32 0.0, %v5339
      %v5341 = vpop.f32.mrf.mxu0
      %v5342 = vadd.f32 0.0, %v5341
      %5343 = vmatmul.bf16.gmra.mxu0 %v5211
      %v5344 = vpop.f32.mrf.mxu0
      %v5345 = vadd.f32 0.0, %v5344
      %v5346 = vpop.f32.mrf.mxu0
      %v5347 = vadd.f32 0.0, %v5346
      %5348 = vmatmul.bf16.gmra.mxu0 %v5212
      %v5349 = vpop.f32.mrf.mxu0
      %v5350 = vadd.f32 0.0, %v5349
      %v5351 = vpop.f32.mrf.mxu0
      %v5352 = vadd.f32 0.0, %v5351
      %5353 = vmatmul.bf16.gmra.mxu0 %v5213
      %v5354 = vpop.f32.mrf.mxu0
      %v5355 = vadd.f32 0.0, %v5354
      %v5356 = vpop.f32.mrf.mxu0
      %v5357 = vadd.f32 0.0, %v5356
      %5358 = vmatmul.bf16.gmra.mxu0 %v5214
      %v5359 = vpop.f32.mrf.mxu0
      %v5360 = vadd.f32 0.0, %v5359
      %v5361 = vpop.f32.mrf.mxu0
      %v5362 = vadd.f32 0.0, %v5361
      %5363 = vmatmul.bf16.gmra.mxu0 %v5215
      %v5364 = vpop.f32.mrf.mxu0
      %v5365 = vadd.f32 0.0, %v5364
      %v5366 = vpop.f32.mrf.mxu0
      %v5367 = vadd.f32 0.0, %v5366
      %5368 = vdwg.mxu0
      %v5369 = vadd.f32 %v4687, %v5290
      %v5370 = vadd.f32 %v4688, %v5292
      %v5371 = vadd.f32 %v4689, %v5295
      %v5372 = vadd.f32 %v4690, %v5297
      %v5373 = vadd.f32 %v4691, %v5300
      %v5374 = vadd.f32 %v4692, %v5302
      %v5375 = vadd.f32 %v4693, %v5305
      %v5376 = vadd.f32 %v4694, %v5307
      %v5377 = vadd.f32 %v4695, %v5310
      %v5378 = vadd.f32 %v4696, %v5312
      %v5379 = vadd.f32 %v4697, %v5315
      %v5380 = vadd.f32 %v4698, %v5317
      %v5381 = vadd.f32 %v4699, %v5320
      %v5382 = vadd.f32 %v4700, %v5322
      %v5383 = vadd.f32 %v4701, %v5325
      %v5384 = vadd.f32 %v4702, %v5327
      %v5385 = vadd.f32 %v4703, %v5330
      %v5386 = vadd.f32 %v4704, %v5332
      %v5387 = vadd.f32 %v4705, %v5335
      %v5388 = vadd.f32 %v4706, %v5337
      %v5389 = vadd.f32 %v4707, %v5340
      %v5390 = vadd.f32 %v4708, %v5342
      %v5391 = vadd.f32 %v4709, %v5345
      %v5392 = vadd.f32 %v4710, %v5347
      %v5393 = vadd.f32 %v4711, %v5350
      %v5394 = vadd.f32 %v4712, %v5352
      %v5395 = vadd.f32 %v4713, %v5355
      %v5396 = vadd.f32 %v4714, %v5357
      %v5397 = vadd.f32 %v4715, %v5360
      %v5398 = vadd.f32 %v4716, %v5362
      %v5399 = vadd.f32 %v4717, %v5365
      %v5400 = vadd.f32 %v4718, %v5367
      %v5401 = vld [vmem:[%s239] sm:$0xe]
      %v5402 = vld [vmem:[%s239 + $0xc] sm:$0xe]
      %v5403 = vld [vmem:[%s239 + $0x18] sm:$0xe]
      %v5404 = vld [vmem:[%s239 + $0x24] sm:$0xe]
      %v5405 = vld [vmem:[%s239 + $0x30] sm:$0xe]
      %v5406 = vld [vmem:[%s239 + $0x3c] sm:$0xe]
      %v5407 = vld [vmem:[%s239 + $0x48] sm:$0xe]
      %v5408 = vld [vmem:[%s239 + $0x54] sm:$0xe]
      %v5409 = vld [vmem:[%s239 + $0x60] sm:$0xe]
      %v5410 = vld [vmem:[%s239 + $0x6c] sm:$0xe]
      %v5411 = vld [vmem:[%s239 + $0x78] sm:$0xe]
      %v5412 = vld [vmem:[%s239 + $0x84] sm:$0xe]
      %v5413 = vld [vmem:[%s239 + $0x90] sm:$0xe]
      %v5414 = vld [vmem:[%s239 + $0x9c] sm:$0xe]
      %v5415 = vld [vmem:[%s239 + $0xa8] sm:$0xe]
      %v5416 = vld [vmem:[%s239 + $0xb4] sm:$0xe]
      %v5465 = vrot.slane %v5401, 5
      %v5466 = vrot.slane %v5465, 4
      %v5467 = vrot.slane %v4720, 5
      %v5468 = vsel %vm1197, %v5466, %v5467
      %v5469 = vrot.slane %v5467, 4
      %v5470 = vrot.slane %v4721, 5
      %v5471 = vsel %vm1197, %v5469, %v5470
      %v5472 = vrot.slane %v5402, 5
      %v5473 = vrot.slane %v5472, 4
      %v5474 = vrot.slane %v4723, 5
      %v5475 = vsel %vm1197, %v5473, %v5474
      %v5476 = vrot.slane %v5474, 4
      %v5477 = vrot.slane %v4724, 5
      %v5478 = vsel %vm1197, %v5476, %v5477
      %v5479 = vrot.slane %v5403, 5
      %v5480 = vrot.slane %v5479, 4
      %v5481 = vrot.slane %v4726, 5
      %v5482 = vsel %vm1197, %v5480, %v5481
      %v5483 = vrot.slane %v5481, 4
      %v5484 = vrot.slane %v4727, 5
      %v5485 = vsel %vm1197, %v5483, %v5484
      %v5486 = vrot.slane %v5404, 5
      %v5487 = vrot.slane %v5486, 4
      %v5488 = vrot.slane %v4729, 5
      %v5489 = vsel %vm1197, %v5487, %v5488
      %v5490 = vrot.slane %v5488, 4
      %v5491 = vrot.slane %v4730, 5
      %v5492 = vsel %vm1197, %v5490, %v5491
      %v5493 = vrot.slane %v5405, 5
      %v5494 = vrot.slane %v5493, 4
      %v5495 = vrot.slane %v4732, 5
      %v5496 = vsel %vm1197, %v5494, %v5495
      %v5497 = vrot.slane %v5495, 4
      %v5498 = vrot.slane %v4733, 5
      %v5499 = vsel %vm1197, %v5497, %v5498
      %v5500 = vrot.slane %v5406, 5
      %v5501 = vrot.slane %v5500, 4
      %v5502 = vrot.slane %v4735, 5
      %v5503 = vsel %vm1197, %v5501, %v5502
      %v5504 = vrot.slane %v5502, 4
      %v5505 = vrot.slane %v4736, 5
      %v5506 = vsel %vm1197, %v5504, %v5505
      %v5507 = vrot.slane %v5407, 5
      %v5508 = vrot.slane %v5507, 4
      %v5509 = vrot.slane %v4738, 5
      %v5510 = vsel %vm1197, %v5508, %v5509
      %v5511 = vrot.slane %v5509, 4
      %v5512 = vrot.slane %v4739, 5
      %v5513 = vsel %vm1197, %v5511, %v5512
      %v5514 = vrot.slane %v5408, 5
      %v5515 = vrot.slane %v5514, 4
      %v5516 = vrot.slane %v4741, 5
      %v5517 = vsel %vm1197, %v5515, %v5516
      %v5518 = vrot.slane %v5516, 4
      %v5519 = vrot.slane %v4742, 5
      %v5520 = vsel %vm1197, %v5518, %v5519
      %v5521 = vrot.slane %v5409, 5
      %v5522 = vrot.slane %v5521, 4
      %v5523 = vrot.slane %v4744, 5
      %v5524 = vsel %vm1197, %v5522, %v5523
      %v5525 = vrot.slane %v5523, 4
      %v5526 = vrot.slane %v4745, 5
      %v5527 = vsel %vm1197, %v5525, %v5526
      %v5528 = vrot.slane %v5410, 5
      %v5529 = vrot.slane %v5528, 4
      %v5530 = vrot.slane %v4747, 5
      %v5531 = vsel %vm1197, %v5529, %v5530
      %v5532 = vrot.slane %v5530, 4
      %v5533 = vrot.slane %v4748, 5
      %v5534 = vsel %vm1197, %v5532, %v5533
      %v5535 = vrot.slane %v5411, 5
      %v5536 = vrot.slane %v5535, 4
      %v5537 = vrot.slane %v4750, 5
      %v5538 = vsel %vm1197, %v5536, %v5537
      %v5539 = vrot.slane %v5537, 4
      %v5540 = vrot.slane %v4751, 5
      %v5541 = vsel %vm1197, %v5539, %v5540
      %v5542 = vrot.slane %v5412, 5
      %v5543 = vrot.slane %v5542, 4
      %v5544 = vrot.slane %v4753, 5
      %v5545 = vsel %vm1197, %v5543, %v5544
      %v5546 = vrot.slane %v5544, 4
      %v5547 = vrot.slane %v4754, 5
      %v5548 = vsel %vm1197, %v5546, %v5547
      %v5549 = vrot.slane %v5413, 5
      %v5550 = vrot.slane %v5549, 4
      %v5551 = vrot.slane %v4756, 5
      %v5552 = vsel %vm1197, %v5550, %v5551
      %v5553 = vrot.slane %v5551, 4
      %v5554 = vrot.slane %v4757, 5
      %v5555 = vsel %vm1197, %v5553, %v5554
      %v5556 = vrot.slane %v5414, 5
      %v5557 = vrot.slane %v5556, 4
      %v5558 = vrot.slane %v4759, 5
      %v5559 = vsel %vm1197, %v5557, %v5558
      %v5560 = vrot.slane %v5558, 4
      %v5561 = vrot.slane %v4760, 5
      %v5562 = vsel %vm1197, %v5560, %v5561
      %v5563 = vrot.slane %v5415, 5
      %v5564 = vrot.slane %v5563, 4
      %v5565 = vrot.slane %v4762, 5
      %v5566 = vsel %vm1197, %v5564, %v5565
      %v5567 = vrot.slane %v5565, 4
      %v5568 = vrot.slane %v4763, 5
      %v5569 = vsel %vm1197, %v5567, %v5568
      %v5570 = vrot.slane %v5416, 5
      %v5571 = vrot.slane %v5570, 4
      %v5572 = vrot.slane %v4765, 5
      %v5573 = vsel %vm1197, %v5571, %v5572
      %v5574 = vrot.slane %v5572, 4
      %v5575 = vrot.slane %v4766, 5
      %v5576 = vsel %vm1197, %v5574, %v5575
      %s5577 = scalar_lea.vmem %s3, 128
      %v5578 = vld [vmem:[%s5577] sm:$0xf]
      %v5579 = vld [vmem:[%s5577 + $0x4] sm:$0xf]
      %v5580 = vld [vmem:[%s5577 + $0x8] sm:$0xf]
      %v5581 = vld [vmem:[%s5577 + $0xc] sm:$0xf]
      %v5582 = vld [vmem:[%s5577 + $0x10] sm:$0xf]
      %v5583 = vld [vmem:[%s5577 + $0x14] sm:$0xf]
      %v5584 = vld [vmem:[%s5577 + $0x18] sm:$0xf]
      %v5585 = vld [vmem:[%s5577 + $0x1c] sm:$0xf]
      %v5586 = vld [vmem:[%s5577 + $0x20] sm:$0xf]
      %v5587 = vld [vmem:[%s5577 + $0x24] sm:$0xf]
      %v5588 = vld [vmem:[%s5577 + $0x28] sm:$0xf]
      %v5589 = vld [vmem:[%s5577 + $0x2c] sm:$0xf]
      %v5590 = vld [vmem:[%s5577 + $0x30] sm:$0xf]
      %v5591 = vld [vmem:[%s5577 + $0x34] sm:$0xf]
      %v5592 = vld [vmem:[%s5577 + $0x38] sm:$0xf]
      %v5593 = vld [vmem:[%s5577 + $0x3c] sm:$0xf]
      %v5594 = vunpack.c.l.b16 %v5468
      %v5595 = vunpack.c.l.b16 %v5471
      %v5596 = vunpack.c.l.b16 %v5475
      %v5597 = vunpack.c.l.b16 %v5478
      %v5598 = vunpack.c.l.b16 %v5482
      %v5599 = vunpack.c.l.b16 %v5485
      %v5600 = vunpack.c.l.b16 %v5489
      %v5601 = vunpack.c.l.b16 %v5492
      %v5602 = vunpack.c.l.b16 %v5496
      %v5603 = vunpack.c.l.b16 %v5499
      %v5604 = vunpack.c.l.b16 %v5503
      %v5605 = vunpack.c.l.b16 %v5506
      %v5606 = vunpack.c.l.b16 %v5510
      %v5607 = vunpack.c.l.b16 %v5513
      %v5608 = vunpack.c.l.b16 %v5517
      %v5609 = vunpack.c.l.b16 %v5520
      %v5610 = vunpack.c.l.b16 %v5524
      %v5611 = vunpack.c.l.b16 %v5527
      %v5612 = vunpack.c.l.b16 %v5531
      %v5613 = vunpack.c.l.b16 %v5534
      %v5614 = vunpack.c.l.b16 %v5538
      %v5615 = vunpack.c.l.b16 %v5541
      %v5616 = vunpack.c.l.b16 %v5545
      %v5617 = vunpack.c.l.b16 %v5548
      %v5618 = vunpack.c.l.b16 %v5552
      %v5619 = vunpack.c.l.b16 %v5555
      %v5620 = vunpack.c.l.b16 %v5559
      %v5621 = vunpack.c.l.b16 %v5562
      %v5622 = vunpack.c.l.b16 %v5566
      %v5623 = vunpack.c.l.b16 %v5569
      %v5624 = vunpack.c.l.b16 %v5573
      %v5625 = vunpack.c.l.b16 %v5576
      %v5626 = vpack.c.b16 %v5595, %v5594
      %v5627 = vpack.c.b16 %v5597, %v5596
      %v5628 = vpack.c.b16 %v5599, %v5598
      %v5629 = vpack.c.b16 %v5601, %v5600
      %v5630 = vpack.c.b16 %v5603, %v5602
      %v5631 = vpack.c.b16 %v5605, %v5604
      %v5632 = vpack.c.b16 %v5607, %v5606
      %v5633 = vpack.c.b16 %v5609, %v5608
      %v5634 = vpack.c.b16 %v5611, %v5610
      %v5635 = vpack.c.b16 %v5613, %v5612
      %v5636 = vpack.c.b16 %v5615, %v5614
      %v5637 = vpack.c.b16 %v5617, %v5616
      %v5638 = vpack.c.b16 %v5619, %v5618
      %v5639 = vpack.c.b16 %v5621, %v5620
      %v5640 = vpack.c.b16 %v5623, %v5622
      %v5641 = vpack.c.b16 %v5625, %v5624
      %v5674 = vunpack.c.l.b16 %v5578
      %v5675 = vunpack.c.l.b16 %v5579
      %v5676 = vunpack.c.l.b16 %v5580
      %v5677 = vunpack.c.l.b16 %v5581
      %v5678 = vunpack.c.l.b16 %v5582
      %v5679 = vunpack.c.l.b16 %v5583
      %v5680 = vunpack.c.l.b16 %v5584
      %v5681 = vunpack.c.l.b16 %v5585
      %v5682 = vunpack.c.l.b16 %v5586
      %v5683 = vunpack.c.l.b16 %v5587
      %v5684 = vunpack.c.l.b16 %v5588
      %v5685 = vunpack.c.l.b16 %v5589
      %v5686 = vunpack.c.l.b16 %v5590
      %v5687 = vunpack.c.l.b16 %v5591
      %v5688 = vunpack.c.l.b16 %v5592
      %v5689 = vunpack.c.l.b16 %v5593
      %v5690 = vpack.c.b16 %v5675, %v5674
      %v5691 = vpack.c.b16 %v5677, %v5676
      %v5692 = vpack.c.b16 %v5679, %v5678
      %v5693 = vpack.c.b16 %v5681, %v5680
      %v5694 = vpack.c.b16 %v5683, %v5682
      %v5695 = vpack.c.b16 %v5685, %v5684
      %v5696 = vpack.c.b16 %v5687, %v5686
      %v5697 = vpack.c.b16 %v5689, %v5688
      %5706 = vmatpush.bf16.msra.mxu0 %v5697
      %5707 = vmatpush.bf16.msra.mxu0 %v5696
      %5708 = vmatpush.bf16.msra.mxu0 %v5695
      %5709 = vmatpush.bf16.msra.mxu0 %v5694
      %5710 = vmatpush.bf16.msra.mxu0 %v5693
      %5711 = vmatpush.bf16.msra.mxu0 %v5692
      %5712 = vmatpush.bf16.msra.mxu0 %v5691
      %5713 = vmatpush.bf16.msra.mxu0 %v5690
      %5714 = vmatmul.bf16.gmra.mxu0 %v5626
      %v5715 = vpop.f32.mrf.mxu0
      %v5716 = vadd.f32 0.0, %v5715
      %v5717 = vpop.f32.mrf.mxu0
      %v5718 = vadd.f32 0.0, %v5717
      %5719 = vmatmul.bf16.gmra.mxu0 %v5627
      %v5720 = vpop.f32.mrf.mxu0
      %v5721 = vadd.f32 0.0, %v5720
      %v5722 = vpop.f32.mrf.mxu0
      %v5723 = vadd.f32 0.0, %v5722
      %5724 = vmatmul.bf16.gmra.mxu0 %v5628
      %v5725 = vpop.f32.mrf.mxu0
      %v5726 = vadd.f32 0.0, %v5725
      %v5727 = vpop.f32.mrf.mxu0
      %v5728 = vadd.f32 0.0, %v5727
      %5729 = vmatmul.bf16.gmra.mxu0 %v5629
      %v5730 = vpop.f32.mrf.mxu0
      %v5731 = vadd.f32 0.0, %v5730
      %v5732 = vpop.f32.mrf.mxu0
      %v5733 = vadd.f32 0.0, %v5732
      %5734 = vmatmul.bf16.gmra.mxu0 %v5630
      %v5735 = vpop.f32.mrf.mxu0
      %v5736 = vadd.f32 0.0, %v5735
      %v5737 = vpop.f32.mrf.mxu0
      %v5738 = vadd.f32 0.0, %v5737
      %5739 = vmatmul.bf16.gmra.mxu0 %v5631
      %v5740 = vpop.f32.mrf.mxu0
      %v5741 = vadd.f32 0.0, %v5740
      %v5742 = vpop.f32.mrf.mxu0
      %v5743 = vadd.f32 0.0, %v5742
      %5744 = vmatmul.bf16.gmra.mxu0 %v5632
      %v5745 = vpop.f32.mrf.mxu0
      %v5746 = vadd.f32 0.0, %v5745
      %v5747 = vpop.f32.mrf.mxu0
      %v5748 = vadd.f32 0.0, %v5747
      %5749 = vmatmul.bf16.gmra.mxu0 %v5633
      %v5750 = vpop.f32.mrf.mxu0
      %v5751 = vadd.f32 0.0, %v5750
      %v5752 = vpop.f32.mrf.mxu0
      %v5753 = vadd.f32 0.0, %v5752
      %5754 = vmatmul.bf16.gmra.mxu0 %v5634
      %v5755 = vpop.f32.mrf.mxu0
      %v5756 = vadd.f32 0.0, %v5755
      %v5757 = vpop.f32.mrf.mxu0
      %v5758 = vadd.f32 0.0, %v5757
      %5759 = vmatmul.bf16.gmra.mxu0 %v5635
      %v5760 = vpop.f32.mrf.mxu0
      %v5761 = vadd.f32 0.0, %v5760
      %v5762 = vpop.f32.mrf.mxu0
      %v5763 = vadd.f32 0.0, %v5762
      %5764 = vmatmul.bf16.gmra.mxu0 %v5636
      %v5765 = vpop.f32.mrf.mxu0
      %v5766 = vadd.f32 0.0, %v5765
      %v5767 = vpop.f32.mrf.mxu0
      %v5768 = vadd.f32 0.0, %v5767
      %5769 = vmatmul.bf16.gmra.mxu0 %v5637
      %v5770 = vpop.f32.mrf.mxu0
      %v5771 = vadd.f32 0.0, %v5770
      %v5772 = vpop.f32.mrf.mxu0
      %v5773 = vadd.f32 0.0, %v5772
      %5774 = vmatmul.bf16.gmra.mxu0 %v5638
      %v5775 = vpop.f32.mrf.mxu0
      %v5776 = vadd.f32 0.0, %v5775
      %v5777 = vpop.f32.mrf.mxu0
      %v5778 = vadd.f32 0.0, %v5777
      %5779 = vmatmul.bf16.gmra.mxu0 %v5639
      %v5780 = vpop.f32.mrf.mxu0
      %v5781 = vadd.f32 0.0, %v5780
      %v5782 = vpop.f32.mrf.mxu0
      %v5783 = vadd.f32 0.0, %v5782
      %5784 = vmatmul.bf16.gmra.mxu0 %v5640
      %v5785 = vpop.f32.mrf.mxu0
      %v5786 = vadd.f32 0.0, %v5785
      %v5787 = vpop.f32.mrf.mxu0
      %v5788 = vadd.f32 0.0, %v5787
      %5789 = vmatmul.bf16.gmra.mxu0 %v5641
      %v5790 = vpop.f32.mrf.mxu0
      %v5791 = vadd.f32 0.0, %v5790
      %v5792 = vpop.f32.mrf.mxu0
      %v5793 = vadd.f32 0.0, %v5792
      %5794 = vdwg.mxu0
      %v5795 = vadd.f32 %v5369, %v5716
      %v5796 = vadd.f32 %v5370, %v5718
      %v5797 = vadd.f32 %v5371, %v5721
      %v5798 = vadd.f32 %v5372, %v5723
      %v5799 = vadd.f32 %v5373, %v5726
      %v5800 = vadd.f32 %v5374, %v5728
      %v5801 = vadd.f32 %v5375, %v5731
      %v5802 = vadd.f32 %v5376, %v5733
      %v5803 = vadd.f32 %v5377, %v5736
      %v5804 = vadd.f32 %v5378, %v5738
      %v5805 = vadd.f32 %v5379, %v5741
      %v5806 = vadd.f32 %v5380, %v5743
      %v5807 = vadd.f32 %v5381, %v5746
      %v5808 = vadd.f32 %v5382, %v5748
      %v5809 = vadd.f32 %v5383, %v5751
      %v5810 = vadd.f32 %v5384, %v5753
      %v5811 = vadd.f32 %v5385, %v5756
      %v5812 = vadd.f32 %v5386, %v5758
      %v5813 = vadd.f32 %v5387, %v5761
      %v5814 = vadd.f32 %v5388, %v5763
      %v5815 = vadd.f32 %v5389, %v5766
      %v5816 = vadd.f32 %v5390, %v5768
      %v5817 = vadd.f32 %v5391, %v5771
      %v5818 = vadd.f32 %v5392, %v5773
      %v5819 = vadd.f32 %v5393, %v5776
      %v5820 = vadd.f32 %v5394, %v5778
      %v5821 = vadd.f32 %v5395, %v5781
      %v5822 = vadd.f32 %v5396, %v5783
      %v5823 = vadd.f32 %v5397, %v5786
      %v5824 = vadd.f32 %v5398, %v5788
      %v5825 = vadd.f32 %v5399, %v5791
      %v5826 = vadd.f32 %v5400, %v5793
      %s5827 = scalar_lea.vmem %s239, 12
      %v5828 = vld [vmem:[%s5827] sm:$0xf]
      %v5829 = vld [vmem:[%s5827 + $0x4] sm:$0xf]
      %v5830 = vld [vmem:[%s5827 + $0xc] sm:$0xf]
      %v5831 = vld [vmem:[%s5827 + $0x10] sm:$0xf]
      %v5832 = vld [vmem:[%s5827 + $0x18] sm:$0xf]
      %v5833 = vld [vmem:[%s5827 + $0x1c] sm:$0xf]
      %v5834 = vld [vmem:[%s5827 + $0x24] sm:$0xf]
      %v5835 = vld [vmem:[%s5827 + $0x28] sm:$0xf]
      %v5836 = vld [vmem:[%s5827 + $0x30] sm:$0xf]
      %v5837 = vld [vmem:[%s5827 + $0x34] sm:$0xf]
      %v5838 = vld [vmem:[%s5827 + $0x3c] sm:$0xf]
      %v5839 = vld [vmem:[%s5827 + $0x40] sm:$0xf]
      %v5840 = vld [vmem:[%s5827 + $0x48] sm:$0xf]
      %v5841 = vld [vmem:[%s5827 + $0x4c] sm:$0xf]
      %v5842 = vld [vmem:[%s5827 + $0x54] sm:$0xf]
      %v5843 = vld [vmem:[%s5827 + $0x58] sm:$0xf]
      %v5844 = vld [vmem:[%s5827 + $0x60] sm:$0xf]
      %v5845 = vld [vmem:[%s5827 + $0x64] sm:$0xf]
      %v5846 = vld [vmem:[%s5827 + $0x6c] sm:$0xf]
      %v5847 = vld [vmem:[%s5827 + $0x70] sm:$0xf]
      %v5848 = vld [vmem:[%s5827 + $0x78] sm:$0xf]
      %v5849 = vld [vmem:[%s5827 + $0x7c] sm:$0xf]
      %v5850 = vld [vmem:[%s5827 + $0x84] sm:$0xf]
      %v5851 = vld [vmem:[%s5827 + $0x88] sm:$0xf]
      %v5852 = vld [vmem:[%s5827 + $0x90] sm:$0xf]
      %v5853 = vld [vmem:[%s5827 + $0x94] sm:$0xf]
      %v5854 = vld [vmem:[%s5827 + $0x9c] sm:$0xf]
      %v5855 = vld [vmem:[%s5827 + $0xa0] sm:$0xf]
      %v5856 = vld [vmem:[%s5827 + $0xa8] sm:$0xf]
      %v5857 = vld [vmem:[%s5827 + $0xac] sm:$0xf]
      %v5858 = vld [vmem:[%s5827 + $0xb4] sm:$0xf]
      %v5859 = vld [vmem:[%s5827 + $0xb8] sm:$0xf]
      %s5860 = scalar_lea.vmem %s3, 192
      %v5861 = vld [vmem:[%s5860] sm:$0xf]
      %v5862 = vld [vmem:[%s5860 + $0x4] sm:$0xf]
      %v5863 = vld [vmem:[%s5860 + $0x8] sm:$0xf]
      %v5864 = vld [vmem:[%s5860 + $0xc] sm:$0xf]
      %v5865 = vld [vmem:[%s5860 + $0x10] sm:$0xf]
      %v5866 = vld [vmem:[%s5860 + $0x14] sm:$0xf]
      %v5867 = vld [vmem:[%s5860 + $0x18] sm:$0xf]
      %v5868 = vld [vmem:[%s5860 + $0x1c] sm:$0xf]
      %v5869 = vld [vmem:[%s5860 + $0x20] sm:$0xf]
      %v5870 = vld [vmem:[%s5860 + $0x24] sm:$0xf]
      %v5871 = vld [vmem:[%s5860 + $0x28] sm:$0xf]
      %v5872 = vld [vmem:[%s5860 + $0x2c] sm:$0xf]
      %v5873 = vld [vmem:[%s5860 + $0x30] sm:$0xf]
      %v5874 = vld [vmem:[%s5860 + $0x34] sm:$0xf]
      %v5875 = vld [vmem:[%s5860 + $0x38] sm:$0xf]
      %v5876 = vld [vmem:[%s5860 + $0x3c] sm:$0xf]
      %v5909 = vunpack.c.l.b16 %v5828
      %v5910 = vunpack.c.l.b16 %v5829
      %v5911 = vunpack.c.l.b16 %v5830
      %v5912 = vunpack.c.l.b16 %v5831
      %v5913 = vunpack.c.l.b16 %v5832
      %v5914 = vunpack.c.l.b16 %v5833
      %v5915 = vunpack.c.l.b16 %v5834
      %v5916 = vunpack.c.l.b16 %v5835
      %v5917 = vunpack.c.l.b16 %v5836
      %v5918 = vunpack.c.l.b16 %v5837
      %v5919 = vunpack.c.l.b16 %v5838
      %v5920 = vunpack.c.l.b16 %v5839
      %v5921 = vunpack.c.l.b16 %v5840
      %v5922 = vunpack.c.l.b16 %v5841
      %v5923 = vunpack.c.l.b16 %v5842
      %v5924 = vunpack.c.l.b16 %v5843
      %v5925 = vunpack.c.l.b16 %v5844
      %v5926 = vunpack.c.l.b16 %v5845
      %v5927 = vunpack.c.l.b16 %v5846
      %v5928 = vunpack.c.l.b16 %v5847
      %v5929 = vunpack.c.l.b16 %v5848
      %v5930 = vunpack.c.l.b16 %v5849
      %v5931 = vunpack.c.l.b16 %v5850
      %v5932 = vunpack.c.l.b16 %v5851
      %v5933 = vunpack.c.l.b16 %v5852
      %v5934 = vunpack.c.l.b16 %v5853
      %v5935 = vunpack.c.l.b16 %v5854
      %v5936 = vunpack.c.l.b16 %v5855
      %v5937 = vunpack.c.l.b16 %v5856
      %v5938 = vunpack.c.l.b16 %v5857
      %v5939 = vunpack.c.l.b16 %v5858
      %v5940 = vunpack.c.l.b16 %v5859
      %v5941 = vpack.c.b16 %v5910, %v5909
      %v5942 = vpack.c.b16 %v5912, %v5911
      %v5943 = vpack.c.b16 %v5914, %v5913
      %v5944 = vpack.c.b16 %v5916, %v5915
      %v5945 = vpack.c.b16 %v5918, %v5917
      %v5946 = vpack.c.b16 %v5920, %v5919
      %v5947 = vpack.c.b16 %v5922, %v5921
      %v5948 = vpack.c.b16 %v5924, %v5923
      %v5949 = vpack.c.b16 %v5926, %v5925
      %v5950 = vpack.c.b16 %v5928, %v5927
      %v5951 = vpack.c.b16 %v5930, %v5929
      %v5952 = vpack.c.b16 %v5932, %v5931
      %v5953 = vpack.c.b16 %v5934, %v5933
      %v5954 = vpack.c.b16 %v5936, %v5935
      %v5955 = vpack.c.b16 %v5938, %v5937
      %v5956 = vpack.c.b16 %v5940, %v5939
      %v5989 = vunpack.c.l.b16 %v5861
      %v5990 = vunpack.c.l.b16 %v5862
      %v5991 = vunpack.c.l.b16 %v5863
      %v5992 = vunpack.c.l.b16 %v5864
      %v5993 = vunpack.c.l.b16 %v5865
      %v5994 = vunpack.c.l.b16 %v5866
      %v5995 = vunpack.c.l.b16 %v5867
      %v5996 = vunpack.c.l.b16 %v5868
      %v5997 = vunpack.c.l.b16 %v5869
      %v5998 = vunpack.c.l.b16 %v5870
      %v5999 = vunpack.c.l.b16 %v5871
      %v6000 = vunpack.c.l.b16 %v5872
      %v6001 = vunpack.c.l.b16 %v5873
      %v6002 = vunpack.c.l.b16 %v5874
      %v6003 = vunpack.c.l.b16 %v5875
      %v6004 = vunpack.c.l.b16 %v5876
      %v6005 = vpack.c.b16 %v5990, %v5989
      %v6006 = vpack.c.b16 %v5992, %v5991
      %v6007 = vpack.c.b16 %v5994, %v5993
      %v6008 = vpack.c.b16 %v5996, %v5995
      %v6009 = vpack.c.b16 %v5998, %v5997
      %v6010 = vpack.c.b16 %v6000, %v5999
      %v6011 = vpack.c.b16 %v6002, %v6001
      %v6012 = vpack.c.b16 %v6004, %v6003
      %6021 = vmatpush.bf16.msra.mxu0 %v6012
      %6022 = vmatpush.bf16.msra.mxu0 %v6011
      %6023 = vmatpush.bf16.msra.mxu0 %v6010
      %6024 = vmatpush.bf16.msra.mxu0 %v6009
      %6025 = vmatpush.bf16.msra.mxu0 %v6008
      %6026 = vmatpush.bf16.msra.mxu0 %v6007
      %6027 = vmatpush.bf16.msra.mxu0 %v6006
      %6028 = vmatpush.bf16.msra.mxu0 %v6005
      %6029 = vmatmul.bf16.gmra.mxu0 %v5941
      %v6030 = vpop.f32.mrf.mxu0
      %v6031 = vadd.f32 0.0, %v6030
      %v6032 = vpop.f32.mrf.mxu0
      %v6033 = vadd.f32 0.0, %v6032
      %6034 = vmatmul.bf16.gmra.mxu0 %v5942
      %v6035 = vpop.f32.mrf.mxu0
      %v6036 = vadd.f32 0.0, %v6035
      %v6037 = vpop.f32.mrf.mxu0
      %v6038 = vadd.f32 0.0, %v6037
      %6039 = vmatmul.bf16.gmra.mxu0 %v5943
      %v6040 = vpop.f32.mrf.mxu0
      %v6041 = vadd.f32 0.0, %v6040
      %v6042 = vpop.f32.mrf.mxu0
      %v6043 = vadd.f32 0.0, %v6042
      %6044 = vmatmul.bf16.gmra.mxu0 %v5944
      %v6045 = vpop.f32.mrf.mxu0
      %v6046 = vadd.f32 0.0, %v6045
      %v6047 = vpop.f32.mrf.mxu0
      %v6048 = vadd.f32 0.0, %v6047
      %6049 = vmatmul.bf16.gmra.mxu0 %v5945
      %v6050 = vpop.f32.mrf.mxu0
      %v6051 = vadd.f32 0.0, %v6050
      %v6052 = vpop.f32.mrf.mxu0
      %v6053 = vadd.f32 0.0, %v6052
      %6054 = vmatmul.bf16.gmra.mxu0 %v5946
      %v6055 = vpop.f32.mrf.mxu0
      %v6056 = vadd.f32 0.0, %v6055
      %v6057 = vpop.f32.mrf.mxu0
      %v6058 = vadd.f32 0.0, %v6057
      %6059 = vmatmul.bf16.gmra.mxu0 %v5947
      %v6060 = vpop.f32.mrf.mxu0
      %v6061 = vadd.f32 0.0, %v6060
      %v6062 = vpop.f32.mrf.mxu0
      %v6063 = vadd.f32 0.0, %v6062
      %6064 = vmatmul.bf16.gmra.mxu0 %v5948
      %v6065 = vpop.f32.mrf.mxu0
      %v6066 = vadd.f32 0.0, %v6065
      %v6067 = vpop.f32.mrf.mxu0
      %v6068 = vadd.f32 0.0, %v6067
      %6069 = vmatmul.bf16.gmra.mxu0 %v5949
      %v6070 = vpop.f32.mrf.mxu0
      %v6071 = vadd.f32 0.0, %v6070
      %v6072 = vpop.f32.mrf.mxu0
      %v6073 = vadd.f32 0.0, %v6072
      %6074 = vmatmul.bf16.gmra.mxu0 %v5950
      %v6075 = vpop.f32.mrf.mxu0
      %v6076 = vadd.f32 0.0, %v6075
      %v6077 = vpop.f32.mrf.mxu0
      %v6078 = vadd.f32 0.0, %v6077
      %6079 = vmatmul.bf16.gmra.mxu0 %v5951
      %v6080 = vpop.f32.mrf.mxu0
      %v6081 = vadd.f32 0.0, %v6080
      %v6082 = vpop.f32.mrf.mxu0
      %v6083 = vadd.f32 0.0, %v6082
      %6084 = vmatmul.bf16.gmra.mxu0 %v5952
      %v6085 = vpop.f32.mrf.mxu0
      %v6086 = vadd.f32 0.0, %v6085
      %v6087 = vpop.f32.mrf.mxu0
      %v6088 = vadd.f32 0.0, %v6087
      %6089 = vmatmul.bf16.gmra.mxu0 %v5953
      %v6090 = vpop.f32.mrf.mxu0
      %v6091 = vadd.f32 0.0, %v6090
      %v6092 = vpop.f32.mrf.mxu0
      %v6093 = vadd.f32 0.0, %v6092
      %6094 = vmatmul.bf16.gmra.mxu0 %v5954
      %v6095 = vpop.f32.mrf.mxu0
      %v6096 = vadd.f32 0.0, %v6095
      %v6097 = vpop.f32.mrf.mxu0
      %v6098 = vadd.f32 0.0, %v6097
      %6099 = vmatmul.bf16.gmra.mxu0 %v5955
      %v6100 = vpop.f32.mrf.mxu0
      %v6101 = vadd.f32 0.0, %v6100
      %v6102 = vpop.f32.mrf.mxu0
      %v6103 = vadd.f32 0.0, %v6102
      %6104 = vmatmul.bf16.gmra.mxu0 %v5956
      %v6105 = vpop.f32.mrf.mxu0
      %v6106 = vadd.f32 0.0, %v6105
      %v6107 = vpop.f32.mrf.mxu0
      %v6108 = vadd.f32 0.0, %v6107
      %6109 = vdwg.mxu0
      %v6110 = vadd.f32 %v5795, %v6031
      %v6111 = vadd.f32 %v5796, %v6033
      %v6112 = vadd.f32 %v5797, %v6036
      %v6113 = vadd.f32 %v5798, %v6038
      %v6114 = vadd.f32 %v5799, %v6041
      %v6115 = vadd.f32 %v5800, %v6043
      %v6116 = vadd.f32 %v5801, %v6046
      %v6117 = vadd.f32 %v5802, %v6048
      %v6118 = vadd.f32 %v5803, %v6051
      %v6119 = vadd.f32 %v5804, %v6053
      %v6120 = vadd.f32 %v5805, %v6056
      %v6121 = vadd.f32 %v5806, %v6058
      %v6122 = vadd.f32 %v5807, %v6061
      %v6123 = vadd.f32 %v5808, %v6063
      %v6124 = vadd.f32 %v5809, %v6066
      %v6125 = vadd.f32 %v5810, %v6068
      %v6126 = vadd.f32 %v5811, %v6071
      %v6127 = vadd.f32 %v5812, %v6073
      %v6128 = vadd.f32 %v5813, %v6076
      %v6129 = vadd.f32 %v5814, %v6078
      %v6130 = vadd.f32 %v5815, %v6081
      %v6131 = vadd.f32 %v5816, %v6083
      %v6132 = vadd.f32 %v5817, %v6086
      %v6133 = vadd.f32 %v5818, %v6088
      %v6134 = vadd.f32 %v5819, %v6091
      %v6135 = vadd.f32 %v5820, %v6093
      %v6136 = vadd.f32 %v5821, %v6096
      %v6137 = vadd.f32 %v5822, %v6098
      %v6138 = vadd.f32 %v5823, %v6101
      %v6139 = vadd.f32 %v5824, %v6103
      %v6140 = vadd.f32 %v5825, %v6106
      %v6141 = vadd.f32 %v5826, %v6108
      %v6142 = vld [vmem:[%s5827] sm:$0xf]
      %v6143 = vld [vmem:[%s5827 + $0x4] sm:$0xf]
      %v6144 = vld [vmem:[%s5827 + $0x8] sm:$0x1]
      %v6145 = vld [vmem:[%s5827 + $0xc] sm:$0xf]
      %v6146 = vld [vmem:[%s5827 + $0x10] sm:$0xf]
      %v6147 = vld [vmem:[%s5827 + $0x14] sm:$0x1]
      %v6148 = vld [vmem:[%s5827 + $0x18] sm:$0xf]
      %v6149 = vld [vmem:[%s5827 + $0x1c] sm:$0xf]
      %v6150 = vld [vmem:[%s5827 + $0x20] sm:$0x1]
      %v6151 = vld [vmem:[%s5827 + $0x24] sm:$0xf]
      %v6152 = vld [vmem:[%s5827 + $0x28] sm:$0xf]
      %v6153 = vld [vmem:[%s5827 + $0x2c] sm:$0x1]
      %v6154 = vld [vmem:[%s5827 + $0x30] sm:$0xf]
      %v6155 = vld [vmem:[%s5827 + $0x34] sm:$0xf]
      %v6156 = vld [vmem:[%s5827 + $0x38] sm:$0x1]
      %v6157 = vld [vmem:[%s5827 + $0x3c] sm:$0xf]
      %v6158 = vld [vmem:[%s5827 + $0x40] sm:$0xf]
      %v6159 = vld [vmem:[%s5827 + $0x44] sm:$0x1]
      %v6160 = vld [vmem:[%s5827 + $0x48] sm:$0xf]
      %v6161 = vld [vmem:[%s5827 + $0x4c] sm:$0xf]
      %v6162 = vld [vmem:[%s5827 + $0x50] sm:$0x1]
      %v6163 = vld [vmem:[%s5827 + $0x54] sm:$0xf]
      %v6164 = vld [vmem:[%s5827 + $0x58] sm:$0xf]
      %v6165 = vld [vmem:[%s5827 + $0x5c] sm:$0x1]
      %v6166 = vld [vmem:[%s5827 + $0x60] sm:$0xf]
      %v6167 = vld [vmem:[%s5827 + $0x64] sm:$0xf]
      %v6168 = vld [vmem:[%s5827 + $0x68] sm:$0x1]
      %v6169 = vld [vmem:[%s5827 + $0x6c] sm:$0xf]
      %v6170 = vld [vmem:[%s5827 + $0x70] sm:$0xf]
      %v6171 = vld [vmem:[%s5827 + $0x74] sm:$0x1]
      %v6172 = vld [vmem:[%s5827 + $0x78] sm:$0xf]
      %v6173 = vld [vmem:[%s5827 + $0x7c] sm:$0xf]
      %v6174 = vld [vmem:[%s5827 + $0x80] sm:$0x1]
      %v6175 = vld [vmem:[%s5827 + $0x84] sm:$0xf]
      %v6176 = vld [vmem:[%s5827 + $0x88] sm:$0xf]
      %v6177 = vld [vmem:[%s5827 + $0x8c] sm:$0x1]
      %v6178 = vld [vmem:[%s5827 + $0x90] sm:$0xf]
      %v6179 = vld [vmem:[%s5827 + $0x94] sm:$0xf]
      %v6180 = vld [vmem:[%s5827 + $0x98] sm:$0x1]
      %v6181 = vld [vmem:[%s5827 + $0x9c] sm:$0xf]
      %v6182 = vld [vmem:[%s5827 + $0xa0] sm:$0xf]
      %v6183 = vld [vmem:[%s5827 + $0xa4] sm:$0x1]
      %v6184 = vld [vmem:[%s5827 + $0xa8] sm:$0xf]
      %v6185 = vld [vmem:[%s5827 + $0xac] sm:$0xf]
      %v6186 = vld [vmem:[%s5827 + $0xb0] sm:$0x1]
      %v6187 = vld [vmem:[%s5827 + $0xb4] sm:$0xf]
      %v6188 = vld [vmem:[%s5827 + $0xb8] sm:$0xf]
      %v6189 = vld [vmem:[%s5827 + $0xbc] sm:$0x1]
      %v6191 = vshrl.u32 %v6142, 16
      %v6193 = vrot.slane %v6191, 4
      %v6194 = vshll.u32 %v6142, 16
      %v6196 = vrot.slane %v6194, 5
      %v6197 = vor.u32 %v6193, %v6196
      %v6198 = vrot.slane %v6197, 4
      %v6200 = vshll.u32 %v6143, 16
      %v6202 = vrot.slane %v6200, 5
      %v6203 = vsel %vm311, %v6198, %v6202
      %v6204 = vshrl.u32 %v6143, 16
      %v6206 = vrot.slane %v6204, 4
      %v6207 = vor.u32 %v6206, %v6202
      %v6208 = vrot.slane %v6207, 4
      %v6210 = vshll.u32 %v6144, 16
      %v6212 = vrot.slane %v6210, 5
      %v6213 = vsel %vm311, %v6208, %v6212
      %v6215 = vshrl.u32 %v6145, 16
      %v6217 = vrot.slane %v6215, 4
      %v6218 = vshll.u32 %v6145, 16
      %v6220 = vrot.slane %v6218, 5
      %v6221 = vor.u32 %v6217, %v6220
      %v6222 = vrot.slane %v6221, 4
      %v6224 = vshll.u32 %v6146, 16
      %v6226 = vrot.slane %v6224, 5
      %v6227 = vsel %vm311, %v6222, %v6226
      %v6228 = vshrl.u32 %v6146, 16
      %v6230 = vrot.slane %v6228, 4
      %v6231 = vor.u32 %v6230, %v6226
      %v6232 = vrot.slane %v6231, 4
      %v6234 = vshll.u32 %v6147, 16
      %v6236 = vrot.slane %v6234, 5
      %v6237 = vsel %vm311, %v6232, %v6236
      %v6239 = vshrl.u32 %v6148, 16
      %v6241 = vrot.slane %v6239, 4
      %v6242 = vshll.u32 %v6148, 16
      %v6244 = vrot.slane %v6242, 5
      %v6245 = vor.u32 %v6241, %v6244
      %v6246 = vrot.slane %v6245, 4
      %v6248 = vshll.u32 %v6149, 16
      %v6250 = vrot.slane %v6248, 5
      %v6251 = vsel %vm311, %v6246, %v6250
      %v6252 = vshrl.u32 %v6149, 16
      %v6254 = vrot.slane %v6252, 4
      %v6255 = vor.u32 %v6254, %v6250
      %v6256 = vrot.slane %v6255, 4
      %v6258 = vshll.u32 %v6150, 16
      %v6260 = vrot.slane %v6258, 5
      %v6261 = vsel %vm311, %v6256, %v6260
      %v6263 = vshrl.u32 %v6151, 16
      %v6265 = vrot.slane %v6263, 4
      %v6266 = vshll.u32 %v6151, 16
      %v6268 = vrot.slane %v6266, 5
      %v6269 = vor.u32 %v6265, %v6268
      %v6270 = vrot.slane %v6269, 4
      %v6272 = vshll.u32 %v6152, 16
      %v6274 = vrot.slane %v6272, 5
      %v6275 = vsel %vm311, %v6270, %v6274
      %v6276 = vshrl.u32 %v6152, 16
      %v6278 = vrot.slane %v6276, 4
      %v6279 = vor.u32 %v6278, %v6274
      %v6280 = vrot.slane %v6279, 4
      %v6282 = vshll.u32 %v6153, 16
      %v6284 = vrot.slane %v6282, 5
      %v6285 = vsel %vm311, %v6280, %v6284
      %v6287 = vshrl.u32 %v6154, 16
      %v6289 = vrot.slane %v6287, 4
      %v6290 = vshll.u32 %v6154, 16
      %v6292 = vrot.slane %v6290, 5
      %v6293 = vor.u32 %v6289, %v6292
      %v6294 = vrot.slane %v6293, 4
      %v6296 = vshll.u32 %v6155, 16
      %v6298 = vrot.slane %v6296, 5
      %v6299 = vsel %vm311, %v6294, %v6298
      %v6300 = vshrl.u32 %v6155, 16
      %v6302 = vrot.slane %v6300, 4
      %v6303 = vor.u32 %v6302, %v6298
      %v6304 = vrot.slane %v6303, 4
      %v6306 = vshll.u32 %v6156, 16
      %v6308 = vrot.slane %v6306, 5
      %v6309 = vsel %vm311, %v6304, %v6308
      %v6311 = vshrl.u32 %v6157, 16
      %v6313 = vrot.slane %v6311, 4
      %v6314 = vshll.u32 %v6157, 16
      %v6316 = vrot.slane %v6314, 5
      %v6317 = vor.u32 %v6313, %v6316
      %v6318 = vrot.slane %v6317, 4
      %v6320 = vshll.u32 %v6158, 16
      %v6322 = vrot.slane %v6320, 5
      %v6323 = vsel %vm311, %v6318, %v6322
      %v6324 = vshrl.u32 %v6158, 16
      %v6326 = vrot.slane %v6324, 4
      %v6327 = vor.u32 %v6326, %v6322
      %v6328 = vrot.slane %v6327, 4
      %v6330 = vshll.u32 %v6159, 16
      %v6332 = vrot.slane %v6330, 5
      %v6333 = vsel %vm311, %v6328, %v6332
      %v6335 = vshrl.u32 %v6160, 16
      %v6337 = vrot.slane %v6335, 4
      %v6338 = vshll.u32 %v6160, 16
      %v6340 = vrot.slane %v6338, 5
      %v6341 = vor.u32 %v6337, %v6340
      %v6342 = vrot.slane %v6341, 4
      %v6344 = vshll.u32 %v6161, 16
      %v6346 = vrot.slane %v6344, 5
      %v6347 = vsel %vm311, %v6342, %v6346
      %v6348 = vshrl.u32 %v6161, 16
      %v6350 = vrot.slane %v6348, 4
      %v6351 = vor.u32 %v6350, %v6346
      %v6352 = vrot.slane %v6351, 4
      %v6354 = vshll.u32 %v6162, 16
      %v6356 = vrot.slane %v6354, 5
      %v6357 = vsel %vm311, %v6352, %v6356
      %v6359 = vshrl.u32 %v6163, 16
      %v6361 = vrot.slane %v6359, 4
      %v6362 = vshll.u32 %v6163, 16
      %v6364 = vrot.slane %v6362, 5
      %v6365 = vor.u32 %v6361, %v6364
      %v6366 = vrot.slane %v6365, 4
      %v6368 = vshll.u32 %v6164, 16
      %v6370 = vrot.slane %v6368, 5
      %v6371 = vsel %vm311, %v6366, %v6370
      %v6372 = vshrl.u32 %v6164, 16
      %v6374 = vrot.slane %v6372, 4
      %v6375 = vor.u32 %v6374, %v6370
      %v6376 = vrot.slane %v6375, 4
      %v6378 = vshll.u32 %v6165, 16
      %v6380 = vrot.slane %v6378, 5
      %v6381 = vsel %vm311, %v6376, %v6380
      %v6383 = vshrl.u32 %v6166, 16
      %v6385 = vrot.slane %v6383, 4
      %v6386 = vshll.u32 %v6166, 16
      %v6388 = vrot.slane %v6386, 5
      %v6389 = vor.u32 %v6385, %v6388
      %v6390 = vrot.slane %v6389, 4
      %v6392 = vshll.u32 %v6167, 16
      %v6394 = vrot.slane %v6392, 5
      %v6395 = vsel %vm311, %v6390, %v6394
      %v6396 = vshrl.u32 %v6167, 16
      %v6398 = vrot.slane %v6396, 4
      %v6399 = vor.u32 %v6398, %v6394
      %v6400 = vrot.slane %v6399, 4
      %v6402 = vshll.u32 %v6168, 16
      %v6404 = vrot.slane %v6402, 5
      %v6405 = vsel %vm311, %v6400, %v6404
      %v6407 = vshrl.u32 %v6169, 16
      %v6409 = vrot.slane %v6407, 4
      %v6410 = vshll.u32 %v6169, 16
      %v6412 = vrot.slane %v6410, 5
      %v6413 = vor.u32 %v6409, %v6412
      %v6414 = vrot.slane %v6413, 4
      %v6416 = vshll.u32 %v6170, 16
      %v6418 = vrot.slane %v6416, 5
      %v6419 = vsel %vm311, %v6414, %v6418
      %v6420 = vshrl.u32 %v6170, 16
      %v6422 = vrot.slane %v6420, 4
      %v6423 = vor.u32 %v6422, %v6418
      %v6424 = vrot.slane %v6423, 4
      %v6426 = vshll.u32 %v6171, 16
      %v6428 = vrot.slane %v6426, 5
      %v6429 = vsel %vm311, %v6424, %v6428
      %v6431 = vshrl.u32 %v6172, 16
      %v6433 = vrot.slane %v6431, 4
      %v6434 = vshll.u32 %v6172, 16
      %v6436 = vrot.slane %v6434, 5
      %v6437 = vor.u32 %v6433, %v6436
      %v6438 = vrot.slane %v6437, 4
      %v6440 = vshll.u32 %v6173, 16
      %v6442 = vrot.slane %v6440, 5
      %v6443 = vsel %vm311, %v6438, %v6442
      %v6444 = vshrl.u32 %v6173, 16
      %v6446 = vrot.slane %v6444, 4
      %v6447 = vor.u32 %v6446, %v6442
      %v6448 = vrot.slane %v6447, 4
      %v6450 = vshll.u32 %v6174, 16
      %v6452 = vrot.slane %v6450, 5
      %v6453 = vsel %vm311, %v6448, %v6452
      %v6455 = vshrl.u32 %v6175, 16
      %v6457 = vrot.slane %v6455, 4
      %v6458 = vshll.u32 %v6175, 16
      %v6460 = vrot.slane %v6458, 5
      %v6461 = vor.u32 %v6457, %v6460
      %v6462 = vrot.slane %v6461, 4
      %v6464 = vshll.u32 %v6176, 16
      %v6466 = vrot.slane %v6464, 5
      %v6467 = vsel %vm311, %v6462, %v6466
      %v6468 = vshrl.u32 %v6176, 16
      %v6470 = vrot.slane %v6468, 4
      %v6471 = vor.u32 %v6470, %v6466
      %v6472 = vrot.slane %v6471, 4
      %v6474 = vshll.u32 %v6177, 16
      %v6476 = vrot.slane %v6474, 5
      %v6477 = vsel %vm311, %v6472, %v6476
      %v6479 = vshrl.u32 %v6178, 16
      %v6481 = vrot.slane %v6479, 4
      %v6482 = vshll.u32 %v6178, 16
      %v6484 = vrot.slane %v6482, 5
      %v6485 = vor.u32 %v6481, %v6484
      %v6486 = vrot.slane %v6485, 4
      %v6488 = vshll.u32 %v6179, 16
      %v6490 = vrot.slane %v6488, 5
      %v6491 = vsel %vm311, %v6486, %v6490
      %v6492 = vshrl.u32 %v6179, 16
      %v6494 = vrot.slane %v6492, 4
      %v6495 = vor.u32 %v6494, %v6490
      %v6496 = vrot.slane %v6495, 4
      %v6498 = vshll.u32 %v6180, 16
      %v6500 = vrot.slane %v6498, 5
      %v6501 = vsel %vm311, %v6496, %v6500
      %v6503 = vshrl.u32 %v6181, 16
      %v6505 = vrot.slane %v6503, 4
      %v6506 = vshll.u32 %v6181, 16
      %v6508 = vrot.slane %v6506, 5
      %v6509 = vor.u32 %v6505, %v6508
      %v6510 = vrot.slane %v6509, 4
      %v6512 = vshll.u32 %v6182, 16
      %v6514 = vrot.slane %v6512, 5
      %v6515 = vsel %vm311, %v6510, %v6514
      %v6516 = vshrl.u32 %v6182, 16
      %v6518 = vrot.slane %v6516, 4
      %v6519 = vor.u32 %v6518, %v6514
      %v6520 = vrot.slane %v6519, 4
      %v6522 = vshll.u32 %v6183, 16
      %v6524 = vrot.slane %v6522, 5
      %v6525 = vsel %vm311, %v6520, %v6524
      %v6527 = vshrl.u32 %v6184, 16
      %v6529 = vrot.slane %v6527, 4
      %v6530 = vshll.u32 %v6184, 16
      %v6532 = vrot.slane %v6530, 5
      %v6533 = vor.u32 %v6529, %v6532
      %v6534 = vrot.slane %v6533, 4
      %v6536 = vshll.u32 %v6185, 16
      %v6538 = vrot.slane %v6536, 5
      %v6539 = vsel %vm311, %v6534, %v6538
      %v6540 = vshrl.u32 %v6185, 16
      %v6542 = vrot.slane %v6540, 4
      %v6543 = vor.u32 %v6542, %v6538
      %v6544 = vrot.slane %v6543, 4
      %v6546 = vshll.u32 %v6186, 16
      %v6548 = vrot.slane %v6546, 5
      %v6549 = vsel %vm311, %v6544, %v6548
      %v6551 = vshrl.u32 %v6187, 16
      %v6553 = vrot.slane %v6551, 4
      %v6554 = vshll.u32 %v6187, 16
      %v6556 = vrot.slane %v6554, 5
      %v6557 = vor.u32 %v6553, %v6556
      %v6558 = vrot.slane %v6557, 4
      %v6560 = vshll.u32 %v6188, 16
      %v6562 = vrot.slane %v6560, 5
      %v6563 = vsel %vm311, %v6558, %v6562
      %v6564 = vshrl.u32 %v6188, 16
      %v6566 = vrot.slane %v6564, 4
      %v6567 = vor.u32 %v6566, %v6562
      %v6568 = vrot.slane %v6567, 4
      %v6570 = vshll.u32 %v6189, 16
      %v6572 = vrot.slane %v6570, 5
      %v6573 = vsel %vm311, %v6568, %v6572
      %s6574 = scalar_lea.vmem %s3, 256
      %v6575 = vld [vmem:[%s6574] sm:$0xf]
      %v6576 = vld [vmem:[%s6574 + $0x4] sm:$0xf]
      %v6577 = vld [vmem:[%s6574 + $0x8] sm:$0xf]
      %v6578 = vld [vmem:[%s6574 + $0xc] sm:$0xf]
      %v6579 = vld [vmem:[%s6574 + $0x10] sm:$0xf]
      %v6580 = vld [vmem:[%s6574 + $0x14] sm:$0xf]
      %v6581 = vld [vmem:[%s6574 + $0x18] sm:$0xf]
      %v6582 = vld [vmem:[%s6574 + $0x1c] sm:$0xf]
      %v6583 = vld [vmem:[%s6574 + $0x20] sm:$0xf]
      %v6584 = vld [vmem:[%s6574 + $0x24] sm:$0xf]
      %v6585 = vld [vmem:[%s6574 + $0x28] sm:$0xf]
      %v6586 = vld [vmem:[%s6574 + $0x2c] sm:$0xf]
      %v6587 = vld [vmem:[%s6574 + $0x30] sm:$0xf]
      %v6588 = vld [vmem:[%s6574 + $0x34] sm:$0xf]
      %v6589 = vld [vmem:[%s6574 + $0x38] sm:$0xf]
      %v6590 = vld [vmem:[%s6574 + $0x3c] sm:$0xf]
      %v6591 = vunpack.c.l.b16 %v6203
      %v6592 = vunpack.c.l.b16 %v6213
      %v6593 = vunpack.c.l.b16 %v6227
      %v6594 = vunpack.c.l.b16 %v6237
      %v6595 = vunpack.c.l.b16 %v6251
      %v6596 = vunpack.c.l.b16 %v6261
      %v6597 = vunpack.c.l.b16 %v6275
      %v6598 = vunpack.c.l.b16 %v6285
      %v6599 = vunpack.c.l.b16 %v6299
      %v6600 = vunpack.c.l.b16 %v6309
      %v6601 = vunpack.c.l.b16 %v6323
      %v6602 = vunpack.c.l.b16 %v6333
      %v6603 = vunpack.c.l.b16 %v6347
      %v6604 = vunpack.c.l.b16 %v6357
      %v6605 = vunpack.c.l.b16 %v6371
      %v6606 = vunpack.c.l.b16 %v6381
      %v6607 = vunpack.c.l.b16 %v6395
      %v6608 = vunpack.c.l.b16 %v6405
      %v6609 = vunpack.c.l.b16 %v6419
      %v6610 = vunpack.c.l.b16 %v6429
      %v6611 = vunpack.c.l.b16 %v6443
      %v6612 = vunpack.c.l.b16 %v6453
      %v6613 = vunpack.c.l.b16 %v6467
      %v6614 = vunpack.c.l.b16 %v6477
      %v6615 = vunpack.c.l.b16 %v6491
      %v6616 = vunpack.c.l.b16 %v6501
      %v6617 = vunpack.c.l.b16 %v6515
      %v6618 = vunpack.c.l.b16 %v6525
      %v6619 = vunpack.c.l.b16 %v6539
      %v6620 = vunpack.c.l.b16 %v6549
      %v6621 = vunpack.c.l.b16 %v6563
      %v6622 = vunpack.c.l.b16 %v6573
      %v6623 = vpack.c.b16 %v6592, %v6591
      %v6624 = vpack.c.b16 %v6594, %v6593
      %v6625 = vpack.c.b16 %v6596, %v6595
      %v6626 = vpack.c.b16 %v6598, %v6597
      %v6627 = vpack.c.b16 %v6600, %v6599
      %v6628 = vpack.c.b16 %v6602, %v6601
      %v6629 = vpack.c.b16 %v6604, %v6603
      %v6630 = vpack.c.b16 %v6606, %v6605
      %v6631 = vpack.c.b16 %v6608, %v6607
      %v6632 = vpack.c.b16 %v6610, %v6609
      %v6633 = vpack.c.b16 %v6612, %v6611
      %v6634 = vpack.c.b16 %v6614, %v6613
      %v6635 = vpack.c.b16 %v6616, %v6615
      %v6636 = vpack.c.b16 %v6618, %v6617
      %v6637 = vpack.c.b16 %v6620, %v6619
      %v6638 = vpack.c.b16 %v6622, %v6621
      %v6671 = vunpack.c.l.b16 %v6575
      %v6672 = vunpack.c.l.b16 %v6576
      %v6673 = vunpack.c.l.b16 %v6577
      %v6674 = vunpack.c.l.b16 %v6578
      %v6675 = vunpack.c.l.b16 %v6579
      %v6676 = vunpack.c.l.b16 %v6580
      %v6677 = vunpack.c.l.b16 %v6581
      %v6678 = vunpack.c.l.b16 %v6582
      %v6679 = vunpack.c.l.b16 %v6583
      %v6680 = vunpack.c.l.b16 %v6584
      %v6681 = vunpack.c.l.b16 %v6585
      %v6682 = vunpack.c.l.b16 %v6586
      %v6683 = vunpack.c.l.b16 %v6587
      %v6684 = vunpack.c.l.b16 %v6588
      %v6685 = vunpack.c.l.b16 %v6589
      %v6686 = vunpack.c.l.b16 %v6590
      %v6687 = vpack.c.b16 %v6672, %v6671
      %v6688 = vpack.c.b16 %v6674, %v6673
      %v6689 = vpack.c.b16 %v6676, %v6675
      %v6690 = vpack.c.b16 %v6678, %v6677
      %v6691 = vpack.c.b16 %v6680, %v6679
      %v6692 = vpack.c.b16 %v6682, %v6681
      %v6693 = vpack.c.b16 %v6684, %v6683
      %v6694 = vpack.c.b16 %v6686, %v6685
      %6703 = vmatpush.bf16.msra.mxu0 %v6694
      %6704 = vmatpush.bf16.msra.mxu0 %v6693
      %6705 = vmatpush.bf16.msra.mxu0 %v6692
      %6706 = vmatpush.bf16.msra.mxu0 %v6691
      %6707 = vmatpush.bf16.msra.mxu0 %v6690
      %6708 = vmatpush.bf16.msra.mxu0 %v6689
      %6709 = vmatpush.bf16.msra.mxu0 %v6688
      %6710 = vmatpush.bf16.msra.mxu0 %v6687
      %6711 = vmatmul.bf16.gmra.mxu0 %v6623
      %v6712 = vpop.f32.mrf.mxu0
      %v6713 = vadd.f32 0.0, %v6712
      %v6714 = vpop.f32.mrf.mxu0
      %v6715 = vadd.f32 0.0, %v6714
      %6716 = vmatmul.bf16.gmra.mxu0 %v6624
      %v6717 = vpop.f32.mrf.mxu0
      %v6718 = vadd.f32 0.0, %v6717
      %v6719 = vpop.f32.mrf.mxu0
      %v6720 = vadd.f32 0.0, %v6719
      %6721 = vmatmul.bf16.gmra.mxu0 %v6625
      %v6722 = vpop.f32.mrf.mxu0
      %v6723 = vadd.f32 0.0, %v6722
      %v6724 = vpop.f32.mrf.mxu0
      %v6725 = vadd.f32 0.0, %v6724
      %6726 = vmatmul.bf16.gmra.mxu0 %v6626
      %v6727 = vpop.f32.mrf.mxu0
      %v6728 = vadd.f32 0.0, %v6727
      %v6729 = vpop.f32.mrf.mxu0
      %v6730 = vadd.f32 0.0, %v6729
      %6731 = vmatmul.bf16.gmra.mxu0 %v6627
      %v6732 = vpop.f32.mrf.mxu0
      %v6733 = vadd.f32 0.0, %v6732
      %v6734 = vpop.f32.mrf.mxu0
      %v6735 = vadd.f32 0.0, %v6734
      %6736 = vmatmul.bf16.gmra.mxu0 %v6628
      %v6737 = vpop.f32.mrf.mxu0
      %v6738 = vadd.f32 0.0, %v6737
      %v6739 = vpop.f32.mrf.mxu0
      %v6740 = vadd.f32 0.0, %v6739
      %6741 = vmatmul.bf16.gmra.mxu0 %v6629
      %v6742 = vpop.f32.mrf.mxu0
      %v6743 = vadd.f32 0.0, %v6742
      %v6744 = vpop.f32.mrf.mxu0
      %v6745 = vadd.f32 0.0, %v6744
      %6746 = vmatmul.bf16.gmra.mxu0 %v6630
      %v6747 = vpop.f32.mrf.mxu0
      %v6748 = vadd.f32 0.0, %v6747
      %v6749 = vpop.f32.mrf.mxu0
      %v6750 = vadd.f32 0.0, %v6749
      %6751 = vmatmul.bf16.gmra.mxu0 %v6631
      %v6752 = vpop.f32.mrf.mxu0
      %v6753 = vadd.f32 0.0, %v6752
      %v6754 = vpop.f32.mrf.mxu0
      %v6755 = vadd.f32 0.0, %v6754
      %6756 = vmatmul.bf16.gmra.mxu0 %v6632
      %v6757 = vpop.f32.mrf.mxu0
      %v6758 = vadd.f32 0.0, %v6757
      %v6759 = vpop.f32.mrf.mxu0
      %v6760 = vadd.f32 0.0, %v6759
      %6761 = vmatmul.bf16.gmra.mxu0 %v6633
      %v6762 = vpop.f32.mrf.mxu0
      %v6763 = vadd.f32 0.0, %v6762
      %v6764 = vpop.f32.mrf.mxu0
      %v6765 = vadd.f32 0.0, %v6764
      %6766 = vmatmul.bf16.gmra.mxu0 %v6634
      %v6767 = vpop.f32.mrf.mxu0
      %v6768 = vadd.f32 0.0, %v6767
      %v6769 = vpop.f32.mrf.mxu0
      %v6770 = vadd.f32 0.0, %v6769
      %6771 = vmatmul.bf16.gmra.mxu0 %v6635
      %v6772 = vpop.f32.mrf.mxu0
      %v6773 = vadd.f32 0.0, %v6772
      %v6774 = vpop.f32.mrf.mxu0
      %v6775 = vadd.f32 0.0, %v6774
      %6776 = vmatmul.bf16.gmra.mxu0 %v6636
      %v6777 = vpop.f32.mrf.mxu0
      %v6778 = vadd.f32 0.0, %v6777
      %v6779 = vpop.f32.mrf.mxu0
      %v6780 = vadd.f32 0.0, %v6779
      %6781 = vmatmul.bf16.gmra.mxu0 %v6637
      %v6782 = vpop.f32.mrf.mxu0
      %v6783 = vadd.f32 0.0, %v6782
      %v6784 = vpop.f32.mrf.mxu0
      %v6785 = vadd.f32 0.0, %v6784
      %6786 = vmatmul.bf16.gmra.mxu0 %v6638
      %v6787 = vpop.f32.mrf.mxu0
      %v6788 = vadd.f32 0.0, %v6787
      %v6789 = vpop.f32.mrf.mxu0
      %v6790 = vadd.f32 0.0, %v6789
      %6791 = vdwg.mxu0
      %v6792 = vadd.f32 %v6110, %v6713
      %v6793 = vadd.f32 %v6111, %v6715
      %v6794 = vadd.f32 %v6112, %v6718
      %v6795 = vadd.f32 %v6113, %v6720
      %v6796 = vadd.f32 %v6114, %v6723
      %v6797 = vadd.f32 %v6115, %v6725
      %v6798 = vadd.f32 %v6116, %v6728
      %v6799 = vadd.f32 %v6117, %v6730
      %v6800 = vadd.f32 %v6118, %v6733
      %v6801 = vadd.f32 %v6119, %v6735
      %v6802 = vadd.f32 %v6120, %v6738
      %v6803 = vadd.f32 %v6121, %v6740
      %v6804 = vadd.f32 %v6122, %v6743
      %v6805 = vadd.f32 %v6123, %v6745
      %v6806 = vadd.f32 %v6124, %v6748
      %v6807 = vadd.f32 %v6125, %v6750
      %v6808 = vadd.f32 %v6126, %v6753
      %v6809 = vadd.f32 %v6127, %v6755
      %v6810 = vadd.f32 %v6128, %v6758
      %v6811 = vadd.f32 %v6129, %v6760
      %v6812 = vadd.f32 %v6130, %v6763
      %v6813 = vadd.f32 %v6131, %v6765
      %v6814 = vadd.f32 %v6132, %v6768
      %v6815 = vadd.f32 %v6133, %v6770
      %v6816 = vadd.f32 %v6134, %v6773
      %v6817 = vadd.f32 %v6135, %v6775
      %v6818 = vadd.f32 %v6136, %v6778
      %v6819 = vadd.f32 %v6137, %v6780
      %v6820 = vadd.f32 %v6138, %v6783
      %v6821 = vadd.f32 %v6139, %v6785
      %v6822 = vadd.f32 %v6140, %v6788
      %v6823 = vadd.f32 %v6141, %v6790
      %v6824 = vld [vmem:[%s5827] sm:$0xe]
      %v6825 = vld [vmem:[%s5827 + $0xc] sm:$0xe]
      %v6826 = vld [vmem:[%s5827 + $0x18] sm:$0xe]
      %v6827 = vld [vmem:[%s5827 + $0x24] sm:$0xe]
      %v6828 = vld [vmem:[%s5827 + $0x30] sm:$0xe]
      %v6829 = vld [vmem:[%s5827 + $0x3c] sm:$0xe]
      %v6830 = vld [vmem:[%s5827 + $0x48] sm:$0xe]
      %v6831 = vld [vmem:[%s5827 + $0x54] sm:$0xe]
      %v6832 = vld [vmem:[%s5827 + $0x60] sm:$0xe]
      %v6833 = vld [vmem:[%s5827 + $0x6c] sm:$0xe]
      %v6834 = vld [vmem:[%s5827 + $0x78] sm:$0xe]
      %v6835 = vld [vmem:[%s5827 + $0x84] sm:$0xe]
      %v6836 = vld [vmem:[%s5827 + $0x90] sm:$0xe]
      %v6837 = vld [vmem:[%s5827 + $0x9c] sm:$0xe]
      %v6838 = vld [vmem:[%s5827 + $0xa8] sm:$0xe]
      %v6839 = vld [vmem:[%s5827 + $0xb4] sm:$0xe]
      %v6888 = vrot.slane %v6824, 5
      %v6889 = vrot.slane %v6888, 4
      %v6890 = vrot.slane %v6143, 5
      %v6891 = vsel %vm1197, %v6889, %v6890
      %v6892 = vrot.slane %v6890, 4
      %v6893 = vrot.slane %v6144, 5
      %v6894 = vsel %vm1197, %v6892, %v6893
      %v6895 = vrot.slane %v6825, 5
      %v6896 = vrot.slane %v6895, 4
      %v6897 = vrot.slane %v6146, 5
      %v6898 = vsel %vm1197, %v6896, %v6897
      %v6899 = vrot.slane %v6897, 4
      %v6900 = vrot.slane %v6147, 5
      %v6901 = vsel %vm1197, %v6899, %v6900
      %v6902 = vrot.slane %v6826, 5
      %v6903 = vrot.slane %v6902, 4
      %v6904 = vrot.slane %v6149, 5
      %v6905 = vsel %vm1197, %v6903, %v6904
      %v6906 = vrot.slane %v6904, 4
      %v6907 = vrot.slane %v6150, 5
      %v6908 = vsel %vm1197, %v6906, %v6907
      %v6909 = vrot.slane %v6827, 5
      %v6910 = vrot.slane %v6909, 4
      %v6911 = vrot.slane %v6152, 5
      %v6912 = vsel %vm1197, %v6910, %v6911
      %v6913 = vrot.slane %v6911, 4
      %v6914 = vrot.slane %v6153, 5
      %v6915 = vsel %vm1197, %v6913, %v6914
      %v6916 = vrot.slane %v6828, 5
      %v6917 = vrot.slane %v6916, 4
      %v6918 = vrot.slane %v6155, 5
      %v6919 = vsel %vm1197, %v6917, %v6918
      %v6920 = vrot.slane %v6918, 4
      %v6921 = vrot.slane %v6156, 5
      %v6922 = vsel %vm1197, %v6920, %v6921
      %v6923 = vrot.slane %v6829, 5
      %v6924 = vrot.slane %v6923, 4
      %v6925 = vrot.slane %v6158, 5
      %v6926 = vsel %vm1197, %v6924, %v6925
      %v6927 = vrot.slane %v6925, 4
      %v6928 = vrot.slane %v6159, 5
      %v6929 = vsel %vm1197, %v6927, %v6928
      %v6930 = vrot.slane %v6830, 5
      %v6931 = vrot.slane %v6930, 4
      %v6932 = vrot.slane %v6161, 5
      %v6933 = vsel %vm1197, %v6931, %v6932
      %v6934 = vrot.slane %v6932, 4
      %v6935 = vrot.slane %v6162, 5
      %v6936 = vsel %vm1197, %v6934, %v6935
      %v6937 = vrot.slane %v6831, 5
      %v6938 = vrot.slane %v6937, 4
      %v6939 = vrot.slane %v6164, 5
      %v6940 = vsel %vm1197, %v6938, %v6939
      %v6941 = vrot.slane %v6939, 4
      %v6942 = vrot.slane %v6165, 5
      %v6943 = vsel %vm1197, %v6941, %v6942
      %v6944 = vrot.slane %v6832, 5
      %v6945 = vrot.slane %v6944, 4
      %v6946 = vrot.slane %v6167, 5
      %v6947 = vsel %vm1197, %v6945, %v6946
      %v6948 = vrot.slane %v6946, 4
      %v6949 = vrot.slane %v6168, 5
      %v6950 = vsel %vm1197, %v6948, %v6949
      %v6951 = vrot.slane %v6833, 5
      %v6952 = vrot.slane %v6951, 4
      %v6953 = vrot.slane %v6170, 5
      %v6954 = vsel %vm1197, %v6952, %v6953
      %v6955 = vrot.slane %v6953, 4
      %v6956 = vrot.slane %v6171, 5
      %v6957 = vsel %vm1197, %v6955, %v6956
      %v6958 = vrot.slane %v6834, 5
      %v6959 = vrot.slane %v6958, 4
      %v6960 = vrot.slane %v6173, 5
      %v6961 = vsel %vm1197, %v6959, %v6960
      %v6962 = vrot.slane %v6960, 4
      %v6963 = vrot.slane %v6174, 5
      %v6964 = vsel %vm1197, %v6962, %v6963
      %v6965 = vrot.slane %v6835, 5
      %v6966 = vrot.slane %v6965, 4
      %v6967 = vrot.slane %v6176, 5
      %v6968 = vsel %vm1197, %v6966, %v6967
      %v6969 = vrot.slane %v6967, 4
      %v6970 = vrot.slane %v6177, 5
      %v6971 = vsel %vm1197, %v6969, %v6970
      %v6972 = vrot.slane %v6836, 5
      %v6973 = vrot.slane %v6972, 4
      %v6974 = vrot.slane %v6179, 5
      %v6975 = vsel %vm1197, %v6973, %v6974
      %v6976 = vrot.slane %v6974, 4
      %v6977 = vrot.slane %v6180, 5
      %v6978 = vsel %vm1197, %v6976, %v6977
      %v6979 = vrot.slane %v6837, 5
      %v6980 = vrot.slane %v6979, 4
      %v6981 = vrot.slane %v6182, 5
      %v6982 = vsel %vm1197, %v6980, %v6981
      %v6983 = vrot.slane %v6981, 4
      %v6984 = vrot.slane %v6183, 5
      %v6985 = vsel %vm1197, %v6983, %v6984
      %v6986 = vrot.slane %v6838, 5
      %v6987 = vrot.slane %v6986, 4
      %v6988 = vrot.slane %v6185, 5
      %v6989 = vsel %vm1197, %v6987, %v6988
      %v6990 = vrot.slane %v6988, 4
      %v6991 = vrot.slane %v6186, 5
      %v6992 = vsel %vm1197, %v6990, %v6991
      %v6993 = vrot.slane %v6839, 5
      %v6994 = vrot.slane %v6993, 4
      %v6995 = vrot.slane %v6188, 5
      %v6996 = vsel %vm1197, %v6994, %v6995
      %v6997 = vrot.slane %v6995, 4
      %v6998 = vrot.slane %v6189, 5
      %v6999 = vsel %vm1197, %v6997, %v6998
      %s7000 = scalar_lea.vmem %s3, 320
      %v7001 = vld [vmem:[%s7000] sm:$0xf]
      %v7002 = vld [vmem:[%s7000 + $0x4] sm:$0xf]
      %v7003 = vld [vmem:[%s7000 + $0x8] sm:$0xf]
      %v7004 = vld [vmem:[%s7000 + $0xc] sm:$0xf]
      %v7005 = vld [vmem:[%s7000 + $0x10] sm:$0xf]
      %v7006 = vld [vmem:[%s7000 + $0x14] sm:$0xf]
      %v7007 = vld [vmem:[%s7000 + $0x18] sm:$0xf]
      %v7008 = vld [vmem:[%s7000 + $0x1c] sm:$0xf]
      %v7009 = vld [vmem:[%s7000 + $0x20] sm:$0xf]
      %v7010 = vld [vmem:[%s7000 + $0x24] sm:$0xf]
      %v7011 = vld [vmem:[%s7000 + $0x28] sm:$0xf]
      %v7012 = vld [vmem:[%s7000 + $0x2c] sm:$0xf]
      %v7013 = vld [vmem:[%s7000 + $0x30] sm:$0xf]
      %v7014 = vld [vmem:[%s7000 + $0x34] sm:$0xf]
      %v7015 = vld [vmem:[%s7000 + $0x38] sm:$0xf]
      %v7016 = vld [vmem:[%s7000 + $0x3c] sm:$0xf]
      %v7017 = vunpack.c.l.b16 %v6891
      %v7018 = vunpack.c.l.b16 %v6894
      %v7019 = vunpack.c.l.b16 %v6898
      %v7020 = vunpack.c.l.b16 %v6901
      %v7021 = vunpack.c.l.b16 %v6905
      %v7022 = vunpack.c.l.b16 %v6908
      %v7023 = vunpack.c.l.b16 %v6912
      %v7024 = vunpack.c.l.b16 %v6915
      %v7025 = vunpack.c.l.b16 %v6919
      %v7026 = vunpack.c.l.b16 %v6922
      %v7027 = vunpack.c.l.b16 %v6926
      %v7028 = vunpack.c.l.b16 %v6929
      %v7029 = vunpack.c.l.b16 %v6933
      %v7030 = vunpack.c.l.b16 %v6936
      %v7031 = vunpack.c.l.b16 %v6940
      %v7032 = vunpack.c.l.b16 %v6943
      %v7033 = vunpack.c.l.b16 %v6947
      %v7034 = vunpack.c.l.b16 %v6950
      %v7035 = vunpack.c.l.b16 %v6954
      %v7036 = vunpack.c.l.b16 %v6957
      %v7037 = vunpack.c.l.b16 %v6961
      %v7038 = vunpack.c.l.b16 %v6964
      %v7039 = vunpack.c.l.b16 %v6968
      %v7040 = vunpack.c.l.b16 %v6971
      %v7041 = vunpack.c.l.b16 %v6975
      %v7042 = vunpack.c.l.b16 %v6978
      %v7043 = vunpack.c.l.b16 %v6982
      %v7044 = vunpack.c.l.b16 %v6985
      %v7045 = vunpack.c.l.b16 %v6989
      %v7046 = vunpack.c.l.b16 %v6992
      %v7047 = vunpack.c.l.b16 %v6996
      %v7048 = vunpack.c.l.b16 %v6999
      %v7049 = vpack.c.b16 %v7018, %v7017
      %v7050 = vpack.c.b16 %v7020, %v7019
      %v7051 = vpack.c.b16 %v7022, %v7021
      %v7052 = vpack.c.b16 %v7024, %v7023
      %v7053 = vpack.c.b16 %v7026, %v7025
      %v7054 = vpack.c.b16 %v7028, %v7027
      %v7055 = vpack.c.b16 %v7030, %v7029
      %v7056 = vpack.c.b16 %v7032, %v7031
      %v7057 = vpack.c.b16 %v7034, %v7033
      %v7058 = vpack.c.b16 %v7036, %v7035
      %v7059 = vpack.c.b16 %v7038, %v7037
      %v7060 = vpack.c.b16 %v7040, %v7039
      %v7061 = vpack.c.b16 %v7042, %v7041
      %v7062 = vpack.c.b16 %v7044, %v7043
      %v7063 = vpack.c.b16 %v7046, %v7045
      %v7064 = vpack.c.b16 %v7048, %v7047
      %v7097 = vunpack.c.l.b16 %v7001
      %v7098 = vunpack.c.l.b16 %v7002
      %v7099 = vunpack.c.l.b16 %v7003
      %v7100 = vunpack.c.l.b16 %v7004
      %v7101 = vunpack.c.l.b16 %v7005
      %v7102 = vunpack.c.l.b16 %v7006
      %v7103 = vunpack.c.l.b16 %v7007
      %v7104 = vunpack.c.l.b16 %v7008
      %v7105 = vunpack.c.l.b16 %v7009
      %v7106 = vunpack.c.l.b16 %v7010
      %v7107 = vunpack.c.l.b16 %v7011
      %v7108 = vunpack.c.l.b16 %v7012
      %v7109 = vunpack.c.l.b16 %v7013
      %v7110 = vunpack.c.l.b16 %v7014
      %v7111 = vunpack.c.l.b16 %v7015
      %v7112 = vunpack.c.l.b16 %v7016
      %v7113 = vpack.c.b16 %v7098, %v7097
      %v7114 = vpack.c.b16 %v7100, %v7099
      %v7115 = vpack.c.b16 %v7102, %v7101
      %v7116 = vpack.c.b16 %v7104, %v7103
      %v7117 = vpack.c.b16 %v7106, %v7105
      %v7118 = vpack.c.b16 %v7108, %v7107
      %v7119 = vpack.c.b16 %v7110, %v7109
      %v7120 = vpack.c.b16 %v7112, %v7111
      %7129 = vmatpush.bf16.msra.mxu0 %v7120
      %7130 = vmatpush.bf16.msra.mxu0 %v7119
      %7131 = vmatpush.bf16.msra.mxu0 %v7118
      %7132 = vmatpush.bf16.msra.mxu0 %v7117
      %7133 = vmatpush.bf16.msra.mxu0 %v7116
      %7134 = vmatpush.bf16.msra.mxu0 %v7115
      %7135 = vmatpush.bf16.msra.mxu0 %v7114
      %7136 = vmatpush.bf16.msra.mxu0 %v7113
      %7137 = vmatmul.bf16.gmra.mxu0 %v7049
      %v7138 = vpop.f32.mrf.mxu0
      %v7139 = vadd.f32 0.0, %v7138
      %v7140 = vpop.f32.mrf.mxu0
      %v7141 = vadd.f32 0.0, %v7140
      %7142 = vmatmul.bf16.gmra.mxu0 %v7050
      %v7143 = vpop.f32.mrf.mxu0
      %v7144 = vadd.f32 0.0, %v7143
      %v7145 = vpop.f32.mrf.mxu0
      %v7146 = vadd.f32 0.0, %v7145
      %7147 = vmatmul.bf16.gmra.mxu0 %v7051
      %v7148 = vpop.f32.mrf.mxu0
      %v7149 = vadd.f32 0.0, %v7148
      %v7150 = vpop.f32.mrf.mxu0
      %v7151 = vadd.f32 0.0, %v7150
      %7152 = vmatmul.bf16.gmra.mxu0 %v7052
      %v7153 = vpop.f32.mrf.mxu0
      %v7154 = vadd.f32 0.0, %v7153
      %v7155 = vpop.f32.mrf.mxu0
      %v7156 = vadd.f32 0.0, %v7155
      %7157 = vmatmul.bf16.gmra.mxu0 %v7053
      %v7158 = vpop.f32.mrf.mxu0
      %v7159 = vadd.f32 0.0, %v7158
      %v7160 = vpop.f32.mrf.mxu0
      %v7161 = vadd.f32 0.0, %v7160
      %7162 = vmatmul.bf16.gmra.mxu0 %v7054
      %v7163 = vpop.f32.mrf.mxu0
      %v7164 = vadd.f32 0.0, %v7163
      %v7165 = vpop.f32.mrf.mxu0
      %v7166 = vadd.f32 0.0, %v7165
      %7167 = vmatmul.bf16.gmra.mxu0 %v7055
      %v7168 = vpop.f32.mrf.mxu0
      %v7169 = vadd.f32 0.0, %v7168
      %v7170 = vpop.f32.mrf.mxu0
      %v7171 = vadd.f32 0.0, %v7170
      %7172 = vmatmul.bf16.gmra.mxu0 %v7056
      %v7173 = vpop.f32.mrf.mxu0
      %v7174 = vadd.f32 0.0, %v7173
      %v7175 = vpop.f32.mrf.mxu0
      %v7176 = vadd.f32 0.0, %v7175
      %7177 = vmatmul.bf16.gmra.mxu0 %v7057
      %v7178 = vpop.f32.mrf.mxu0
      %v7179 = vadd.f32 0.0, %v7178
      %v7180 = vpop.f32.mrf.mxu0
      %v7181 = vadd.f32 0.0, %v7180
      %7182 = vmatmul.bf16.gmra.mxu0 %v7058
      %v7183 = vpop.f32.mrf.mxu0
      %v7184 = vadd.f32 0.0, %v7183
      %v7185 = vpop.f32.mrf.mxu0
      %v7186 = vadd.f32 0.0, %v7185
      %7187 = vmatmul.bf16.gmra.mxu0 %v7059
      %v7188 = vpop.f32.mrf.mxu0
      %v7189 = vadd.f32 0.0, %v7188
      %v7190 = vpop.f32.mrf.mxu0
      %v7191 = vadd.f32 0.0, %v7190
      %7192 = vmatmul.bf16.gmra.mxu0 %v7060
      %v7193 = vpop.f32.mrf.mxu0
      %v7194 = vadd.f32 0.0, %v7193
      %v7195 = vpop.f32.mrf.mxu0
      %v7196 = vadd.f32 0.0, %v7195
      %7197 = vmatmul.bf16.gmra.mxu0 %v7061
      %v7198 = vpop.f32.mrf.mxu0
      %v7199 = vadd.f32 0.0, %v7198
      %v7200 = vpop.f32.mrf.mxu0
      %v7201 = vadd.f32 0.0, %v7200
      %7202 = vmatmul.bf16.gmra.mxu0 %v7062
      %v7203 = vpop.f32.mrf.mxu0
      %v7204 = vadd.f32 0.0, %v7203
      %v7205 = vpop.f32.mrf.mxu0
      %v7206 = vadd.f32 0.0, %v7205
      %7207 = vmatmul.bf16.gmra.mxu0 %v7063
      %v7208 = vpop.f32.mrf.mxu0
      %v7209 = vadd.f32 0.0, %v7208
      %v7210 = vpop.f32.mrf.mxu0
      %v7211 = vadd.f32 0.0, %v7210
      %7212 = vmatmul.bf16.gmra.mxu0 %v7064
      %v7213 = vpop.f32.mrf.mxu0
      %v7214 = vadd.f32 0.0, %v7213
      %v7215 = vpop.f32.mrf.mxu0
      %v7216 = vadd.f32 0.0, %v7215
      %7217 = vdwg.mxu0
      %v7218 = vadd.f32 %v6792, %v7139
      %v7219 = vadd.f32 %v6793, %v7141
      %v7220 = vadd.f32 %v6794, %v7144
      %v7221 = vadd.f32 %v6795, %v7146
      %v7222 = vadd.f32 %v6796, %v7149
      %v7223 = vadd.f32 %v6797, %v7151
      %v7224 = vadd.f32 %v6798, %v7154
      %v7225 = vadd.f32 %v6799, %v7156
      %v7226 = vadd.f32 %v6800, %v7159
      %v7227 = vadd.f32 %v6801, %v7161
      %v7228 = vadd.f32 %v6802, %v7164
      %v7229 = vadd.f32 %v6803, %v7166
      %v7230 = vadd.f32 %v6804, %v7169
      %v7231 = vadd.f32 %v6805, %v7171
      %v7232 = vadd.f32 %v6806, %v7174
      %v7233 = vadd.f32 %v6807, %v7176
      %v7234 = vadd.f32 %v6808, %v7179
      %v7235 = vadd.f32 %v6809, %v7181
      %v7236 = vadd.f32 %v6810, %v7184
      %v7237 = vadd.f32 %v6811, %v7186
      %v7238 = vadd.f32 %v6812, %v7189
      %v7239 = vadd.f32 %v6813, %v7191
      %v7240 = vadd.f32 %v6814, %v7194
      %v7241 = vadd.f32 %v6815, %v7196
      %v7242 = vadd.f32 %v6816, %v7199
      %v7243 = vadd.f32 %v6817, %v7201
      %v7244 = vadd.f32 %v6818, %v7204
      %v7245 = vadd.f32 %v6819, %v7206
      %v7246 = vadd.f32 %v6820, %v7209
      %v7247 = vadd.f32 %v6821, %v7211
      %v7248 = vadd.f32 %v6822, %v7214
      %v7249 = vadd.f32 %v6823, %v7216
      %s7250 = scalar_lea.vmem %s239, 24
      %v7251 = vld [vmem:[%s7250] sm:$0xf]
      %v7252 = vld [vmem:[%s7250 + $0x4] sm:$0xf]
      %v7253 = vld [vmem:[%s7250 + $0xc] sm:$0xf]
      %v7254 = vld [vmem:[%s7250 + $0x10] sm:$0xf]
      %v7255 = vld [vmem:[%s7250 + $0x18] sm:$0xf]
      %v7256 = vld [vmem:[%s7250 + $0x1c] sm:$0xf]
      %v7257 = vld [vmem:[%s7250 + $0x24] sm:$0xf]
      %v7258 = vld [vmem:[%s7250 + $0x28] sm:$0xf]
      %v7259 = vld [vmem:[%s7250 + $0x30] sm:$0xf]
      %v7260 = vld [vmem:[%s7250 + $0x34] sm:$0xf]
      %v7261 = vld [vmem:[%s7250 + $0x3c] sm:$0xf]
      %v7262 = vld [vmem:[%s7250 + $0x40] sm:$0xf]
      %v7263 = vld [vmem:[%s7250 + $0x48] sm:$0xf]
      %v7264 = vld [vmem:[%s7250 + $0x4c] sm:$0xf]
      %v7265 = vld [vmem:[%s7250 + $0x54] sm:$0xf]
      %v7266 = vld [vmem:[%s7250 + $0x58] sm:$0xf]
      %v7267 = vld [vmem:[%s7250 + $0x60] sm:$0xf]
      %v7268 = vld [vmem:[%s7250 + $0x64] sm:$0xf]
      %v7269 = vld [vmem:[%s7250 + $0x6c] sm:$0xf]
      %v7270 = vld [vmem:[%s7250 + $0x70] sm:$0xf]
      %v7271 = vld [vmem:[%s7250 + $0x78] sm:$0xf]
      %v7272 = vld [vmem:[%s7250 + $0x7c] sm:$0xf]
      %v7273 = vld [vmem:[%s7250 + $0x84] sm:$0xf]
      %v7274 = vld [vmem:[%s7250 + $0x88] sm:$0xf]
      %v7275 = vld [vmem:[%s7250 + $0x90] sm:$0xf]
      %v7276 = vld [vmem:[%s7250 + $0x94] sm:$0xf]
      %v7277 = vld [vmem:[%s7250 + $0x9c] sm:$0xf]
      %v7278 = vld [vmem:[%s7250 + $0xa0] sm:$0xf]
      %v7279 = vld [vmem:[%s7250 + $0xa8] sm:$0xf]
      %v7280 = vld [vmem:[%s7250 + $0xac] sm:$0xf]
      %v7281 = vld [vmem:[%s7250 + $0xb4] sm:$0xf]
      %v7282 = vld [vmem:[%s7250 + $0xb8] sm:$0xf]
      %s7283 = scalar_lea.vmem %s3, 384
      %v7284 = vld [vmem:[%s7283] sm:$0xf]
      %v7285 = vld [vmem:[%s7283 + $0x4] sm:$0xf]
      %v7286 = vld [vmem:[%s7283 + $0x8] sm:$0xf]
      %v7287 = vld [vmem:[%s7283 + $0xc] sm:$0xf]
      %v7288 = vld [vmem:[%s7283 + $0x10] sm:$0xf]
      %v7289 = vld [vmem:[%s7283 + $0x14] sm:$0xf]
      %v7290 = vld [vmem:[%s7283 + $0x18] sm:$0xf]
      %v7291 = vld [vmem:[%s7283 + $0x1c] sm:$0xf]
      %v7292 = vld [vmem:[%s7283 + $0x20] sm:$0xf]
      %v7293 = vld [vmem:[%s7283 + $0x24] sm:$0xf]
      %v7294 = vld [vmem:[%s7283 + $0x28] sm:$0xf]
      %v7295 = vld [vmem:[%s7283 + $0x2c] sm:$0xf]
      %v7296 = vld [vmem:[%s7283 + $0x30] sm:$0xf]
      %v7297 = vld [vmem:[%s7283 + $0x34] sm:$0xf]
      %v7298 = vld [vmem:[%s7283 + $0x38] sm:$0xf]
      %v7299 = vld [vmem:[%s7283 + $0x3c] sm:$0xf]
      %v7332 = vunpack.c.l.b16 %v7251
      %v7333 = vunpack.c.l.b16 %v7252
      %v7334 = vunpack.c.l.b16 %v7253
      %v7335 = vunpack.c.l.b16 %v7254
      %v7336 = vunpack.c.l.b16 %v7255
      %v7337 = vunpack.c.l.b16 %v7256
      %v7338 = vunpack.c.l.b16 %v7257
      %v7339 = vunpack.c.l.b16 %v7258
      %v7340 = vunpack.c.l.b16 %v7259
      %v7341 = vunpack.c.l.b16 %v7260
      %v7342 = vunpack.c.l.b16 %v7261
      %v7343 = vunpack.c.l.b16 %v7262
      %v7344 = vunpack.c.l.b16 %v7263
      %v7345 = vunpack.c.l.b16 %v7264
      %v7346 = vunpack.c.l.b16 %v7265
      %v7347 = vunpack.c.l.b16 %v7266
      %v7348 = vunpack.c.l.b16 %v7267
      %v7349 = vunpack.c.l.b16 %v7268
      %v7350 = vunpack.c.l.b16 %v7269
      %v7351 = vunpack.c.l.b16 %v7270
      %v7352 = vunpack.c.l.b16 %v7271
      %v7353 = vunpack.c.l.b16 %v7272
      %v7354 = vunpack.c.l.b16 %v7273
      %v7355 = vunpack.c.l.b16 %v7274
      %v7356 = vunpack.c.l.b16 %v7275
      %v7357 = vunpack.c.l.b16 %v7276
      %v7358 = vunpack.c.l.b16 %v7277
      %v7359 = vunpack.c.l.b16 %v7278
      %v7360 = vunpack.c.l.b16 %v7279
      %v7361 = vunpack.c.l.b16 %v7280
      %v7362 = vunpack.c.l.b16 %v7281
      %v7363 = vunpack.c.l.b16 %v7282
      %v7364 = vpack.c.b16 %v7333, %v7332
      %v7365 = vpack.c.b16 %v7335, %v7334
      %v7366 = vpack.c.b16 %v7337, %v7336
      %v7367 = vpack.c.b16 %v7339, %v7338
      %v7368 = vpack.c.b16 %v7341, %v7340
      %v7369 = vpack.c.b16 %v7343, %v7342
      %v7370 = vpack.c.b16 %v7345, %v7344
      %v7371 = vpack.c.b16 %v7347, %v7346
      %v7372 = vpack.c.b16 %v7349, %v7348
      %v7373 = vpack.c.b16 %v7351, %v7350
      %v7374 = vpack.c.b16 %v7353, %v7352
      %v7375 = vpack.c.b16 %v7355, %v7354
      %v7376 = vpack.c.b16 %v7357, %v7356
      %v7377 = vpack.c.b16 %v7359, %v7358
      %v7378 = vpack.c.b16 %v7361, %v7360
      %v7379 = vpack.c.b16 %v7363, %v7362
      %v7412 = vunpack.c.l.b16 %v7284
      %v7413 = vunpack.c.l.b16 %v7285
      %v7414 = vunpack.c.l.b16 %v7286
      %v7415 = vunpack.c.l.b16 %v7287
      %v7416 = vunpack.c.l.b16 %v7288
      %v7417 = vunpack.c.l.b16 %v7289
      %v7418 = vunpack.c.l.b16 %v7290
      %v7419 = vunpack.c.l.b16 %v7291
      %v7420 = vunpack.c.l.b16 %v7292
      %v7421 = vunpack.c.l.b16 %v7293
      %v7422 = vunpack.c.l.b16 %v7294
      %v7423 = vunpack.c.l.b16 %v7295
      %v7424 = vunpack.c.l.b16 %v7296
      %v7425 = vunpack.c.l.b16 %v7297
      %v7426 = vunpack.c.l.b16 %v7298
      %v7427 = vunpack.c.l.b16 %v7299
      %v7428 = vpack.c.b16 %v7413, %v7412
      %v7429 = vpack.c.b16 %v7415, %v7414
      %v7430 = vpack.c.b16 %v7417, %v7416
      %v7431 = vpack.c.b16 %v7419, %v7418
      %v7432 = vpack.c.b16 %v7421, %v7420
      %v7433 = vpack.c.b16 %v7423, %v7422
      %v7434 = vpack.c.b16 %v7425, %v7424
      %v7435 = vpack.c.b16 %v7427, %v7426
      %7444 = vmatpush.bf16.msra.mxu0 %v7435
      %7445 = vmatpush.bf16.msra.mxu0 %v7434
      %7446 = vmatpush.bf16.msra.mxu0 %v7433
      %7447 = vmatpush.bf16.msra.mxu0 %v7432
      %7448 = vmatpush.bf16.msra.mxu0 %v7431
      %7449 = vmatpush.bf16.msra.mxu0 %v7430
      %7450 = vmatpush.bf16.msra.mxu0 %v7429
      %7451 = vmatpush.bf16.msra.mxu0 %v7428
      %7452 = vmatmul.bf16.gmra.mxu0 %v7364
      %v7453 = vpop.f32.mrf.mxu0
      %v7454 = vadd.f32 0.0, %v7453
      %v7455 = vpop.f32.mrf.mxu0
      %v7456 = vadd.f32 0.0, %v7455
      %7457 = vmatmul.bf16.gmra.mxu0 %v7365
      %v7458 = vpop.f32.mrf.mxu0
      %v7459 = vadd.f32 0.0, %v7458
      %v7460 = vpop.f32.mrf.mxu0
      %v7461 = vadd.f32 0.0, %v7460
      %7462 = vmatmul.bf16.gmra.mxu0 %v7366
      %v7463 = vpop.f32.mrf.mxu0
      %v7464 = vadd.f32 0.0, %v7463
      %v7465 = vpop.f32.mrf.mxu0
      %v7466 = vadd.f32 0.0, %v7465
      %7467 = vmatmul.bf16.gmra.mxu0 %v7367
      %v7468 = vpop.f32.mrf.mxu0
      %v7469 = vadd.f32 0.0, %v7468
      %v7470 = vpop.f32.mrf.mxu0
      %v7471 = vadd.f32 0.0, %v7470
      %7472 = vmatmul.bf16.gmra.mxu0 %v7368
      %v7473 = vpop.f32.mrf.mxu0
      %v7474 = vadd.f32 0.0, %v7473
      %v7475 = vpop.f32.mrf.mxu0
      %v7476 = vadd.f32 0.0, %v7475
      %7477 = vmatmul.bf16.gmra.mxu0 %v7369
      %v7478 = vpop.f32.mrf.mxu0
      %v7479 = vadd.f32 0.0, %v7478
      %v7480 = vpop.f32.mrf.mxu0
      %v7481 = vadd.f32 0.0, %v7480
      %7482 = vmatmul.bf16.gmra.mxu0 %v7370
      %v7483 = vpop.f32.mrf.mxu0
      %v7484 = vadd.f32 0.0, %v7483
      %v7485 = vpop.f32.mrf.mxu0
      %v7486 = vadd.f32 0.0, %v7485
      %7487 = vmatmul.bf16.gmra.mxu0 %v7371
      %v7488 = vpop.f32.mrf.mxu0
      %v7489 = vadd.f32 0.0, %v7488
      %v7490 = vpop.f32.mrf.mxu0
      %v7491 = vadd.f32 0.0, %v7490
      %7492 = vmatmul.bf16.gmra.mxu0 %v7372
      %v7493 = vpop.f32.mrf.mxu0
      %v7494 = vadd.f32 0.0, %v7493
      %v7495 = vpop.f32.mrf.mxu0
      %v7496 = vadd.f32 0.0, %v7495
      %7497 = vmatmul.bf16.gmra.mxu0 %v7373
      %v7498 = vpop.f32.mrf.mxu0
      %v7499 = vadd.f32 0.0, %v7498
      %v7500 = vpop.f32.mrf.mxu0
      %v7501 = vadd.f32 0.0, %v7500
      %7502 = vmatmul.bf16.gmra.mxu0 %v7374
      %v7503 = vpop.f32.mrf.mxu0
      %v7504 = vadd.f32 0.0, %v7503
      %v7505 = vpop.f32.mrf.mxu0
      %v7506 = vadd.f32 0.0, %v7505
      %7507 = vmatmul.bf16.gmra.mxu0 %v7375
      %v7508 = vpop.f32.mrf.mxu0
      %v7509 = vadd.f32 0.0, %v7508
      %v7510 = vpop.f32.mrf.mxu0
      %v7511 = vadd.f32 0.0, %v7510
      %7512 = vmatmul.bf16.gmra.mxu0 %v7376
      %v7513 = vpop.f32.mrf.mxu0
      %v7514 = vadd.f32 0.0, %v7513
      %v7515 = vpop.f32.mrf.mxu0
      %v7516 = vadd.f32 0.0, %v7515
      %7517 = vmatmul.bf16.gmra.mxu0 %v7377
      %v7518 = vpop.f32.mrf.mxu0
      %v7519 = vadd.f32 0.0, %v7518
      %v7520 = vpop.f32.mrf.mxu0
      %v7521 = vadd.f32 0.0, %v7520
      %7522 = vmatmul.bf16.gmra.mxu0 %v7378
      %v7523 = vpop.f32.mrf.mxu0
      %v7524 = vadd.f32 0.0, %v7523
      %v7525 = vpop.f32.mrf.mxu0
      %v7526 = vadd.f32 0.0, %v7525
      %7527 = vmatmul.bf16.gmra.mxu0 %v7379
      %v7528 = vpop.f32.mrf.mxu0
      %v7529 = vadd.f32 0.0, %v7528
      %v7530 = vpop.f32.mrf.mxu0
      %v7531 = vadd.f32 0.0, %v7530
      %7532 = vdwg.mxu0
      %v7533 = vadd.f32 %v7218, %v7454
      %v7534 = vadd.f32 %v7219, %v7456
      %v7535 = vadd.f32 %v7220, %v7459
      %v7536 = vadd.f32 %v7221, %v7461
      %v7537 = vadd.f32 %v7222, %v7464
      %v7538 = vadd.f32 %v7223, %v7466
      %v7539 = vadd.f32 %v7224, %v7469
      %v7540 = vadd.f32 %v7225, %v7471
      %v7541 = vadd.f32 %v7226, %v7474
      %v7542 = vadd.f32 %v7227, %v7476
      %v7543 = vadd.f32 %v7228, %v7479
      %v7544 = vadd.f32 %v7229, %v7481
      %v7545 = vadd.f32 %v7230, %v7484
      %v7546 = vadd.f32 %v7231, %v7486
      %v7547 = vadd.f32 %v7232, %v7489
      %v7548 = vadd.f32 %v7233, %v7491
      %v7549 = vadd.f32 %v7234, %v7494
      %v7550 = vadd.f32 %v7235, %v7496
      %v7551 = vadd.f32 %v7236, %v7499
      %v7552 = vadd.f32 %v7237, %v7501
      %v7553 = vadd.f32 %v7238, %v7504
      %v7554 = vadd.f32 %v7239, %v7506
      %v7555 = vadd.f32 %v7240, %v7509
      %v7556 = vadd.f32 %v7241, %v7511
      %v7557 = vadd.f32 %v7242, %v7514
      %v7558 = vadd.f32 %v7243, %v7516
      %v7559 = vadd.f32 %v7244, %v7519
      %v7560 = vadd.f32 %v7245, %v7521
      %v7561 = vadd.f32 %v7246, %v7524
      %v7562 = vadd.f32 %v7247, %v7526
      %v7563 = vadd.f32 %v7248, %v7529
      %v7564 = vadd.f32 %v7249, %v7531
      %v7565 = vld [vmem:[%s7250] sm:$0xf]
      %v7566 = vld [vmem:[%s7250 + $0x4] sm:$0xf]
      %v7567 = vld [vmem:[%s7250 + $0x8] sm:$0x1]
      %v7568 = vld [vmem:[%s7250 + $0xc] sm:$0xf]
      %v7569 = vld [vmem:[%s7250 + $0x10] sm:$0xf]
      %v7570 = vld [vmem:[%s7250 + $0x14] sm:$0x1]
      %v7571 = vld [vmem:[%s7250 + $0x18] sm:$0xf]
      %v7572 = vld [vmem:[%s7250 + $0x1c] sm:$0xf]
      %v7573 = vld [vmem:[%s7250 + $0x20] sm:$0x1]
      %v7574 = vld [vmem:[%s7250 + $0x24] sm:$0xf]
      %v7575 = vld [vmem:[%s7250 + $0x28] sm:$0xf]
      %v7576 = vld [vmem:[%s7250 + $0x2c] sm:$0x1]
      %v7577 = vld [vmem:[%s7250 + $0x30] sm:$0xf]
      %v7578 = vld [vmem:[%s7250 + $0x34] sm:$0xf]
      %v7579 = vld [vmem:[%s7250 + $0x38] sm:$0x1]
      %v7580 = vld [vmem:[%s7250 + $0x3c] sm:$0xf]
      %v7581 = vld [vmem:[%s7250 + $0x40] sm:$0xf]
      %v7582 = vld [vmem:[%s7250 + $0x44] sm:$0x1]
      %v7583 = vld [vmem:[%s7250 + $0x48] sm:$0xf]
      %v7584 = vld [vmem:[%s7250 + $0x4c] sm:$0xf]
      %v7585 = vld [vmem:[%s7250 + $0x50] sm:$0x1]
      %v7586 = vld [vmem:[%s7250 + $0x54] sm:$0xf]
      %v7587 = vld [vmem:[%s7250 + $0x58] sm:$0xf]
      %v7588 = vld [vmem:[%s7250 + $0x5c] sm:$0x1]
      %v7589 = vld [vmem:[%s7250 + $0x60] sm:$0xf]
      %v7590 = vld [vmem:[%s7250 + $0x64] sm:$0xf]
      %v7591 = vld [vmem:[%s7250 + $0x68] sm:$0x1]
      %v7592 = vld [vmem:[%s7250 + $0x6c] sm:$0xf]
      %v7593 = vld [vmem:[%s7250 + $0x70] sm:$0xf]
      %v7594 = vld [vmem:[%s7250 + $0x74] sm:$0x1]
      %v7595 = vld [vmem:[%s7250 + $0x78] sm:$0xf]
      %v7596 = vld [vmem:[%s7250 + $0x7c] sm:$0xf]
      %v7597 = vld [vmem:[%s7250 + $0x80] sm:$0x1]
      %v7598 = vld [vmem:[%s7250 + $0x84] sm:$0xf]
      %v7599 = vld [vmem:[%s7250 + $0x88] sm:$0xf]
      %v7600 = vld [vmem:[%s7250 + $0x8c] sm:$0x1]
      %v7601 = vld [vmem:[%s7250 + $0x90] sm:$0xf]
      %v7602 = vld [vmem:[%s7250 + $0x94] sm:$0xf]
      %v7603 = vld [vmem:[%s7250 + $0x98] sm:$0x1]
      %v7604 = vld [vmem:[%s7250 + $0x9c] sm:$0xf]
      %v7605 = vld [vmem:[%s7250 + $0xa0] sm:$0xf]
      %v7606 = vld [vmem:[%s7250 + $0xa4] sm:$0x1]
      %v7607 = vld [vmem:[%s7250 + $0xa8] sm:$0xf]
      %v7608 = vld [vmem:[%s7250 + $0xac] sm:$0xf]
      %v7609 = vld [vmem:[%s7250 + $0xb0] sm:$0x1]
      %v7610 = vld [vmem:[%s7250 + $0xb4] sm:$0xf]
      %v7611 = vld [vmem:[%s7250 + $0xb8] sm:$0xf]
      %v7612 = vld [vmem:[%s7250 + $0xbc] sm:$0x1]
      %v7614 = vshrl.u32 %v7565, 16
      %v7616 = vrot.slane %v7614, 4
      %v7617 = vshll.u32 %v7565, 16
      %v7619 = vrot.slane %v7617, 5
      %v7620 = vor.u32 %v7616, %v7619
      %v7621 = vrot.slane %v7620, 4
      %v7623 = vshll.u32 %v7566, 16
      %v7625 = vrot.slane %v7623, 5
      %v7626 = vsel %vm311, %v7621, %v7625
      %v7627 = vshrl.u32 %v7566, 16
      %v7629 = vrot.slane %v7627, 4
      %v7630 = vor.u32 %v7629, %v7625
      %v7631 = vrot.slane %v7630, 4
      %v7633 = vshll.u32 %v7567, 16
      %v7635 = vrot.slane %v7633, 5
      %v7636 = vsel %vm311, %v7631, %v7635
      %v7638 = vshrl.u32 %v7568, 16
      %v7640 = vrot.slane %v7638, 4
      %v7641 = vshll.u32 %v7568, 16
      %v7643 = vrot.slane %v7641, 5
      %v7644 = vor.u32 %v7640, %v7643
      %v7645 = vrot.slane %v7644, 4
      %v7647 = vshll.u32 %v7569, 16
      %v7649 = vrot.slane %v7647, 5
      %v7650 = vsel %vm311, %v7645, %v7649
      %v7651 = vshrl.u32 %v7569, 16
      %v7653 = vrot.slane %v7651, 4
      %v7654 = vor.u32 %v7653, %v7649
      %v7655 = vrot.slane %v7654, 4
      %v7657 = vshll.u32 %v7570, 16
      %v7659 = vrot.slane %v7657, 5
      %v7660 = vsel %vm311, %v7655, %v7659
      %v7662 = vshrl.u32 %v7571, 16
      %v7664 = vrot.slane %v7662, 4
      %v7665 = vshll.u32 %v7571, 16
      %v7667 = vrot.slane %v7665, 5
      %v7668 = vor.u32 %v7664, %v7667
      %v7669 = vrot.slane %v7668, 4
      %v7671 = vshll.u32 %v7572, 16
      %v7673 = vrot.slane %v7671, 5
      %v7674 = vsel %vm311, %v7669, %v7673
      %v7675 = vshrl.u32 %v7572, 16
      %v7677 = vrot.slane %v7675, 4
      %v7678 = vor.u32 %v7677, %v7673
      %v7679 = vrot.slane %v7678, 4
      %v7681 = vshll.u32 %v7573, 16
      %v7683 = vrot.slane %v7681, 5
      %v7684 = vsel %vm311, %v7679, %v7683
      %v7686 = vshrl.u32 %v7574, 16
      %v7688 = vrot.slane %v7686, 4
      %v7689 = vshll.u32 %v7574, 16
      %v7691 = vrot.slane %v7689, 5
      %v7692 = vor.u32 %v7688, %v7691
      %v7693 = vrot.slane %v7692, 4
      %v7695 = vshll.u32 %v7575, 16
      %v7697 = vrot.slane %v7695, 5
      %v7698 = vsel %vm311, %v7693, %v7697
      %v7699 = vshrl.u32 %v7575, 16
      %v7701 = vrot.slane %v7699, 4
      %v7702 = vor.u32 %v7701, %v7697
      %v7703 = vrot.slane %v7702, 4
      %v7705 = vshll.u32 %v7576, 16
      %v7707 = vrot.slane %v7705, 5
      %v7708 = vsel %vm311, %v7703, %v7707
      %v7710 = vshrl.u32 %v7577, 16
      %v7712 = vrot.slane %v7710, 4
      %v7713 = vshll.u32 %v7577, 16
      %v7715 = vrot.slane %v7713, 5
      %v7716 = vor.u32 %v7712, %v7715
      %v7717 = vrot.slane %v7716, 4
      %v7719 = vshll.u32 %v7578, 16
      %v7721 = vrot.slane %v7719, 5
      %v7722 = vsel %vm311, %v7717, %v7721
      %v7723 = vshrl.u32 %v7578, 16
      %v7725 = vrot.slane %v7723, 4
      %v7726 = vor.u32 %v7725, %v7721
      %v7727 = vrot.slane %v7726, 4
      %v7729 = vshll.u32 %v7579, 16
      %v7731 = vrot.slane %v7729, 5
      %v7732 = vsel %vm311, %v7727, %v7731
      %v7734 = vshrl.u32 %v7580, 16
      %v7736 = vrot.slane %v7734, 4
      %v7737 = vshll.u32 %v7580, 16
      %v7739 = vrot.slane %v7737, 5
      %v7740 = vor.u32 %v7736, %v7739
      %v7741 = vrot.slane %v7740, 4
      %v7743 = vshll.u32 %v7581, 16
      %v7745 = vrot.slane %v7743, 5
      %v7746 = vsel %vm311, %v7741, %v7745
      %v7747 = vshrl.u32 %v7581, 16
      %v7749 = vrot.slane %v7747, 4
      %v7750 = vor.u32 %v7749, %v7745
      %v7751 = vrot.slane %v7750, 4
      %v7753 = vshll.u32 %v7582, 16
      %v7755 = vrot.slane %v7753, 5
      %v7756 = vsel %vm311, %v7751, %v7755
      %v7758 = vshrl.u32 %v7583, 16
      %v7760 = vrot.slane %v7758, 4
      %v7761 = vshll.u32 %v7583, 16
      %v7763 = vrot.slane %v7761, 5
      %v7764 = vor.u32 %v7760, %v7763
      %v7765 = vrot.slane %v7764, 4
      %v7767 = vshll.u32 %v7584, 16
      %v7769 = vrot.slane %v7767, 5
      %v7770 = vsel %vm311, %v7765, %v7769
      %v7771 = vshrl.u32 %v7584, 16
      %v7773 = vrot.slane %v7771, 4
      %v7774 = vor.u32 %v7773, %v7769
      %v7775 = vrot.slane %v7774, 4
      %v7777 = vshll.u32 %v7585, 16
      %v7779 = vrot.slane %v7777, 5
      %v7780 = vsel %vm311, %v7775, %v7779
      %v7782 = vshrl.u32 %v7586, 16
      %v7784 = vrot.slane %v7782, 4
      %v7785 = vshll.u32 %v7586, 16
      %v7787 = vrot.slane %v7785, 5
      %v7788 = vor.u32 %v7784, %v7787
      %v7789 = vrot.slane %v7788, 4
      %v7791 = vshll.u32 %v7587, 16
      %v7793 = vrot.slane %v7791, 5
      %v7794 = vsel %vm311, %v7789, %v7793
      %v7795 = vshrl.u32 %v7587, 16
      %v7797 = vrot.slane %v7795, 4
      %v7798 = vor.u32 %v7797, %v7793
      %v7799 = vrot.slane %v7798, 4
      %v7801 = vshll.u32 %v7588, 16
      %v7803 = vrot.slane %v7801, 5
      %v7804 = vsel %vm311, %v7799, %v7803
      %v7806 = vshrl.u32 %v7589, 16
      %v7808 = vrot.slane %v7806, 4
      %v7809 = vshll.u32 %v7589, 16
      %v7811 = vrot.slane %v7809, 5
      %v7812 = vor.u32 %v7808, %v7811
      %v7813 = vrot.slane %v7812, 4
      %v7815 = vshll.u32 %v7590, 16
      %v7817 = vrot.slane %v7815, 5
      %v7818 = vsel %vm311, %v7813, %v7817
      %v7819 = vshrl.u32 %v7590, 16
      %v7821 = vrot.slane %v7819, 4
      %v7822 = vor.u32 %v7821, %v7817
      %v7823 = vrot.slane %v7822, 4
      %v7825 = vshll.u32 %v7591, 16
      %v7827 = vrot.slane %v7825, 5
      %v7828 = vsel %vm311, %v7823, %v7827
      %v7830 = vshrl.u32 %v7592, 16
      %v7832 = vrot.slane %v7830, 4
      %v7833 = vshll.u32 %v7592, 16
      %v7835 = vrot.slane %v7833, 5
      %v7836 = vor.u32 %v7832, %v7835
      %v7837 = vrot.slane %v7836, 4
      %v7839 = vshll.u32 %v7593, 16
      %v7841 = vrot.slane %v7839, 5
      %v7842 = vsel %vm311, %v7837, %v7841
      %v7843 = vshrl.u32 %v7593, 16
      %v7845 = vrot.slane %v7843, 4
      %v7846 = vor.u32 %v7845, %v7841
      %v7847 = vrot.slane %v7846, 4
      %v7849 = vshll.u32 %v7594, 16
      %v7851 = vrot.slane %v7849, 5
      %v7852 = vsel %vm311, %v7847, %v7851
      %v7854 = vshrl.u32 %v7595, 16
      %v7856 = vrot.slane %v7854, 4
      %v7857 = vshll.u32 %v7595, 16
      %v7859 = vrot.slane %v7857, 5
      %v7860 = vor.u32 %v7856, %v7859
      %v7861 = vrot.slane %v7860, 4
      %v7863 = vshll.u32 %v7596, 16
      %v7865 = vrot.slane %v7863, 5
      %v7866 = vsel %vm311, %v7861, %v7865
      %v7867 = vshrl.u32 %v7596, 16
      %v7869 = vrot.slane %v7867, 4
      %v7870 = vor.u32 %v7869, %v7865
      %v7871 = vrot.slane %v7870, 4
      %v7873 = vshll.u32 %v7597, 16
      %v7875 = vrot.slane %v7873, 5
      %v7876 = vsel %vm311, %v7871, %v7875
      %v7878 = vshrl.u32 %v7598, 16
      %v7880 = vrot.slane %v7878, 4
      %v7881 = vshll.u32 %v7598, 16
      %v7883 = vrot.slane %v7881, 5
      %v7884 = vor.u32 %v7880, %v7883
      %v7885 = vrot.slane %v7884, 4
      %v7887 = vshll.u32 %v7599, 16
      %v7889 = vrot.slane %v7887, 5
      %v7890 = vsel %vm311, %v7885, %v7889
      %v7891 = vshrl.u32 %v7599, 16
      %v7893 = vrot.slane %v7891, 4
      %v7894 = vor.u32 %v7893, %v7889
      %v7895 = vrot.slane %v7894, 4
      %v7897 = vshll.u32 %v7600, 16
      %v7899 = vrot.slane %v7897, 5
      %v7900 = vsel %vm311, %v7895, %v7899
      %v7902 = vshrl.u32 %v7601, 16
      %v7904 = vrot.slane %v7902, 4
      %v7905 = vshll.u32 %v7601, 16
      %v7907 = vrot.slane %v7905, 5
      %v7908 = vor.u32 %v7904, %v7907
      %v7909 = vrot.slane %v7908, 4
      %v7911 = vshll.u32 %v7602, 16
      %v7913 = vrot.slane %v7911, 5
      %v7914 = vsel %vm311, %v7909, %v7913
      %v7915 = vshrl.u32 %v7602, 16
      %v7917 = vrot.slane %v7915, 4
      %v7918 = vor.u32 %v7917, %v7913
      %v7919 = vrot.slane %v7918, 4
      %v7921 = vshll.u32 %v7603, 16
      %v7923 = vrot.slane %v7921, 5
      %v7924 = vsel %vm311, %v7919, %v7923
      %v7926 = vshrl.u32 %v7604, 16
      %v7928 = vrot.slane %v7926, 4
      %v7929 = vshll.u32 %v7604, 16
      %v7931 = vrot.slane %v7929, 5
      %v7932 = vor.u32 %v7928, %v7931
      %v7933 = vrot.slane %v7932, 4
      %v7935 = vshll.u32 %v7605, 16
      %v7937 = vrot.slane %v7935, 5
      %v7938 = vsel %vm311, %v7933, %v7937
      %v7939 = vshrl.u32 %v7605, 16
      %v7941 = vrot.slane %v7939, 4
      %v7942 = vor.u32 %v7941, %v7937
      %v7943 = vrot.slane %v7942, 4
      %v7945 = vshll.u32 %v7606, 16
      %v7947 = vrot.slane %v7945, 5
      %v7948 = vsel %vm311, %v7943, %v7947
      %v7950 = vshrl.u32 %v7607, 16
      %v7952 = vrot.slane %v7950, 4
      %v7953 = vshll.u32 %v7607, 16
      %v7955 = vrot.slane %v7953, 5
      %v7956 = vor.u32 %v7952, %v7955
      %v7957 = vrot.slane %v7956, 4
      %v7959 = vshll.u32 %v7608, 16
      %v7961 = vrot.slane %v7959, 5
      %v7962 = vsel %vm311, %v7957, %v7961
      %v7963 = vshrl.u32 %v7608, 16
      %v7965 = vrot.slane %v7963, 4
      %v7966 = vor.u32 %v7965, %v7961
      %v7967 = vrot.slane %v7966, 4
      %v7969 = vshll.u32 %v7609, 16
      %v7971 = vrot.slane %v7969, 5
      %v7972 = vsel %vm311, %v7967, %v7971
      %v7974 = vshrl.u32 %v7610, 16
      %v7976 = vrot.slane %v7974, 4
      %v7977 = vshll.u32 %v7610, 16
      %v7979 = vrot.slane %v7977, 5
      %v7980 = vor.u32 %v7976, %v7979
      %v7981 = vrot.slane %v7980, 4
      %v7983 = vshll.u32 %v7611, 16
      %v7985 = vrot.slane %v7983, 5
      %v7986 = vsel %vm311, %v7981, %v7985
      %v7987 = vshrl.u32 %v7611, 16
      %v7989 = vrot.slane %v7987, 4
      %v7990 = vor.u32 %v7989, %v7985
      %v7991 = vrot.slane %v7990, 4
      %v7993 = vshll.u32 %v7612, 16
      %v7995 = vrot.slane %v7993, 5
      %v7996 = vsel %vm311, %v7991, %v7995
      %s7997 = scalar_lea.vmem %s3, 448
      %v7998 = vld [vmem:[%s7997] sm:$0xf]
      %v7999 = vld [vmem:[%s7997 + $0x4] sm:$0xf]
      %v8000 = vld [vmem:[%s7997 + $0x8] sm:$0xf]
      %v8001 = vld [vmem:[%s7997 + $0xc] sm:$0xf]
      %v8002 = vld [vmem:[%s7997 + $0x10] sm:$0xf]
      %v8003 = vld [vmem:[%s7997 + $0x14] sm:$0xf]
      %v8004 = vld [vmem:[%s7997 + $0x18] sm:$0xf]
      %v8005 = vld [vmem:[%s7997 + $0x1c] sm:$0xf]
      %v8006 = vld [vmem:[%s7997 + $0x20] sm:$0xf]
      %v8007 = vld [vmem:[%s7997 + $0x24] sm:$0xf]
      %v8008 = vld [vmem:[%s7997 + $0x28] sm:$0xf]
      %v8009 = vld [vmem:[%s7997 + $0x2c] sm:$0xf]
      %v8010 = vld [vmem:[%s7997 + $0x30] sm:$0xf]
      %v8011 = vld [vmem:[%s7997 + $0x34] sm:$0xf]
      %v8012 = vld [vmem:[%s7997 + $0x38] sm:$0xf]
      %v8013 = vld [vmem:[%s7997 + $0x3c] sm:$0xf]
      %v8014 = vunpack.c.l.b16 %v7626
      %v8015 = vunpack.c.l.b16 %v7636
      %v8016 = vunpack.c.l.b16 %v7650
      %v8017 = vunpack.c.l.b16 %v7660
      %v8018 = vunpack.c.l.b16 %v7674
      %v8019 = vunpack.c.l.b16 %v7684
      %v8020 = vunpack.c.l.b16 %v7698
      %v8021 = vunpack.c.l.b16 %v7708
      %v8022 = vunpack.c.l.b16 %v7722
      %v8023 = vunpack.c.l.b16 %v7732
      %v8024 = vunpack.c.l.b16 %v7746
      %v8025 = vunpack.c.l.b16 %v7756
      %v8026 = vunpack.c.l.b16 %v7770
      %v8027 = vunpack.c.l.b16 %v7780
      %v8028 = vunpack.c.l.b16 %v7794
      %v8029 = vunpack.c.l.b16 %v7804
      %v8030 = vunpack.c.l.b16 %v7818
      %v8031 = vunpack.c.l.b16 %v7828
      %v8032 = vunpack.c.l.b16 %v7842
      %v8033 = vunpack.c.l.b16 %v7852
      %v8034 = vunpack.c.l.b16 %v7866
      %v8035 = vunpack.c.l.b16 %v7876
      %v8036 = vunpack.c.l.b16 %v7890
      %v8037 = vunpack.c.l.b16 %v7900
      %v8038 = vunpack.c.l.b16 %v7914
      %v8039 = vunpack.c.l.b16 %v7924
      %v8040 = vunpack.c.l.b16 %v7938
      %v8041 = vunpack.c.l.b16 %v7948
      %v8042 = vunpack.c.l.b16 %v7962
      %v8043 = vunpack.c.l.b16 %v7972
      %v8044 = vunpack.c.l.b16 %v7986
      %v8045 = vunpack.c.l.b16 %v7996
      %v8046 = vpack.c.b16 %v8015, %v8014
      %v8047 = vpack.c.b16 %v8017, %v8016
      %v8048 = vpack.c.b16 %v8019, %v8018
      %v8049 = vpack.c.b16 %v8021, %v8020
      %v8050 = vpack.c.b16 %v8023, %v8022
      %v8051 = vpack.c.b16 %v8025, %v8024
      %v8052 = vpack.c.b16 %v8027, %v8026
      %v8053 = vpack.c.b16 %v8029, %v8028
      %v8054 = vpack.c.b16 %v8031, %v8030
      %v8055 = vpack.c.b16 %v8033, %v8032
      %v8056 = vpack.c.b16 %v8035, %v8034
      %v8057 = vpack.c.b16 %v8037, %v8036
      %v8058 = vpack.c.b16 %v8039, %v8038
      %v8059 = vpack.c.b16 %v8041, %v8040
      %v8060 = vpack.c.b16 %v8043, %v8042
      %v8061 = vpack.c.b16 %v8045, %v8044
      %v8094 = vunpack.c.l.b16 %v7998
      %v8095 = vunpack.c.l.b16 %v7999
      %v8096 = vunpack.c.l.b16 %v8000
      %v8097 = vunpack.c.l.b16 %v8001
      %v8098 = vunpack.c.l.b16 %v8002
      %v8099 = vunpack.c.l.b16 %v8003
      %v8100 = vunpack.c.l.b16 %v8004
      %v8101 = vunpack.c.l.b16 %v8005
      %v8102 = vunpack.c.l.b16 %v8006
      %v8103 = vunpack.c.l.b16 %v8007
      %v8104 = vunpack.c.l.b16 %v8008
      %v8105 = vunpack.c.l.b16 %v8009
      %v8106 = vunpack.c.l.b16 %v8010
      %v8107 = vunpack.c.l.b16 %v8011
      %v8108 = vunpack.c.l.b16 %v8012
      %v8109 = vunpack.c.l.b16 %v8013
      %v8110 = vpack.c.b16 %v8095, %v8094
      %v8111 = vpack.c.b16 %v8097, %v8096
      %v8112 = vpack.c.b16 %v8099, %v8098
      %v8113 = vpack.c.b16 %v8101, %v8100
      %v8114 = vpack.c.b16 %v8103, %v8102
      %v8115 = vpack.c.b16 %v8105, %v8104
      %v8116 = vpack.c.b16 %v8107, %v8106
      %v8117 = vpack.c.b16 %v8109, %v8108
      %8126 = vmatpush.bf16.msra.mxu0 %v8117
      %8127 = vmatpush.bf16.msra.mxu0 %v8116
      %8128 = vmatpush.bf16.msra.mxu0 %v8115
      %8129 = vmatpush.bf16.msra.mxu0 %v8114
      %8130 = vmatpush.bf16.msra.mxu0 %v8113
      %8131 = vmatpush.bf16.msra.mxu0 %v8112
      %8132 = vmatpush.bf16.msra.mxu0 %v8111
      %8133 = vmatpush.bf16.msra.mxu0 %v8110
      %8134 = vmatmul.bf16.gmra.mxu0 %v8046
      %v8135 = vpop.f32.mrf.mxu0
      %v8136 = vadd.f32 0.0, %v8135
      %v8137 = vpop.f32.mrf.mxu0
      %v8138 = vadd.f32 0.0, %v8137
      %8139 = vmatmul.bf16.gmra.mxu0 %v8047
      %v8140 = vpop.f32.mrf.mxu0
      %v8141 = vadd.f32 0.0, %v8140
      %v8142 = vpop.f32.mrf.mxu0
      %v8143 = vadd.f32 0.0, %v8142
      %8144 = vmatmul.bf16.gmra.mxu0 %v8048
      %v8145 = vpop.f32.mrf.mxu0
      %v8146 = vadd.f32 0.0, %v8145
      %v8147 = vpop.f32.mrf.mxu0
      %v8148 = vadd.f32 0.0, %v8147
      %8149 = vmatmul.bf16.gmra.mxu0 %v8049
      %v8150 = vpop.f32.mrf.mxu0
      %v8151 = vadd.f32 0.0, %v8150
      %v8152 = vpop.f32.mrf.mxu0
      %v8153 = vadd.f32 0.0, %v8152
      %8154 = vmatmul.bf16.gmra.mxu0 %v8050
      %v8155 = vpop.f32.mrf.mxu0
      %v8156 = vadd.f32 0.0, %v8155
      %v8157 = vpop.f32.mrf.mxu0
      %v8158 = vadd.f32 0.0, %v8157
      %8159 = vmatmul.bf16.gmra.mxu0 %v8051
      %v8160 = vpop.f32.mrf.mxu0
      %v8161 = vadd.f32 0.0, %v8160
      %v8162 = vpop.f32.mrf.mxu0
      %v8163 = vadd.f32 0.0, %v8162
      %8164 = vmatmul.bf16.gmra.mxu0 %v8052
      %v8165 = vpop.f32.mrf.mxu0
      %v8166 = vadd.f32 0.0, %v8165
      %v8167 = vpop.f32.mrf.mxu0
      %v8168 = vadd.f32 0.0, %v8167
      %8169 = vmatmul.bf16.gmra.mxu0 %v8053
      %v8170 = vpop.f32.mrf.mxu0
      %v8171 = vadd.f32 0.0, %v8170
      %v8172 = vpop.f32.mrf.mxu0
      %v8173 = vadd.f32 0.0, %v8172
      %8174 = vmatmul.bf16.gmra.mxu0 %v8054
      %v8175 = vpop.f32.mrf.mxu0
      %v8176 = vadd.f32 0.0, %v8175
      %v8177 = vpop.f32.mrf.mxu0
      %v8178 = vadd.f32 0.0, %v8177
      %8179 = vmatmul.bf16.gmra.mxu0 %v8055
      %v8180 = vpop.f32.mrf.mxu0
      %v8181 = vadd.f32 0.0, %v8180
      %v8182 = vpop.f32.mrf.mxu0
      %v8183 = vadd.f32 0.0, %v8182
      %8184 = vmatmul.bf16.gmra.mxu0 %v8056
      %v8185 = vpop.f32.mrf.mxu0
      %v8186 = vadd.f32 0.0, %v8185
      %v8187 = vpop.f32.mrf.mxu0
      %v8188 = vadd.f32 0.0, %v8187
      %8189 = vmatmul.bf16.gmra.mxu0 %v8057
      %v8190 = vpop.f32.mrf.mxu0
      %v8191 = vadd.f32 0.0, %v8190
      %v8192 = vpop.f32.mrf.mxu0
      %v8193 = vadd.f32 0.0, %v8192
      %8194 = vmatmul.bf16.gmra.mxu0 %v8058
      %v8195 = vpop.f32.mrf.mxu0
      %v8196 = vadd.f32 0.0, %v8195
      %v8197 = vpop.f32.mrf.mxu0
      %v8198 = vadd.f32 0.0, %v8197
      %8199 = vmatmul.bf16.gmra.mxu0 %v8059
      %v8200 = vpop.f32.mrf.mxu0
      %v8201 = vadd.f32 0.0, %v8200
      %v8202 = vpop.f32.mrf.mxu0
      %v8203 = vadd.f32 0.0, %v8202
      %8204 = vmatmul.bf16.gmra.mxu0 %v8060
      %v8205 = vpop.f32.mrf.mxu0
      %v8206 = vadd.f32 0.0, %v8205
      %v8207 = vpop.f32.mrf.mxu0
      %v8208 = vadd.f32 0.0, %v8207
      %8209 = vmatmul.bf16.gmra.mxu0 %v8061
      %v8210 = vpop.f32.mrf.mxu0
      %v8211 = vadd.f32 0.0, %v8210
      %v8212 = vpop.f32.mrf.mxu0
      %v8213 = vadd.f32 0.0, %v8212
      %8214 = vdwg.mxu0
      %v8215 = vadd.f32 %v7533, %v8136
      %v8216 = vadd.f32 %v7534, %v8138
      %v8217 = vadd.f32 %v7535, %v8141
      %v8218 = vadd.f32 %v7536, %v8143
      %v8219 = vadd.f32 %v7537, %v8146
      %v8220 = vadd.f32 %v7538, %v8148
      %v8221 = vadd.f32 %v7539, %v8151
      %v8222 = vadd.f32 %v7540, %v8153
      %v8223 = vadd.f32 %v7541, %v8156
      %v8224 = vadd.f32 %v7542, %v8158
      %v8225 = vadd.f32 %v7543, %v8161
      %v8226 = vadd.f32 %v7544, %v8163
      %v8227 = vadd.f32 %v7545, %v8166
      %v8228 = vadd.f32 %v7546, %v8168
      %v8229 = vadd.f32 %v7547, %v8171
      %v8230 = vadd.f32 %v7548, %v8173
      %v8231 = vadd.f32 %v7549, %v8176
      %v8232 = vadd.f32 %v7550, %v8178
      %v8233 = vadd.f32 %v7551, %v8181
      %v8234 = vadd.f32 %v7552, %v8183
      %v8235 = vadd.f32 %v7553, %v8186
      %v8236 = vadd.f32 %v7554, %v8188
      %v8237 = vadd.f32 %v7555, %v8191
      %v8238 = vadd.f32 %v7556, %v8193
      %v8239 = vadd.f32 %v7557, %v8196
      %v8240 = vadd.f32 %v7558, %v8198
      %v8241 = vadd.f32 %v7559, %v8201
      %v8242 = vadd.f32 %v7560, %v8203
      %v8243 = vadd.f32 %v7561, %v8206
      %v8244 = vadd.f32 %v7562, %v8208
      %v8245 = vadd.f32 %v7563, %v8211
      %v8246 = vadd.f32 %v7564, %v8213
      %v8247 = vld [vmem:[%s7250] sm:$0xe]
      %v8248 = vld [vmem:[%s7250 + $0xc] sm:$0xe]
      %v8249 = vld [vmem:[%s7250 + $0x18] sm:$0xe]
      %v8250 = vld [vmem:[%s7250 + $0x24] sm:$0xe]
      %v8251 = vld [vmem:[%s7250 + $0x30] sm:$0xe]
      %v8252 = vld [vmem:[%s7250 + $0x3c] sm:$0xe]
      %v8253 = vld [vmem:[%s7250 + $0x48] sm:$0xe]
      %v8254 = vld [vmem:[%s7250 + $0x54] sm:$0xe]
      %v8255 = vld [vmem:[%s7250 + $0x60] sm:$0xe]
      %v8256 = vld [vmem:[%s7250 + $0x6c] sm:$0xe]
      %v8257 = vld [vmem:[%s7250 + $0x78] sm:$0xe]
      %v8258 = vld [vmem:[%s7250 + $0x84] sm:$0xe]
      %v8259 = vld [vmem:[%s7250 + $0x90] sm:$0xe]
      %v8260 = vld [vmem:[%s7250 + $0x9c] sm:$0xe]
      %v8261 = vld [vmem:[%s7250 + $0xa8] sm:$0xe]
      %v8262 = vld [vmem:[%s7250 + $0xb4] sm:$0xe]
      %v8311 = vrot.slane %v8247, 5
      %v8312 = vrot.slane %v8311, 4
      %v8313 = vrot.slane %v7566, 5
      %v8314 = vsel %vm1197, %v8312, %v8313
      %v8315 = vrot.slane %v8313, 4
      %v8316 = vrot.slane %v7567, 5
      %v8317 = vsel %vm1197, %v8315, %v8316
      %v8318 = vrot.slane %v8248, 5
      %v8319 = vrot.slane %v8318, 4
      %v8320 = vrot.slane %v7569, 5
      %v8321 = vsel %vm1197, %v8319, %v8320
      %v8322 = vrot.slane %v8320, 4
      %v8323 = vrot.slane %v7570, 5
      %v8324 = vsel %vm1197, %v8322, %v8323
      %v8325 = vrot.slane %v8249, 5
      %v8326 = vrot.slane %v8325, 4
      %v8327 = vrot.slane %v7572, 5
      %v8328 = vsel %vm1197, %v8326, %v8327
      %v8329 = vrot.slane %v8327, 4
      %v8330 = vrot.slane %v7573, 5
      %v8331 = vsel %vm1197, %v8329, %v8330
      %v8332 = vrot.slane %v8250, 5
      %v8333 = vrot.slane %v8332, 4
      %v8334 = vrot.slane %v7575, 5
      %v8335 = vsel %vm1197, %v8333, %v8334
      %v8336 = vrot.slane %v8334, 4
      %v8337 = vrot.slane %v7576, 5
      %v8338 = vsel %vm1197, %v8336, %v8337
      %v8339 = vrot.slane %v8251, 5
      %v8340 = vrot.slane %v8339, 4
      %v8341 = vrot.slane %v7578, 5
      %v8342 = vsel %vm1197, %v8340, %v8341
      %v8343 = vrot.slane %v8341, 4
      %v8344 = vrot.slane %v7579, 5
      %v8345 = vsel %vm1197, %v8343, %v8344
      %v8346 = vrot.slane %v8252, 5
      %v8347 = vrot.slane %v8346, 4
      %v8348 = vrot.slane %v7581, 5
      %v8349 = vsel %vm1197, %v8347, %v8348
      %v8350 = vrot.slane %v8348, 4
      %v8351 = vrot.slane %v7582, 5
      %v8352 = vsel %vm1197, %v8350, %v8351
      %v8353 = vrot.slane %v8253, 5
      %v8354 = vrot.slane %v8353, 4
      %v8355 = vrot.slane %v7584, 5
      %v8356 = vsel %vm1197, %v8354, %v8355
      %v8357 = vrot.slane %v8355, 4
      %v8358 = vrot.slane %v7585, 5
      %v8359 = vsel %vm1197, %v8357, %v8358
      %v8360 = vrot.slane %v8254, 5
      %v8361 = vrot.slane %v8360, 4
      %v8362 = vrot.slane %v7587, 5
      %v8363 = vsel %vm1197, %v8361, %v8362
      %v8364 = vrot.slane %v8362, 4
      %v8365 = vrot.slane %v7588, 5
      %v8366 = vsel %vm1197, %v8364, %v8365
      %v8367 = vrot.slane %v8255, 5
      %v8368 = vrot.slane %v8367, 4
      %v8369 = vrot.slane %v7590, 5
      %v8370 = vsel %vm1197, %v8368, %v8369
      %v8371 = vrot.slane %v8369, 4
      %v8372 = vrot.slane %v7591, 5
      %v8373 = vsel %vm1197, %v8371, %v8372
      %v8374 = vrot.slane %v8256, 5
      %v8375 = vrot.slane %v8374, 4
      %v8376 = vrot.slane %v7593, 5
      %v8377 = vsel %vm1197, %v8375, %v8376
      %v8378 = vrot.slane %v8376, 4
      %v8379 = vrot.slane %v7594, 5
      %v8380 = vsel %vm1197, %v8378, %v8379
      %v8381 = vrot.slane %v8257, 5
      %v8382 = vrot.slane %v8381, 4
      %v8383 = vrot.slane %v7596, 5
      %v8384 = vsel %vm1197, %v8382, %v8383
      %v8385 = vrot.slane %v8383, 4
      %v8386 = vrot.slane %v7597, 5
      %v8387 = vsel %vm1197, %v8385, %v8386
      %v8388 = vrot.slane %v8258, 5
      %v8389 = vrot.slane %v8388, 4
      %v8390 = vrot.slane %v7599, 5
      %v8391 = vsel %vm1197, %v8389, %v8390
      %v8392 = vrot.slane %v8390, 4
      %v8393 = vrot.slane %v7600, 5
      %v8394 = vsel %vm1197, %v8392, %v8393
      %v8395 = vrot.slane %v8259, 5
      %v8396 = vrot.slane %v8395, 4
      %v8397 = vrot.slane %v7602, 5
      %v8398 = vsel %vm1197, %v8396, %v8397
      %v8399 = vrot.slane %v8397, 4
      %v8400 = vrot.slane %v7603, 5
      %v8401 = vsel %vm1197, %v8399, %v8400
      %v8402 = vrot.slane %v8260, 5
      %v8403 = vrot.slane %v8402, 4
      %v8404 = vrot.slane %v7605, 5
      %v8405 = vsel %vm1197, %v8403, %v8404
      %v8406 = vrot.slane %v8404, 4
      %v8407 = vrot.slane %v7606, 5
      %v8408 = vsel %vm1197, %v8406, %v8407
      %v8409 = vrot.slane %v8261, 5
      %v8410 = vrot.slane %v8409, 4
      %v8411 = vrot.slane %v7608, 5
      %v8412 = vsel %vm1197, %v8410, %v8411
      %v8413 = vrot.slane %v8411, 4
      %v8414 = vrot.slane %v7609, 5
      %v8415 = vsel %vm1197, %v8413, %v8414
      %v8416 = vrot.slane %v8262, 5
      %v8417 = vrot.slane %v8416, 4
      %v8418 = vrot.slane %v7611, 5
      %v8419 = vsel %vm1197, %v8417, %v8418
      %v8420 = vrot.slane %v8418, 4
      %v8421 = vrot.slane %v7612, 5
      %v8422 = vsel %vm1197, %v8420, %v8421
      %s8423 = scalar_lea.vmem %s3, 512
      %v8424 = vld [vmem:[%s8423] sm:$0xf]
      %v8425 = vld [vmem:[%s8423 + $0x4] sm:$0xf]
      %v8426 = vld [vmem:[%s8423 + $0x8] sm:$0xf]
      %v8427 = vld [vmem:[%s8423 + $0xc] sm:$0xf]
      %v8428 = vld [vmem:[%s8423 + $0x10] sm:$0xf]
      %v8429 = vld [vmem:[%s8423 + $0x14] sm:$0xf]
      %v8430 = vld [vmem:[%s8423 + $0x18] sm:$0xf]
      %v8431 = vld [vmem:[%s8423 + $0x1c] sm:$0xf]
      %v8432 = vld [vmem:[%s8423 + $0x20] sm:$0xf]
      %v8433 = vld [vmem:[%s8423 + $0x24] sm:$0xf]
      %v8434 = vld [vmem:[%s8423 + $0x28] sm:$0xf]
      %v8435 = vld [vmem:[%s8423 + $0x2c] sm:$0xf]
      %v8436 = vld [vmem:[%s8423 + $0x30] sm:$0xf]
      %v8437 = vld [vmem:[%s8423 + $0x34] sm:$0xf]
      %v8438 = vld [vmem:[%s8423 + $0x38] sm:$0xf]
      %v8439 = vld [vmem:[%s8423 + $0x3c] sm:$0xf]
      %v8440 = vunpack.c.l.b16 %v8314
      %v8441 = vunpack.c.l.b16 %v8317
      %v8442 = vunpack.c.l.b16 %v8321
      %v8443 = vunpack.c.l.b16 %v8324
      %v8444 = vunpack.c.l.b16 %v8328
      %v8445 = vunpack.c.l.b16 %v8331
      %v8446 = vunpack.c.l.b16 %v8335
      %v8447 = vunpack.c.l.b16 %v8338
      %v8448 = vunpack.c.l.b16 %v8342
      %v8449 = vunpack.c.l.b16 %v8345
      %v8450 = vunpack.c.l.b16 %v8349
      %v8451 = vunpack.c.l.b16 %v8352
      %v8452 = vunpack.c.l.b16 %v8356
      %v8453 = vunpack.c.l.b16 %v8359
      %v8454 = vunpack.c.l.b16 %v8363
      %v8455 = vunpack.c.l.b16 %v8366
      %v8456 = vunpack.c.l.b16 %v8370
      %v8457 = vunpack.c.l.b16 %v8373
      %v8458 = vunpack.c.l.b16 %v8377
      %v8459 = vunpack.c.l.b16 %v8380
      %v8460 = vunpack.c.l.b16 %v8384
      %v8461 = vunpack.c.l.b16 %v8387
      %v8462 = vunpack.c.l.b16 %v8391
      %v8463 = vunpack.c.l.b16 %v8394
      %v8464 = vunpack.c.l.b16 %v8398
      %v8465 = vunpack.c.l.b16 %v8401
      %v8466 = vunpack.c.l.b16 %v8405
      %v8467 = vunpack.c.l.b16 %v8408
      %v8468 = vunpack.c.l.b16 %v8412
      %v8469 = vunpack.c.l.b16 %v8415
      %v8470 = vunpack.c.l.b16 %v8419
      %v8471 = vunpack.c.l.b16 %v8422
      %v8472 = vpack.c.b16 %v8441, %v8440
      %v8473 = vpack.c.b16 %v8443, %v8442
      %v8474 = vpack.c.b16 %v8445, %v8444
      %v8475 = vpack.c.b16 %v8447, %v8446
      %v8476 = vpack.c.b16 %v8449, %v8448
      %v8477 = vpack.c.b16 %v8451, %v8450
      %v8478 = vpack.c.b16 %v8453, %v8452
      %v8479 = vpack.c.b16 %v8455, %v8454
      %v8480 = vpack.c.b16 %v8457, %v8456
      %v8481 = vpack.c.b16 %v8459, %v8458
      %v8482 = vpack.c.b16 %v8461, %v8460
      %v8483 = vpack.c.b16 %v8463, %v8462
      %v8484 = vpack.c.b16 %v8465, %v8464
      %v8485 = vpack.c.b16 %v8467, %v8466
      %v8486 = vpack.c.b16 %v8469, %v8468
      %v8487 = vpack.c.b16 %v8471, %v8470
      %v8520 = vunpack.c.l.b16 %v8424
      %v8521 = vunpack.c.l.b16 %v8425
      %v8522 = vunpack.c.l.b16 %v8426
      %v8523 = vunpack.c.l.b16 %v8427
      %v8524 = vunpack.c.l.b16 %v8428
      %v8525 = vunpack.c.l.b16 %v8429
      %v8526 = vunpack.c.l.b16 %v8430
      %v8527 = vunpack.c.l.b16 %v8431
      %v8528 = vunpack.c.l.b16 %v8432
      %v8529 = vunpack.c.l.b16 %v8433
      %v8530 = vunpack.c.l.b16 %v8434
      %v8531 = vunpack.c.l.b16 %v8435
      %v8532 = vunpack.c.l.b16 %v8436
      %v8533 = vunpack.c.l.b16 %v8437
      %v8534 = vunpack.c.l.b16 %v8438
      %v8535 = vunpack.c.l.b16 %v8439
      %v8536 = vpack.c.b16 %v8521, %v8520
      %v8537 = vpack.c.b16 %v8523, %v8522
      %v8538 = vpack.c.b16 %v8525, %v8524
      %v8539 = vpack.c.b16 %v8527, %v8526
      %v8540 = vpack.c.b16 %v8529, %v8528
      %v8541 = vpack.c.b16 %v8531, %v8530
      %v8542 = vpack.c.b16 %v8533, %v8532
      %v8543 = vpack.c.b16 %v8535, %v8534
      %8552 = vmatpush.bf16.msra.mxu0 %v8543
      %8553 = vmatpush.bf16.msra.mxu0 %v8542
      %8554 = vmatpush.bf16.msra.mxu0 %v8541
      %8555 = vmatpush.bf16.msra.mxu0 %v8540
      %8556 = vmatpush.bf16.msra.mxu0 %v8539
      %8557 = vmatpush.bf16.msra.mxu0 %v8538
      %8558 = vmatpush.bf16.msra.mxu0 %v8537
      %8559 = vmatpush.bf16.msra.mxu0 %v8536
      %8560 = vmatmul.bf16.gmra.mxu0 %v8472
      %v8561 = vpop.f32.mrf.mxu0
      %v8562 = vadd.f32 0.0, %v8561
      %v8563 = vpop.f32.mrf.mxu0
      %v8564 = vadd.f32 0.0, %v8563
      %8565 = vmatmul.bf16.gmra.mxu0 %v8473
      %v8566 = vpop.f32.mrf.mxu0
      %v8567 = vadd.f32 0.0, %v8566
      %v8568 = vpop.f32.mrf.mxu0
      %v8569 = vadd.f32 0.0, %v8568
      %8570 = vmatmul.bf16.gmra.mxu0 %v8474
      %v8571 = vpop.f32.mrf.mxu0
      %v8572 = vadd.f32 0.0, %v8571
      %v8573 = vpop.f32.mrf.mxu0
      %v8574 = vadd.f32 0.0, %v8573
      %8575 = vmatmul.bf16.gmra.mxu0 %v8475
      %v8576 = vpop.f32.mrf.mxu0
      %v8577 = vadd.f32 0.0, %v8576
      %v8578 = vpop.f32.mrf.mxu0
      %v8579 = vadd.f32 0.0, %v8578
      %8580 = vmatmul.bf16.gmra.mxu0 %v8476
      %v8581 = vpop.f32.mrf.mxu0
      %v8582 = vadd.f32 0.0, %v8581
      %v8583 = vpop.f32.mrf.mxu0
      %v8584 = vadd.f32 0.0, %v8583
      %8585 = vmatmul.bf16.gmra.mxu0 %v8477
      %v8586 = vpop.f32.mrf.mxu0
      %v8587 = vadd.f32 0.0, %v8586
      %v8588 = vpop.f32.mrf.mxu0
      %v8589 = vadd.f32 0.0, %v8588
      %8590 = vmatmul.bf16.gmra.mxu0 %v8478
      %v8591 = vpop.f32.mrf.mxu0
      %v8592 = vadd.f32 0.0, %v8591
      %v8593 = vpop.f32.mrf.mxu0
      %v8594 = vadd.f32 0.0, %v8593
      %8595 = vmatmul.bf16.gmra.mxu0 %v8479
      %v8596 = vpop.f32.mrf.mxu0
      %v8597 = vadd.f32 0.0, %v8596
      %v8598 = vpop.f32.mrf.mxu0
      %v8599 = vadd.f32 0.0, %v8598
      %8600 = vmatmul.bf16.gmra.mxu0 %v8480
      %v8601 = vpop.f32.mrf.mxu0
      %v8602 = vadd.f32 0.0, %v8601
      %v8603 = vpop.f32.mrf.mxu0
      %v8604 = vadd.f32 0.0, %v8603
      %8605 = vmatmul.bf16.gmra.mxu0 %v8481
      %v8606 = vpop.f32.mrf.mxu0
      %v8607 = vadd.f32 0.0, %v8606
      %v8608 = vpop.f32.mrf.mxu0
      %v8609 = vadd.f32 0.0, %v8608
      %8610 = vmatmul.bf16.gmra.mxu0 %v8482
      %v8611 = vpop.f32.mrf.mxu0
      %v8612 = vadd.f32 0.0, %v8611
      %v8613 = vpop.f32.mrf.mxu0
      %v8614 = vadd.f32 0.0, %v8613
      %8615 = vmatmul.bf16.gmra.mxu0 %v8483
      %v8616 = vpop.f32.mrf.mxu0
      %v8617 = vadd.f32 0.0, %v8616
      %v8618 = vpop.f32.mrf.mxu0
      %v8619 = vadd.f32 0.0, %v8618
      %8620 = vmatmul.bf16.gmra.mxu0 %v8484
      %v8621 = vpop.f32.mrf.mxu0
      %v8622 = vadd.f32 0.0, %v8621
      %v8623 = vpop.f32.mrf.mxu0
      %v8624 = vadd.f32 0.0, %v8623
      %8625 = vmatmul.bf16.gmra.mxu0 %v8485
      %v8626 = vpop.f32.mrf.mxu0
      %v8627 = vadd.f32 0.0, %v8626
      %v8628 = vpop.f32.mrf.mxu0
      %v8629 = vadd.f32 0.0, %v8628
      %8630 = vmatmul.bf16.gmra.mxu0 %v8486
      %v8631 = vpop.f32.mrf.mxu0
      %v8632 = vadd.f32 0.0, %v8631
      %v8633 = vpop.f32.mrf.mxu0
      %v8634 = vadd.f32 0.0, %v8633
      %8635 = vmatmul.bf16.gmra.mxu0 %v8487
      %v8636 = vpop.f32.mrf.mxu0
      %v8637 = vadd.f32 0.0, %v8636
      %v8638 = vpop.f32.mrf.mxu0
      %v8639 = vadd.f32 0.0, %v8638
      %8640 = vdwg.mxu0
      %v8641 = vadd.f32 %v8215, %v8562
      %v8642 = vadd.f32 %v8216, %v8564
      %v8643 = vadd.f32 %v8217, %v8567
      %v8644 = vadd.f32 %v8218, %v8569
      %v8645 = vadd.f32 %v8219, %v8572
      %v8646 = vadd.f32 %v8220, %v8574
      %v8647 = vadd.f32 %v8221, %v8577
      %v8648 = vadd.f32 %v8222, %v8579
      %v8649 = vadd.f32 %v8223, %v8582
      %v8650 = vadd.f32 %v8224, %v8584
      %v8651 = vadd.f32 %v8225, %v8587
      %v8652 = vadd.f32 %v8226, %v8589
      %v8653 = vadd.f32 %v8227, %v8592
      %v8654 = vadd.f32 %v8228, %v8594
      %v8655 = vadd.f32 %v8229, %v8597
      %v8656 = vadd.f32 %v8230, %v8599
      %v8657 = vadd.f32 %v8231, %v8602
      %v8658 = vadd.f32 %v8232, %v8604
      %v8659 = vadd.f32 %v8233, %v8607
      %v8660 = vadd.f32 %v8234, %v8609
      %v8661 = vadd.f32 %v8235, %v8612
      %v8662 = vadd.f32 %v8236, %v8614
      %v8663 = vadd.f32 %v8237, %v8617
      %v8664 = vadd.f32 %v8238, %v8619
      %v8665 = vadd.f32 %v8239, %v8622
      %v8666 = vadd.f32 %v8240, %v8624
      %v8667 = vadd.f32 %v8241, %v8627
      %v8668 = vadd.f32 %v8242, %v8629
      %v8669 = vadd.f32 %v8243, %v8632
      %v8670 = vadd.f32 %v8244, %v8634
      %v8671 = vadd.f32 %v8245, %v8637
      %v8672 = vadd.f32 %v8246, %v8639
      %v8673 = vld [vmem:[%s4] sm:$0x1]
      %v8675 = vperm.slane %v8673, 0
      %v8677 = vadd.f32 %v8641, %v8675
      %v8678 = vadd.f32 %v8642, %v8675
      %v8679 = vadd.f32 %v8643, %v8675
      %v8680 = vadd.f32 %v8644, %v8675
      %v8681 = vadd.f32 %v8645, %v8675
      %v8682 = vadd.f32 %v8646, %v8675
      %v8683 = vadd.f32 %v8647, %v8675
      %v8684 = vadd.f32 %v8648, %v8675
      %v8685 = vadd.f32 %v8649, %v8675
      %v8686 = vadd.f32 %v8650, %v8675
      %v8687 = vadd.f32 %v8651, %v8675
      %v8688 = vadd.f32 %v8652, %v8675
      %v8689 = vadd.f32 %v8653, %v8675
      %v8690 = vadd.f32 %v8654, %v8675
      %v8691 = vadd.f32 %v8655, %v8675
      %v8692 = vadd.f32 %v8656, %v8675
      %v8693 = vadd.f32 %v8657, %v8675
      %v8694 = vadd.f32 %v8658, %v8675
      %v8695 = vadd.f32 %v8659, %v8675
      %v8696 = vadd.f32 %v8660, %v8675
      %v8697 = vadd.f32 %v8661, %v8675
      %v8698 = vadd.f32 %v8662, %v8675
      %v8699 = vadd.f32 %v8663, %v8675
      %v8700 = vadd.f32 %v8664, %v8675
      %v8701 = vadd.f32 %v8665, %v8675
      %v8702 = vadd.f32 %v8666, %v8675
      %v8703 = vadd.f32 %v8667, %v8675
      %v8704 = vadd.f32 %v8668, %v8675
      %v8705 = vadd.f32 %v8669, %v8675
      %v8706 = vadd.f32 %v8670, %v8675
      %v8707 = vadd.f32 %v8671, %v8675
      %v8708 = vadd.f32 %v8672, %v8675
      %v8709 = vmax.f32 %v8677, 0.0
      %v8710 = vmax.f32 %v8678, 0.0
      %v8711 = vmax.f32 %v8679, 0.0
      %v8712 = vmax.f32 %v8680, 0.0
      %v8713 = vmax.f32 %v8681, 0.0
      %v8714 = vmax.f32 %v8682, 0.0
      %v8715 = vmax.f32 %v8683, 0.0
      %v8716 = vmax.f32 %v8684, 0.0
      %v8717 = vmax.f32 %v8685, 0.0
      %v8718 = vmax.f32 %v8686, 0.0
      %v8719 = vmax.f32 %v8687, 0.0
      %v8720 = vmax.f32 %v8688, 0.0
      %v8721 = vmax.f32 %v8689, 0.0
      %v8722 = vmax.f32 %v8690, 0.0
      %v8723 = vmax.f32 %v8691, 0.0
      %v8724 = vmax.f32 %v8692, 0.0
      %v8725 = vmax.f32 %v8693, 0.0
      %v8726 = vmax.f32 %v8694, 0.0
      %v8727 = vmax.f32 %v8695, 0.0
      %v8728 = vmax.f32 %v8696, 0.0
      %v8729 = vmax.f32 %v8697, 0.0
      %v8730 = vmax.f32 %v8698, 0.0
      %v8731 = vmax.f32 %v8699, 0.0
      %v8732 = vmax.f32 %v8700, 0.0
      %v8733 = vmax.f32 %v8701, 0.0
      %v8734 = vmax.f32 %v8702, 0.0
      %v8735 = vmax.f32 %v8703, 0.0
      %v8736 = vmax.f32 %v8704, 0.0
      %v8737 = vmax.f32 %v8705, 0.0
      %v8738 = vmax.f32 %v8706, 0.0
      %v8739 = vmax.f32 %v8707, 0.0
      %v8740 = vmax.f32 %v8708, 0.0
      %v8741 = vpack.c.bf16 %v8709, %v8709
      %v8742 = vpack.c.bf16 %v8710, %v8710
      %v8743 = vpack.c.bf16 %v8711, %v8711
      %v8744 = vpack.c.bf16 %v8712, %v8712
      %v8745 = vpack.c.bf16 %v8713, %v8713
      %v8746 = vpack.c.bf16 %v8714, %v8714
      %v8747 = vpack.c.bf16 %v8715, %v8715
      %v8748 = vpack.c.bf16 %v8716, %v8716
      %v8749 = vpack.c.bf16 %v8717, %v8717
      %v8750 = vpack.c.bf16 %v8718, %v8718
      %v8751 = vpack.c.bf16 %v8719, %v8719
      %v8752 = vpack.c.bf16 %v8720, %v8720
      %v8753 = vpack.c.bf16 %v8721, %v8721
      %v8754 = vpack.c.bf16 %v8722, %v8722
      %v8755 = vpack.c.bf16 %v8723, %v8723
      %v8756 = vpack.c.bf16 %v8724, %v8724
      %v8757 = vpack.c.bf16 %v8725, %v8725
      %v8758 = vpack.c.bf16 %v8726, %v8726
      %v8759 = vpack.c.bf16 %v8727, %v8727
      %v8760 = vpack.c.bf16 %v8728, %v8728
      %v8761 = vpack.c.bf16 %v8729, %v8729
      %v8762 = vpack.c.bf16 %v8730, %v8730
      %v8763 = vpack.c.bf16 %v8731, %v8731
      %v8764 = vpack.c.bf16 %v8732, %v8732
      %v8765 = vpack.c.bf16 %v8733, %v8733
      %v8766 = vpack.c.bf16 %v8734, %v8734
      %v8767 = vpack.c.bf16 %v8735, %v8735
      %v8768 = vpack.c.bf16 %v8736, %v8736
      %v8769 = vpack.c.bf16 %v8737, %v8737
      %v8770 = vpack.c.bf16 %v8738, %v8738
      %v8771 = vpack.c.bf16 %v8739, %v8739
      %v8772 = vpack.c.bf16 %v8740, %v8740
      %8773 = vst [vmem:[%s244] sm:$0xf] %v8741
      %8774 = vst [vmem:[%s244 + $0x4] sm:$0xf] %v8742
      %8775 = vst [vmem:[%s244 + $0x8] sm:$0xf] %v8743
      %8776 = vst [vmem:[%s244 + $0xc] sm:$0xf] %v8744
      %8777 = vst [vmem:[%s244 + $0x10] sm:$0xf] %v8745
      %8778 = vst [vmem:[%s244 + $0x14] sm:$0xf] %v8746
      %8779 = vst [vmem:[%s244 + $0x18] sm:$0xf] %v8747
      %8780 = vst [vmem:[%s244 + $0x1c] sm:$0xf] %v8748
      %8781 = vst [vmem:[%s244 + $0x20] sm:$0xf] %v8749
      %8782 = vst [vmem:[%s244 + $0x24] sm:$0xf] %v8750
      %8783 = vst [vmem:[%s244 + $0x28] sm:$0xf] %v8751
      %8784 = vst [vmem:[%s244 + $0x2c] sm:$0xf] %v8752
      %8785 = vst [vmem:[%s244 + $0x30] sm:$0xf] %v8753
      %8786 = vst [vmem:[%s244 + $0x34] sm:$0xf] %v8754
      %8787 = vst [vmem:[%s244 + $0x38] sm:$0xf] %v8755
      %8788 = vst [vmem:[%s244 + $0x3c] sm:$0xf] %v8756
      %8789 = vst [vmem:[%s244 + $0x40] sm:$0xf] %v8757
      %8790 = vst [vmem:[%s244 + $0x44] sm:$0xf] %v8758
      %8791 = vst [vmem:[%s244 + $0x48] sm:$0xf] %v8759
      %8792 = vst [vmem:[%s244 + $0x4c] sm:$0xf] %v8760
      %8793 = vst [vmem:[%s244 + $0x50] sm:$0xf] %v8761
      %8794 = vst [vmem:[%s244 + $0x54] sm:$0xf] %v8762
      %8795 = vst [vmem:[%s244 + $0x58] sm:$0xf] %v8763
      %8796 = vst [vmem:[%s244 + $0x5c] sm:$0xf] %v8764
      %8797 = vst [vmem:[%s244 + $0x60] sm:$0xf] %v8765
      %8798 = vst [vmem:[%s244 + $0x64] sm:$0xf] %v8766
      %8799 = vst [vmem:[%s244 + $0x68] sm:$0xf] %v8767
      %8800 = vst [vmem:[%s244 + $0x6c] sm:$0xf] %v8768
      %8801 = vst [vmem:[%s244 + $0x70] sm:$0xf] %v8769
      %8802 = vst [vmem:[%s244 + $0x74] sm:$0xf] %v8770
      %8803 = vst [vmem:[%s244 + $0x78] sm:$0xf] %v8771
      %8804 = vst [vmem:[%s244 + $0x7c] sm:$0xf] %v8772
      %p8805 = scmp.lt.s32.totalorder %s16, 1
      %s8806 = scalar_select %p8805, %s16, 1
      %s8807 = smul.addr %s8806, 32
      %s8808 = smul.addr %s8807, 4
      %s8809 = scalar_lea.vmem %s5, %s8808
      // Predicated region
      $region41: #{up_forward.2} parent=39 // pred_check
        %p8810 = pneg %p149
      $region42: #{up_forward.2} parent=39 // pred_check_branch
        %8812 = sbr.rel (%p8810) target = $region44
      $region43: #{up_forward.2} parent=39 // pred_region
        _
      $region44: #{up_forward.2} parent=39 // pred_fallthru
        _
    $region40: #{up_forward.2} parent=5 // pred_fallthru
      _
    %p8813 = scmp.le.s32.totalorder 2, %s11
    // Predicated region
    $region45: #{up_forward.2} parent=5 // pred_check
      %p8814 = pneg %p8813
    $region46: #{up_forward.2} parent=5 // pred_check_branch
      %8816 = sbr.rel (%p8814) target = $region48
    $region47: #{up_forward.2} parent=5 // pred_region
      %s8817 = ssub.s32 %s11, 2
      // Predicated region
      $region49: #{up_forward.2} parent=47 // pred_check
        %p8818 = pneg %p155
      $region50: #{up_forward.2} parent=47 // pred_check_branch
        %8820 = sbr.rel (%p8818) target = $region52
      $region51: #{up_forward.2} parent=47 // pred_region
        %p8821 = scmp.lt.s32.totalorder %s17, 1
        %s8822 = scalar_select %p8821, %s17, 1
        %s8823 = smul.addr %s8822, 32
        %s8824 = smul.addr %s8823, 4
        %s8825 = scalar_lea.vmem %s5, %s8824
      $region52: #{up_forward.2} parent=47 // pred_fallthru
        _
    $region48: #{up_forward.2} parent=5 // pred_fallthru
      _
  $region6: #{up_forward.2} parent=0 // loop_footer
    %s15 = sadd.s32 1, %s11
  $region7: #{up_forward.2} parent=0 // loop_footer_branch
    %10 = sbr.rel target = $region3
  $region8: #{up_forward.2} parent=0 // loop_exit
    _

</llo_original>
